<compile_context>
chip_gen: v7x
topology: tpu7x:2x2x1
jax: 0.10.0
libtpu: 0.0.40
codegen_flags: <defaults>
</compile_context>

<pallas_src>
import functools

import jax
import jax.numpy as jnp
from jax.experimental import pallas as pl
from jax.experimental.pallas import tpu as pltpu


# ---------------------------------------------------------------------------
# In-kernel helpers
# ---------------------------------------------------------------------------

def _avgpool2x2(a, hd, wd, c):
    """2x2 average pool of an (hd, wd, c) value -> (hd//2, wd//2, c).

    Uses only minor-dim-preserving reshapes + static index selects (Mosaic friendly).
    """
    p = a.reshape(hd // 2, 2, wd // 2, 2, c)
    return 0.25 * (p[:, 0, :, 0, :] + p[:, 0, :, 1, :]
                   + p[:, 1, :, 0, :] + p[:, 1, :, 1, :])


def _conv3x3_from_padded(src_ref, w, b, dst_ref, *, H, W, cin, cout, relu,
                         dst_padded, row_chunk):
    """3x3 'same' conv over a zero-padded (H+2, W+2, cin) f32 VMEM scratch.

    w : (9*cin, cout) bf16, tap-major rows ((dy*3+dx)*cin + ci)
    b : (1, cout) f32
    Processes `row_chunk` output rows at a time: slices the 9 shifted windows straight
    from the padded scratch, builds the K-fused patch matrix once (in-VMEM concat) and
    issues a single MXU matmul with K = 9*cin.  Bias (+ optional ReLU) applied in f32.
    Writes into the interior of a padded scratch if dst_padded, else into an (H, W, cout)
    scratch.
    """
    for r0 in range(0, H, row_chunk):
        wins = []
        for dy in range(3):
            for dx in range(3):
                win = src_ref[r0 + dy:r0 + dy + row_chunk, dx:dx + W, :]
                wins.append(win.reshape(row_chunk * W, cin))
        patches = jnp.concatenate(wins, axis=-1).astype(jnp.bfloat16)   # (rc*W, 9*cin)
        acc = jnp.dot(patches, w, preferred_element_type=jnp.float32) + b
        if relu:
            acc = jnp.maximum(acc, 0.0)
        chunk = acc.reshape(row_chunk, W, cout).astype(dst_ref.dtype)
        if dst_padded:
            dst_ref[1 + r0:1 + r0 + row_chunk, 1:W + 1, :] = chunk
        else:
            dst_ref[r0:r0 + row_chunk, :, :] = chunk


def _dblock_kernel(*refs, H, W, C1, C2, C3, preactivation, downsample,
                   learnable_sc, row_chunk):
    if learnable_sc:
        (x_ref, w1_ref, b1_ref, w2_ref, b2_ref, wsc_ref, bsc_ref,
         o_ref, xs_ref, hs_ref, h2_ref) = refs
    else:
        (x_ref, w1_ref, b1_ref, w2_ref, b2_ref,
         o_ref, xs_ref, hs_ref, h2_ref) = refs
        wsc_ref = bsc_ref = None

    x = x_ref[0]                                           # (H, W, C1) f32

    # --- stage 0: zero-padded input lives only in VMEM (no HBM pad pass). ---
    # relu(0) == 0, so applying the pre-activation ReLU before writing into the
    # zero-padded scratch equals padding relu(x).
    xs_ref[...] = jnp.zeros_like(xs_ref)
    xin = jnp.maximum(x, 0.0) if preactivation else x
    xs_ref[1:H + 1, 1:W + 1, :] = xin

    # --- stage 1: conv1 + bias + ReLU -> padded hs scratch (never hits HBM). ---
    hs_ref[...] = jnp.zeros_like(hs_ref)
    _conv3x3_from_padded(xs_ref, w1_ref[...], b1_ref[...], hs_ref,
                         H=H, W=W, cin=C1, cout=C2, relu=True,
                         dst_padded=True, row_chunk=row_chunk)

    # --- stage 2: conv2 + bias -> h2 scratch. ---
    _conv3x3_from_padded(hs_ref, w2_ref[...], b2_ref[...], h2_ref,
                         H=H, W=W, cin=C2, cout=C3, relu=False,
                         dst_padded=False, row_chunk=row_chunk)

    # --- stage 3: main-path 2x2 avg pool, fused. ---
    h = h2_ref[...]                                        # (H, W, C3) f32
    if downsample:
        h = _avgpool2x2(h, H, W, C3)

    # --- stage 4: shortcut. Avg-pool commutes exactly with the 1x1 conv + bias,
    #     so pool first (4x fewer shortcut MACs); raw x (no ReLU) feeds the shortcut. ---
    sc = x
    if downsample:
        sc = _avgpool2x2(sc, H, W, C1)
    if learnable_sc:
        ho, wo = sc.shape[0], sc.shape[1]
        sc2 = sc.reshape(ho * wo, C1).astype(jnp.bfloat16)
        sc = (jnp.dot(sc2, wsc_ref[...], preferred_element_type=jnp.float32)
              + bsc_ref[...]).reshape(ho, wo, C3)

    # --- stage 5: residual add + single HBM write for the whole block. ---
    o_ref[0] = (h + sc).astype(o_ref.dtype)


# ---------------------------------------------------------------------------
# JAX glue: spectral norm, weight prep, DBlock wrapper
# ---------------------------------------------------------------------------

def spectral_norm_weight(w, u, eps=1e-12):
    """One power-iteration step (num_svs=1, num_itrs=1): W / sigma_0 (eval semantics)."""
    cout = w.shape[0]
    Wm = w.reshape(cout, -1).astype(jnp.float32)
    v = u @ Wm
    v = v / jnp.maximum(jnp.linalg.norm(v), eps)
    u_new = v @ Wm.T
    u_new = u_new / jnp.maximum(jnp.linalg.norm(u_new), eps)
    sv = jnp.squeeze((v @ Wm.T) @ u_new.T)
    return w / sv


def prep_conv3(p):
    """(Cout,Cin,3,3) torch weight -> SN-normalized (9*Cin, Cout) bf16 + (1,Cout) f32 bias."""
    w = spectral_norm_weight(p["w"], p["u"])
    cout, cin = w.shape[0], w.shape[1]
    w9 = jnp.transpose(w, (2, 3, 1, 0)).reshape(9 * cin, cout)
    return w9.astype(jnp.bfloat16), p["b"].reshape(1, -1).astype(jnp.float32)


def prep_conv1(p):
    """(Cout,Cin,1,1) torch weight -> SN-normalized (Cin, Cout) bf16 + (1,Cout) f32 bias."""
    w = spectral_norm_weight(p["w"], p["u"])
    wm = w.reshape(w.shape[0], w.shape[1]).T
    return wm.astype(jnp.bfloat16), p["b"].reshape(1, -1).astype(jnp.float32)


def d_block(x_nchw, params, *, preactivation, downsample):
    """DBlock forward (wide=True, activation=ReLU, downsample=AvgPool2d(2) if enabled)."""
    B, C1, H, W = x_nchw.shape
    if downsample:
        assert H % 2 == 0 and W % 2 == 0
    x = jnp.transpose(x_nchw, (0, 2, 3, 1)).astype(jnp.float32)   # NHWC

    w1, b1 = prep_conv3(params["conv1"])
    w2, b2 = prep_conv3(params["conv2"])
    C2, C3 = int(w1.shape[1]), int(w2.shape[1])
    learnable_sc = "conv_sc" in params

    Ho, Wo = (H // 2, W // 2) if downsample else (H, W)
    row_chunk = 8 if H % 8 == 0 else H

    args = [x, w1, b1, w2, b2]
    in_specs = [
        pl.BlockSpec((1, H, W, C1), lambda n: (n, 0, 0, 0)),
        pl.BlockSpec((9 * C1, C2), lambda n: (0, 0)),
        pl.BlockSpec((1, C2), lambda n: (0, 0)),
        pl.BlockSpec((9 * C2, C3), lambda n: (0, 0)),
        pl.BlockSpec((1, C3), lambda n: (0, 0)),
    ]
    if learnable_sc:
        wsc, bsc = prep_conv1(params["conv_sc"])
        args += [wsc, bsc]
        in_specs += [
            pl.BlockSpec((C1, C3), lambda n: (0, 0)),
            pl.BlockSpec((1, C3), lambda n: (0, 0)),
        ]

    kernel = functools.partial(
        _dblock_kernel, H=H, W=W, C1=C1, C2=C2, C3=C3,
        preactivation=preactivation, downsample=downsample,
        learnable_sc=learnable_sc, row_chunk=row_chunk)

    flops = 2 * B * H * W * 9 * (C1 * C2 + C2 * C3)
    bytes_accessed = (B * H * W * C1 * 4 + B * Ho * Wo * C3 * 4
                      + (w1.size + w2.size) * 2 + (b1.size + b2.size) * 4)
    if learnable_sc:
        flops += 2 * B * Ho * Wo * C1 * C3
        bytes_accessed += wsc.size * 2 + bsc.size * 4

    out = pl.pallas_call(
        kernel,
        out_shape=jax.ShapeDtypeStruct((B, Ho, Wo, C3), jnp.float32),
        grid_spec=pltpu.PrefetchScalarGridSpec(
            num_scalar_prefetch=0,
            grid=(B,),
            in_specs=in_specs,
            out_specs=pl.BlockSpec((1, Ho, Wo, C3), lambda n: (n, 0, 0, 0)),
            scratch_shapes=[
                pltpu.VMEM((H + 2, W + 2, C1), jnp.float32),   # zero-padded x
                pltpu.VMEM((H + 2, W + 2, C2), jnp.float32),   # zero-padded conv1 output
                pltpu.VMEM((H, W, C3), jnp.float32),           # conv2 output
            ],
        ),
        compiler_params=pltpu.CompilerParams(
            dimension_semantics=("parallel",),
            vmem_limit_bytes=32 * 1024 * 1024,
        ),
        cost_estimate=pl.CostEstimate(
            flops=int(flops), transcendentals=0, bytes_accessed=int(bytes_accessed)),
    )(*args)

    return jnp.transpose(out, (0, 3, 1, 2))                       # NCHW


# ---------------------------------------------------------------------------
# Pure-JAX reference (module order, f32) for a numerical sanity check
# ---------------------------------------------------------------------------

def _reference_dblock(x_nchw, params, *, preactivation, downsample):
    def conv(x, p, pad):
        w = spectral_norm_weight(p["w"], p["u"])
        y = jax.lax.conv_general_dilated(
            x, w, window_strides=(1, 1), padding=((pad, pad), (pad, pad)),
            dimension_numbers=("NCHW", "OIHW", "NCHW"))
        return y + p["b"].reshape(1, -1, 1, 1)

    def pool(x):
        b, c, hh, ww = x.shape
        return x.reshape(b, c, hh // 2, 2, ww // 2, 2).mean(axis=(3, 5))

    x = x_nchw.astype(jnp.float32)
    h = jnp.maximum(x, 0.0) if preactivation else x
    h = conv(h, params["conv1"], 1)
    h = jnp.maximum(h, 0.0)
    h = conv(h, params["conv2"], 1)
    if downsample:
        h = pool(h)
    sc = x
    if preactivation:
        if "conv_sc" in params:
            sc = conv(sc, params["conv_sc"], 0)
        if downsample:
            sc = pool(sc)
    else:
        if downsample:
            sc = pool(sc)
        if "conv_sc" in params:
            sc = conv(sc, params["conv_sc"], 0)
    return h + sc


# ---------------------------------------------------------------------------
# Parameters (deterministic synthetic init following the module __init__ shapes)
# ---------------------------------------------------------------------------

def make_snconv_params(key, cin, cout, k):
    kw, ku, kb = jax.random.split(key, 3)
    return {
        "w": 0.1 * jax.random.normal(kw, (cout, cin, k, k), dtype=jnp.float32),
        "u": jax.random.normal(ku, (1, cout), dtype=jnp.float32),
        "b": 0.01 * jax.random.normal(kb, (cout,), dtype=jnp.float32),
    }


# ---------------------------------------------------------------------------

if __name__ == "__main__":
    B, CIN, COUT, H, W = 2, 4, 8, 16, 16

    key = jax.random.PRNGKey(0)
    k1, k2, k3, kx = jax.random.split(key, 4)
    params = {
        "conv1": make_snconv_params(k1, CIN, COUT, 3),    # which_conv: 3x3, pad 1
        "conv2": make_snconv_params(k2, COUT, COUT, 3),   # hidden = out (wide=True)
        "conv_sc": make_snconv_params(k3, CIN, COUT, 1),  # learnable shortcut (Cin != Cout)
    }
    x = jax.random.normal(kx, (B, CIN, H, W), dtype=jnp.float32)

    def check(preactivation):
        fwd = jax.jit(functools.partial(d_block, preactivation=preactivation,
                                        downsample=True))
        out = jax.block_until_ready(fwd(x, params))
        assert out.shape == (B, COUT, H // 2, W // 2), out.shape
        assert bool(jnp.all(jnp.isfinite(out)))
        ref = _reference_dblock(x, params, preactivation=preactivation, downsample=True)
        err = float(jnp.max(jnp.abs(out - ref)))
        scale = max(1.0, float(jnp.max(jnp.abs(ref))))
        # bf16 MXU operands + exact (but reordered) pool/1x1 commute -> loose tolerance.
        assert err <= 5e-2 * scale, (err, scale)

    check(preactivation=True)    # typical mid-network DBlock
    check(preactivation=False)   # first-block configuration

    print("KERNEL_OK")
</pallas_src>

<mosaic_0001>
module attributes {stable_mosaic.version = 11 : i64} {
  func.func @_dblock_kernel(%arg0: i32, %arg1: memref<1x16x16x4xf32, #tpu.memory_space<vmem>>, %arg2: memref<36x8xbf16, #tpu.memory_space<vmem>>, %arg3: memref<1x8xf32, #tpu.memory_space<vmem>>, %arg4: memref<72x8xbf16, #tpu.memory_space<vmem>>, %arg5: memref<1x8xf32, #tpu.memory_space<vmem>>, %arg6: memref<4x8xbf16, #tpu.memory_space<vmem>>, %arg7: memref<1x8xf32, #tpu.memory_space<vmem>>, %arg8: memref<1x8x8x8xf32, #tpu.memory_space<vmem>>, %arg9: memref<18x18x4xf32, #tpu.memory_space<vmem>>, %arg10: memref<18x18x8xf32, #tpu.memory_space<vmem>>, %arg11: memref<16x16x8xf32, #tpu.memory_space<vmem>>) attributes {dimension_semantics = [#tpu.dimension_semantics<parallel>], iteration_bounds = array<i64: 2>, scalar_prefetch = 0 : i64, scratch_operands = 3 : i64, tpu.core_type = #tpu.core_type<tc>, window_params = [{transform_indices = @transform_0, window_bounds = array<i64: 1, 16, 16, 4>}, {pipeline_mode = #tpu.pipeline_mode<synchronous>, transform_indices = @transform_1, window_bounds = array<i64: 36, 8>}, {pipeline_mode = #tpu.pipeline_mode<synchronous>, transform_indices = @transform_2, window_bounds = array<i64: 1, 8>}, {pipeline_mode = #tpu.pipeline_mode<synchronous>, transform_indices = @transform_3, window_bounds = array<i64: 72, 8>}, {pipeline_mode = #tpu.pipeline_mode<synchronous>, transform_indices = @transform_4, window_bounds = array<i64: 1, 8>}, {pipeline_mode = #tpu.pipeline_mode<synchronous>, transform_indices = @transform_5, window_bounds = array<i64: 4, 8>}, {pipeline_mode = #tpu.pipeline_mode<synchronous>, transform_indices = @transform_6, window_bounds = array<i64: 1, 8>}, {transform_indices = @transform_7, window_bounds = array<i64: 1, 8, 8, 8>}]} {
    %c0 = arith.constant 0 : index
    %c0_0 = arith.constant 0 : index
    %c0_1 = arith.constant 0 : index
    %c0_2 = arith.constant 0 : index
    %0 = vector.load %arg1[%c0, %c0_0, %c0_1, %c0_2] : memref<1x16x16x4xf32, #tpu.memory_space<vmem>>, vector<1x16x16x4xf32>
    %1 = vector.shape_cast %0 : vector<1x16x16x4xf32> to vector<16x16x4xf32>
    %cst = arith.constant 0.000000e+00 : f32
    %2 = vector.broadcast %cst : f32 to vector<18x18x4xf32>
    %c0_3 = arith.constant 0 : index
    %c0_4 = arith.constant 0 : index
    %c0_5 = arith.constant 0 : index
    %3 = vector.load %arg9[%c0_3, %c0_4, %c0_5] : memref<18x18x4xf32, #tpu.memory_space<vmem>>, vector<18x18x4xf32>
    tpu.vector_store %arg9[%c0_3, %c0_4, %c0_5], %2 {strides = array<i32>} : memref<18x18x4xf32, #tpu.memory_space<vmem>>, vector<18x18x4xf32>,
    %cst_6 = arith.constant 0.000000e+00 : f32
    %4 = vector.broadcast %cst_6 : f32 to vector<16x16x4xf32>
    %5 = arith.maximumf %1, %4 : vector<16x16x4xf32>
    %c1 = arith.constant 1 : index
    %c1_7 = arith.constant 1 : index
    %c0_8 = arith.constant 0 : index
    %6 = vector.load %arg9[%c1, %c1_7, %c0_8] : memref<18x18x4xf32, #tpu.memory_space<vmem>>, vector<16x16x4xf32>
    tpu.vector_store %arg9[%c1, %c1_7, %c0_8], %5 {strides = array<i32>} : memref<18x18x4xf32, #tpu.memory_space<vmem>>, vector<16x16x4xf32>,
    %cst_9 = arith.constant 0.000000e+00 : f32
    %7 = vector.broadcast %cst_9 : f32 to vector<18x18x8xf32>
    %c0_10 = arith.constant 0 : index
    %c0_11 = arith.constant 0 : index
    %c0_12 = arith.constant 0 : index
    %8 = vector.load %arg10[%c0_10, %c0_11, %c0_12] : memref<18x18x8xf32, #tpu.memory_space<vmem>>, vector<18x18x8xf32>
    tpu.vector_store %arg10[%c0_10, %c0_11, %c0_12], %7 {strides = array<i32>} : memref<18x18x8xf32, #tpu.memory_space<vmem>>, vector<18x18x8xf32>,
    %c0_13 = arith.constant 0 : index
    %c0_14 = arith.constant 0 : index
    %9 = vector.load %arg2[%c0_13, %c0_14] : memref<36x8xbf16, #tpu.memory_space<vmem>>, vector<36x8xbf16>
    %c0_15 = arith.constant 0 : index
    %c0_16 = arith.constant 0 : index
    %10 = vector.load %arg3[%c0_15, %c0_16] : memref<1x8xf32, #tpu.memory_space<vmem>>, vector<1x8xf32>
    %c0_17 = arith.constant 0 : index
    %c0_18 = arith.constant 0 : index
    %c0_19 = arith.constant 0 : index
    %11 = vector.load %arg9[%c0_17, %c0_18, %c0_19] : memref<18x18x4xf32, #tpu.memory_space<vmem>>, vector<8x16x4xf32>
    %12 = vector.shape_cast %11 : vector<8x16x4xf32> to vector<128x4xf32>
    %c0_20 = arith.constant 0 : index
    %c1_21 = arith.constant 1 : index
    %c0_22 = arith.constant 0 : index
    %13 = vector.load %arg9[%c0_20, %c1_21, %c0_22] : memref<18x18x4xf32, #tpu.memory_space<vmem>>, vector<8x16x4xf32>
    %14 = vector.shape_cast %13 : vector<8x16x4xf32> to vector<128x4xf32>
    %c0_23 = arith.constant 0 : index
    %c2 = arith.constant 2 : index
    %c0_24 = arith.constant 0 : index
    %15 = vector.load %arg9[%c0_23, %c2, %c0_24] : memref<18x18x4xf32, #tpu.memory_space<vmem>>, vector<8x16x4xf32>
    %16 = vector.shape_cast %15 : vector<8x16x4xf32> to vector<128x4xf32>
    %c1_25 = arith.constant 1 : index
    %c0_26 = arith.constant 0 : index
    %c0_27 = arith.constant 0 : index
    %17 = vector.load %arg9[%c1_25, %c0_26, %c0_27] : memref<18x18x4xf32, #tpu.memory_space<vmem>>, vector<8x16x4xf32>
    %18 = vector.shape_cast %17 : vector<8x16x4xf32> to vector<128x4xf32>
    %c1_28 = arith.constant 1 : index
    %c1_29 = arith.constant 1 : index
    %c0_30 = arith.constant 0 : index
    %19 = vector.load %arg9[%c1_28, %c1_29, %c0_30] : memref<18x18x4xf32, #tpu.memory_space<vmem>>, vector<8x16x4xf32>
    %20 = vector.shape_cast %19 : vector<8x16x4xf32> to vector<128x4xf32>
    %c1_31 = arith.constant 1 : index
    %c2_32 = arith.constant 2 : index
    %c0_33 = arith.constant 0 : index
    %21 = vector.load %arg9[%c1_31, %c2_32, %c0_33] : memref<18x18x4xf32, #tpu.memory_space<vmem>>, vector<8x16x4xf32>
    %22 = vector.shape_cast %21 : vector<8x16x4xf32> to vector<128x4xf32>
    %c2_34 = arith.constant 2 : index
    %c0_35 = arith.constant 0 : index
    %c0_36 = arith.constant 0 : index
    %23 = vector.load %arg9[%c2_34, %c0_35, %c0_36] : memref<18x18x4xf32, #tpu.memory_space<vmem>>, vector<8x16x4xf32>
    %24 = vector.shape_cast %23 : vector<8x16x4xf32> to vector<128x4xf32>
    %c2_37 = arith.constant 2 : index
    %c1_38 = arith.constant 1 : index
    %c0_39 = arith.constant 0 : index
    %25 = vector.load %arg9[%c2_37, %c1_38, %c0_39] : memref<18x18x4xf32, #tpu.memory_space<vmem>>, vector<8x16x4xf32>
    %26 = vector.shape_cast %25 : vector<8x16x4xf32> to vector<128x4xf32>
    %c2_40 = arith.constant 2 : index
    %c2_41 = arith.constant 2 : index
    %c0_42 = arith.constant 0 : index
    %27 = vector.load %arg9[%c2_40, %c2_41, %c0_42] : memref<18x18x4xf32, #tpu.memory_space<vmem>>, vector<8x16x4xf32>
    %28 = vector.shape_cast %27 : vector<8x16x4xf32> to vector<128x4xf32>
    %29 = tpu.concatenate %12, %14, %16, %18, %20, %22, %24, %26, %28 in 1 : vector<128x4xf32>, vector<128x4xf32>, vector<128x4xf32>, vector<128x4xf32>, vector<128x4xf32>, vector<128x4xf32>, vector<128x4xf32>, vector<128x4xf32>, vector<128x4xf32> -> vector<128x36xf32>
    %30 = arith.truncf %29 : vector<128x36xf32> to vector<128x36xbf16>
    %cst_43 = arith.constant dense<0.000000e+00> : vector<128x8xf32>
    %31 = tpu.matmul %30, %9, %cst_43 {dimension_numbers = #tpu.dot_dimension_numbers<[1], [0], [0], [1], [0, 0, 1, 1], [], []>} : vector<128x36xbf16>, vector<36x8xbf16>, vector<128x8xf32> -> vector<128x8xf32>
    %32 = vector.broadcast %10 : vector<1x8xf32> to vector<128x8xf32>
    %33 = arith.addf %31, %32 : vector<128x8xf32>
    %cst_44 = arith.constant 0.000000e+00 : f32
    %34 = vector.broadcast %cst_44 : f32 to vector<128x8xf32>
    %35 = arith.maximumf %33, %34 : vector<128x8xf32>
    %36 = vector.shape_cast %35 : vector<128x8xf32> to vector<8x16x8xf32>
    %c1_45 = arith.constant 1 : index
    %c1_46 = arith.constant 1 : index
    %c0_47 = arith.constant 0 : index
    %37 = vector.load %arg10[%c1_45, %c1_46, %c0_47] : memref<18x18x8xf32, #tpu.memory_space<vmem>>, vector<8x16x8xf32>
    tpu.vector_store %arg10[%c1_45, %c1_46, %c0_47], %36 {strides = array<i32>} : memref<18x18x8xf32, #tpu.memory_space<vmem>>, vector<8x16x8xf32>,
    %c8 = arith.constant 8 : index
    %c0_48 = arith.constant 0 : index
    %c0_49 = arith.constant 0 : index
    %38 = vector.load %arg9[%c8, %c0_48, %c0_49] : memref<18x18x4xf32, #tpu.memory_space<vmem>>, vector<8x16x4xf32>
    %39 = vector.shape_cast %38 : vector<8x16x4xf32> to vector<128x4xf32>
    %c8_50 = arith.constant 8 : index
    %c1_51 = arith.constant 1 : index
    %c0_52 = arith.constant 0 : index
    %40 = vector.load %arg9[%c8_50, %c1_51, %c0_52] : memref<18x18x4xf32, #tpu.memory_space<vmem>>, vector<8x16x4xf32>
    %41 = vector.shape_cast %40 : vector<8x16x4xf32> to vector<128x4xf32>
    %c8_53 = arith.constant 8 : index
    %c2_54 = arith.constant 2 : index
    %c0_55 = arith.constant 0 : index
    %42 = vector.load %arg9[%c8_53, %c2_54, %c0_55] : memref<18x18x4xf32, #tpu.memory_space<vmem>>, vector<8x16x4xf32>
    %43 = vector.shape_cast %42 : vector<8x16x4xf32> to vector<128x4xf32>
    %c9 = arith.constant 9 : index
    %c0_56 = arith.constant 0 : index
    %c0_57 = arith.constant 0 : index
    %44 = vector.load %arg9[%c9, %c0_56, %c0_57] : memref<18x18x4xf32, #tpu.memory_space<vmem>>, vector<8x16x4xf32>
    %45 = vector.shape_cast %44 : vector<8x16x4xf32> to vector<128x4xf32>
    %c9_58 = arith.constant 9 : index
    %c1_59 = arith.constant 1 : index
    %c0_60 = arith.constant 0 : index
    %46 = vector.load %arg9[%c9_58, %c1_59, %c0_60] : memref<18x18x4xf32, #tpu.memory_space<vmem>>, vector<8x16x4xf32>
    %47 = vector.shape_cast %46 : vector<8x16x4xf32> to vector<128x4xf32>
    %c9_61 = arith.constant 9 : index
    %c2_62 = arith.constant 2 : index
    %c0_63 = arith.constant 0 : index
    %48 = vector.load %arg9[%c9_61, %c2_62, %c0_63] : memref<18x18x4xf32, #tpu.memory_space<vmem>>, vector<8x16x4xf32>
    %49 = vector.shape_cast %48 : vector<8x16x4xf32> to vector<128x4xf32>
    %c10 = arith.constant 10 : index
    %c0_64 = arith.constant 0 : index
    %c0_65 = arith.constant 0 : index
    %50 = vector.load %arg9[%c10, %c0_64, %c0_65] : memref<18x18x4xf32, #tpu.memory_space<vmem>>, vector<8x16x4xf32>
    %51 = vector.shape_cast %50 : vector<8x16x4xf32> to vector<128x4xf32>
    %c10_66 = arith.constant 10 : index
    %c1_67 = arith.constant 1 : index
    %c0_68 = arith.constant 0 : index
    %52 = vector.load %arg9[%c10_66, %c1_67, %c0_68] : memref<18x18x4xf32, #tpu.memory_space<vmem>>, vector<8x16x4xf32>
    %53 = vector.shape_cast %52 : vector<8x16x4xf32> to vector<128x4xf32>
    %c10_69 = arith.constant 10 : index
    %c2_70 = arith.constant 2 : index
    %c0_71 = arith.constant 0 : index
    %54 = vector.load %arg9[%c10_69, %c2_70, %c0_71] : memref<18x18x4xf32, #tpu.memory_space<vmem>>, vector<8x16x4xf32>
    %55 = vector.shape_cast %54 : vector<8x16x4xf32> to vector<128x4xf32>
    %56 = tpu.concatenate %39, %41, %43, %45, %47, %49, %51, %53, %55 in 1 : vector<128x4xf32>, vector<128x4xf32>, vector<128x4xf32>, vector<128x4xf32>, vector<128x4xf32>, vector<128x4xf32>, vector<128x4xf32>, vector<128x4xf32>, vector<128x4xf32> -> vector<128x36xf32>
    %57 = arith.truncf %56 : vector<128x36xf32> to vector<128x36xbf16>
    %cst_72 = arith.constant dense<0.000000e+00> : vector<128x8xf32>
    %58 = tpu.matmul %57, %9, %cst_72 {dimension_numbers = #tpu.dot_dimension_numbers<[1], [0], [0], [1], [0, 0, 1, 1], [], []>} : vector<128x36xbf16>, vector<36x8xbf16>, vector<128x8xf32> -> vector<128x8xf32>
    %59 = vector.broadcast %10 : vector<1x8xf32> to vector<128x8xf32>
    %60 = arith.addf %58, %59 : vector<128x8xf32>
    %cst_73 = arith.constant 0.000000e+00 : f32
    %61 = vector.broadcast %cst_73 : f32 to vector<128x8xf32>
    %62 = arith.maximumf %60, %61 : vector<128x8xf32>
    %63 = vector.shape_cast %62 : vector<128x8xf32> to vector<8x16x8xf32>
    %c9_74 = arith.constant 9 : index
    %c1_75 = arith.constant 1 : index
    %c0_76 = arith.constant 0 : index
    %64 = vector.load %arg10[%c9_74, %c1_75, %c0_76] : memref<18x18x8xf32, #tpu.memory_space<vmem>>, vector<8x16x8xf32>
    tpu.vector_store %arg10[%c9_74, %c1_75, %c0_76], %63 {strides = array<i32>} : memref<18x18x8xf32, #tpu.memory_space<vmem>>, vector<8x16x8xf32>,
    %c0_77 = arith.constant 0 : index
    %c0_78 = arith.constant 0 : index
    %65 = vector.load %arg4[%c0_77, %c0_78] : memref<72x8xbf16, #tpu.memory_space<vmem>>, vector<72x8xbf16>
    %c0_79 = arith.constant 0 : index
    %c0_80 = arith.constant 0 : index
    %66 = vector.load %arg5[%c0_79, %c0_80] : memref<1x8xf32, #tpu.memory_space<vmem>>, vector<1x8xf32>
    %c0_81 = arith.constant 0 : index
    %c0_82 = arith.constant 0 : index
    %c0_83 = arith.constant 0 : index
    %67 = vector.load %arg10[%c0_81, %c0_82, %c0_83] : memref<18x18x8xf32, #tpu.memory_space<vmem>>, vector<8x16x8xf32>
    %68 = vector.shape_cast %67 : vector<8x16x8xf32> to vector<128x8xf32>
    %c0_84 = arith.constant 0 : index
    %c1_85 = arith.constant 1 : index
    %c0_86 = arith.constant 0 : index
    %69 = vector.load %arg10[%c0_84, %c1_85, %c0_86] : memref<18x18x8xf32, #tpu.memory_space<vmem>>, vector<8x16x8xf32>
    %70 = vector.shape_cast %69 : vector<8x16x8xf32> to vector<128x8xf32>
    %c0_87 = arith.constant 0 : index
    %c2_88 = arith.constant 2 : index
    %c0_89 = arith.constant 0 : index
    %71 = vector.load %arg10[%c0_87, %c2_88, %c0_89] : memref<18x18x8xf32, #tpu.memory_space<vmem>>, vector<8x16x8xf32>
    %72 = vector.shape_cast %71 : vector<8x16x8xf32> to vector<128x8xf32>
    %c1_90 = arith.constant 1 : index
    %c0_91 = arith.constant 0 : index
    %c0_92 = arith.constant 0 : index
    %73 = vector.load %arg10[%c1_90, %c0_91, %c0_92] : memref<18x18x8xf32, #tpu.memory_space<vmem>>, vector<8x16x8xf32>
    %74 = vector.shape_cast %73 : vector<8x16x8xf32> to vector<128x8xf32>
    %c1_93 = arith.constant 1 : index
    %c1_94 = arith.constant 1 : index
    %c0_95 = arith.constant 0 : index
    %75 = vector.load %arg10[%c1_93, %c1_94, %c0_95] : memref<18x18x8xf32, #tpu.memory_space<vmem>>, vector<8x16x8xf32>
    %76 = vector.shape_cast %75 : vector<8x16x8xf32> to vector<128x8xf32>
    %c1_96 = arith.constant 1 : index
    %c2_97 = arith.constant 2 : index
    %c0_98 = arith.constant 0 : index
    %77 = vector.load %arg10[%c1_96, %c2_97, %c0_98] : memref<18x18x8xf32, #tpu.memory_space<vmem>>, vector<8x16x8xf32>
    %78 = vector.shape_cast %77 : vector<8x16x8xf32> to vector<128x8xf32>
    %c2_99 = arith.constant 2 : index
    %c0_100 = arith.constant 0 : index
    %c0_101 = arith.constant 0 : index
    %79 = vector.load %arg10[%c2_99, %c0_100, %c0_101] : memref<18x18x8xf32, #tpu.memory_space<vmem>>, vector<8x16x8xf32>
    %80 = vector.shape_cast %79 : vector<8x16x8xf32> to vector<128x8xf32>
    %c2_102 = arith.constant 2 : index
    %c1_103 = arith.constant 1 : index
    %c0_104 = arith.constant 0 : index
    %81 = vector.load %arg10[%c2_102, %c1_103, %c0_104] : memref<18x18x8xf32, #tpu.memory_space<vmem>>, vector<8x16x8xf32>
    %82 = vector.shape_cast %81 : vector<8x16x8xf32> to vector<128x8xf32>
    %c2_105 = arith.constant 2 : index
    %c2_106 = arith.constant 2 : index
    %c0_107 = arith.constant 0 : index
    %83 = vector.load %arg10[%c2_105, %c2_106, %c0_107] : memref<18x18x8xf32, #tpu.memory_space<vmem>>, vector<8x16x8xf32>
    %84 = vector.shape_cast %83 : vector<8x16x8xf32> to vector<128x8xf32>
    %85 = tpu.concatenate %68, %70, %72, %74, %76, %78, %80, %82, %84 in 1 : vector<128x8xf32>, vector<128x8xf32>, vector<128x8xf32>, vector<128x8xf32>, vector<128x8xf32>, vector<128x8xf32>, vector<128x8xf32>, vector<128x8xf32>, vector<128x8xf32> -> vector<128x72xf32>
    %86 = arith.truncf %85 : vector<128x72xf32> to vector<128x72xbf16>
    %cst_108 = arith.constant dense<0.000000e+00> : vector<128x8xf32>
    %87 = tpu.matmul %86, %65, %cst_108 {dimension_numbers = #tpu.dot_dimension_numbers<[1], [0], [0], [1], [0, 0, 1, 1], [], []>} : vector<128x72xbf16>, vector<72x8xbf16>, vector<128x8xf32> -> vector<128x8xf32>
    %88 = vector.broadcast %66 : vector<1x8xf32> to vector<128x8xf32>
    %89 = arith.addf %87, %88 : vector<128x8xf32>
    %90 = vector.shape_cast %89 : vector<128x8xf32> to vector<8x16x8xf32>
    %c0_109 = arith.constant 0 : index
    %c0_110 = arith.constant 0 : index
    %c0_111 = arith.constant 0 : index
    %91 = vector.load %arg11[%c0_109, %c0_110, %c0_111] : memref<16x16x8xf32, #tpu.memory_space<vmem>>, vector<8x16x8xf32>
    tpu.vector_store %arg11[%c0_109, %c0_110, %c0_111], %90 {strides = array<i32>} : memref<16x16x8xf32, #tpu.memory_space<vmem>>, vector<8x16x8xf32>,
    %c8_112 = arith.constant 8 : index
    %c0_113 = arith.constant 0 : index
    %c0_114 = arith.constant 0 : index
    %92 = vector.load %arg10[%c8_112, %c0_113, %c0_114] : memref<18x18x8xf32, #tpu.memory_space<vmem>>, vector<8x16x8xf32>
    %93 = vector.shape_cast %92 : vector<8x16x8xf32> to vector<128x8xf32>
    %c8_115 = arith.constant 8 : index
    %c1_116 = arith.constant 1 : index
    %c0_117 = arith.constant 0 : index
    %94 = vector.load %arg10[%c8_115, %c1_116, %c0_117] : memref<18x18x8xf32, #tpu.memory_space<vmem>>, vector<8x16x8xf32>
    %95 = vector.shape_cast %94 : vector<8x16x8xf32> to vector<128x8xf32>
    %c8_118 = arith.constant 8 : index
    %c2_119 = arith.constant 2 : index
    %c0_120 = arith.constant 0 : index
    %96 = vector.load %arg10[%c8_118, %c2_119, %c0_120] : memref<18x18x8xf32, #tpu.memory_space<vmem>>, vector<8x16x8xf32>
    %97 = vector.shape_cast %96 : vector<8x16x8xf32> to vector<128x8xf32>
    %c9_121 = arith.constant 9 : index
    %c0_122 = arith.constant 0 : index
    %c0_123 = arith.constant 0 : index
    %98 = vector.load %arg10[%c9_121, %c0_122, %c0_123] : memref<18x18x8xf32, #tpu.memory_space<vmem>>, vector<8x16x8xf32>
    %99 = vector.shape_cast %98 : vector<8x16x8xf32> to vector<128x8xf32>
    %c9_124 = arith.constant 9 : index
    %c1_125 = arith.constant 1 : index
    %c0_126 = arith.constant 0 : index
    %100 = vector.load %arg10[%c9_124, %c1_125, %c0_126] : memref<18x18x8xf32, #tpu.memory_space<vmem>>, vector<8x16x8xf32>
    %101 = vector.shape_cast %100 : vector<8x16x8xf32> to vector<128x8xf32>
    %c9_127 = arith.constant 9 : index
    %c2_128 = arith.constant 2 : index
    %c0_129 = arith.constant 0 : index
    %102 = vector.load %arg10[%c9_127, %c2_128, %c0_129] : memref<18x18x8xf32, #tpu.memory_space<vmem>>, vector<8x16x8xf32>
    %103 = vector.shape_cast %102 : vector<8x16x8xf32> to vector<128x8xf32>
    %c10_130 = arith.constant 10 : index
    %c0_131 = arith.constant 0 : index
    %c0_132 = arith.constant 0 : index
    %104 = vector.load %arg10[%c10_130, %c0_131, %c0_132] : memref<18x18x8xf32, #tpu.memory_space<vmem>>, vector<8x16x8xf32>
    %105 = vector.shape_cast %104 : vector<8x16x8xf32> to vector<128x8xf32>
    %c10_133 = arith.constant 10 : index
    %c1_134 = arith.constant 1 : index
    %c0_135 = arith.constant 0 : index
    %106 = vector.load %arg10[%c10_133, %c1_134, %c0_135] : memref<18x18x8xf32, #tpu.memory_space<vmem>>, vector<8x16x8xf32>
    %107 = vector.shape_cast %106 : vector<8x16x8xf32> to vector<128x8xf32>
    %c10_136 = arith.constant 10 : index
    %c2_137 = arith.constant 2 : index
    %c0_138 = arith.constant 0 : index
    %108 = vector.load %arg10[%c10_136, %c2_137, %c0_138] : memref<18x18x8xf32, #tpu.memory_space<vmem>>, vector<8x16x8xf32>
    %109 = vector.shape_cast %108 : vector<8x16x8xf32> to vector<128x8xf32>
    %110 = tpu.concatenate %93, %95, %97, %99, %101, %103, %105, %107, %109 in 1 : vector<128x8xf32>, vector<128x8xf32>, vector<128x8xf32>, vector<128x8xf32>, vector<128x8xf32>, vector<128x8xf32>, vector<128x8xf32>, vector<128x8xf32>, vector<128x8xf32> -> vector<128x72xf32>
    %111 = arith.truncf %110 : vector<128x72xf32> to vector<128x72xbf16>
    %cst_139 = arith.constant dense<0.000000e+00> : vector<128x8xf32>
    %112 = tpu.matmul %111, %65, %cst_139 {dimension_numbers = #tpu.dot_dimension_numbers<[1], [0], [0], [1], [0, 0, 1, 1], [], []>} : vector<128x72xbf16>, vector<72x8xbf16>, vector<128x8xf32> -> vector<128x8xf32>
    %113 = vector.broadcast %66 : vector<1x8xf32> to vector<128x8xf32>
    %114 = arith.addf %112, %113 : vector<128x8xf32>
    %115 = vector.shape_cast %114 : vector<128x8xf32> to vector<8x16x8xf32>
    %c8_140 = arith.constant 8 : index
    %c0_141 = arith.constant 0 : index
    %c0_142 = arith.constant 0 : index
    %116 = vector.load %arg11[%c8_140, %c0_141, %c0_142] : memref<16x16x8xf32, #tpu.memory_space<vmem>>, vector<8x16x8xf32>
    tpu.vector_store %arg11[%c8_140, %c0_141, %c0_142], %115 {strides = array<i32>} : memref<16x16x8xf32, #tpu.memory_space<vmem>>, vector<8x16x8xf32>,
    %c0_143 = arith.constant 0 : index
    %c0_144 = arith.constant 0 : index
    %c0_145 = arith.constant 0 : index
    %117 = vector.load %arg11[%c0_143, %c0_144, %c0_145] : memref<16x16x8xf32, #tpu.memory_space<vmem>>, vector<16x16x8xf32>
    %118 = vector.shape_cast %117 : vector<16x16x8xf32> to vector<8x2x8x2x8xf32>
    %119 = vector.extract_strided_slice %118 {offsets = [0, 0, 0, 0, 0], sizes = [8, 1, 8, 1, 8], strides = [1, 1, 1, 1, 1]} : vector<8x2x8x2x8xf32> to vector<8x1x8x1x8xf32>
    %120 = vector.shape_cast %119 : vector<8x1x8x1x8xf32> to vector<8x8x8xf32>
    %121 = vector.extract_strided_slice %118 {offsets = [0, 0, 0, 1, 0], sizes = [8, 1, 8, 1, 8], strides = [1, 1, 1, 1, 1]} : vector<8x2x8x2x8xf32> to vector<8x1x8x1x8xf32>
    %122 = vector.shape_cast %121 : vector<8x1x8x1x8xf32> to vector<8x8x8xf32>
    %123 = arith.addf %120, %122 : vector<8x8x8xf32>
    %124 = vector.extract_strided_slice %118 {offsets = [0, 1, 0, 0, 0], sizes = [8, 1, 8, 1, 8], strides = [1, 1, 1, 1, 1]} : vector<8x2x8x2x8xf32> to vector<8x1x8x1x8xf32>
    %125 = vector.shape_cast %124 : vector<8x1x8x1x8xf32> to vector<8x8x8xf32>
    %126 = arith.addf %123, %125 : vector<8x8x8xf32>
    %127 = vector.extract_strided_slice %118 {offsets = [0, 1, 0, 1, 0], sizes = [8, 1, 8, 1, 8], strides = [1, 1, 1, 1, 1]} : vector<8x2x8x2x8xf32> to vector<8x1x8x1x8xf32>
    %128 = vector.shape_cast %127 : vector<8x1x8x1x8xf32> to vector<8x8x8xf32>
    %129 = arith.addf %126, %128 : vector<8x8x8xf32>
    %cst_146 = arith.constant 2.500000e-01 : f32
    %130 = vector.broadcast %cst_146 : f32 to vector<8x8x8xf32>
    %131 = arith.mulf %130, %129 : vector<8x8x8xf32>
    %132 = vector.shape_cast %1 : vector<16x16x4xf32> to vector<8x2x8x2x4xf32>
    %133 = vector.extract_strided_slice %132 {offsets = [0, 0, 0, 0, 0], sizes = [8, 1, 8, 1, 4], strides = [1, 1, 1, 1, 1]} : vector<8x2x8x2x4xf32> to vector<8x1x8x1x4xf32>
    %134 = vector.shape_cast %133 : vector<8x1x8x1x4xf32> to vector<8x8x4xf32>
    %135 = vector.extract_strided_slice %132 {offsets = [0, 0, 0, 1, 0], sizes = [8, 1, 8, 1, 4], strides = [1, 1, 1, 1, 1]} : vector<8x2x8x2x4xf32> to vector<8x1x8x1x4xf32>
    %136 = vector.shape_cast %135 : vector<8x1x8x1x4xf32> to vector<8x8x4xf32>
    %137 = arith.addf %134, %136 : vector<8x8x4xf32>
    %138 = vector.extract_strided_slice %132 {offsets = [0, 1, 0, 0, 0], sizes = [8, 1, 8, 1, 4], strides = [1, 1, 1, 1, 1]} : vector<8x2x8x2x4xf32> to vector<8x1x8x1x4xf32>
    %139 = vector.shape_cast %138 : vector<8x1x8x1x4xf32> to vector<8x8x4xf32>
    %140 = arith.addf %137, %139 : vector<8x8x4xf32>
    %141 = vector.extract_strided_slice %132 {offsets = [0, 1, 0, 1, 0], sizes = [8, 1, 8, 1, 4], strides = [1, 1, 1, 1, 1]} : vector<8x2x8x2x4xf32> to vector<8x1x8x1x4xf32>
    %142 = vector.shape_cast %141 : vector<8x1x8x1x4xf32> to vector<8x8x4xf32>
    %143 = arith.addf %140, %142 : vector<8x8x4xf32>
    %cst_147 = arith.constant 2.500000e-01 : f32
    %144 = vector.broadcast %cst_147 : f32 to vector<8x8x4xf32>
    %145 = arith.mulf %144, %143 : vector<8x8x4xf32>
    %146 = vector.shape_cast %145 : vector<8x8x4xf32> to vector<64x4xf32>
    %147 = arith.truncf %146 : vector<64x4xf32> to vector<64x4xbf16>
    %c0_148 = arith.constant 0 : index
    %c0_149 = arith.constant 0 : index
    %148 = vector.load %arg6[%c0_148, %c0_149] : memref<4x8xbf16, #tpu.memory_space<vmem>>, vector<4x8xbf16>
    %cst_150 = arith.constant dense<0.000000e+00> : vector<64x8xf32>
    %149 = tpu.matmul %147, %148, %cst_150 {dimension_numbers = #tpu.dot_dimension_numbers<[1], [0], [0], [1], [0, 0, 1, 1], [], []>} : vector<64x4xbf16>, vector<4x8xbf16>, vector<64x8xf32> -> vector<64x8xf32>
    %c0_151 = arith.constant 0 : index
    %c0_152 = arith.constant 0 : index
    %150 = vector.load %arg7[%c0_151, %c0_152] : memref<1x8xf32, #tpu.memory_space<vmem>>, vector<1x8xf32>
    %151 = vector.broadcast %150 : vector<1x8xf32> to vector<64x8xf32>
    %152 = arith.addf %149, %151 : vector<64x8xf32>
    %153 = vector.shape_cast %152 : vector<64x8xf32> to vector<8x8x8xf32>
    %154 = arith.addf %131, %153 : vector<8x8x8xf32>
    %c0_153 = arith.constant 0 : index
    %c0_154 = arith.constant 0 : index
    %c0_155 = arith.constant 0 : index
    %c0_156 = arith.constant 0 : index
    %155 = vector.load %arg8[%c0_153, %c0_154, %c0_155, %c0_156] : memref<1x8x8x8xf32, #tpu.memory_space<vmem>>, vector<1x8x8x8xf32>
    %156 = vector.shape_cast %155 : vector<1x8x8x8xf32> to vector<8x8x8xf32>
    %157 = vector.shape_cast %154 : vector<8x8x8xf32> to vector<1x8x8x8xf32>
    tpu.vector_store %arg8[%c0_153, %c0_154, %c0_155, %c0_156], %157 {strides = array<i32>} : memref<1x8x8x8xf32, #tpu.memory_space<vmem>>, vector<1x8x8x8xf32>,
    return
  }
  func.func @transform_0(%arg0: i32) -> (i32, i32, i32, i32) {
    %c0_i32 = arith.constant 0 : i32
    %c0_i32_0 = arith.constant 0 : i32
    %c0_i32_1 = arith.constant 0 : i32
    %c0_i32_2 = arith.constant 0 : i32
    return %arg0, %c0_i32, %c0_i32_0, %c0_i32_1 : i32, i32, i32, i32
  }
  func.func @transform_1(%arg0: i32) -> (i32, i32) {
    %c0_i32 = arith.constant 0 : i32
    %c0_i32_0 = arith.constant 0 : i32
    %c0_i32_1 = arith.constant 0 : i32
    return %c0_i32, %c0_i32_0 : i32, i32
  }
  func.func @transform_2(%arg0: i32) -> (i32, i32) {
    %c0_i32 = arith.constant 0 : i32
    %c0_i32_0 = arith.constant 0 : i32
    %c0_i32_1 = arith.constant 0 : i32
    return %c0_i32, %c0_i32_0 : i32, i32
  }
  func.func @transform_3(%arg0: i32) -> (i32, i32) {
    %c0_i32 = arith.constant 0 : i32
    %c0_i32_0 = arith.constant 0 : i32
    %c0_i32_1 = arith.constant 0 : i32
    return %c0_i32, %c0_i32_0 : i32, i32
  }
  func.func @transform_4(%arg0: i32) -> (i32, i32) {
    %c0_i32 = arith.constant 0 : i32
    %c0_i32_0 = arith.constant 0 : i32
    %c0_i32_1 = arith.constant 0 : i32
    return %c0_i32, %c0_i32_0 : i32, i32
  }
  func.func @transform_5(%arg0: i32) -> (i32, i32) {
    %c0_i32 = arith.constant 0 : i32
    %c0_i32_0 = arith.constant 0 : i32
    %c0_i32_1 = arith.constant 0 : i32
    return %c0_i32, %c0_i32_0 : i32, i32
  }
  func.func @transform_6(%arg0: i32) -> (i32, i32) {
    %c0_i32 = arith.constant 0 : i32
    %c0_i32_0 = arith.constant 0 : i32
    %c0_i32_1 = arith.constant 0 : i32
    return %c0_i32, %c0_i32_0 : i32, i32
  }
  func.func @transform_7(%arg0: i32) -> (i32, i32, i32, i32) {
    %c0_i32 = arith.constant 0 : i32
    %c0_i32_0 = arith.constant 0 : i32
    %c0_i32_1 = arith.constant 0 : i32
    %c0_i32_2 = arith.constant 0 : i32
    return %arg0, %c0_i32, %c0_i32_0, %c0_i32_1 : i32, i32, i32, i32
  }
}

</mosaic_0001>

<llo_original>
// kernel: d_block.1
$region0: #{d_block.1}
  #allocation0 [shape = 'u32[]', space=smem, size = 0x4, offset = 0x4, fixed_abs, tag = 'smem constant byte address 0x4 - core index']
  #allocation1 [shape = 'u32[144,128]{1,0:T(1,128)}', space=vmem, size = 0x12000, scoped, tag = 'internal scratch']
  #allocation2 [shape = 'f32[18,18,4]{2,1,0:T(8,128)}', space=vmem, size = 0x36000, scoped, tag = 'scratch operand']
  #allocation3 [shape = 'f32[18,18,8]{2,1,0:T(8,128)}', space=vmem, size = 0x36000, scoped, tag = 'scratch operand']
  #allocation4 [shape = 'f32[16,16,8]{2,1,0:T(8,128)}', space=vmem, size = 0x20000, scoped, tag = 'scratch operand']
  %s0 = inlined_call_operand.vmem [shape: f32[2,16,16,4], index: 0, kind: input, shape index: {}]
  %s1 = inlined_call_operand.vmem [shape: bf16[36,8], index: 1, kind: input, shape index: {}]
  %s2 = inlined_call_operand.vmem [shape: f32[1,8], index: 2, kind: input, shape index: {}]
  %s3 = inlined_call_operand.vmem [shape: bf16[72,8], index: 3, kind: input, shape index: {}]
  %s4 = inlined_call_operand.vmem [shape: f32[1,8], index: 4, kind: input, shape index: {}]
  %s5 = inlined_call_operand.vmem [shape: bf16[4,8], index: 5, kind: input, shape index: {}]
  %s6 = inlined_call_operand.vmem [shape: f32[1,8], index: 6, kind: input, shape index: {}]
  %s7 = inlined_call_operand.vmem [shape: f32[2,8,8,8], index: 7, kind: output, shape index: {}]
  %s8 = sld [smem:[#allocation0]]
  $region61: #{d_block.1} parent=0
    _
  %s10 = ssub.s32 1, %s8
  %s11 = scalar_select 0, %s10, %s8
  loop: start=0, step=1, limit=4
  $region2: #{d_block.1} parent=0 // loop_pre_header
    _
  $region3: #{d_block.1} parent=0 // loop_header
    %s13 = sphi 0, %s17
    %p14 = scmp.ge.s32.totalorder %s13, 4
    %s23 = sphi 0, %s25
    %s26 = sphi 0, %s23
    %s27 = sphi 0, %s26
    %s43 = sphi 0, %s27
    %s47 = sphi 0, %s47
    %s49 = sphi 0, %s47
    %s50 = sphi 0, %s49
    %s64 = sphi 0, %s50
    %s68 = sphi 0, %s68
    %s70 = sphi 0, %s68
    %s71 = sphi 0, %s70
    %s85 = sphi 0, %s71
    %s89 = sphi 0, %s89
    %s91 = sphi 0, %s89
    %s92 = sphi 0, %s91
    %s106 = sphi 0, %s92
    %s110 = sphi 0, %s110
    %s112 = sphi 0, %s110
    %s113 = sphi 0, %s112
    %s127 = sphi 0, %s113
    %s131 = sphi 0, %s131
    %s133 = sphi 0, %s131
    %s134 = sphi 0, %s133
    %s148 = sphi 0, %s134
    %s152 = sphi 0, %s152
    %s154 = sphi 0, %s152
    %s155 = sphi 0, %s154
    %s169 = sphi 0, %s155
    %s175 = sphi 0, %s177
    %s178 = sphi 0, %s175
    %s179 = sphi 0, %s178
    %s195 = sphi 0, %s179
  $region4: #{d_block.1} parent=0 // loop_header_branch
    %16 = sbr.rel (%p14) target = $region8
  $region5: #{d_block.1} parent=0 // loop_body
    %s18 = ssub.s32 %s13, 1
    %s19 = ssub.s32 %s13, 2
    %s20 = sadd.s32 %s13, 1
    %s21 = ssub.s32 %s13, %s20
    %p22 = scmp.eq.s32.totalorder %s21, 0
    %s24 = sadd.s32 %s23, 1
    %s25 = scalar_select %p22, %s23, %s24
    %p28 = pneg %p22
    %p29 = scmp.eq.s32.totalorder %s13, 1
    %p30 = por %p28, %p29
    %p31 = scmp.ne.s32.totalorder %s23, %s26
    %p32 = scmp.eq.s32.totalorder %s13, 0
    %p33 = por %p31, %p32
    %p34 = scmp.ne.s32.totalorder %s23, %s26
    %p35 = scmp.eq.s32.totalorder %s18, 1
    %p36 = por %p34, %p35
    %p37 = scmp.ne.s32.totalorder %s26, %s27
    %p38 = scmp.eq.s32.totalorder %s18, 0
    %p39 = por %p37, %p38
    %p40 = scmp.ne.s32.totalorder %s26, %s27
    %p41 = scmp.eq.s32.totalorder %s19, 1
    %p42 = por %p40, %p41
    %p44 = scmp.ne.s32.totalorder %s27, %s43
    %p45 = scmp.eq.s32.totalorder %s19, 0
    %p46 = por %p44, %p45
    %s48 = sadd.s32 %s47, 1
    %p51 = scmp.eq.s32.totalorder %s13, 1
    %p52 = scmp.ne.s32.totalorder %s47, %s49
    %p53 = scmp.eq.s32.totalorder %s13, 0
    %p54 = por %p52, %p53
    %p55 = scmp.ne.s32.totalorder %s47, %s49
    %p56 = scmp.eq.s32.totalorder %s18, 1
    %p57 = por %p55, %p56
    %p58 = scmp.ne.s32.totalorder %s49, %s50
    %p59 = scmp.eq.s32.totalorder %s18, 0
    %p60 = por %p58, %p59
    %p61 = scmp.ne.s32.totalorder %s49, %s50
    %p62 = scmp.eq.s32.totalorder %s19, 1
    %p63 = por %p61, %p62
    %p65 = scmp.ne.s32.totalorder %s50, %s64
    %p66 = scmp.eq.s32.totalorder %s19, 0
    %p67 = por %p65, %p66
    %s69 = sadd.s32 %s68, 1
    %p72 = scmp.eq.s32.totalorder %s13, 1
    %p73 = scmp.ne.s32.totalorder %s68, %s70
    %p74 = scmp.eq.s32.totalorder %s13, 0
    %p75 = por %p73, %p74
    %p76 = scmp.ne.s32.totalorder %s68, %s70
    %p77 = scmp.eq.s32.totalorder %s18, 1
    %p78 = por %p76, %p77
    %p79 = scmp.ne.s32.totalorder %s70, %s71
    %p80 = scmp.eq.s32.totalorder %s18, 0
    %p81 = por %p79, %p80
    %p82 = scmp.ne.s32.totalorder %s70, %s71
    %p83 = scmp.eq.s32.totalorder %s19, 1
    %p84 = por %p82, %p83
    %p86 = scmp.ne.s32.totalorder %s71, %s85
    %p87 = scmp.eq.s32.totalorder %s19, 0
    %p88 = por %p86, %p87
    %s90 = sadd.s32 %s89, 1
    %p93 = scmp.eq.s32.totalorder %s13, 1
    %p94 = scmp.ne.s32.totalorder %s89, %s91
    %p95 = scmp.eq.s32.totalorder %s13, 0
    %p96 = por %p94, %p95
    %p97 = scmp.ne.s32.totalorder %s89, %s91
    %p98 = scmp.eq.s32.totalorder %s18, 1
    %p99 = por %p97, %p98
    %p100 = scmp.ne.s32.totalorder %s91, %s92
    %p101 = scmp.eq.s32.totalorder %s18, 0
    %p102 = por %p100, %p101
    %p103 = scmp.ne.s32.totalorder %s91, %s92
    %p104 = scmp.eq.s32.totalorder %s19, 1
    %p105 = por %p103, %p104
    %p107 = scmp.ne.s32.totalorder %s92, %s106
    %p108 = scmp.eq.s32.totalorder %s19, 0
    %p109 = por %p107, %p108
    %s111 = sadd.s32 %s110, 1
    %p114 = scmp.eq.s32.totalorder %s13, 1
    %p115 = scmp.ne.s32.totalorder %s110, %s112
    %p116 = scmp.eq.s32.totalorder %s13, 0
    %p117 = por %p115, %p116
    %p118 = scmp.ne.s32.totalorder %s110, %s112
    %p119 = scmp.eq.s32.totalorder %s18, 1
    %p120 = por %p118, %p119
    %p121 = scmp.ne.s32.totalorder %s112, %s113
    %p122 = scmp.eq.s32.totalorder %s18, 0
    %p123 = por %p121, %p122
    %p124 = scmp.ne.s32.totalorder %s112, %s113
    %p125 = scmp.eq.s32.totalorder %s19, 1
    %p126 = por %p124, %p125
    %p128 = scmp.ne.s32.totalorder %s113, %s127
    %p129 = scmp.eq.s32.totalorder %s19, 0
    %p130 = por %p128, %p129
    %s132 = sadd.s32 %s131, 1
    %p135 = scmp.eq.s32.totalorder %s13, 1
    %p136 = scmp.ne.s32.totalorder %s131, %s133
    %p137 = scmp.eq.s32.totalorder %s13, 0
    %p138 = por %p136, %p137
    %p139 = scmp.ne.s32.totalorder %s131, %s133
    %p140 = scmp.eq.s32.totalorder %s18, 1
    %p141 = por %p139, %p140
    %p142 = scmp.ne.s32.totalorder %s133, %s134
    %p143 = scmp.eq.s32.totalorder %s18, 0
    %p144 = por %p142, %p143
    %p145 = scmp.ne.s32.totalorder %s133, %s134
    %p146 = scmp.eq.s32.totalorder %s19, 1
    %p147 = por %p145, %p146
    %p149 = scmp.ne.s32.totalorder %s134, %s148
    %p150 = scmp.eq.s32.totalorder %s19, 0
    %p151 = por %p149, %p150
    %s153 = sadd.s32 %s152, 1
    %p156 = scmp.eq.s32.totalorder %s13, 1
    %p157 = scmp.ne.s32.totalorder %s152, %s154
    %p158 = scmp.eq.s32.totalorder %s13, 0
    %p159 = por %p157, %p158
    %p160 = scmp.ne.s32.totalorder %s152, %s154
    %p161 = scmp.eq.s32.totalorder %s18, 1
    %p162 = por %p160, %p161
    %p163 = scmp.ne.s32.totalorder %s154, %s155
    %p164 = scmp.eq.s32.totalorder %s18, 0
    %p165 = por %p163, %p164
    %p166 = scmp.ne.s32.totalorder %s154, %s155
    %p167 = scmp.eq.s32.totalorder %s19, 1
    %p168 = por %p166, %p167
    %p170 = scmp.ne.s32.totalorder %s155, %s169
    %p171 = scmp.eq.s32.totalorder %s19, 0
    %p172 = por %p170, %p171
    %s173 = ssub.s32 %s13, %s20
    %p174 = scmp.eq.s32.totalorder %s173, 0
    %s176 = sadd.s32 %s175, 1
    %s177 = scalar_select %p174, %s175, %s176
    %p180 = pneg %p174
    %p181 = scmp.eq.s32.totalorder %s13, 1
    %p182 = por %p180, %p181
    %p183 = scmp.ne.s32.totalorder %s175, %s178
    %p184 = scmp.eq.s32.totalorder %s13, 0
    %p185 = por %p183, %p184
    %p186 = scmp.ne.s32.totalorder %s175, %s178
    %p187 = scmp.eq.s32.totalorder %s18, 1
    %p188 = por %p186, %p187
    %p189 = scmp.ne.s32.totalorder %s178, %s179
    %p190 = scmp.eq.s32.totalorder %s18, 0
    %p191 = por %p189, %p190
    %p192 = scmp.ne.s32.totalorder %s178, %s179
    %p193 = scmp.eq.s32.totalorder %s19, 1
    %p194 = por %p192, %p193
    %p196 = scmp.ne.s32.totalorder %s179, %s195
    %p197 = scmp.eq.s32.totalorder %s19, 0
    %p198 = por %p196, %p197
    %p199 = scmp.le.s32.totalorder 1, %s13
    %p200 = scmp.lt.s32.totalorder %s13, 3
    %p201 = pnand %p199, %p200
    %p202 = pneg %p201
    // Predicated region
    $region9: #{d_block.1} parent=5 // pred_check
      _
    $region10: #{d_block.1} parent=5 // pred_check_branch
      %204 = sbr.rel (%p201) target = $region12
    $region11: #{d_block.1} parent=5 // pred_region
      %s205 = ssub.s32 %s13, 1
      // Predicated region
      $region13: #{d_block.1} parent=11 // pred_check
        %p206 = pneg %p60
      $region14: #{d_block.1} parent=11 // pred_check_branch
        %208 = sbr.rel (%p206) target = $region16
      $region15: #{d_block.1} parent=11 // pred_region
        _
      $region16: #{d_block.1} parent=11 // pred_fallthru
        _
      // Predicated region
      $region17: #{d_block.1} parent=11 // pred_check
        %p209 = pneg %p81
      $region18: #{d_block.1} parent=11 // pred_check_branch
        %211 = sbr.rel (%p209) target = $region20
      $region19: #{d_block.1} parent=11 // pred_region
        _
      $region20: #{d_block.1} parent=11 // pred_fallthru
        _
      // Predicated region
      $region21: #{d_block.1} parent=11 // pred_check
        %p212 = pneg %p102
      $region22: #{d_block.1} parent=11 // pred_check_branch
        %214 = sbr.rel (%p212) target = $region24
      $region23: #{d_block.1} parent=11 // pred_region
        _
      $region24: #{d_block.1} parent=11 // pred_fallthru
        _
      // Predicated region
      $region25: #{d_block.1} parent=11 // pred_check
        %p215 = pneg %p123
      $region26: #{d_block.1} parent=11 // pred_check_branch
        %217 = sbr.rel (%p215) target = $region28
      $region27: #{d_block.1} parent=11 // pred_region
        _
      $region28: #{d_block.1} parent=11 // pred_fallthru
        _
      // Predicated region
      $region29: #{d_block.1} parent=11 // pred_check
        %p218 = pneg %p144
      $region30: #{d_block.1} parent=11 // pred_check_branch
        %220 = sbr.rel (%p218) target = $region32
      $region31: #{d_block.1} parent=11 // pred_region
        _
      $region32: #{d_block.1} parent=11 // pred_fallthru
        _
      // Predicated region
      $region33: #{d_block.1} parent=11 // pred_check
        %p221 = pneg %p165
      $region34: #{d_block.1} parent=11 // pred_check_branch
        %223 = sbr.rel (%p221) target = $region36
      $region35: #{d_block.1} parent=11 // pred_region
        _
      $region36: #{d_block.1} parent=11 // pred_fallthru
        _
    $region12: #{d_block.1} parent=5 // pred_fallthru
      _
    %p224 = scmp.lt.s32.totalorder %s13, 2
    // Predicated region
    $region37: #{d_block.1} parent=5 // pred_check
      %p225 = pneg %p224
    $region38: #{d_block.1} parent=5 // pred_check_branch
      %227 = sbr.rel (%p225) target = $region40
    $region39: #{d_block.1} parent=5 // pred_region
      // Predicated region
      $region41: #{d_block.1} parent=39 // pred_check
        %p228 = pneg %p33
      $region42: #{d_block.1} parent=39 // pred_check_branch
        %230 = sbr.rel (%p228) target = $region44
      $region43: #{d_block.1} parent=39 // pred_region
        %p231 = scmp.lt.s32.totalorder %s13, 1
        %s232 = scalar_select %p231, %s13, 1
        %s233 = smul.addr %s232, 32
        %s234 = smul.addr %s233, 8
        %s235 = scalar_lea.vmem %s0, %s234
      $region44: #{d_block.1} parent=39 // pred_fallthru
        _
    $region40: #{d_block.1} parent=5 // pred_fallthru
      _
    %p236 = scmp.le.s32.totalorder 1, %s13
    %p237 = scmp.lt.s32.totalorder %s13, 3
    %p238 = pnand %p236, %p237
    %p239 = pneg %p238
    // Predicated region
    $region45: #{d_block.1} parent=5 // pred_check
      _
    $region46: #{d_block.1} parent=5 // pred_check_branch
      %241 = sbr.rel (%p238) target = $region48
    $region47: #{d_block.1} parent=5 // pred_region
      %s242 = ssub.s32 %s13, 1
      %p243 = scmp.lt.s32.totalorder %s18, 1
      %s244 = scalar_select %p243, %s18, 1
      %s245 = smul.addr %s244, 32
      %s246 = smul.addr %s245, 8
      %s247 = scalar_lea.vmem %s0, %s246
      %p248 = pneg %p39
      %p249 = pneg %p36
      %p250 = pneg %p60
      %p251 = pneg %p57
      %p252 = pneg %p81
      %p253 = pneg %p78
      %p254 = pneg %p102
      %p255 = pneg %p99
      %p256 = pneg %p123
      %p257 = pneg %p120
      %p258 = pneg %p144
      %p259 = pneg %p141
      %p260 = pneg %p165
      %p261 = pneg %p162
      %p262 = pneg %p191
      %p263 = pneg %p188
      %p264 = scmp.lt.s32.totalorder %s18, 1
      %s265 = scalar_select %p264, %s18, 1
      %s266 = smul.addr %s265, 8
      %s267 = smul.addr %s266, 8
      %s268 = scalar_lea.vmem %s7, %s267
      %p269 = scmp.lt.s32.totalorder %s18, 1
      %s270 = scalar_select %p269, %s18, 1
      %s271 = smul.addr %s270, 32
      %s272 = smul.addr %s271, 8
      %s273 = scalar_lea.vmem %s0, %s272
      %p274 = scmp.lt.s32.totalorder %s18, 1
      %s275 = scalar_select %p274, %s18, 1
      %s276 = smul.addr %s275, 8
      %s277 = smul.addr %s276, 8
      %s278 = scalar_lea.vmem %s7, %s277
      %v280 = vld [vmem:[%s273] sm:$0xff]
      %v281 = vld [vmem:[%s273 + $0x8] sm:$0xff]
      %v282 = vld [vmem:[%s273 + $0x10] sm:$0xff]
      %v283 = vld [vmem:[%s273 + $0x18] sm:$0xff]
      %v284 = vld [vmem:[%s273 + $0x20] sm:$0xff]
      %v285 = vld [vmem:[%s273 + $0x28] sm:$0xff]
      %v286 = vld [vmem:[%s273 + $0x30] sm:$0xff]
      %v287 = vld [vmem:[%s273 + $0x38] sm:$0xff]
      %v288 = vld [vmem:[%s273 + $0x40] sm:$0xff]
      %v289 = vld [vmem:[%s273 + $0x48] sm:$0xff]
      %v290 = vld [vmem:[%s273 + $0x50] sm:$0xff]
      %v291 = vld [vmem:[%s273 + $0x58] sm:$0xff]
      %v292 = vld [vmem:[%s273 + $0x60] sm:$0xff]
      %v293 = vld [vmem:[%s273 + $0x68] sm:$0xff]
      %v294 = vld [vmem:[%s273 + $0x70] sm:$0xff]
      %v295 = vld [vmem:[%s273 + $0x78] sm:$0xff]
      %v296 = vld [vmem:[%s273 + $0x80] sm:$0xff]
      %v297 = vld [vmem:[%s273 + $0x88] sm:$0xff]
      %v298 = vld [vmem:[%s273 + $0x90] sm:$0xff]
      %v299 = vld [vmem:[%s273 + $0x98] sm:$0xff]
      %v300 = vld [vmem:[%s273 + $0xa0] sm:$0xff]
      %v301 = vld [vmem:[%s273 + $0xa8] sm:$0xff]
      %v302 = vld [vmem:[%s273 + $0xb0] sm:$0xff]
      %v303 = vld [vmem:[%s273 + $0xb8] sm:$0xff]
      %v304 = vld [vmem:[%s273 + $0xc0] sm:$0xff]
      %v305 = vld [vmem:[%s273 + $0xc8] sm:$0xff]
      %v306 = vld [vmem:[%s273 + $0xd0] sm:$0xff]
      %v307 = vld [vmem:[%s273 + $0xd8] sm:$0xff]
      %v308 = vld [vmem:[%s273 + $0xe0] sm:$0xff]
      %v309 = vld [vmem:[%s273 + $0xe8] sm:$0xff]
      %v310 = vld [vmem:[%s273 + $0xf0] sm:$0xff]
      %v311 = vld [vmem:[%s273 + $0xf8] sm:$0xff]
      %vm312 = vcmask 31744
      %313 = vst.msk [vmem:[#allocation2] sm:$0xff] %vm312, 0.0
      %314 = vst.msk [vmem:[#allocation2 + $0x8] sm:$0xff] %vm312, 0.0
      %vm315 = vcmask 25600
      %316 = vst.msk [vmem:[#allocation2 + $0x10] sm:$0x3] %vm315, 0.0
      %317 = vst.msk [vmem:[#allocation2 + $0x18] sm:$0xff] %vm312, 0.0
      %318 = vst.msk [vmem:[#allocation2 + $0x20] sm:$0xff] %vm312, 0.0
      %319 = vst.msk [vmem:[#allocation2 + $0x28] sm:$0x3] %vm315, 0.0
      %320 = vst.msk [vmem:[#allocation2 + $0x30] sm:$0xff] %vm312, 0.0
      %321 = vst.msk [vmem:[#allocation2 + $0x38] sm:$0xff] %vm312, 0.0
      %322 = vst.msk [vmem:[#allocation2 + $0x40] sm:$0x3] %vm315, 0.0
      %323 = vst.msk [vmem:[#allocation2 + $0x48] sm:$0xff] %vm312, 0.0
      %324 = vst.msk [vmem:[#allocation2 + $0x50] sm:$0xff] %vm312, 0.0
      %325 = vst.msk [vmem:[#allocation2 + $0x58] sm:$0x3] %vm315, 0.0
      %326 = vst.msk [vmem:[#allocation2 + $0x60] sm:$0xff] %vm312, 0.0
      %327 = vst.msk [vmem:[#allocation2 + $0x68] sm:$0xff] %vm312, 0.0
      %328 = vst.msk [vmem:[#allocation2 + $0x70] sm:$0x3] %vm315, 0.0
      %329 = vst.msk [vmem:[#allocation2 + $0x78] sm:$0xff] %vm312, 0.0
      %330 = vst.msk [vmem:[#allocation2 + $0x80] sm:$0xff] %vm312, 0.0
      %331 = vst.msk [vmem:[#allocation2 + $0x88] sm:$0x3] %vm315, 0.0
      %332 = vst.msk [vmem:[#allocation2 + $0x90] sm:$0xff] %vm312, 0.0
      %333 = vst.msk [vmem:[#allocation2 + $0x98] sm:$0xff] %vm312, 0.0
      %334 = vst.msk [vmem:[#allocation2 + $0xa0] sm:$0x3] %vm315, 0.0
      %335 = vst.msk [vmem:[#allocation2 + $0xa8] sm:$0xff] %vm312, 0.0
      %336 = vst.msk [vmem:[#allocation2 + $0xb0] sm:$0xff] %vm312, 0.0
      %337 = vst.msk [vmem:[#allocation2 + $0xb8] sm:$0x3] %vm315, 0.0
      %338 = vst.msk [vmem:[#allocation2 + $0xc0] sm:$0xff] %vm312, 0.0
      %339 = vst.msk [vmem:[#allocation2 + $0xc8] sm:$0xff] %vm312, 0.0
      %340 = vst.msk [vmem:[#allocation2 + $0xd0] sm:$0x3] %vm315, 0.0
      %341 = vst.msk [vmem:[#allocation2 + $0xd8] sm:$0xff] %vm312, 0.0
      %342 = vst.msk [vmem:[#allocation2 + $0xe0] sm:$0xff] %vm312, 0.0
      %343 = vst.msk [vmem:[#allocation2 + $0xe8] sm:$0x3] %vm315, 0.0
      %344 = vst.msk [vmem:[#allocation2 + $0xf0] sm:$0xff] %vm312, 0.0
      %345 = vst.msk [vmem:[#allocation2 + $0xf8] sm:$0xff] %vm312, 0.0
      %346 = vst.msk [vmem:[#allocation2 + $0x100] sm:$0x3] %vm315, 0.0
      %347 = vst.msk [vmem:[#allocation2 + $0x108] sm:$0xff] %vm312, 0.0
      %348 = vst.msk [vmem:[#allocation2 + $0x110] sm:$0xff] %vm312, 0.0
      %349 = vst.msk [vmem:[#allocation2 + $0x118] sm:$0x3] %vm315, 0.0
      %350 = vst.msk [vmem:[#allocation2 + $0x120] sm:$0xff] %vm312, 0.0
      %351 = vst.msk [vmem:[#allocation2 + $0x128] sm:$0xff] %vm312, 0.0
      %352 = vst.msk [vmem:[#allocation2 + $0x130] sm:$0x3] %vm315, 0.0
      %353 = vst.msk [vmem:[#allocation2 + $0x138] sm:$0xff] %vm312, 0.0
      %354 = vst.msk [vmem:[#allocation2 + $0x140] sm:$0xff] %vm312, 0.0
      %355 = vst.msk [vmem:[#allocation2 + $0x148] sm:$0x3] %vm315, 0.0
      %356 = vst.msk [vmem:[#allocation2 + $0x150] sm:$0xff] %vm312, 0.0
      %357 = vst.msk [vmem:[#allocation2 + $0x158] sm:$0xff] %vm312, 0.0
      %358 = vst.msk [vmem:[#allocation2 + $0x160] sm:$0x3] %vm315, 0.0
      %359 = vst.msk [vmem:[#allocation2 + $0x168] sm:$0xff] %vm312, 0.0
      %360 = vst.msk [vmem:[#allocation2 + $0x170] sm:$0xff] %vm312, 0.0
      %361 = vst.msk [vmem:[#allocation2 + $0x178] sm:$0x3] %vm315, 0.0
      %362 = vst.msk [vmem:[#allocation2 + $0x180] sm:$0xff] %vm312, 0.0
      %363 = vst.msk [vmem:[#allocation2 + $0x188] sm:$0xff] %vm312, 0.0
      %364 = vst.msk [vmem:[#allocation2 + $0x190] sm:$0x3] %vm315, 0.0
      %365 = vst.msk [vmem:[#allocation2 + $0x198] sm:$0xff] %vm312, 0.0
      %366 = vst.msk [vmem:[#allocation2 + $0x1a0] sm:$0xff] %vm312, 0.0
      %367 = vst.msk [vmem:[#allocation2 + $0x1a8] sm:$0x3] %vm315, 0.0
      %v368 = vmax.f32 %v280, 0.0
      %v369 = vmax.f32 %v281, 0.0
      %v370 = vmax.f32 %v282, 0.0
      %v371 = vmax.f32 %v283, 0.0
      %v372 = vmax.f32 %v284, 0.0
      %v373 = vmax.f32 %v285, 0.0
      %v374 = vmax.f32 %v286, 0.0
      %v375 = vmax.f32 %v287, 0.0
      %v376 = vmax.f32 %v288, 0.0
      %v377 = vmax.f32 %v289, 0.0
      %v378 = vmax.f32 %v290, 0.0
      %v379 = vmax.f32 %v291, 0.0
      %v380 = vmax.f32 %v292, 0.0
      %v381 = vmax.f32 %v293, 0.0
      %v382 = vmax.f32 %v294, 0.0
      %v383 = vmax.f32 %v295, 0.0
      %v384 = vmax.f32 %v296, 0.0
      %v385 = vmax.f32 %v297, 0.0
      %v386 = vmax.f32 %v298, 0.0
      %v387 = vmax.f32 %v299, 0.0
      %v388 = vmax.f32 %v300, 0.0
      %v389 = vmax.f32 %v301, 0.0
      %v390 = vmax.f32 %v302, 0.0
      %v391 = vmax.f32 %v303, 0.0
      %v392 = vmax.f32 %v304, 0.0
      %v393 = vmax.f32 %v305, 0.0
      %v394 = vmax.f32 %v306, 0.0
      %v395 = vmax.f32 %v307, 0.0
      %v396 = vmax.f32 %v308, 0.0
      %v397 = vmax.f32 %v309, 0.0
      %v398 = vmax.f32 %v310, 0.0
      %v399 = vmax.f32 %v311, 0.0
      %s400 = scalar_lea.vmem [#allocation2], 24
      %401 = vst.msk [vmem:[%s400 + $0x1] sm:$0xff] %vm312, %v368
      %402 = vst.msk [vmem:[%s400 + $0x9] sm:$0xff] %vm312, %v369
      %403 = vst.msk [vmem:[%s400 + $0x19] sm:$0xff] %vm312, %v370
      %404 = vst.msk [vmem:[%s400 + $0x21] sm:$0xff] %vm312, %v371
      %405 = vst.msk [vmem:[%s400 + $0x31] sm:$0xff] %vm312, %v372
      %406 = vst.msk [vmem:[%s400 + $0x39] sm:$0xff] %vm312, %v373
      %407 = vst.msk [vmem:[%s400 + $0x49] sm:$0xff] %vm312, %v374
      %408 = vst.msk [vmem:[%s400 + $0x51] sm:$0xff] %vm312, %v375
      %409 = vst.msk [vmem:[%s400 + $0x61] sm:$0xff] %vm312, %v376
      %410 = vst.msk [vmem:[%s400 + $0x69] sm:$0xff] %vm312, %v377
      %411 = vst.msk [vmem:[%s400 + $0x79] sm:$0xff] %vm312, %v378
      %412 = vst.msk [vmem:[%s400 + $0x81] sm:$0xff] %vm312, %v379
      %413 = vst.msk [vmem:[%s400 + $0x91] sm:$0xff] %vm312, %v380
      %414 = vst.msk [vmem:[%s400 + $0x99] sm:$0xff] %vm312, %v381
      %415 = vst.msk [vmem:[%s400 + $0xa9] sm:$0xff] %vm312, %v382
      %416 = vst.msk [vmem:[%s400 + $0xb1] sm:$0xff] %vm312, %v383
      %417 = vst.msk [vmem:[%s400 + $0xc1] sm:$0xff] %vm312, %v384
      %418 = vst.msk [vmem:[%s400 + $0xc9] sm:$0xff] %vm312, %v385
      %419 = vst.msk [vmem:[%s400 + $0xd9] sm:$0xff] %vm312, %v386
      %420 = vst.msk [vmem:[%s400 + $0xe1] sm:$0xff] %vm312, %v387
      %421 = vst.msk [vmem:[%s400 + $0xf1] sm:$0xff] %vm312, %v388
      %422 = vst.msk [vmem:[%s400 + $0xf9] sm:$0xff] %vm312, %v389
      %423 = vst.msk [vmem:[%s400 + $0x109] sm:$0xff] %vm312, %v390
      %424 = vst.msk [vmem:[%s400 + $0x111] sm:$0xff] %vm312, %v391
      %425 = vst.msk [vmem:[%s400 + $0x121] sm:$0xff] %vm312, %v392
      %426 = vst.msk [vmem:[%s400 + $0x129] sm:$0xff] %vm312, %v393
      %427 = vst.msk [vmem:[%s400 + $0x139] sm:$0xff] %vm312, %v394
      %428 = vst.msk [vmem:[%s400 + $0x141] sm:$0xff] %vm312, %v395
      %429 = vst.msk [vmem:[%s400 + $0x151] sm:$0xff] %vm312, %v396
      %430 = vst.msk [vmem:[%s400 + $0x159] sm:$0xff] %vm312, %v397
      %431 = vst.msk [vmem:[%s400 + $0x169] sm:$0xff] %vm312, %v398
      %432 = vst.msk [vmem:[%s400 + $0x171] sm:$0xff] %vm312, %v399
      %vm433 = vcmask 64512
      %434 = vst.msk [vmem:[#allocation3] sm:$0xff] %vm433, 0.0
      %435 = vst.msk [vmem:[#allocation3 + $0x8] sm:$0xff] %vm433, 0.0
      %vm436 = vcmask 58368
      %437 = vst.msk [vmem:[#allocation3 + $0x10] sm:$0x3] %vm436, 0.0
      %438 = vst.msk [vmem:[#allocation3 + $0x18] sm:$0xff] %vm433, 0.0
      %439 = vst.msk [vmem:[#allocation3 + $0x20] sm:$0xff] %vm433, 0.0
      %440 = vst.msk [vmem:[#allocation3 + $0x28] sm:$0x3] %vm436, 0.0
      %441 = vst.msk [vmem:[#allocation3 + $0x30] sm:$0xff] %vm433, 0.0
      %442 = vst.msk [vmem:[#allocation3 + $0x38] sm:$0xff] %vm433, 0.0
      %443 = vst.msk [vmem:[#allocation3 + $0x40] sm:$0x3] %vm436, 0.0
      %444 = vst.msk [vmem:[#allocation3 + $0x48] sm:$0xff] %vm433, 0.0
      %445 = vst.msk [vmem:[#allocation3 + $0x50] sm:$0xff] %vm433, 0.0
      %446 = vst.msk [vmem:[#allocation3 + $0x58] sm:$0x3] %vm436, 0.0
      %447 = vst.msk [vmem:[#allocation3 + $0x60] sm:$0xff] %vm433, 0.0
      %448 = vst.msk [vmem:[#allocation3 + $0x68] sm:$0xff] %vm433, 0.0
      %449 = vst.msk [vmem:[#allocation3 + $0x70] sm:$0x3] %vm436, 0.0
      %450 = vst.msk [vmem:[#allocation3 + $0x78] sm:$0xff] %vm433, 0.0
      %451 = vst.msk [vmem:[#allocation3 + $0x80] sm:$0xff] %vm433, 0.0
      %452 = vst.msk [vmem:[#allocation3 + $0x88] sm:$0x3] %vm436, 0.0
      %453 = vst.msk [vmem:[#allocation3 + $0x90] sm:$0xff] %vm433, 0.0
      %454 = vst.msk [vmem:[#allocation3 + $0x98] sm:$0xff] %vm433, 0.0
      %455 = vst.msk [vmem:[#allocation3 + $0xa0] sm:$0x3] %vm436, 0.0
      %456 = vst.msk [vmem:[#allocation3 + $0xa8] sm:$0xff] %vm433, 0.0
      %457 = vst.msk [vmem:[#allocation3 + $0xb0] sm:$0xff] %vm433, 0.0
      %458 = vst.msk [vmem:[#allocation3 + $0xb8] sm:$0x3] %vm436, 0.0
      %459 = vst.msk [vmem:[#allocation3 + $0xc0] sm:$0xff] %vm433, 0.0
      %460 = vst.msk [vmem:[#allocation3 + $0xc8] sm:$0xff] %vm433, 0.0
      %461 = vst.msk [vmem:[#allocation3 + $0xd0] sm:$0x3] %vm436, 0.0
      %462 = vst.msk [vmem:[#allocation3 + $0xd8] sm:$0xff] %vm433, 0.0
      %463 = vst.msk [vmem:[#allocation3 + $0xe0] sm:$0xff] %vm433, 0.0
      %464 = vst.msk [vmem:[#allocation3 + $0xe8] sm:$0x3] %vm436, 0.0
      %465 = vst.msk [vmem:[#allocation3 + $0xf0] sm:$0xff] %vm433, 0.0
      %466 = vst.msk [vmem:[#allocation3 + $0xf8] sm:$0xff] %vm433, 0.0
      %467 = vst.msk [vmem:[#allocation3 + $0x100] sm:$0x3] %vm436, 0.0
      %468 = vst.msk [vmem:[#allocation3 + $0x108] sm:$0xff] %vm433, 0.0
      %469 = vst.msk [vmem:[#allocation3 + $0x110] sm:$0xff] %vm433, 0.0
      %470 = vst.msk [vmem:[#allocation3 + $0x118] sm:$0x3] %vm436, 0.0
      %471 = vst.msk [vmem:[#allocation3 + $0x120] sm:$0xff] %vm433, 0.0
      %472 = vst.msk [vmem:[#allocation3 + $0x128] sm:$0xff] %vm433, 0.0
      %473 = vst.msk [vmem:[#allocation3 + $0x130] sm:$0x3] %vm436, 0.0
      %474 = vst.msk [vmem:[#allocation3 + $0x138] sm:$0xff] %vm433, 0.0
      %475 = vst.msk [vmem:[#allocation3 + $0x140] sm:$0xff] %vm433, 0.0
      %476 = vst.msk [vmem:[#allocation3 + $0x148] sm:$0x3] %vm436, 0.0
      %477 = vst.msk [vmem:[#allocation3 + $0x150] sm:$0xff] %vm433, 0.0
      %478 = vst.msk [vmem:[#allocation3 + $0x158] sm:$0xff] %vm433, 0.0
      %479 = vst.msk [vmem:[#allocation3 + $0x160] sm:$0x3] %vm436, 0.0
      %480 = vst.msk [vmem:[#allocation3 + $0x168] sm:$0xff] %vm433, 0.0
      %481 = vst.msk [vmem:[#allocation3 + $0x170] sm:$0xff] %vm433, 0.0
      %482 = vst.msk [vmem:[#allocation3 + $0x178] sm:$0x3] %vm436, 0.0
      %483 = vst.msk [vmem:[#allocation3 + $0x180] sm:$0xff] %vm433, 0.0
      %484 = vst.msk [vmem:[#allocation3 + $0x188] sm:$0xff] %vm433, 0.0
      %485 = vst.msk [vmem:[#allocation3 + $0x190] sm:$0x3] %vm436, 0.0
      %486 = vst.msk [vmem:[#allocation3 + $0x198] sm:$0xff] %vm433, 0.0
      %487 = vst.msk [vmem:[#allocation3 + $0x1a0] sm:$0xff] %vm433, 0.0
      %488 = vst.msk [vmem:[#allocation3 + $0x1a8] sm:$0x3] %vm436, 0.0
      %v489 = vld [vmem:[%s1] sm:$0xf]
      %v490 = vld [vmem:[%s1 + $0x4] sm:$0xf]
      %v491 = vld [vmem:[%s1 + $0x8] sm:$0xf]
      %v492 = vld [vmem:[%s1 + $0xc] sm:$0xf]
      %v493 = vld [vmem:[%s1 + $0x10] sm:$0x3]
      %v494 = vld [vmem:[%s2] sm:$0x1]
      %v495 = vld [vmem:[#allocation2] sm:$0xff]
      %v496 = vld [vmem:[#allocation2 + $0x8] sm:$0xff]
      %v497 = vld [vmem:[#allocation2 + $0x18] sm:$0xff]
      %v498 = vld [vmem:[#allocation2 + $0x20] sm:$0xff]
      %v499 = vld [vmem:[#allocation2 + $0x30] sm:$0xff]
      %v500 = vld [vmem:[#allocation2 + $0x38] sm:$0xff]
      %v501 = vld [vmem:[#allocation2 + $0x48] sm:$0xff]
      %v502 = vld [vmem:[#allocation2 + $0x50] sm:$0xff]
      %v503 = vld [vmem:[#allocation2 + $0x60] sm:$0xff]
      %v504 = vld [vmem:[#allocation2 + $0x68] sm:$0xff]
      %v505 = vld [vmem:[#allocation2 + $0x78] sm:$0xff]
      %v506 = vld [vmem:[#allocation2 + $0x80] sm:$0xff]
      %v507 = vld [vmem:[#allocation2 + $0x90] sm:$0xff]
      %v508 = vld [vmem:[#allocation2 + $0x98] sm:$0xff]
      %v509 = vld [vmem:[#allocation2 + $0xa8] sm:$0xff]
      %v510 = vld [vmem:[#allocation2 + $0xb0] sm:$0xff]
      %v511 = vld [vmem:[#allocation2 + $0x1] sm:$0xff]
      %v512 = vld [vmem:[#allocation2 + $0x9] sm:$0xff]
      %v513 = vld [vmem:[#allocation2 + $0x19] sm:$0xff]
      %v514 = vld [vmem:[#allocation2 + $0x21] sm:$0xff]
      %v515 = vld [vmem:[#allocation2 + $0x31] sm:$0xff]
      %v516 = vld [vmem:[#allocation2 + $0x39] sm:$0xff]
      %v517 = vld [vmem:[#allocation2 + $0x49] sm:$0xff]
      %v518 = vld [vmem:[#allocation2 + $0x51] sm:$0xff]
      %v519 = vld [vmem:[#allocation2 + $0x61] sm:$0xff]
      %v520 = vld [vmem:[#allocation2 + $0x69] sm:$0xff]
      %v521 = vld [vmem:[#allocation2 + $0x79] sm:$0xff]
      %v522 = vld [vmem:[#allocation2 + $0x81] sm:$0xff]
      %v523 = vld [vmem:[#allocation2 + $0x91] sm:$0xff]
      %v524 = vld [vmem:[#allocation2 + $0x99] sm:$0xff]
      %v525 = vld [vmem:[#allocation2 + $0xa9] sm:$0xff]
      %v526 = vld [vmem:[#allocation2 + $0xb1] sm:$0xff]
      %v527 = vld [vmem:[#allocation2 + $0x2] sm:$0xff]
      %v528 = vld [vmem:[#allocation2 + $0xa] sm:$0xff]
      %v529 = vld [vmem:[#allocation2 + $0x1a] sm:$0xff]
      %v530 = vld [vmem:[#allocation2 + $0x22] sm:$0xff]
      %v531 = vld [vmem:[#allocation2 + $0x32] sm:$0xff]
      %v532 = vld [vmem:[#allocation2 + $0x3a] sm:$0xff]
      %v533 = vld [vmem:[#allocation2 + $0x4a] sm:$0xff]
      %v534 = vld [vmem:[#allocation2 + $0x52] sm:$0xff]
      %v535 = vld [vmem:[#allocation2 + $0x62] sm:$0xff]
      %v536 = vld [vmem:[#allocation2 + $0x6a] sm:$0xff]
      %v537 = vld [vmem:[#allocation2 + $0x7a] sm:$0xff]
      %v538 = vld [vmem:[#allocation2 + $0x82] sm:$0xff]
      %v539 = vld [vmem:[#allocation2 + $0x92] sm:$0xff]
      %v540 = vld [vmem:[#allocation2 + $0x9a] sm:$0xff]
      %v541 = vld [vmem:[#allocation2 + $0xaa] sm:$0xff]
      %v542 = vld [vmem:[#allocation2 + $0xb2] sm:$0xff]
      %v543 = vld [vmem:[%s400] sm:$0xff]
      %v544 = vld [vmem:[%s400 + $0x8] sm:$0xff]
      %v545 = vld [vmem:[%s400 + $0x18] sm:$0xff]
      %v546 = vld [vmem:[%s400 + $0x20] sm:$0xff]
      %v547 = vld [vmem:[%s400 + $0x30] sm:$0xff]
      %v548 = vld [vmem:[%s400 + $0x38] sm:$0xff]
      %v549 = vld [vmem:[%s400 + $0x48] sm:$0xff]
      %v550 = vld [vmem:[%s400 + $0x50] sm:$0xff]
      %v551 = vld [vmem:[%s400 + $0x60] sm:$0xff]
      %v552 = vld [vmem:[%s400 + $0x68] sm:$0xff]
      %v553 = vld [vmem:[%s400 + $0x78] sm:$0xff]
      %v554 = vld [vmem:[%s400 + $0x80] sm:$0xff]
      %v555 = vld [vmem:[%s400 + $0x90] sm:$0xff]
      %v556 = vld [vmem:[%s400 + $0x98] sm:$0xff]
      %v557 = vld [vmem:[%s400 + $0xa8] sm:$0xff]
      %v558 = vld [vmem:[%s400 + $0xb0] sm:$0xff]
      %v559 = vld [vmem:[%s400 + $0x1] sm:$0xff]
      %v560 = vld [vmem:[%s400 + $0x9] sm:$0xff]
      %v561 = vld [vmem:[%s400 + $0x19] sm:$0xff]
      %v562 = vld [vmem:[%s400 + $0x21] sm:$0xff]
      %v563 = vld [vmem:[%s400 + $0x31] sm:$0xff]
      %v564 = vld [vmem:[%s400 + $0x39] sm:$0xff]
      %v565 = vld [vmem:[%s400 + $0x49] sm:$0xff]
      %v566 = vld [vmem:[%s400 + $0x51] sm:$0xff]
      %v567 = vld [vmem:[%s400 + $0x61] sm:$0xff]
      %v568 = vld [vmem:[%s400 + $0x69] sm:$0xff]
      %v569 = vld [vmem:[%s400 + $0x79] sm:$0xff]
      %v570 = vld [vmem:[%s400 + $0x81] sm:$0xff]
      %v571 = vld [vmem:[%s400 + $0x91] sm:$0xff]
      %v572 = vld [vmem:[%s400 + $0x99] sm:$0xff]
      %v573 = vld [vmem:[%s400 + $0xa9] sm:$0xff]
      %v574 = vld [vmem:[%s400 + $0xb1] sm:$0xff]
      %v575 = vld [vmem:[%s400 + $0x2] sm:$0xff]
      %v576 = vld [vmem:[%s400 + $0xa] sm:$0xff]
      %v577 = vld [vmem:[%s400 + $0x1a] sm:$0xff]
      %v578 = vld [vmem:[%s400 + $0x22] sm:$0xff]
      %v579 = vld [vmem:[%s400 + $0x32] sm:$0xff]
      %v580 = vld [vmem:[%s400 + $0x3a] sm:$0xff]
      %v581 = vld [vmem:[%s400 + $0x4a] sm:$0xff]
      %v582 = vld [vmem:[%s400 + $0x52] sm:$0xff]
      %v583 = vld [vmem:[%s400 + $0x62] sm:$0xff]
      %v584 = vld [vmem:[%s400 + $0x6a] sm:$0xff]
      %v585 = vld [vmem:[%s400 + $0x7a] sm:$0xff]
      %v586 = vld [vmem:[%s400 + $0x82] sm:$0xff]
      %v587 = vld [vmem:[%s400 + $0x92] sm:$0xff]
      %v588 = vld [vmem:[%s400 + $0x9a] sm:$0xff]
      %v589 = vld [vmem:[%s400 + $0xaa] sm:$0xff]
      %v590 = vld [vmem:[%s400 + $0xb2] sm:$0xff]
      %s591 = scalar_lea.vmem [#allocation2], 48
      %v592 = vld [vmem:[%s591] sm:$0xff]
      %v593 = vld [vmem:[%s591 + $0x8] sm:$0xff]
      %v594 = vld [vmem:[%s591 + $0x18] sm:$0xff]
      %v595 = vld [vmem:[%s591 + $0x20] sm:$0xff]
      %v596 = vld [vmem:[%s591 + $0x30] sm:$0xff]
      %v597 = vld [vmem:[%s591 + $0x38] sm:$0xff]
      %v598 = vld [vmem:[%s591 + $0x48] sm:$0xff]
      %v599 = vld [vmem:[%s591 + $0x50] sm:$0xff]
      %v600 = vld [vmem:[%s591 + $0x60] sm:$0xff]
      %v601 = vld [vmem:[%s591 + $0x68] sm:$0xff]
      %v602 = vld [vmem:[%s591 + $0x78] sm:$0xff]
      %v603 = vld [vmem:[%s591 + $0x80] sm:$0xff]
      %v604 = vld [vmem:[%s591 + $0x90] sm:$0xff]
      %v605 = vld [vmem:[%s591 + $0x98] sm:$0xff]
      %v606 = vld [vmem:[%s591 + $0xa8] sm:$0xff]
      %v607 = vld [vmem:[%s591 + $0xb0] sm:$0xff]
      %v608 = vld [vmem:[%s591 + $0x1] sm:$0xff]
      %v609 = vld [vmem:[%s591 + $0x9] sm:$0xff]
      %v610 = vld [vmem:[%s591 + $0x19] sm:$0xff]
      %v611 = vld [vmem:[%s591 + $0x21] sm:$0xff]
      %v612 = vld [vmem:[%s591 + $0x31] sm:$0xff]
      %v613 = vld [vmem:[%s591 + $0x39] sm:$0xff]
      %v614 = vld [vmem:[%s591 + $0x49] sm:$0xff]
      %v615 = vld [vmem:[%s591 + $0x51] sm:$0xff]
      %v616 = vld [vmem:[%s591 + $0x61] sm:$0xff]
      %v617 = vld [vmem:[%s591 + $0x69] sm:$0xff]
      %v618 = vld [vmem:[%s591 + $0x79] sm:$0xff]
      %v619 = vld [vmem:[%s591 + $0x81] sm:$0xff]
      %v620 = vld [vmem:[%s591 + $0x91] sm:$0xff]
      %v621 = vld [vmem:[%s591 + $0x99] sm:$0xff]
      %v622 = vld [vmem:[%s591 + $0xa9] sm:$0xff]
      %v623 = vld [vmem:[%s591 + $0xb1] sm:$0xff]
      %v624 = vld [vmem:[%s591 + $0x2] sm:$0xff]
      %v625 = vld [vmem:[%s591 + $0xa] sm:$0xff]
      %v626 = vld [vmem:[%s591 + $0x1a] sm:$0xff]
      %v627 = vld [vmem:[%s591 + $0x22] sm:$0xff]
      %v628 = vld [vmem:[%s591 + $0x32] sm:$0xff]
      %v629 = vld [vmem:[%s591 + $0x3a] sm:$0xff]
      %v630 = vld [vmem:[%s591 + $0x4a] sm:$0xff]
      %v631 = vld [vmem:[%s591 + $0x52] sm:$0xff]
      %v632 = vld [vmem:[%s591 + $0x62] sm:$0xff]
      %v633 = vld [vmem:[%s591 + $0x6a] sm:$0xff]
      %v634 = vld [vmem:[%s591 + $0x7a] sm:$0xff]
      %v635 = vld [vmem:[%s591 + $0x82] sm:$0xff]
      %v636 = vld [vmem:[%s591 + $0x92] sm:$0xff]
      %v637 = vld [vmem:[%s591 + $0x9a] sm:$0xff]
      %v638 = vld [vmem:[%s591 + $0xaa] sm:$0xff]
      %v639 = vld [vmem:[%s591 + $0xb2] sm:$0xff]
      %656 = vrot.lane.b32.xlu0 %v511, 4
      %v657 = vpop.permute.xlu0 %656
      %658 = vrot.lane.b32.xlu0 %v512, 4
      %v659 = vpop.permute.xlu0 %658
      %660 = vrot.lane.b32.xlu0 %v513, 4
      %v661 = vpop.permute.xlu0 %660
      %662 = vrot.lane.b32.xlu0 %v514, 4
      %v663 = vpop.permute.xlu0 %662
      %664 = vrot.lane.b32.xlu0 %v515, 4
      %v665 = vpop.permute.xlu0 %664
      %666 = vrot.lane.b32.xlu0 %v516, 4
      %v667 = vpop.permute.xlu0 %666
      %668 = vrot.lane.b32.xlu0 %v517, 4
      %v669 = vpop.permute.xlu0 %668
      %670 = vrot.lane.b32.xlu0 %v518, 4
      %v671 = vpop.permute.xlu0 %670
      %672 = vrot.lane.b32.xlu0 %v519, 4
      %v673 = vpop.permute.xlu0 %672
      %674 = vrot.lane.b32.xlu0 %v520, 4
      %v675 = vpop.permute.xlu0 %674
      %676 = vrot.lane.b32.xlu0 %v521, 4
      %v677 = vpop.permute.xlu0 %676
      %678 = vrot.lane.b32.xlu0 %v522, 4
      %v679 = vpop.permute.xlu0 %678
      %680 = vrot.lane.b32.xlu0 %v523, 4
      %v681 = vpop.permute.xlu0 %680
      %682 = vrot.lane.b32.xlu0 %v524, 4
      %v683 = vpop.permute.xlu0 %682
      %684 = vrot.lane.b32.xlu0 %v525, 4
      %v685 = vpop.permute.xlu0 %684
      %686 = vrot.lane.b32.xlu0 %v526, 4
      %v687 = vpop.permute.xlu0 %686
      %720 = vrot.lane.b32.xlu0 %v527, 8
      %v721 = vpop.permute.xlu0 %720
      %722 = vrot.lane.b32.xlu0 %v528, 8
      %v723 = vpop.permute.xlu0 %722
      %724 = vrot.lane.b32.xlu0 %v529, 8
      %v725 = vpop.permute.xlu0 %724
      %726 = vrot.lane.b32.xlu0 %v530, 8
      %v727 = vpop.permute.xlu0 %726
      %728 = vrot.lane.b32.xlu0 %v531, 8
      %v729 = vpop.permute.xlu0 %728
      %730 = vrot.lane.b32.xlu0 %v532, 8
      %v731 = vpop.permute.xlu0 %730
      %732 = vrot.lane.b32.xlu0 %v533, 8
      %v733 = vpop.permute.xlu0 %732
      %734 = vrot.lane.b32.xlu0 %v534, 8
      %v735 = vpop.permute.xlu0 %734
      %736 = vrot.lane.b32.xlu0 %v535, 8
      %v737 = vpop.permute.xlu0 %736
      %738 = vrot.lane.b32.xlu0 %v536, 8
      %v739 = vpop.permute.xlu0 %738
      %740 = vrot.lane.b32.xlu0 %v537, 8
      %v741 = vpop.permute.xlu0 %740
      %742 = vrot.lane.b32.xlu0 %v538, 8
      %v743 = vpop.permute.xlu0 %742
      %744 = vrot.lane.b32.xlu0 %v539, 8
      %v745 = vpop.permute.xlu0 %744
      %746 = vrot.lane.b32.xlu0 %v540, 8
      %v747 = vpop.permute.xlu0 %746
      %748 = vrot.lane.b32.xlu0 %v541, 8
      %v749 = vpop.permute.xlu0 %748
      %750 = vrot.lane.b32.xlu0 %v542, 8
      %v751 = vpop.permute.xlu0 %750
      %784 = vrot.lane.b32.xlu0 %v543, 12
      %v785 = vpop.permute.xlu0 %784
      %786 = vrot.lane.b32.xlu0 %v544, 12
      %v787 = vpop.permute.xlu0 %786
      %788 = vrot.lane.b32.xlu0 %v545, 12
      %v789 = vpop.permute.xlu0 %788
      %790 = vrot.lane.b32.xlu0 %v546, 12
      %v791 = vpop.permute.xlu0 %790
      %792 = vrot.lane.b32.xlu0 %v547, 12
      %v793 = vpop.permute.xlu0 %792
      %794 = vrot.lane.b32.xlu0 %v548, 12
      %v795 = vpop.permute.xlu0 %794
      %796 = vrot.lane.b32.xlu0 %v549, 12
      %v797 = vpop.permute.xlu0 %796
      %798 = vrot.lane.b32.xlu0 %v550, 12
      %v799 = vpop.permute.xlu0 %798
      %800 = vrot.lane.b32.xlu0 %v551, 12
      %v801 = vpop.permute.xlu0 %800
      %802 = vrot.lane.b32.xlu0 %v552, 12
      %v803 = vpop.permute.xlu0 %802
      %804 = vrot.lane.b32.xlu0 %v553, 12
      %v805 = vpop.permute.xlu0 %804
      %806 = vrot.lane.b32.xlu0 %v554, 12
      %v807 = vpop.permute.xlu0 %806
      %808 = vrot.lane.b32.xlu0 %v555, 12
      %v809 = vpop.permute.xlu0 %808
      %810 = vrot.lane.b32.xlu0 %v556, 12
      %v811 = vpop.permute.xlu0 %810
      %812 = vrot.lane.b32.xlu0 %v557, 12
      %v813 = vpop.permute.xlu0 %812
      %814 = vrot.lane.b32.xlu0 %v558, 12
      %v815 = vpop.permute.xlu0 %814
      %848 = vrot.lane.b32.xlu0 %v559, 16
      %v849 = vpop.permute.xlu0 %848
      %850 = vrot.lane.b32.xlu0 %v560, 16
      %v851 = vpop.permute.xlu0 %850
      %852 = vrot.lane.b32.xlu0 %v561, 16
      %v853 = vpop.permute.xlu0 %852
      %854 = vrot.lane.b32.xlu0 %v562, 16
      %v855 = vpop.permute.xlu0 %854
      %856 = vrot.lane.b32.xlu0 %v563, 16
      %v857 = vpop.permute.xlu0 %856
      %858 = vrot.lane.b32.xlu0 %v564, 16
      %v859 = vpop.permute.xlu0 %858
      %860 = vrot.lane.b32.xlu0 %v565, 16
      %v861 = vpop.permute.xlu0 %860
      %862 = vrot.lane.b32.xlu0 %v566, 16
      %v863 = vpop.permute.xlu0 %862
      %864 = vrot.lane.b32.xlu0 %v567, 16
      %v865 = vpop.permute.xlu0 %864
      %866 = vrot.lane.b32.xlu0 %v568, 16
      %v867 = vpop.permute.xlu0 %866
      %868 = vrot.lane.b32.xlu0 %v569, 16
      %v869 = vpop.permute.xlu0 %868
      %870 = vrot.lane.b32.xlu0 %v570, 16
      %v871 = vpop.permute.xlu0 %870
      %872 = vrot.lane.b32.xlu0 %v571, 16
      %v873 = vpop.permute.xlu0 %872
      %874 = vrot.lane.b32.xlu0 %v572, 16
      %v875 = vpop.permute.xlu0 %874
      %876 = vrot.lane.b32.xlu0 %v573, 16
      %v877 = vpop.permute.xlu0 %876
      %878 = vrot.lane.b32.xlu0 %v574, 16
      %v879 = vpop.permute.xlu0 %878
      %912 = vrot.lane.b32.xlu0 %v575, 20
      %v913 = vpop.permute.xlu0 %912
      %914 = vrot.lane.b32.xlu0 %v576, 20
      %v915 = vpop.permute.xlu0 %914
      %916 = vrot.lane.b32.xlu0 %v577, 20
      %v917 = vpop.permute.xlu0 %916
      %918 = vrot.lane.b32.xlu0 %v578, 20
      %v919 = vpop.permute.xlu0 %918
      %920 = vrot.lane.b32.xlu0 %v579, 20
      %v921 = vpop.permute.xlu0 %920
      %922 = vrot.lane.b32.xlu0 %v580, 20
      %v923 = vpop.permute.xlu0 %922
      %924 = vrot.lane.b32.xlu0 %v581, 20
      %v925 = vpop.permute.xlu0 %924
      %926 = vrot.lane.b32.xlu0 %v582, 20
      %v927 = vpop.permute.xlu0 %926
      %928 = vrot.lane.b32.xlu0 %v583, 20
      %v929 = vpop.permute.xlu0 %928
      %930 = vrot.lane.b32.xlu0 %v584, 20
      %v931 = vpop.permute.xlu0 %930
      %932 = vrot.lane.b32.xlu0 %v585, 20
      %v933 = vpop.permute.xlu0 %932
      %934 = vrot.lane.b32.xlu0 %v586, 20
      %v935 = vpop.permute.xlu0 %934
      %936 = vrot.lane.b32.xlu0 %v587, 20
      %v937 = vpop.permute.xlu0 %936
      %938 = vrot.lane.b32.xlu0 %v588, 20
      %v939 = vpop.permute.xlu0 %938
      %940 = vrot.lane.b32.xlu0 %v589, 20
      %v941 = vpop.permute.xlu0 %940
      %942 = vrot.lane.b32.xlu0 %v590, 20
      %v943 = vpop.permute.xlu0 %942
      %976 = vrot.lane.b32.xlu0 %v592, 24
      %v977 = vpop.permute.xlu0 %976
      %978 = vrot.lane.b32.xlu0 %v593, 24
      %v979 = vpop.permute.xlu0 %978
      %980 = vrot.lane.b32.xlu0 %v594, 24
      %v981 = vpop.permute.xlu0 %980
      %982 = vrot.lane.b32.xlu0 %v595, 24
      %v983 = vpop.permute.xlu0 %982
      %984 = vrot.lane.b32.xlu0 %v596, 24
      %v985 = vpop.permute.xlu0 %984
      %986 = vrot.lane.b32.xlu0 %v597, 24
      %v987 = vpop.permute.xlu0 %986
      %988 = vrot.lane.b32.xlu0 %v598, 24
      %v989 = vpop.permute.xlu0 %988
      %990 = vrot.lane.b32.xlu0 %v599, 24
      %v991 = vpop.permute.xlu0 %990
      %992 = vrot.lane.b32.xlu0 %v600, 24
      %v993 = vpop.permute.xlu0 %992
      %994 = vrot.lane.b32.xlu0 %v601, 24
      %v995 = vpop.permute.xlu0 %994
      %996 = vrot.lane.b32.xlu0 %v602, 24
      %v997 = vpop.permute.xlu0 %996
      %998 = vrot.lane.b32.xlu0 %v603, 24
      %v999 = vpop.permute.xlu0 %998
      %1000 = vrot.lane.b32.xlu0 %v604, 24
      %v1001 = vpop.permute.xlu0 %1000
      %1002 = vrot.lane.b32.xlu0 %v605, 24
      %v1003 = vpop.permute.xlu0 %1002
      %1004 = vrot.lane.b32.xlu0 %v606, 24
      %v1005 = vpop.permute.xlu0 %1004
      %1006 = vrot.lane.b32.xlu0 %v607, 24
      %v1007 = vpop.permute.xlu0 %1006
      %1040 = vrot.lane.b32.xlu0 %v608, 28
      %v1041 = vpop.permute.xlu0 %1040
      %1042 = vrot.lane.b32.xlu0 %v609, 28
      %v1043 = vpop.permute.xlu0 %1042
      %1044 = vrot.lane.b32.xlu0 %v610, 28
      %v1045 = vpop.permute.xlu0 %1044
      %1046 = vrot.lane.b32.xlu0 %v611, 28
      %v1047 = vpop.permute.xlu0 %1046
      %1048 = vrot.lane.b32.xlu0 %v612, 28
      %v1049 = vpop.permute.xlu0 %1048
      %1050 = vrot.lane.b32.xlu0 %v613, 28
      %v1051 = vpop.permute.xlu0 %1050
      %1052 = vrot.lane.b32.xlu0 %v614, 28
      %v1053 = vpop.permute.xlu0 %1052
      %1054 = vrot.lane.b32.xlu0 %v615, 28
      %v1055 = vpop.permute.xlu0 %1054
      %1056 = vrot.lane.b32.xlu0 %v616, 28
      %v1057 = vpop.permute.xlu0 %1056
      %1058 = vrot.lane.b32.xlu0 %v617, 28
      %v1059 = vpop.permute.xlu0 %1058
      %1060 = vrot.lane.b32.xlu0 %v618, 28
      %v1061 = vpop.permute.xlu0 %1060
      %1062 = vrot.lane.b32.xlu0 %v619, 28
      %v1063 = vpop.permute.xlu0 %1062
      %1064 = vrot.lane.b32.xlu0 %v620, 28
      %v1065 = vpop.permute.xlu0 %1064
      %1066 = vrot.lane.b32.xlu0 %v621, 28
      %v1067 = vpop.permute.xlu0 %1066
      %1068 = vrot.lane.b32.xlu0 %v622, 28
      %v1069 = vpop.permute.xlu0 %1068
      %1070 = vrot.lane.b32.xlu0 %v623, 28
      %v1071 = vpop.permute.xlu0 %1070
      %1104 = vrot.lane.b32.xlu0 %v624, 32
      %v1105 = vpop.permute.xlu0 %1104
      %1106 = vrot.lane.b32.xlu0 %v625, 32
      %v1107 = vpop.permute.xlu0 %1106
      %1108 = vrot.lane.b32.xlu0 %v626, 32
      %v1109 = vpop.permute.xlu0 %1108
      %1110 = vrot.lane.b32.xlu0 %v627, 32
      %v1111 = vpop.permute.xlu0 %1110
      %1112 = vrot.lane.b32.xlu0 %v628, 32
      %v1113 = vpop.permute.xlu0 %1112
      %1114 = vrot.lane.b32.xlu0 %v629, 32
      %v1115 = vpop.permute.xlu0 %1114
      %1116 = vrot.lane.b32.xlu0 %v630, 32
      %v1117 = vpop.permute.xlu0 %1116
      %1118 = vrot.lane.b32.xlu0 %v631, 32
      %v1119 = vpop.permute.xlu0 %1118
      %1120 = vrot.lane.b32.xlu0 %v632, 32
      %v1121 = vpop.permute.xlu0 %1120
      %1122 = vrot.lane.b32.xlu0 %v633, 32
      %v1123 = vpop.permute.xlu0 %1122
      %1124 = vrot.lane.b32.xlu0 %v634, 32
      %v1125 = vpop.permute.xlu0 %1124
      %1126 = vrot.lane.b32.xlu0 %v635, 32
      %v1127 = vpop.permute.xlu0 %1126
      %1128 = vrot.lane.b32.xlu0 %v636, 32
      %v1129 = vpop.permute.xlu0 %1128
      %1130 = vrot.lane.b32.xlu0 %v637, 32
      %v1131 = vpop.permute.xlu0 %1130
      %1132 = vrot.lane.b32.xlu0 %v638, 32
      %v1133 = vpop.permute.xlu0 %1132
      %1134 = vrot.lane.b32.xlu0 %v639, 32
      %v1135 = vpop.permute.xlu0 %1134
      %v1152 = vsel %vm312, %v495, %v657
      %v1153 = vsel %vm312, %v496, %v659
      %v1154 = vsel %vm312, %v497, %v661
      %v1155 = vsel %vm312, %v498, %v663
      %v1156 = vsel %vm312, %v499, %v665
      %v1157 = vsel %vm312, %v500, %v667
      %v1158 = vsel %vm312, %v501, %v669
      %v1159 = vsel %vm312, %v502, %v671
      %v1160 = vsel %vm312, %v503, %v673
      %v1161 = vsel %vm312, %v504, %v675
      %v1162 = vsel %vm312, %v505, %v677
      %v1163 = vsel %vm312, %v506, %v679
      %v1164 = vsel %vm312, %v507, %v681
      %v1165 = vsel %vm312, %v508, %v683
      %v1166 = vsel %vm312, %v509, %v685
      %v1167 = vsel %vm312, %v510, %v687
      %v1168 = vsel %vm433, %v1152, %v721
      %v1169 = vsel %vm433, %v1153, %v723
      %v1170 = vsel %vm433, %v1154, %v725
      %v1171 = vsel %vm433, %v1155, %v727
      %v1172 = vsel %vm433, %v1156, %v729
      %v1173 = vsel %vm433, %v1157, %v731
      %v1174 = vsel %vm433, %v1158, %v733
      %v1175 = vsel %vm433, %v1159, %v735
      %v1176 = vsel %vm433, %v1160, %v737
      %v1177 = vsel %vm433, %v1161, %v739
      %v1178 = vsel %vm433, %v1162, %v741
      %v1179 = vsel %vm433, %v1163, %v743
      %v1180 = vsel %vm433, %v1164, %v745
      %v1181 = vsel %vm433, %v1165, %v747
      %v1182 = vsel %vm433, %v1166, %v749
      %v1183 = vsel %vm433, %v1167, %v751
      %vm1184 = vcmask 97280
      %v1185 = vsel %vm1184, %v1168, %v785
      %v1186 = vsel %vm1184, %v1169, %v787
      %v1187 = vsel %vm1184, %v1170, %v789
      %v1188 = vsel %vm1184, %v1171, %v791
      %v1189 = vsel %vm1184, %v1172, %v793
      %v1190 = vsel %vm1184, %v1173, %v795
      %v1191 = vsel %vm1184, %v1174, %v797
      %v1192 = vsel %vm1184, %v1175, %v799
      %v1193 = vsel %vm1184, %v1176, %v801
      %v1194 = vsel %vm1184, %v1177, %v803
      %v1195 = vsel %vm1184, %v1178, %v805
      %v1196 = vsel %vm1184, %v1179, %v807
      %v1197 = vsel %vm1184, %v1180, %v809
      %v1198 = vsel %vm1184, %v1181, %v811
      %v1199 = vsel %vm1184, %v1182, %v813
      %v1200 = vsel %vm1184, %v1183, %v815
      %vm1201 = vcmask 130048
      %v1202 = vsel %vm1201, %v1185, %v849
      %v1203 = vsel %vm1201, %v1186, %v851
      %v1204 = vsel %vm1201, %v1187, %v853
      %v1205 = vsel %vm1201, %v1188, %v855
      %v1206 = vsel %vm1201, %v1189, %v857
      %v1207 = vsel %vm1201, %v1190, %v859
      %v1208 = vsel %vm1201, %v1191, %v861
      %v1209 = vsel %vm1201, %v1192, %v863
      %v1210 = vsel %vm1201, %v1193, %v865
      %v1211 = vsel %vm1201, %v1194, %v867
      %v1212 = vsel %vm1201, %v1195, %v869
      %v1213 = vsel %vm1201, %v1196, %v871
      %v1214 = vsel %vm1201, %v1197, %v873
      %v1215 = vsel %vm1201, %v1198, %v875
      %v1216 = vsel %vm1201, %v1199, %v877
      %v1217 = vsel %vm1201, %v1200, %v879
      %vm1218 = vcmask 162816
      %v1219 = vsel %vm1218, %v1202, %v913
      %v1220 = vsel %vm1218, %v1203, %v915
      %v1221 = vsel %vm1218, %v1204, %v917
      %v1222 = vsel %vm1218, %v1205, %v919
      %v1223 = vsel %vm1218, %v1206, %v921
      %v1224 = vsel %vm1218, %v1207, %v923
      %v1225 = vsel %vm1218, %v1208, %v925
      %v1226 = vsel %vm1218, %v1209, %v927
      %v1227 = vsel %vm1218, %v1210, %v929
      %v1228 = vsel %vm1218, %v1211, %v931
      %v1229 = vsel %vm1218, %v1212, %v933
      %v1230 = vsel %vm1218, %v1213, %v935
      %v1231 = vsel %vm1218, %v1214, %v937
      %v1232 = vsel %vm1218, %v1215, %v939
      %v1233 = vsel %vm1218, %v1216, %v941
      %v1234 = vsel %vm1218, %v1217, %v943
      %vm1235 = vcmask 195584
      %v1236 = vsel %vm1235, %v1219, %v977
      %v1237 = vsel %vm1235, %v1220, %v979
      %v1238 = vsel %vm1235, %v1221, %v981
      %v1239 = vsel %vm1235, %v1222, %v983
      %v1240 = vsel %vm1235, %v1223, %v985
      %v1241 = vsel %vm1235, %v1224, %v987
      %v1242 = vsel %vm1235, %v1225, %v989
      %v1243 = vsel %vm1235, %v1226, %v991
      %v1244 = vsel %vm1235, %v1227, %v993
      %v1245 = vsel %vm1235, %v1228, %v995
      %v1246 = vsel %vm1235, %v1229, %v997
      %v1247 = vsel %vm1235, %v1230, %v999
      %v1248 = vsel %vm1235, %v1231, %v1001
      %v1249 = vsel %vm1235, %v1232, %v1003
      %v1250 = vsel %vm1235, %v1233, %v1005
      %v1251 = vsel %vm1235, %v1234, %v1007
      %vm1252 = vcmask 228352
      %v1253 = vsel %vm1252, %v1236, %v1041
      %v1254 = vsel %vm1252, %v1237, %v1043
      %v1255 = vsel %vm1252, %v1238, %v1045
      %v1256 = vsel %vm1252, %v1239, %v1047
      %v1257 = vsel %vm1252, %v1240, %v1049
      %v1258 = vsel %vm1252, %v1241, %v1051
      %v1259 = vsel %vm1252, %v1242, %v1053
      %v1260 = vsel %vm1252, %v1243, %v1055
      %v1261 = vsel %vm1252, %v1244, %v1057
      %v1262 = vsel %vm1252, %v1245, %v1059
      %v1263 = vsel %vm1252, %v1246, %v1061
      %v1264 = vsel %vm1252, %v1247, %v1063
      %v1265 = vsel %vm1252, %v1248, %v1065
      %v1266 = vsel %vm1252, %v1249, %v1067
      %v1267 = vsel %vm1252, %v1250, %v1069
      %v1268 = vsel %vm1252, %v1251, %v1071
      %vm1269 = vcmask 261120
      %v1270 = vsel %vm1269, %v1253, %v1105
      %v1271 = vsel %vm1269, %v1254, %v1107
      %v1272 = vsel %vm1269, %v1255, %v1109
      %v1273 = vsel %vm1269, %v1256, %v1111
      %v1274 = vsel %vm1269, %v1257, %v1113
      %v1275 = vsel %vm1269, %v1258, %v1115
      %v1276 = vsel %vm1269, %v1259, %v1117
      %v1277 = vsel %vm1269, %v1260, %v1119
      %v1278 = vsel %vm1269, %v1261, %v1121
      %v1279 = vsel %vm1269, %v1262, %v1123
      %v1280 = vsel %vm1269, %v1263, %v1125
      %v1281 = vsel %vm1269, %v1264, %v1127
      %v1282 = vsel %vm1269, %v1265, %v1129
      %v1283 = vsel %vm1269, %v1266, %v1131
      %v1284 = vsel %vm1269, %v1267, %v1133
      %v1285 = vsel %vm1269, %v1268, %v1135
      %v1286 = vpack.c.bf16 %v1271, %v1270
      %v1287 = vpack.c.bf16 %v1273, %v1272
      %v1288 = vpack.c.bf16 %v1275, %v1274
      %v1289 = vpack.c.bf16 %v1277, %v1276
      %v1290 = vpack.c.bf16 %v1279, %v1278
      %v1291 = vpack.c.bf16 %v1281, %v1280
      %v1292 = vpack.c.bf16 %v1283, %v1282
      %v1293 = vpack.c.bf16 %v1285, %v1284
      %v1295 = vlaneseq
      %v1296 = vshrl.u32 %v1295, 7
      %v1297 = vsub.s32 0, %v1296
      %v1298 = vrot.slane %v494, %v1297
      %v1305 = vunpack.c.l.b16 %v489
      %v1306 = vunpack.c.l.b16 %v490
      %v1307 = vunpack.c.l.b16 %v491
      %v1308 = vunpack.c.l.b16 %v492
      %v1309 = vunpack.c.l.b16 %v493
      %v1310 = vpack.c.b16 %v1306, %v1305
      %v1311 = vpack.c.b16 %v1308, %v1307
      %v1312 = vpack.c.b16 %v1309, %v1309
      %vm1315 = vcmask 293888
      %v1317 = vsel %vm1315, %v1286, 0
      %v1320 = vsel %vm1315, %v1287, 0
      %v1323 = vsel %vm1315, %v1288, 0
      %v1326 = vsel %vm1315, %v1289, 0
      %v1329 = vsel %vm1315, %v1290, 0
      %v1332 = vsel %vm1315, %v1291, 0
      %v1335 = vsel %vm1315, %v1292, 0
      %v1338 = vsel %vm1315, %v1293, 0
      %vm1340 = vcmask 1041408
      %v1342 = vsel %vm1340, %v1312, 0
      %1344 = vmatprep.subr.bf16.mxu0 0
      %1345 = vmatpush1.bf16.msra.mxu0 %v1310
      %1346 = vmatprep.subr.bf16.mxu0 0
      %1347 = vmatpush1.bf16.msra.mxu0 %v1311
      %1348 = vmatprep.subr.bf16.mxu0 0
      %1349 = vmatpush1.bf16.msra.mxu0 %v1342
      %1350 = vmatprep.subr.bf16.mxu0 0
      %1351 = vmatpush1.bf16.msra.mxu0 0
      %1352 = vmatprep.subr.bf16.mxu0 0
      %1353 = vmatpush1.bf16.msra.mxu0 0
      %1354 = vmatprep.subr.bf16.mxu0 0
      %1355 = vmatpush1.bf16.msra.mxu0 0
      %1356 = vmatprep.subr.bf16.mxu0 0
      %1357 = vmatpush1.bf16.msra.mxu0 0
      %1358 = vmatprep.subr.bf16.mxu0 0
      %1359 = vmatpush1.bf16.msra.mxu0 0
      %1360 = vmatprep.subr.bf16.mxu0 0
      %1361 = vmatpush1.bf16.msra.mxu0 0
      %1362 = vmatprep.subr.bf16.mxu0 0
      %1363 = vmatpush1.bf16.msra.mxu0 0
      %1364 = vmatprep.subr.bf16.mxu0 0
      %1365 = vmatpush1.bf16.msra.mxu0 0
      %1366 = vmatprep.subr.bf16.mxu0 0
      %1367 = vmatpush1.bf16.msra.mxu0 0
      %1368 = vmatprep.subr.bf16.mxu0 0
      %1369 = vmatpush1.bf16.msra.mxu0 0
      %1370 = vmatprep.subr.bf16.mxu0 0
      %1371 = vmatpush1.bf16.msra.mxu0 0
      %1372 = vmatprep.subr.bf16.mxu0 0
      %1373 = vmatpush1.bf16.msra.mxu0 0
      %1374 = vmatprep.subr.bf16.mxu0 0
      %1375 = vmatpush1.bf16.msra.mxu0 0
      %1376 = vmatprep.mubr.bf16.mxu0 0
      %1377 = vmatmul.mubr.bf16.gmra.mrb[0].mxu0 %v1317
      %v1378 = vpop.f32.mrb[0].mxu0
      %v1379 = vadd.f32 %v1298, %v1378
      %v1380 = vpop.f32.mrb[0].mxu0
      %v1381 = vpop.f32.mrb[0].mxu0
      %v1382 = vadd.f32 %v1298, %v1381
      %v1383 = vpop.f32.mrb[0].mxu0
      %1384 = vmatprep.mubr.bf16.mxu0 0
      %1385 = vmatmul.mubr.bf16.gmra.mrb[0].mxu0 %v1320
      %v1386 = vpop.f32.mrb[0].mxu0
      %v1387 = vadd.f32 %v1298, %v1386
      %v1388 = vpop.f32.mrb[0].mxu0
      %v1389 = vpop.f32.mrb[0].mxu0
      %v1390 = vadd.f32 %v1298, %v1389
      %v1391 = vpop.f32.mrb[0].mxu0
      %1392 = vmatprep.mubr.bf16.mxu0 0
      %1393 = vmatmul.mubr.bf16.gmra.mrb[0].mxu0 %v1323
      %v1394 = vpop.f32.mrb[0].mxu0
      %v1395 = vadd.f32 %v1298, %v1394
      %v1396 = vpop.f32.mrb[0].mxu0
      %v1397 = vpop.f32.mrb[0].mxu0
      %v1398 = vadd.f32 %v1298, %v1397
      %v1399 = vpop.f32.mrb[0].mxu0
      %1400 = vmatprep.mubr.bf16.mxu0 0
      %1401 = vmatmul.mubr.bf16.gmra.mrb[0].mxu0 %v1326
      %v1402 = vpop.f32.mrb[0].mxu0
      %v1403 = vadd.f32 %v1298, %v1402
      %v1404 = vpop.f32.mrb[0].mxu0
      %v1405 = vpop.f32.mrb[0].mxu0
      %v1406 = vadd.f32 %v1298, %v1405
      %v1407 = vpop.f32.mrb[0].mxu0
      %1408 = vmatprep.mubr.bf16.mxu0 0
      %1409 = vmatmul.mubr.bf16.gmra.mrb[0].mxu0 %v1329
      %v1410 = vpop.f32.mrb[0].mxu0
      %v1411 = vadd.f32 %v1298, %v1410
      %v1412 = vpop.f32.mrb[0].mxu0
      %v1413 = vpop.f32.mrb[0].mxu0
      %v1414 = vadd.f32 %v1298, %v1413
      %v1415 = vpop.f32.mrb[0].mxu0
      %1416 = vmatprep.mubr.bf16.mxu0 0
      %1417 = vmatmul.mubr.bf16.gmra.mrb[0].mxu0 %v1332
      %v1418 = vpop.f32.mrb[0].mxu0
      %v1419 = vadd.f32 %v1298, %v1418
      %v1420 = vpop.f32.mrb[0].mxu0
      %v1421 = vpop.f32.mrb[0].mxu0
      %v1422 = vadd.f32 %v1298, %v1421
      %v1423 = vpop.f32.mrb[0].mxu0
      %1424 = vmatprep.mubr.bf16.mxu0 0
      %1425 = vmatmul.mubr.bf16.gmra.mrb[0].mxu0 %v1335
      %v1426 = vpop.f32.mrb[0].mxu0
      %v1427 = vadd.f32 %v1298, %v1426
      %v1428 = vpop.f32.mrb[0].mxu0
      %v1429 = vpop.f32.mrb[0].mxu0
      %v1430 = vadd.f32 %v1298, %v1429
      %v1431 = vpop.f32.mrb[0].mxu0
      %1432 = vmatprep.mubr.bf16.mxu0 0
      %1433 = vmatmul.mubr.bf16.gmra.mrb[0].mxu0 %v1338
      %v1434 = vpop.f32.mrb[0].mxu0
      %v1435 = vadd.f32 %v1298, %v1434
      %v1436 = vpop.f32.mrb[0].mxu0
      %v1437 = vpop.f32.mrb[0].mxu0
      %v1438 = vadd.f32 %v1298, %v1437
      %v1439 = vpop.f32.mrb[0].mxu0
      %1440 = vdwg.mxu0
      %v1441 = vmax.f32 %v1379, 0.0
      %v1442 = vmax.f32 %v1382, 0.0
      %v1443 = vmax.f32 %v1387, 0.0
      %v1444 = vmax.f32 %v1390, 0.0
      %v1445 = vmax.f32 %v1395, 0.0
      %v1446 = vmax.f32 %v1398, 0.0
      %v1447 = vmax.f32 %v1403, 0.0
      %v1448 = vmax.f32 %v1406, 0.0
      %v1449 = vmax.f32 %v1411, 0.0
      %v1450 = vmax.f32 %v1414, 0.0
      %v1451 = vmax.f32 %v1419, 0.0
      %v1452 = vmax.f32 %v1422, 0.0
      %v1453 = vmax.f32 %v1427, 0.0
      %v1454 = vmax.f32 %v1430, 0.0
      %v1455 = vmax.f32 %v1435, 0.0
      %v1456 = vmax.f32 %v1438, 0.0
      %s1457 = scalar_lea.vmem [#allocation3], 24
      %1458 = vst.msk [vmem:[%s1457 + $0x1] sm:$0xff] %vm433, %v1441
      %1459 = vst.msk [vmem:[%s1457 + $0x9] sm:$0xff] %vm433, %v1442
      %1460 = vst.msk [vmem:[%s1457 + $0x19] sm:$0xff] %vm433, %v1443
      %1461 = vst.msk [vmem:[%s1457 + $0x21] sm:$0xff] %vm433, %v1444
      %1462 = vst.msk [vmem:[%s1457 + $0x31] sm:$0xff] %vm433, %v1445
      %1463 = vst.msk [vmem:[%s1457 + $0x39] sm:$0xff] %vm433, %v1446
      %1464 = vst.msk [vmem:[%s1457 + $0x49] sm:$0xff] %vm433, %v1447
      %1465 = vst.msk [vmem:[%s1457 + $0x51] sm:$0xff] %vm433, %v1448
      %1466 = vst.msk [vmem:[%s1457 + $0x61] sm:$0xff] %vm433, %v1449
      %1467 = vst.msk [vmem:[%s1457 + $0x69] sm:$0xff] %vm433, %v1450
      %1468 = vst.msk [vmem:[%s1457 + $0x79] sm:$0xff] %vm433, %v1451
      %1469 = vst.msk [vmem:[%s1457 + $0x81] sm:$0xff] %vm433, %v1452
      %1470 = vst.msk [vmem:[%s1457 + $0x91] sm:$0xff] %vm433, %v1453
      %1471 = vst.msk [vmem:[%s1457 + $0x99] sm:$0xff] %vm433, %v1454
      %1472 = vst.msk [vmem:[%s1457 + $0xa9] sm:$0xff] %vm433, %v1455
      %1473 = vst.msk [vmem:[%s1457 + $0xb1] sm:$0xff] %vm433, %v1456
      %s1474 = scalar_lea.vmem [#allocation2], 192
      %v1475 = vld [vmem:[%s1474] sm:$0xff]
      %v1476 = vld [vmem:[%s1474 + $0x8] sm:$0xff]
      %v1477 = vld [vmem:[%s1474 + $0x18] sm:$0xff]
      %v1478 = vld [vmem:[%s1474 + $0x20] sm:$0xff]
      %v1479 = vld [vmem:[%s1474 + $0x30] sm:$0xff]
      %v1480 = vld [vmem:[%s1474 + $0x38] sm:$0xff]
      %v1481 = vld [vmem:[%s1474 + $0x48] sm:$0xff]
      %v1482 = vld [vmem:[%s1474 + $0x50] sm:$0xff]
      %v1483 = vld [vmem:[%s1474 + $0x60] sm:$0xff]
      %v1484 = vld [vmem:[%s1474 + $0x68] sm:$0xff]
      %v1485 = vld [vmem:[%s1474 + $0x78] sm:$0xff]
      %v1486 = vld [vmem:[%s1474 + $0x80] sm:$0xff]
      %v1487 = vld [vmem:[%s1474 + $0x90] sm:$0xff]
      %v1488 = vld [vmem:[%s1474 + $0x98] sm:$0xff]
      %v1489 = vld [vmem:[%s1474 + $0xa8] sm:$0xff]
      %v1490 = vld [vmem:[%s1474 + $0xb0] sm:$0xff]
      %v1491 = vld [vmem:[%s1474 + $0x1] sm:$0xff]
      %v1492 = vld [vmem:[%s1474 + $0x9] sm:$0xff]
      %v1493 = vld [vmem:[%s1474 + $0x19] sm:$0xff]
      %v1494 = vld [vmem:[%s1474 + $0x21] sm:$0xff]
      %v1495 = vld [vmem:[%s1474 + $0x31] sm:$0xff]
      %v1496 = vld [vmem:[%s1474 + $0x39] sm:$0xff]
      %v1497 = vld [vmem:[%s1474 + $0x49] sm:$0xff]
      %v1498 = vld [vmem:[%s1474 + $0x51] sm:$0xff]
      %v1499 = vld [vmem:[%s1474 + $0x61] sm:$0xff]
      %v1500 = vld [vmem:[%s1474 + $0x69] sm:$0xff]
      %v1501 = vld [vmem:[%s1474 + $0x79] sm:$0xff]
      %v1502 = vld [vmem:[%s1474 + $0x81] sm:$0xff]
      %v1503 = vld [vmem:[%s1474 + $0x91] sm:$0xff]
      %v1504 = vld [vmem:[%s1474 + $0x99] sm:$0xff]
      %v1505 = vld [vmem:[%s1474 + $0xa9] sm:$0xff]
      %v1506 = vld [vmem:[%s1474 + $0xb1] sm:$0xff]
      %v1507 = vld [vmem:[%s1474 + $0x2] sm:$0xff]
      %v1508 = vld [vmem:[%s1474 + $0xa] sm:$0xff]
      %v1509 = vld [vmem:[%s1474 + $0x1a] sm:$0xff]
      %v1510 = vld [vmem:[%s1474 + $0x22] sm:$0xff]
      %v1511 = vld [vmem:[%s1474 + $0x32] sm:$0xff]
      %v1512 = vld [vmem:[%s1474 + $0x3a] sm:$0xff]
      %v1513 = vld [vmem:[%s1474 + $0x4a] sm:$0xff]
      %v1514 = vld [vmem:[%s1474 + $0x52] sm:$0xff]
      %v1515 = vld [vmem:[%s1474 + $0x62] sm:$0xff]
      %v1516 = vld [vmem:[%s1474 + $0x6a] sm:$0xff]
      %v1517 = vld [vmem:[%s1474 + $0x7a] sm:$0xff]
      %v1518 = vld [vmem:[%s1474 + $0x82] sm:$0xff]
      %v1519 = vld [vmem:[%s1474 + $0x92] sm:$0xff]
      %v1520 = vld [vmem:[%s1474 + $0x9a] sm:$0xff]
      %v1521 = vld [vmem:[%s1474 + $0xaa] sm:$0xff]
      %v1522 = vld [vmem:[%s1474 + $0xb2] sm:$0xff]
      %s1523 = scalar_lea.vmem [#allocation2], 216
      %v1524 = vld [vmem:[%s1523] sm:$0xff]
      %v1525 = vld [vmem:[%s1523 + $0x8] sm:$0xff]
      %v1526 = vld [vmem:[%s1523 + $0x18] sm:$0xff]
      %v1527 = vld [vmem:[%s1523 + $0x20] sm:$0xff]
      %v1528 = vld [vmem:[%s1523 + $0x30] sm:$0xff]
      %v1529 = vld [vmem:[%s1523 + $0x38] sm:$0xff]
      %v1530 = vld [vmem:[%s1523 + $0x48] sm:$0xff]
      %v1531 = vld [vmem:[%s1523 + $0x50] sm:$0xff]
      %v1532 = vld [vmem:[%s1523 + $0x60] sm:$0xff]
      %v1533 = vld [vmem:[%s1523 + $0x68] sm:$0xff]
      %v1534 = vld [vmem:[%s1523 + $0x78] sm:$0xff]
      %v1535 = vld [vmem:[%s1523 + $0x80] sm:$0xff]
      %v1536 = vld [vmem:[%s1523 + $0x90] sm:$0xff]
      %v1537 = vld [vmem:[%s1523 + $0x98] sm:$0xff]
      %v1538 = vld [vmem:[%s1523 + $0xa8] sm:$0xff]
      %v1539 = vld [vmem:[%s1523 + $0xb0] sm:$0xff]
      %v1540 = vld [vmem:[%s1523 + $0x1] sm:$0xff]
      %v1541 = vld [vmem:[%s1523 + $0x9] sm:$0xff]
      %v1542 = vld [vmem:[%s1523 + $0x19] sm:$0xff]
      %v1543 = vld [vmem:[%s1523 + $0x21] sm:$0xff]
      %v1544 = vld [vmem:[%s1523 + $0x31] sm:$0xff]
      %v1545 = vld [vmem:[%s1523 + $0x39] sm:$0xff]
      %v1546 = vld [vmem:[%s1523 + $0x49] sm:$0xff]
      %v1547 = vld [vmem:[%s1523 + $0x51] sm:$0xff]
      %v1548 = vld [vmem:[%s1523 + $0x61] sm:$0xff]
      %v1549 = vld [vmem:[%s1523 + $0x69] sm:$0xff]
      %v1550 = vld [vmem:[%s1523 + $0x79] sm:$0xff]
      %v1551 = vld [vmem:[%s1523 + $0x81] sm:$0xff]
      %v1552 = vld [vmem:[%s1523 + $0x91] sm:$0xff]
      %v1553 = vld [vmem:[%s1523 + $0x99] sm:$0xff]
      %v1554 = vld [vmem:[%s1523 + $0xa9] sm:$0xff]
      %v1555 = vld [vmem:[%s1523 + $0xb1] sm:$0xff]
      %v1556 = vld [vmem:[%s1523 + $0x2] sm:$0xff]
      %v1557 = vld [vmem:[%s1523 + $0xa] sm:$0xff]
      %v1558 = vld [vmem:[%s1523 + $0x1a] sm:$0xff]
      %v1559 = vld [vmem:[%s1523 + $0x22] sm:$0xff]
      %v1560 = vld [vmem:[%s1523 + $0x32] sm:$0xff]
      %v1561 = vld [vmem:[%s1523 + $0x3a] sm:$0xff]
      %v1562 = vld [vmem:[%s1523 + $0x4a] sm:$0xff]
      %v1563 = vld [vmem:[%s1523 + $0x52] sm:$0xff]
      %v1564 = vld [vmem:[%s1523 + $0x62] sm:$0xff]
      %v1565 = vld [vmem:[%s1523 + $0x6a] sm:$0xff]
      %v1566 = vld [vmem:[%s1523 + $0x7a] sm:$0xff]
      %v1567 = vld [vmem:[%s1523 + $0x82] sm:$0xff]
      %v1568 = vld [vmem:[%s1523 + $0x92] sm:$0xff]
      %v1569 = vld [vmem:[%s1523 + $0x9a] sm:$0xff]
      %v1570 = vld [vmem:[%s1523 + $0xaa] sm:$0xff]
      %v1571 = vld [vmem:[%s1523 + $0xb2] sm:$0xff]
      %s1572 = scalar_lea.vmem [#allocation2], 240
      %v1573 = vld [vmem:[%s1572] sm:$0xff]
      %v1574 = vld [vmem:[%s1572 + $0x8] sm:$0xff]
      %v1575 = vld [vmem:[%s1572 + $0x18] sm:$0xff]
      %v1576 = vld [vmem:[%s1572 + $0x20] sm:$0xff]
      %v1577 = vld [vmem:[%s1572 + $0x30] sm:$0xff]
      %v1578 = vld [vmem:[%s1572 + $0x38] sm:$0xff]
      %v1579 = vld [vmem:[%s1572 + $0x48] sm:$0xff]
      %v1580 = vld [vmem:[%s1572 + $0x50] sm:$0xff]
      %v1581 = vld [vmem:[%s1572 + $0x60] sm:$0xff]
      %v1582 = vld [vmem:[%s1572 + $0x68] sm:$0xff]
      %v1583 = vld [vmem:[%s1572 + $0x78] sm:$0xff]
      %v1584 = vld [vmem:[%s1572 + $0x80] sm:$0xff]
      %v1585 = vld [vmem:[%s1572 + $0x90] sm:$0xff]
      %v1586 = vld [vmem:[%s1572 + $0x98] sm:$0xff]
      %v1587 = vld [vmem:[%s1572 + $0xa8] sm:$0xff]
      %v1588 = vld [vmem:[%s1572 + $0xb0] sm:$0xff]
      %v1589 = vld [vmem:[%s1572 + $0x1] sm:$0xff]
      %v1590 = vld [vmem:[%s1572 + $0x9] sm:$0xff]
      %v1591 = vld [vmem:[%s1572 + $0x19] sm:$0xff]
      %v1592 = vld [vmem:[%s1572 + $0x21] sm:$0xff]
      %v1593 = vld [vmem:[%s1572 + $0x31] sm:$0xff]
      %v1594 = vld [vmem:[%s1572 + $0x39] sm:$0xff]
      %v1595 = vld [vmem:[%s1572 + $0x49] sm:$0xff]
      %v1596 = vld [vmem:[%s1572 + $0x51] sm:$0xff]
      %v1597 = vld [vmem:[%s1572 + $0x61] sm:$0xff]
      %v1598 = vld [vmem:[%s1572 + $0x69] sm:$0xff]
      %v1599 = vld [vmem:[%s1572 + $0x79] sm:$0xff]
      %v1600 = vld [vmem:[%s1572 + $0x81] sm:$0xff]
      %v1601 = vld [vmem:[%s1572 + $0x91] sm:$0xff]
      %v1602 = vld [vmem:[%s1572 + $0x99] sm:$0xff]
      %v1603 = vld [vmem:[%s1572 + $0xa9] sm:$0xff]
      %v1604 = vld [vmem:[%s1572 + $0xb1] sm:$0xff]
      %v1605 = vld [vmem:[%s1572 + $0x2] sm:$0xff]
      %v1606 = vld [vmem:[%s1572 + $0xa] sm:$0xff]
      %v1607 = vld [vmem:[%s1572 + $0x1a] sm:$0xff]
      %v1608 = vld [vmem:[%s1572 + $0x22] sm:$0xff]
      %v1609 = vld [vmem:[%s1572 + $0x32] sm:$0xff]
      %v1610 = vld [vmem:[%s1572 + $0x3a] sm:$0xff]
      %v1611 = vld [vmem:[%s1572 + $0x4a] sm:$0xff]
      %v1612 = vld [vmem:[%s1572 + $0x52] sm:$0xff]
      %v1613 = vld [vmem:[%s1572 + $0x62] sm:$0xff]
      %v1614 = vld [vmem:[%s1572 + $0x6a] sm:$0xff]
      %v1615 = vld [vmem:[%s1572 + $0x7a] sm:$0xff]
      %v1616 = vld [vmem:[%s1572 + $0x82] sm:$0xff]
      %v1617 = vld [vmem:[%s1572 + $0x92] sm:$0xff]
      %v1618 = vld [vmem:[%s1572 + $0x9a] sm:$0xff]
      %v1619 = vld [vmem:[%s1572 + $0xaa] sm:$0xff]
      %v1620 = vld [vmem:[%s1572 + $0xb2] sm:$0xff]
      %1637 = vrot.lane.b32.xlu0 %v1491, 4
      %v1638 = vpop.permute.xlu0 %1637
      %1639 = vrot.lane.b32.xlu0 %v1492, 4
      %v1640 = vpop.permute.xlu0 %1639
      %1641 = vrot.lane.b32.xlu0 %v1493, 4
      %v1642 = vpop.permute.xlu0 %1641
      %1643 = vrot.lane.b32.xlu0 %v1494, 4
      %v1644 = vpop.permute.xlu0 %1643
      %1645 = vrot.lane.b32.xlu0 %v1495, 4
      %v1646 = vpop.permute.xlu0 %1645
      %1647 = vrot.lane.b32.xlu0 %v1496, 4
      %v1648 = vpop.permute.xlu0 %1647
      %1649 = vrot.lane.b32.xlu0 %v1497, 4
      %v1650 = vpop.permute.xlu0 %1649
      %1651 = vrot.lane.b32.xlu0 %v1498, 4
      %v1652 = vpop.permute.xlu0 %1651
      %1653 = vrot.lane.b32.xlu0 %v1499, 4
      %v1654 = vpop.permute.xlu0 %1653
      %1655 = vrot.lane.b32.xlu0 %v1500, 4
      %v1656 = vpop.permute.xlu0 %1655
      %1657 = vrot.lane.b32.xlu0 %v1501, 4
      %v1658 = vpop.permute.xlu0 %1657
      %1659 = vrot.lane.b32.xlu0 %v1502, 4
      %v1660 = vpop.permute.xlu0 %1659
      %1661 = vrot.lane.b32.xlu0 %v1503, 4
      %v1662 = vpop.permute.xlu0 %1661
      %1663 = vrot.lane.b32.xlu0 %v1504, 4
      %v1664 = vpop.permute.xlu0 %1663
      %1665 = vrot.lane.b32.xlu0 %v1505, 4
      %v1666 = vpop.permute.xlu0 %1665
      %1667 = vrot.lane.b32.xlu0 %v1506, 4
      %v1668 = vpop.permute.xlu0 %1667
      %1701 = vrot.lane.b32.xlu0 %v1507, 8
      %v1702 = vpop.permute.xlu0 %1701
      %1703 = vrot.lane.b32.xlu0 %v1508, 8
      %v1704 = vpop.permute.xlu0 %1703
      %1705 = vrot.lane.b32.xlu0 %v1509, 8
      %v1706 = vpop.permute.xlu0 %1705
      %1707 = vrot.lane.b32.xlu0 %v1510, 8
      %v1708 = vpop.permute.xlu0 %1707
      %1709 = vrot.lane.b32.xlu0 %v1511, 8
      %v1710 = vpop.permute.xlu0 %1709
      %1711 = vrot.lane.b32.xlu0 %v1512, 8
      %v1712 = vpop.permute.xlu0 %1711
      %1713 = vrot.lane.b32.xlu0 %v1513, 8
      %v1714 = vpop.permute.xlu0 %1713
      %1715 = vrot.lane.b32.xlu0 %v1514, 8
      %v1716 = vpop.permute.xlu0 %1715
      %1717 = vrot.lane.b32.xlu0 %v1515, 8
      %v1718 = vpop.permute.xlu0 %1717
      %1719 = vrot.lane.b32.xlu0 %v1516, 8
      %v1720 = vpop.permute.xlu0 %1719
      %1721 = vrot.lane.b32.xlu0 %v1517, 8
      %v1722 = vpop.permute.xlu0 %1721
      %1723 = vrot.lane.b32.xlu0 %v1518, 8
      %v1724 = vpop.permute.xlu0 %1723
      %1725 = vrot.lane.b32.xlu0 %v1519, 8
      %v1726 = vpop.permute.xlu0 %1725
      %1727 = vrot.lane.b32.xlu0 %v1520, 8
      %v1728 = vpop.permute.xlu0 %1727
      %1729 = vrot.lane.b32.xlu0 %v1521, 8
      %v1730 = vpop.permute.xlu0 %1729
      %1731 = vrot.lane.b32.xlu0 %v1522, 8
      %v1732 = vpop.permute.xlu0 %1731
      %1765 = vrot.lane.b32.xlu0 %v1524, 12
      %v1766 = vpop.permute.xlu0 %1765
      %1767 = vrot.lane.b32.xlu0 %v1525, 12
      %v1768 = vpop.permute.xlu0 %1767
      %1769 = vrot.lane.b32.xlu0 %v1526, 12
      %v1770 = vpop.permute.xlu0 %1769
      %1771 = vrot.lane.b32.xlu0 %v1527, 12
      %v1772 = vpop.permute.xlu0 %1771
      %1773 = vrot.lane.b32.xlu0 %v1528, 12
      %v1774 = vpop.permute.xlu0 %1773
      %1775 = vrot.lane.b32.xlu0 %v1529, 12
      %v1776 = vpop.permute.xlu0 %1775
      %1777 = vrot.lane.b32.xlu0 %v1530, 12
      %v1778 = vpop.permute.xlu0 %1777
      %1779 = vrot.lane.b32.xlu0 %v1531, 12
      %v1780 = vpop.permute.xlu0 %1779
      %1781 = vrot.lane.b32.xlu0 %v1532, 12
      %v1782 = vpop.permute.xlu0 %1781
      %1783 = vrot.lane.b32.xlu0 %v1533, 12
      %v1784 = vpop.permute.xlu0 %1783
      %1785 = vrot.lane.b32.xlu0 %v1534, 12
      %v1786 = vpop.permute.xlu0 %1785
      %1787 = vrot.lane.b32.xlu0 %v1535, 12
      %v1788 = vpop.permute.xlu0 %1787
      %1789 = vrot.lane.b32.xlu0 %v1536, 12
      %v1790 = vpop.permute.xlu0 %1789
      %1791 = vrot.lane.b32.xlu0 %v1537, 12
      %v1792 = vpop.permute.xlu0 %1791
      %1793 = vrot.lane.b32.xlu0 %v1538, 12
      %v1794 = vpop.permute.xlu0 %1793
      %1795 = vrot.lane.b32.xlu0 %v1539, 12
      %v1796 = vpop.permute.xlu0 %1795
      %1829 = vrot.lane.b32.xlu0 %v1540, 16
      %v1830 = vpop.permute.xlu0 %1829
      %1831 = vrot.lane.b32.xlu0 %v1541, 16
      %v1832 = vpop.permute.xlu0 %1831
      %1833 = vrot.lane.b32.xlu0 %v1542, 16
      %v1834 = vpop.permute.xlu0 %1833
      %1835 = vrot.lane.b32.xlu0 %v1543, 16
      %v1836 = vpop.permute.xlu0 %1835
      %1837 = vrot.lane.b32.xlu0 %v1544, 16
      %v1838 = vpop.permute.xlu0 %1837
      %1839 = vrot.lane.b32.xlu0 %v1545, 16
      %v1840 = vpop.permute.xlu0 %1839
      %1841 = vrot.lane.b32.xlu0 %v1546, 16
      %v1842 = vpop.permute.xlu0 %1841
      %1843 = vrot.lane.b32.xlu0 %v1547, 16
      %v1844 = vpop.permute.xlu0 %1843
      %1845 = vrot.lane.b32.xlu0 %v1548, 16
      %v1846 = vpop.permute.xlu0 %1845
      %1847 = vrot.lane.b32.xlu0 %v1549, 16
      %v1848 = vpop.permute.xlu0 %1847
      %1849 = vrot.lane.b32.xlu0 %v1550, 16
      %v1850 = vpop.permute.xlu0 %1849
      %1851 = vrot.lane.b32.xlu0 %v1551, 16
      %v1852 = vpop.permute.xlu0 %1851
      %1853 = vrot.lane.b32.xlu0 %v1552, 16
      %v1854 = vpop.permute.xlu0 %1853
      %1855 = vrot.lane.b32.xlu0 %v1553, 16
      %v1856 = vpop.permute.xlu0 %1855
      %1857 = vrot.lane.b32.xlu0 %v1554, 16
      %v1858 = vpop.permute.xlu0 %1857
      %1859 = vrot.lane.b32.xlu0 %v1555, 16
      %v1860 = vpop.permute.xlu0 %1859
      %1893 = vrot.lane.b32.xlu0 %v1556, 20
      %v1894 = vpop.permute.xlu0 %1893
      %1895 = vrot.lane.b32.xlu0 %v1557, 20
      %v1896 = vpop.permute.xlu0 %1895
      %1897 = vrot.lane.b32.xlu0 %v1558, 20
      %v1898 = vpop.permute.xlu0 %1897
      %1899 = vrot.lane.b32.xlu0 %v1559, 20
      %v1900 = vpop.permute.xlu0 %1899
      %1901 = vrot.lane.b32.xlu0 %v1560, 20
      %v1902 = vpop.permute.xlu0 %1901
      %1903 = vrot.lane.b32.xlu0 %v1561, 20
      %v1904 = vpop.permute.xlu0 %1903
      %1905 = vrot.lane.b32.xlu0 %v1562, 20
      %v1906 = vpop.permute.xlu0 %1905
      %1907 = vrot.lane.b32.xlu0 %v1563, 20
      %v1908 = vpop.permute.xlu0 %1907
      %1909 = vrot.lane.b32.xlu0 %v1564, 20
      %v1910 = vpop.permute.xlu0 %1909
      %1911 = vrot.lane.b32.xlu0 %v1565, 20
      %v1912 = vpop.permute.xlu0 %1911
      %1913 = vrot.lane.b32.xlu0 %v1566, 20
      %v1914 = vpop.permute.xlu0 %1913
      %1915 = vrot.lane.b32.xlu0 %v1567, 20
      %v1916 = vpop.permute.xlu0 %1915
      %1917 = vrot.lane.b32.xlu0 %v1568, 20
      %v1918 = vpop.permute.xlu0 %1917
      %1919 = vrot.lane.b32.xlu0 %v1569, 20
      %v1920 = vpop.permute.xlu0 %1919
      %1921 = vrot.lane.b32.xlu0 %v1570, 20
      %v1922 = vpop.permute.xlu0 %1921
      %1923 = vrot.lane.b32.xlu0 %v1571, 20
      %v1924 = vpop.permute.xlu0 %1923
      %1957 = vrot.lane.b32.xlu0 %v1573, 24
      %v1958 = vpop.permute.xlu0 %1957
      %1959 = vrot.lane.b32.xlu0 %v1574, 24
      %v1960 = vpop.permute.xlu0 %1959
      %1961 = vrot.lane.b32.xlu0 %v1575, 24
      %v1962 = vpop.permute.xlu0 %1961
      %1963 = vrot.lane.b32.xlu0 %v1576, 24
      %v1964 = vpop.permute.xlu0 %1963
      %1965 = vrot.lane.b32.xlu0 %v1577, 24
      %v1966 = vpop.permute.xlu0 %1965
      %1967 = vrot.lane.b32.xlu0 %v1578, 24
      %v1968 = vpop.permute.xlu0 %1967
      %1969 = vrot.lane.b32.xlu0 %v1579, 24
      %v1970 = vpop.permute.xlu0 %1969
      %1971 = vrot.lane.b32.xlu0 %v1580, 24
      %v1972 = vpop.permute.xlu0 %1971
      %1973 = vrot.lane.b32.xlu0 %v1581, 24
      %v1974 = vpop.permute.xlu0 %1973
      %1975 = vrot.lane.b32.xlu0 %v1582, 24
      %v1976 = vpop.permute.xlu0 %1975
      %1977 = vrot.lane.b32.xlu0 %v1583, 24
      %v1978 = vpop.permute.xlu0 %1977
      %1979 = vrot.lane.b32.xlu0 %v1584, 24
      %v1980 = vpop.permute.xlu0 %1979
      %1981 = vrot.lane.b32.xlu0 %v1585, 24
      %v1982 = vpop.permute.xlu0 %1981
      %1983 = vrot.lane.b32.xlu0 %v1586, 24
      %v1984 = vpop.permute.xlu0 %1983
      %1985 = vrot.lane.b32.xlu0 %v1587, 24
      %v1986 = vpop.permute.xlu0 %1985
      %1987 = vrot.lane.b32.xlu0 %v1588, 24
      %v1988 = vpop.permute.xlu0 %1987
      %2021 = vrot.lane.b32.xlu0 %v1589, 28
      %v2022 = vpop.permute.xlu0 %2021
      %2023 = vrot.lane.b32.xlu0 %v1590, 28
      %v2024 = vpop.permute.xlu0 %2023
      %2025 = vrot.lane.b32.xlu0 %v1591, 28
      %v2026 = vpop.permute.xlu0 %2025
      %2027 = vrot.lane.b32.xlu0 %v1592, 28
      %v2028 = vpop.permute.xlu0 %2027
      %2029 = vrot.lane.b32.xlu0 %v1593, 28
      %v2030 = vpop.permute.xlu0 %2029
      %2031 = vrot.lane.b32.xlu0 %v1594, 28
      %v2032 = vpop.permute.xlu0 %2031
      %2033 = vrot.lane.b32.xlu0 %v1595, 28
      %v2034 = vpop.permute.xlu0 %2033
      %2035 = vrot.lane.b32.xlu0 %v1596, 28
      %v2036 = vpop.permute.xlu0 %2035
      %2037 = vrot.lane.b32.xlu0 %v1597, 28
      %v2038 = vpop.permute.xlu0 %2037
      %2039 = vrot.lane.b32.xlu0 %v1598, 28
      %v2040 = vpop.permute.xlu0 %2039
      %2041 = vrot.lane.b32.xlu0 %v1599, 28
      %v2042 = vpop.permute.xlu0 %2041
      %2043 = vrot.lane.b32.xlu0 %v1600, 28
      %v2044 = vpop.permute.xlu0 %2043
      %2045 = vrot.lane.b32.xlu0 %v1601, 28
      %v2046 = vpop.permute.xlu0 %2045
      %2047 = vrot.lane.b32.xlu0 %v1602, 28
      %v2048 = vpop.permute.xlu0 %2047
      %2049 = vrot.lane.b32.xlu0 %v1603, 28
      %v2050 = vpop.permute.xlu0 %2049
      %2051 = vrot.lane.b32.xlu0 %v1604, 28
      %v2052 = vpop.permute.xlu0 %2051
      %2085 = vrot.lane.b32.xlu0 %v1605, 32
      %v2086 = vpop.permute.xlu0 %2085
      %2087 = vrot.lane.b32.xlu0 %v1606, 32
      %v2088 = vpop.permute.xlu0 %2087
      %2089 = vrot.lane.b32.xlu0 %v1607, 32
      %v2090 = vpop.permute.xlu0 %2089
      %2091 = vrot.lane.b32.xlu0 %v1608, 32
      %v2092 = vpop.permute.xlu0 %2091
      %2093 = vrot.lane.b32.xlu0 %v1609, 32
      %v2094 = vpop.permute.xlu0 %2093
      %2095 = vrot.lane.b32.xlu0 %v1610, 32
      %v2096 = vpop.permute.xlu0 %2095
      %2097 = vrot.lane.b32.xlu0 %v1611, 32
      %v2098 = vpop.permute.xlu0 %2097
      %2099 = vrot.lane.b32.xlu0 %v1612, 32
      %v2100 = vpop.permute.xlu0 %2099
      %2101 = vrot.lane.b32.xlu0 %v1613, 32
      %v2102 = vpop.permute.xlu0 %2101
      %2103 = vrot.lane.b32.xlu0 %v1614, 32
      %v2104 = vpop.permute.xlu0 %2103
      %2105 = vrot.lane.b32.xlu0 %v1615, 32
      %v2106 = vpop.permute.xlu0 %2105
      %2107 = vrot.lane.b32.xlu0 %v1616, 32
      %v2108 = vpop.permute.xlu0 %2107
      %2109 = vrot.lane.b32.xlu0 %v1617, 32
      %v2110 = vpop.permute.xlu0 %2109
      %2111 = vrot.lane.b32.xlu0 %v1618, 32
      %v2112 = vpop.permute.xlu0 %2111
      %2113 = vrot.lane.b32.xlu0 %v1619, 32
      %v2114 = vpop.permute.xlu0 %2113
      %2115 = vrot.lane.b32.xlu0 %v1620, 32
      %v2116 = vpop.permute.xlu0 %2115
      %v2133 = vsel %vm312, %v1475, %v1638
      %v2134 = vsel %vm312, %v1476, %v1640
      %v2135 = vsel %vm312, %v1477, %v1642
      %v2136 = vsel %vm312, %v1478, %v1644
      %v2137 = vsel %vm312, %v1479, %v1646
      %v2138 = vsel %vm312, %v1480, %v1648
      %v2139 = vsel %vm312, %v1481, %v1650
      %v2140 = vsel %vm312, %v1482, %v1652
      %v2141 = vsel %vm312, %v1483, %v1654
      %v2142 = vsel %vm312, %v1484, %v1656
      %v2143 = vsel %vm312, %v1485, %v1658
      %v2144 = vsel %vm312, %v1486, %v1660
      %v2145 = vsel %vm312, %v1487, %v1662
      %v2146 = vsel %vm312, %v1488, %v1664
      %v2147 = vsel %vm312, %v1489, %v1666
      %v2148 = vsel %vm312, %v1490, %v1668
      %v2149 = vsel %vm433, %v2133, %v1702
      %v2150 = vsel %vm433, %v2134, %v1704
      %v2151 = vsel %vm433, %v2135, %v1706
      %v2152 = vsel %vm433, %v2136, %v1708
      %v2153 = vsel %vm433, %v2137, %v1710
      %v2154 = vsel %vm433, %v2138, %v1712
      %v2155 = vsel %vm433, %v2139, %v1714
      %v2156 = vsel %vm433, %v2140, %v1716
      %v2157 = vsel %vm433, %v2141, %v1718
      %v2158 = vsel %vm433, %v2142, %v1720
      %v2159 = vsel %vm433, %v2143, %v1722
      %v2160 = vsel %vm433, %v2144, %v1724
      %v2161 = vsel %vm433, %v2145, %v1726
      %v2162 = vsel %vm433, %v2146, %v1728
      %v2163 = vsel %vm433, %v2147, %v1730
      %v2164 = vsel %vm433, %v2148, %v1732
      %v2165 = vsel %vm1184, %v2149, %v1766
      %v2166 = vsel %vm1184, %v2150, %v1768
      %v2167 = vsel %vm1184, %v2151, %v1770
      %v2168 = vsel %vm1184, %v2152, %v1772
      %v2169 = vsel %vm1184, %v2153, %v1774
      %v2170 = vsel %vm1184, %v2154, %v1776
      %v2171 = vsel %vm1184, %v2155, %v1778
      %v2172 = vsel %vm1184, %v2156, %v1780
      %v2173 = vsel %vm1184, %v2157, %v1782
      %v2174 = vsel %vm1184, %v2158, %v1784
      %v2175 = vsel %vm1184, %v2159, %v1786
      %v2176 = vsel %vm1184, %v2160, %v1788
      %v2177 = vsel %vm1184, %v2161, %v1790
      %v2178 = vsel %vm1184, %v2162, %v1792
      %v2179 = vsel %vm1184, %v2163, %v1794
      %v2180 = vsel %vm1184, %v2164, %v1796
      %v2181 = vsel %vm1201, %v2165, %v1830
      %v2182 = vsel %vm1201, %v2166, %v1832
      %v2183 = vsel %vm1201, %v2167, %v1834
      %v2184 = vsel %vm1201, %v2168, %v1836
      %v2185 = vsel %vm1201, %v2169, %v1838
      %v2186 = vsel %vm1201, %v2170, %v1840
      %v2187 = vsel %vm1201, %v2171, %v1842
      %v2188 = vsel %vm1201, %v2172, %v1844
      %v2189 = vsel %vm1201, %v2173, %v1846
      %v2190 = vsel %vm1201, %v2174, %v1848
      %v2191 = vsel %vm1201, %v2175, %v1850
      %v2192 = vsel %vm1201, %v2176, %v1852
      %v2193 = vsel %vm1201, %v2177, %v1854
      %v2194 = vsel %vm1201, %v2178, %v1856
      %v2195 = vsel %vm1201, %v2179, %v1858
      %v2196 = vsel %vm1201, %v2180, %v1860
      %v2197 = vsel %vm1218, %v2181, %v1894
      %v2198 = vsel %vm1218, %v2182, %v1896
      %v2199 = vsel %vm1218, %v2183, %v1898
      %v2200 = vsel %vm1218, %v2184, %v1900
      %v2201 = vsel %vm1218, %v2185, %v1902
      %v2202 = vsel %vm1218, %v2186, %v1904
      %v2203 = vsel %vm1218, %v2187, %v1906
      %v2204 = vsel %vm1218, %v2188, %v1908
      %v2205 = vsel %vm1218, %v2189, %v1910
      %v2206 = vsel %vm1218, %v2190, %v1912
      %v2207 = vsel %vm1218, %v2191, %v1914
      %v2208 = vsel %vm1218, %v2192, %v1916
      %v2209 = vsel %vm1218, %v2193, %v1918
      %v2210 = vsel %vm1218, %v2194, %v1920
      %v2211 = vsel %vm1218, %v2195, %v1922
      %v2212 = vsel %vm1218, %v2196, %v1924
      %v2213 = vsel %vm1235, %v2197, %v1958
      %v2214 = vsel %vm1235, %v2198, %v1960
      %v2215 = vsel %vm1235, %v2199, %v1962
      %v2216 = vsel %vm1235, %v2200, %v1964
      %v2217 = vsel %vm1235, %v2201, %v1966
      %v2218 = vsel %vm1235, %v2202, %v1968
      %v2219 = vsel %vm1235, %v2203, %v1970
      %v2220 = vsel %vm1235, %v2204, %v1972
      %v2221 = vsel %vm1235, %v2205, %v1974
      %v2222 = vsel %vm1235, %v2206, %v1976
      %v2223 = vsel %vm1235, %v2207, %v1978
      %v2224 = vsel %vm1235, %v2208, %v1980
      %v2225 = vsel %vm1235, %v2209, %v1982
      %v2226 = vsel %vm1235, %v2210, %v1984
      %v2227 = vsel %vm1235, %v2211, %v1986
      %v2228 = vsel %vm1235, %v2212, %v1988
      %v2229 = vsel %vm1252, %v2213, %v2022
      %v2230 = vsel %vm1252, %v2214, %v2024
      %v2231 = vsel %vm1252, %v2215, %v2026
      %v2232 = vsel %vm1252, %v2216, %v2028
      %v2233 = vsel %vm1252, %v2217, %v2030
      %v2234 = vsel %vm1252, %v2218, %v2032
      %v2235 = vsel %vm1252, %v2219, %v2034
      %v2236 = vsel %vm1252, %v2220, %v2036
      %v2237 = vsel %vm1252, %v2221, %v2038
      %v2238 = vsel %vm1252, %v2222, %v2040
      %v2239 = vsel %vm1252, %v2223, %v2042
      %v2240 = vsel %vm1252, %v2224, %v2044
      %v2241 = vsel %vm1252, %v2225, %v2046
      %v2242 = vsel %vm1252, %v2226, %v2048
      %v2243 = vsel %vm1252, %v2227, %v2050
      %v2244 = vsel %vm1252, %v2228, %v2052
      %v2245 = vsel %vm1269, %v2229, %v2086
      %v2246 = vsel %vm1269, %v2230, %v2088
      %v2247 = vsel %vm1269, %v2231, %v2090
      %v2248 = vsel %vm1269, %v2232, %v2092
      %v2249 = vsel %vm1269, %v2233, %v2094
      %v2250 = vsel %vm1269, %v2234, %v2096
      %v2251 = vsel %vm1269, %v2235, %v2098
      %v2252 = vsel %vm1269, %v2236, %v2100
      %v2253 = vsel %vm1269, %v2237, %v2102
      %v2254 = vsel %vm1269, %v2238, %v2104
      %v2255 = vsel %vm1269, %v2239, %v2106
      %v2256 = vsel %vm1269, %v2240, %v2108
      %v2257 = vsel %vm1269, %v2241, %v2110
      %v2258 = vsel %vm1269, %v2242, %v2112
      %v2259 = vsel %vm1269, %v2243, %v2114
      %v2260 = vsel %vm1269, %v2244, %v2116
      %v2261 = vpack.c.bf16 %v2246, %v2245
      %v2262 = vpack.c.bf16 %v2248, %v2247
      %v2263 = vpack.c.bf16 %v2250, %v2249
      %v2264 = vpack.c.bf16 %v2252, %v2251
      %v2265 = vpack.c.bf16 %v2254, %v2253
      %v2266 = vpack.c.bf16 %v2256, %v2255
      %v2267 = vpack.c.bf16 %v2258, %v2257
      %v2268 = vpack.c.bf16 %v2260, %v2259
      %v2270 = vsel %vm1315, %v2261, 0
      %v2273 = vsel %vm1315, %v2262, 0
      %v2276 = vsel %vm1315, %v2263, 0
      %v2279 = vsel %vm1315, %v2264, 0
      %v2282 = vsel %vm1315, %v2265, 0
      %v2285 = vsel %vm1315, %v2266, 0
      %v2288 = vsel %vm1315, %v2267, 0
      %v2291 = vsel %vm1315, %v2268, 0
      %2293 = vmatprep.subr.bf16.mxu0 0
      %2294 = vmatpush1.bf16.msra.mxu0 %v1310
      %2295 = vmatprep.subr.bf16.mxu0 0
      %2296 = vmatpush1.bf16.msra.mxu0 %v1311
      %2297 = vmatprep.subr.bf16.mxu0 0
      %2298 = vmatpush1.bf16.msra.mxu0 %v1342
      %2299 = vmatprep.subr.bf16.mxu0 0
      %2300 = vmatpush1.bf16.msra.mxu0 0
      %2301 = vmatprep.subr.bf16.mxu0 0
      %2302 = vmatpush1.bf16.msra.mxu0 0
      %2303 = vmatprep.subr.bf16.mxu0 0
      %2304 = vmatpush1.bf16.msra.mxu0 0
      %2305 = vmatprep.subr.bf16.mxu0 0
      %2306 = vmatpush1.bf16.msra.mxu0 0
      %2307 = vmatprep.subr.bf16.mxu0 0
      %2308 = vmatpush1.bf16.msra.mxu0 0
      %2309 = vmatprep.subr.bf16.mxu0 0
      %2310 = vmatpush1.bf16.msra.mxu0 0
      %2311 = vmatprep.subr.bf16.mxu0 0
      %2312 = vmatpush1.bf16.msra.mxu0 0
      %2313 = vmatprep.subr.bf16.mxu0 0
      %2314 = vmatpush1.bf16.msra.mxu0 0
      %2315 = vmatprep.subr.bf16.mxu0 0
      %2316 = vmatpush1.bf16.msra.mxu0 0
      %2317 = vmatprep.subr.bf16.mxu0 0
      %2318 = vmatpush1.bf16.msra.mxu0 0
      %2319 = vmatprep.subr.bf16.mxu0 0
      %2320 = vmatpush1.bf16.msra.mxu0 0
      %2321 = vmatprep.subr.bf16.mxu0 0
      %2322 = vmatpush1.bf16.msra.mxu0 0
      %2323 = vmatprep.subr.bf16.mxu0 0
      %2324 = vmatpush1.bf16.msra.mxu0 0
      %2325 = vmatprep.mubr.bf16.mxu0 0
      %2326 = vmatmul.mubr.bf16.gmra.mrb[0].mxu0 %v2270
      %v2327 = vpop.f32.mrb[0].mxu0
      %v2328 = vadd.f32 %v1298, %v2327
      %v2329 = vpop.f32.mrb[0].mxu0
      %v2330 = vpop.f32.mrb[0].mxu0
      %v2331 = vadd.f32 %v1298, %v2330
      %v2332 = vpop.f32.mrb[0].mxu0
      %2333 = vmatprep.mubr.bf16.mxu0 0
      %2334 = vmatmul.mubr.bf16.gmra.mrb[0].mxu0 %v2273
      %v2335 = vpop.f32.mrb[0].mxu0
      %v2336 = vadd.f32 %v1298, %v2335
      %v2337 = vpop.f32.mrb[0].mxu0
      %v2338 = vpop.f32.mrb[0].mxu0
      %v2339 = vadd.f32 %v1298, %v2338
      %v2340 = vpop.f32.mrb[0].mxu0
      %2341 = vmatprep.mubr.bf16.mxu0 0
      %2342 = vmatmul.mubr.bf16.gmra.mrb[0].mxu0 %v2276
      %v2343 = vpop.f32.mrb[0].mxu0
      %v2344 = vadd.f32 %v1298, %v2343
      %v2345 = vpop.f32.mrb[0].mxu0
      %v2346 = vpop.f32.mrb[0].mxu0
      %v2347 = vadd.f32 %v1298, %v2346
      %v2348 = vpop.f32.mrb[0].mxu0
      %2349 = vmatprep.mubr.bf16.mxu0 0
      %2350 = vmatmul.mubr.bf16.gmra.mrb[0].mxu0 %v2279
      %v2351 = vpop.f32.mrb[0].mxu0
      %v2352 = vadd.f32 %v1298, %v2351
      %v2353 = vpop.f32.mrb[0].mxu0
      %v2354 = vpop.f32.mrb[0].mxu0
      %v2355 = vadd.f32 %v1298, %v2354
      %v2356 = vpop.f32.mrb[0].mxu0
      %2357 = vmatprep.mubr.bf16.mxu0 0
      %2358 = vmatmul.mubr.bf16.gmra.mrb[0].mxu0 %v2282
      %v2359 = vpop.f32.mrb[0].mxu0
      %v2360 = vadd.f32 %v1298, %v2359
      %v2361 = vpop.f32.mrb[0].mxu0
      %v2362 = vpop.f32.mrb[0].mxu0
      %v2363 = vadd.f32 %v1298, %v2362
      %v2364 = vpop.f32.mrb[0].mxu0
      %2365 = vmatprep.mubr.bf16.mxu0 0
      %2366 = vmatmul.mubr.bf16.gmra.mrb[0].mxu0 %v2285
      %v2367 = vpop.f32.mrb[0].mxu0
      %v2368 = vadd.f32 %v1298, %v2367
      %v2369 = vpop.f32.mrb[0].mxu0
      %v2370 = vpop.f32.mrb[0].mxu0
      %v2371 = vadd.f32 %v1298, %v2370
      %v2372 = vpop.f32.mrb[0].mxu0
      %2373 = vmatprep.mubr.bf16.mxu0 0
      %2374 = vmatmul.mubr.bf16.gmra.mrb[0].mxu0 %v2288
      %v2375 = vpop.f32.mrb[0].mxu0
      %v2376 = vadd.f32 %v1298, %v2375
      %v2377 = vpop.f32.mrb[0].mxu0
      %v2378 = vpop.f32.mrb[0].mxu0
      %v2379 = vadd.f32 %v1298, %v2378
      %v2380 = vpop.f32.mrb[0].mxu0
      %2381 = vmatprep.mubr.bf16.mxu0 0
      %2382 = vmatmul.mubr.bf16.gmra.mrb[0].mxu0 %v2291
      %v2383 = vpop.f32.mrb[0].mxu0
      %v2384 = vadd.f32 %v1298, %v2383
      %v2385 = vpop.f32.mrb[0].mxu0
      %v2386 = vpop.f32.mrb[0].mxu0
      %v2387 = vadd.f32 %v1298, %v2386
      %v2388 = vpop.f32.mrb[0].mxu0
      %2389 = vdwg.mxu0
      %v2390 = vmax.f32 %v2328, 0.0
      %v2391 = vmax.f32 %v2331, 0.0
      %v2392 = vmax.f32 %v2336, 0.0
      %v2393 = vmax.f32 %v2339, 0.0
      %v2394 = vmax.f32 %v2344, 0.0
      %v2395 = vmax.f32 %v2347, 0.0
      %v2396 = vmax.f32 %v2352, 0.0
      %v2397 = vmax.f32 %v2355, 0.0
      %v2398 = vmax.f32 %v2360, 0.0
      %v2399 = vmax.f32 %v2363, 0.0
      %v2400 = vmax.f32 %v2368, 0.0
      %v2401 = vmax.f32 %v2371, 0.0
      %v2402 = vmax.f32 %v2376, 0.0
      %v2403 = vmax.f32 %v2379, 0.0
      %v2404 = vmax.f32 %v2384, 0.0
      %v2405 = vmax.f32 %v2387, 0.0
      %s2406 = scalar_lea.vmem [#allocation3], 216
      %2407 = vst.msk [vmem:[%s2406 + $0x1] sm:$0xff] %vm433, %v2390
      %2408 = vst.msk [vmem:[%s2406 + $0x9] sm:$0xff] %vm433, %v2391
      %2409 = vst.msk [vmem:[%s2406 + $0x19] sm:$0xff] %vm433, %v2392
      %2410 = vst.msk [vmem:[%s2406 + $0x21] sm:$0xff] %vm433, %v2393
      %2411 = vst.msk [vmem:[%s2406 + $0x31] sm:$0xff] %vm433, %v2394
      %2412 = vst.msk [vmem:[%s2406 + $0x39] sm:$0xff] %vm433, %v2395
      %2413 = vst.msk [vmem:[%s2406 + $0x49] sm:$0xff] %vm433, %v2396
      %2414 = vst.msk [vmem:[%s2406 + $0x51] sm:$0xff] %vm433, %v2397
      %2415 = vst.msk [vmem:[%s2406 + $0x61] sm:$0xff] %vm433, %v2398
      %2416 = vst.msk [vmem:[%s2406 + $0x69] sm:$0xff] %vm433, %v2399
      %2417 = vst.msk [vmem:[%s2406 + $0x79] sm:$0xff] %vm433, %v2400
      %2418 = vst.msk [vmem:[%s2406 + $0x81] sm:$0xff] %vm433, %v2401
      %2419 = vst.msk [vmem:[%s2406 + $0x91] sm:$0xff] %vm433, %v2402
      %2420 = vst.msk [vmem:[%s2406 + $0x99] sm:$0xff] %vm433, %v2403
      %2421 = vst.msk [vmem:[%s2406 + $0xa9] sm:$0xff] %vm433, %v2404
      %2422 = vst.msk [vmem:[%s2406 + $0xb1] sm:$0xff] %vm433, %v2405
      %v2423 = vld [vmem:[%s3] sm:$0xf]
      %v2424 = vld [vmem:[%s3 + $0x4] sm:$0xf]
      %v2425 = vld [vmem:[%s3 + $0x8] sm:$0xf]
      %v2426 = vld [vmem:[%s3 + $0xc] sm:$0xf]
      %v2427 = vld [vmem:[%s3 + $0x10] sm:$0xf]
      %v2428 = vld [vmem:[%s3 + $0x14] sm:$0xf]
      %v2429 = vld [vmem:[%s3 + $0x18] sm:$0xf]
      %v2430 = vld [vmem:[%s3 + $0x1c] sm:$0xf]
      %v2431 = vld [vmem:[%s3 + $0x20] sm:$0xf]
      %v2432 = vld [vmem:[%s4] sm:$0x1]
      %v2433 = vld [vmem:[#allocation3] sm:$0xff]
      %v2434 = vld [vmem:[#allocation3 + $0x8] sm:$0xff]
      %v2435 = vld [vmem:[#allocation3 + $0x18] sm:$0xff]
      %v2436 = vld [vmem:[#allocation3 + $0x20] sm:$0xff]
      %v2437 = vld [vmem:[#allocation3 + $0x30] sm:$0xff]
      %v2438 = vld [vmem:[#allocation3 + $0x38] sm:$0xff]
      %v2439 = vld [vmem:[#allocation3 + $0x48] sm:$0xff]
      %v2440 = vld [vmem:[#allocation3 + $0x50] sm:$0xff]
      %v2441 = vld [vmem:[#allocation3 + $0x60] sm:$0xff]
      %v2442 = vld [vmem:[#allocation3 + $0x68] sm:$0xff]
      %v2443 = vld [vmem:[#allocation3 + $0x78] sm:$0xff]
      %v2444 = vld [vmem:[#allocation3 + $0x80] sm:$0xff]
      %v2445 = vld [vmem:[#allocation3 + $0x90] sm:$0xff]
      %v2446 = vld [vmem:[#allocation3 + $0x98] sm:$0xff]
      %v2447 = vld [vmem:[#allocation3 + $0xa8] sm:$0xff]
      %v2448 = vld [vmem:[#allocation3 + $0xb0] sm:$0xff]
      %v2449 = vld [vmem:[#allocation3 + $0x1] sm:$0xff]
      %v2450 = vld [vmem:[#allocation3 + $0x9] sm:$0xff]
      %v2451 = vld [vmem:[#allocation3 + $0x19] sm:$0xff]
      %v2452 = vld [vmem:[#allocation3 + $0x21] sm:$0xff]
      %v2453 = vld [vmem:[#allocation3 + $0x31] sm:$0xff]
      %v2454 = vld [vmem:[#allocation3 + $0x39] sm:$0xff]
      %v2455 = vld [vmem:[#allocation3 + $0x49] sm:$0xff]
      %v2456 = vld [vmem:[#allocation3 + $0x51] sm:$0xff]
      %v2457 = vld [vmem:[#allocation3 + $0x61] sm:$0xff]
      %v2458 = vld [vmem:[#allocation3 + $0x69] sm:$0xff]
      %v2459 = vld [vmem:[#allocation3 + $0x79] sm:$0xff]
      %v2460 = vld [vmem:[#allocation3 + $0x81] sm:$0xff]
      %v2461 = vld [vmem:[#allocation3 + $0x91] sm:$0xff]
      %v2462 = vld [vmem:[#allocation3 + $0x99] sm:$0xff]
      %v2463 = vld [vmem:[#allocation3 + $0xa9] sm:$0xff]
      %v2464 = vld [vmem:[#allocation3 + $0xb1] sm:$0xff]
      %v2465 = vld [vmem:[#allocation3 + $0x2] sm:$0xff]
      %v2466 = vld [vmem:[#allocation3 + $0xa] sm:$0xff]
      %v2467 = vld [vmem:[#allocation3 + $0x1a] sm:$0xff]
      %v2468 = vld [vmem:[#allocation3 + $0x22] sm:$0xff]
      %v2469 = vld [vmem:[#allocation3 + $0x32] sm:$0xff]
      %v2470 = vld [vmem:[#allocation3 + $0x3a] sm:$0xff]
      %v2471 = vld [vmem:[#allocation3 + $0x4a] sm:$0xff]
      %v2472 = vld [vmem:[#allocation3 + $0x52] sm:$0xff]
      %v2473 = vld [vmem:[#allocation3 + $0x62] sm:$0xff]
      %v2474 = vld [vmem:[#allocation3 + $0x6a] sm:$0xff]
      %v2475 = vld [vmem:[#allocation3 + $0x7a] sm:$0xff]
      %v2476 = vld [vmem:[#allocation3 + $0x82] sm:$0xff]
      %v2477 = vld [vmem:[#allocation3 + $0x92] sm:$0xff]
      %v2478 = vld [vmem:[#allocation3 + $0x9a] sm:$0xff]
      %v2479 = vld [vmem:[#allocation3 + $0xaa] sm:$0xff]
      %v2480 = vld [vmem:[#allocation3 + $0xb2] sm:$0xff]
      %v2481 = vld [vmem:[%s1457] sm:$0xff]
      %v2482 = vld [vmem:[%s1457 + $0x8] sm:$0xff]
      %v2483 = vld [vmem:[%s1457 + $0x18] sm:$0xff]
      %v2484 = vld [vmem:[%s1457 + $0x20] sm:$0xff]
      %v2485 = vld [vmem:[%s1457 + $0x30] sm:$0xff]
      %v2486 = vld [vmem:[%s1457 + $0x38] sm:$0xff]
      %v2487 = vld [vmem:[%s1457 + $0x48] sm:$0xff]
      %v2488 = vld [vmem:[%s1457 + $0x50] sm:$0xff]
      %v2489 = vld [vmem:[%s1457 + $0x60] sm:$0xff]
      %v2490 = vld [vmem:[%s1457 + $0x68] sm:$0xff]
      %v2491 = vld [vmem:[%s1457 + $0x78] sm:$0xff]
      %v2492 = vld [vmem:[%s1457 + $0x80] sm:$0xff]
      %v2493 = vld [vmem:[%s1457 + $0x90] sm:$0xff]
      %v2494 = vld [vmem:[%s1457 + $0x98] sm:$0xff]
      %v2495 = vld [vmem:[%s1457 + $0xa8] sm:$0xff]
      %v2496 = vld [vmem:[%s1457 + $0xb0] sm:$0xff]
      %v2497 = vld [vmem:[%s1457 + $0x1] sm:$0xff]
      %v2498 = vld [vmem:[%s1457 + $0x9] sm:$0xff]
      %v2499 = vld [vmem:[%s1457 + $0x19] sm:$0xff]
      %v2500 = vld [vmem:[%s1457 + $0x21] sm:$0xff]
      %v2501 = vld [vmem:[%s1457 + $0x31] sm:$0xff]
      %v2502 = vld [vmem:[%s1457 + $0x39] sm:$0xff]
      %v2503 = vld [vmem:[%s1457 + $0x49] sm:$0xff]
      %v2504 = vld [vmem:[%s1457 + $0x51] sm:$0xff]
      %v2505 = vld [vmem:[%s1457 + $0x61] sm:$0xff]
      %v2506 = vld [vmem:[%s1457 + $0x69] sm:$0xff]
      %v2507 = vld [vmem:[%s1457 + $0x79] sm:$0xff]
      %v2508 = vld [vmem:[%s1457 + $0x81] sm:$0xff]
      %v2509 = vld [vmem:[%s1457 + $0x91] sm:$0xff]
      %v2510 = vld [vmem:[%s1457 + $0x99] sm:$0xff]
      %v2511 = vld [vmem:[%s1457 + $0xa9] sm:$0xff]
      %v2512 = vld [vmem:[%s1457 + $0xb1] sm:$0xff]
      %v2513 = vld [vmem:[%s1457 + $0x2] sm:$0xff]
      %v2514 = vld [vmem:[%s1457 + $0xa] sm:$0xff]
      %v2515 = vld [vmem:[%s1457 + $0x1a] sm:$0xff]
      %v2516 = vld [vmem:[%s1457 + $0x22] sm:$0xff]
      %v2517 = vld [vmem:[%s1457 + $0x32] sm:$0xff]
      %v2518 = vld [vmem:[%s1457 + $0x3a] sm:$0xff]
      %v2519 = vld [vmem:[%s1457 + $0x4a] sm:$0xff]
      %v2520 = vld [vmem:[%s1457 + $0x52] sm:$0xff]
      %v2521 = vld [vmem:[%s1457 + $0x62] sm:$0xff]
      %v2522 = vld [vmem:[%s1457 + $0x6a] sm:$0xff]
      %v2523 = vld [vmem:[%s1457 + $0x7a] sm:$0xff]
      %v2524 = vld [vmem:[%s1457 + $0x82] sm:$0xff]
      %v2525 = vld [vmem:[%s1457 + $0x92] sm:$0xff]
      %v2526 = vld [vmem:[%s1457 + $0x9a] sm:$0xff]
      %v2527 = vld [vmem:[%s1457 + $0xaa] sm:$0xff]
      %v2528 = vld [vmem:[%s1457 + $0xb2] sm:$0xff]
      %s2529 = scalar_lea.vmem [#allocation3], 48
      %v2530 = vld [vmem:[%s2529] sm:$0xff]
      %v2531 = vld [vmem:[%s2529 + $0x8] sm:$0xff]
      %v2532 = vld [vmem:[%s2529 + $0x18] sm:$0xff]
      %v2533 = vld [vmem:[%s2529 + $0x20] sm:$0xff]
      %v2534 = vld [vmem:[%s2529 + $0x30] sm:$0xff]
      %v2535 = vld [vmem:[%s2529 + $0x38] sm:$0xff]
      %v2536 = vld [vmem:[%s2529 + $0x48] sm:$0xff]
      %v2537 = vld [vmem:[%s2529 + $0x50] sm:$0xff]
      %v2538 = vld [vmem:[%s2529 + $0x60] sm:$0xff]
      %v2539 = vld [vmem:[%s2529 + $0x68] sm:$0xff]
      %v2540 = vld [vmem:[%s2529 + $0x78] sm:$0xff]
      %v2541 = vld [vmem:[%s2529 + $0x80] sm:$0xff]
      %v2542 = vld [vmem:[%s2529 + $0x90] sm:$0xff]
      %v2543 = vld [vmem:[%s2529 + $0x98] sm:$0xff]
      %v2544 = vld [vmem:[%s2529 + $0xa8] sm:$0xff]
      %v2545 = vld [vmem:[%s2529 + $0xb0] sm:$0xff]
      %v2546 = vld [vmem:[%s2529 + $0x1] sm:$0xff]
      %v2547 = vld [vmem:[%s2529 + $0x9] sm:$0xff]
      %v2548 = vld [vmem:[%s2529 + $0x19] sm:$0xff]
      %v2549 = vld [vmem:[%s2529 + $0x21] sm:$0xff]
      %v2550 = vld [vmem:[%s2529 + $0x31] sm:$0xff]
      %v2551 = vld [vmem:[%s2529 + $0x39] sm:$0xff]
      %v2552 = vld [vmem:[%s2529 + $0x49] sm:$0xff]
      %v2553 = vld [vmem:[%s2529 + $0x51] sm:$0xff]
      %v2554 = vld [vmem:[%s2529 + $0x61] sm:$0xff]
      %v2555 = vld [vmem:[%s2529 + $0x69] sm:$0xff]
      %v2556 = vld [vmem:[%s2529 + $0x79] sm:$0xff]
      %v2557 = vld [vmem:[%s2529 + $0x81] sm:$0xff]
      %v2558 = vld [vmem:[%s2529 + $0x91] sm:$0xff]
      %v2559 = vld [vmem:[%s2529 + $0x99] sm:$0xff]
      %v2560 = vld [vmem:[%s2529 + $0xa9] sm:$0xff]
      %v2561 = vld [vmem:[%s2529 + $0xb1] sm:$0xff]
      %v2562 = vld [vmem:[%s2529 + $0x2] sm:$0xff]
      %v2563 = vld [vmem:[%s2529 + $0xa] sm:$0xff]
      %v2564 = vld [vmem:[%s2529 + $0x1a] sm:$0xff]
      %v2565 = vld [vmem:[%s2529 + $0x22] sm:$0xff]
      %v2566 = vld [vmem:[%s2529 + $0x32] sm:$0xff]
      %v2567 = vld [vmem:[%s2529 + $0x3a] sm:$0xff]
      %v2568 = vld [vmem:[%s2529 + $0x4a] sm:$0xff]
      %v2569 = vld [vmem:[%s2529 + $0x52] sm:$0xff]
      %v2570 = vld [vmem:[%s2529 + $0x62] sm:$0xff]
      %v2571 = vld [vmem:[%s2529 + $0x6a] sm:$0xff]
      %v2572 = vld [vmem:[%s2529 + $0x7a] sm:$0xff]
      %v2573 = vld [vmem:[%s2529 + $0x82] sm:$0xff]
      %v2574 = vld [vmem:[%s2529 + $0x92] sm:$0xff]
      %v2575 = vld [vmem:[%s2529 + $0x9a] sm:$0xff]
      %v2576 = vld [vmem:[%s2529 + $0xaa] sm:$0xff]
      %v2577 = vld [vmem:[%s2529 + $0xb2] sm:$0xff]
      %2594 = vrot.lane.b32.xlu0 %v2449, 8
      %v2595 = vpop.permute.xlu0 %2594
      %2596 = vrot.lane.b32.xlu0 %v2450, 8
      %v2597 = vpop.permute.xlu0 %2596
      %2598 = vrot.lane.b32.xlu0 %v2451, 8
      %v2599 = vpop.permute.xlu0 %2598
      %2600 = vrot.lane.b32.xlu0 %v2452, 8
      %v2601 = vpop.permute.xlu0 %2600
      %2602 = vrot.lane.b32.xlu0 %v2453, 8
      %v2603 = vpop.permute.xlu0 %2602
      %2604 = vrot.lane.b32.xlu0 %v2454, 8
      %v2605 = vpop.permute.xlu0 %2604
      %2606 = vrot.lane.b32.xlu0 %v2455, 8
      %v2607 = vpop.permute.xlu0 %2606
      %2608 = vrot.lane.b32.xlu0 %v2456, 8
      %v2609 = vpop.permute.xlu0 %2608
      %2610 = vrot.lane.b32.xlu0 %v2457, 8
      %v2611 = vpop.permute.xlu0 %2610
      %2612 = vrot.lane.b32.xlu0 %v2458, 8
      %v2613 = vpop.permute.xlu0 %2612
      %2614 = vrot.lane.b32.xlu0 %v2459, 8
      %v2615 = vpop.permute.xlu0 %2614
      %2616 = vrot.lane.b32.xlu0 %v2460, 8
      %v2617 = vpop.permute.xlu0 %2616
      %2618 = vrot.lane.b32.xlu0 %v2461, 8
      %v2619 = vpop.permute.xlu0 %2618
      %2620 = vrot.lane.b32.xlu0 %v2462, 8
      %v2621 = vpop.permute.xlu0 %2620
      %2622 = vrot.lane.b32.xlu0 %v2463, 8
      %v2623 = vpop.permute.xlu0 %2622
      %2624 = vrot.lane.b32.xlu0 %v2464, 8
      %v2625 = vpop.permute.xlu0 %2624
      %2658 = vrot.lane.b32.xlu0 %v2465, 16
      %v2659 = vpop.permute.xlu0 %2658
      %2660 = vrot.lane.b32.xlu0 %v2466, 16
      %v2661 = vpop.permute.xlu0 %2660
      %2662 = vrot.lane.b32.xlu0 %v2467, 16
      %v2663 = vpop.permute.xlu0 %2662
      %2664 = vrot.lane.b32.xlu0 %v2468, 16
      %v2665 = vpop.permute.xlu0 %2664
      %2666 = vrot.lane.b32.xlu0 %v2469, 16
      %v2667 = vpop.permute.xlu0 %2666
      %2668 = vrot.lane.b32.xlu0 %v2470, 16
      %v2669 = vpop.permute.xlu0 %2668
      %2670 = vrot.lane.b32.xlu0 %v2471, 16
      %v2671 = vpop.permute.xlu0 %2670
      %2672 = vrot.lane.b32.xlu0 %v2472, 16
      %v2673 = vpop.permute.xlu0 %2672
      %2674 = vrot.lane.b32.xlu0 %v2473, 16
      %v2675 = vpop.permute.xlu0 %2674
      %2676 = vrot.lane.b32.xlu0 %v2474, 16
      %v2677 = vpop.permute.xlu0 %2676
      %2678 = vrot.lane.b32.xlu0 %v2475, 16
      %v2679 = vpop.permute.xlu0 %2678
      %2680 = vrot.lane.b32.xlu0 %v2476, 16
      %v2681 = vpop.permute.xlu0 %2680
      %2682 = vrot.lane.b32.xlu0 %v2477, 16
      %v2683 = vpop.permute.xlu0 %2682
      %2684 = vrot.lane.b32.xlu0 %v2478, 16
      %v2685 = vpop.permute.xlu0 %2684
      %2686 = vrot.lane.b32.xlu0 %v2479, 16
      %v2687 = vpop.permute.xlu0 %2686
      %2688 = vrot.lane.b32.xlu0 %v2480, 16
      %v2689 = vpop.permute.xlu0 %2688
      %2722 = vrot.lane.b32.xlu0 %v2481, 24
      %v2723 = vpop.permute.xlu0 %2722
      %2724 = vrot.lane.b32.xlu0 %v2482, 24
      %v2725 = vpop.permute.xlu0 %2724
      %2726 = vrot.lane.b32.xlu0 %v2483, 24
      %v2727 = vpop.permute.xlu0 %2726
      %2728 = vrot.lane.b32.xlu0 %v2484, 24
      %v2729 = vpop.permute.xlu0 %2728
      %2730 = vrot.lane.b32.xlu0 %v2485, 24
      %v2731 = vpop.permute.xlu0 %2730
      %2732 = vrot.lane.b32.xlu0 %v2486, 24
      %v2733 = vpop.permute.xlu0 %2732
      %2734 = vrot.lane.b32.xlu0 %v2487, 24
      %v2735 = vpop.permute.xlu0 %2734
      %2736 = vrot.lane.b32.xlu0 %v2488, 24
      %v2737 = vpop.permute.xlu0 %2736
      %2738 = vrot.lane.b32.xlu0 %v2489, 24
      %v2739 = vpop.permute.xlu0 %2738
      %2740 = vrot.lane.b32.xlu0 %v2490, 24
      %v2741 = vpop.permute.xlu0 %2740
      %2742 = vrot.lane.b32.xlu0 %v2491, 24
      %v2743 = vpop.permute.xlu0 %2742
      %2744 = vrot.lane.b32.xlu0 %v2492, 24
      %v2745 = vpop.permute.xlu0 %2744
      %2746 = vrot.lane.b32.xlu0 %v2493, 24
      %v2747 = vpop.permute.xlu0 %2746
      %2748 = vrot.lane.b32.xlu0 %v2494, 24
      %v2749 = vpop.permute.xlu0 %2748
      %2750 = vrot.lane.b32.xlu0 %v2495, 24
      %v2751 = vpop.permute.xlu0 %2750
      %2752 = vrot.lane.b32.xlu0 %v2496, 24
      %v2753 = vpop.permute.xlu0 %2752
      %2786 = vrot.lane.b32.xlu0 %v2497, 32
      %v2787 = vpop.permute.xlu0 %2786
      %2788 = vrot.lane.b32.xlu0 %v2498, 32
      %v2789 = vpop.permute.xlu0 %2788
      %2790 = vrot.lane.b32.xlu0 %v2499, 32
      %v2791 = vpop.permute.xlu0 %2790
      %2792 = vrot.lane.b32.xlu0 %v2500, 32
      %v2793 = vpop.permute.xlu0 %2792
      %2794 = vrot.lane.b32.xlu0 %v2501, 32
      %v2795 = vpop.permute.xlu0 %2794
      %2796 = vrot.lane.b32.xlu0 %v2502, 32
      %v2797 = vpop.permute.xlu0 %2796
      %2798 = vrot.lane.b32.xlu0 %v2503, 32
      %v2799 = vpop.permute.xlu0 %2798
      %2800 = vrot.lane.b32.xlu0 %v2504, 32
      %v2801 = vpop.permute.xlu0 %2800
      %2802 = vrot.lane.b32.xlu0 %v2505, 32
      %v2803 = vpop.permute.xlu0 %2802
      %2804 = vrot.lane.b32.xlu0 %v2506, 32
      %v2805 = vpop.permute.xlu0 %2804
      %2806 = vrot.lane.b32.xlu0 %v2507, 32
      %v2807 = vpop.permute.xlu0 %2806
      %2808 = vrot.lane.b32.xlu0 %v2508, 32
      %v2809 = vpop.permute.xlu0 %2808
      %2810 = vrot.lane.b32.xlu0 %v2509, 32
      %v2811 = vpop.permute.xlu0 %2810
      %2812 = vrot.lane.b32.xlu0 %v2510, 32
      %v2813 = vpop.permute.xlu0 %2812
      %2814 = vrot.lane.b32.xlu0 %v2511, 32
      %v2815 = vpop.permute.xlu0 %2814
      %2816 = vrot.lane.b32.xlu0 %v2512, 32
      %v2817 = vpop.permute.xlu0 %2816
      %2850 = vrot.lane.b32.xlu0 %v2513, 40
      %v2851 = vpop.permute.xlu0 %2850
      %2852 = vrot.lane.b32.xlu0 %v2514, 40
      %v2853 = vpop.permute.xlu0 %2852
      %2854 = vrot.lane.b32.xlu0 %v2515, 40
      %v2855 = vpop.permute.xlu0 %2854
      %2856 = vrot.lane.b32.xlu0 %v2516, 40
      %v2857 = vpop.permute.xlu0 %2856
      %2858 = vrot.lane.b32.xlu0 %v2517, 40
      %v2859 = vpop.permute.xlu0 %2858
      %2860 = vrot.lane.b32.xlu0 %v2518, 40
      %v2861 = vpop.permute.xlu0 %2860
      %2862 = vrot.lane.b32.xlu0 %v2519, 40
      %v2863 = vpop.permute.xlu0 %2862
      %2864 = vrot.lane.b32.xlu0 %v2520, 40
      %v2865 = vpop.permute.xlu0 %2864
      %2866 = vrot.lane.b32.xlu0 %v2521, 40
      %v2867 = vpop.permute.xlu0 %2866
      %2868 = vrot.lane.b32.xlu0 %v2522, 40
      %v2869 = vpop.permute.xlu0 %2868
      %2870 = vrot.lane.b32.xlu0 %v2523, 40
      %v2871 = vpop.permute.xlu0 %2870
      %2872 = vrot.lane.b32.xlu0 %v2524, 40
      %v2873 = vpop.permute.xlu0 %2872
      %2874 = vrot.lane.b32.xlu0 %v2525, 40
      %v2875 = vpop.permute.xlu0 %2874
      %2876 = vrot.lane.b32.xlu0 %v2526, 40
      %v2877 = vpop.permute.xlu0 %2876
      %2878 = vrot.lane.b32.xlu0 %v2527, 40
      %v2879 = vpop.permute.xlu0 %2878
      %2880 = vrot.lane.b32.xlu0 %v2528, 40
      %v2881 = vpop.permute.xlu0 %2880
      %2914 = vrot.lane.b32.xlu0 %v2530, 48
      %v2915 = vpop.permute.xlu0 %2914
      %2916 = vrot.lane.b32.xlu0 %v2531, 48
      %v2917 = vpop.permute.xlu0 %2916
      %2918 = vrot.lane.b32.xlu0 %v2532, 48
      %v2919 = vpop.permute.xlu0 %2918
      %2920 = vrot.lane.b32.xlu0 %v2533, 48
      %v2921 = vpop.permute.xlu0 %2920
      %2922 = vrot.lane.b32.xlu0 %v2534, 48
      %v2923 = vpop.permute.xlu0 %2922
      %2924 = vrot.lane.b32.xlu0 %v2535, 48
      %v2925 = vpop.permute.xlu0 %2924
      %2926 = vrot.lane.b32.xlu0 %v2536, 48
      %v2927 = vpop.permute.xlu0 %2926
      %2928 = vrot.lane.b32.xlu0 %v2537, 48
      %v2929 = vpop.permute.xlu0 %2928
      %2930 = vrot.lane.b32.xlu0 %v2538, 48
      %v2931 = vpop.permute.xlu0 %2930
      %2932 = vrot.lane.b32.xlu0 %v2539, 48
      %v2933 = vpop.permute.xlu0 %2932
      %2934 = vrot.lane.b32.xlu0 %v2540, 48
      %v2935 = vpop.permute.xlu0 %2934
      %2936 = vrot.lane.b32.xlu0 %v2541, 48
      %v2937 = vpop.permute.xlu0 %2936
      %2938 = vrot.lane.b32.xlu0 %v2542, 48
      %v2939 = vpop.permute.xlu0 %2938
      %2940 = vrot.lane.b32.xlu0 %v2543, 48
      %v2941 = vpop.permute.xlu0 %2940
      %2942 = vrot.lane.b32.xlu0 %v2544, 48
      %v2943 = vpop.permute.xlu0 %2942
      %2944 = vrot.lane.b32.xlu0 %v2545, 48
      %v2945 = vpop.permute.xlu0 %2944
      %2978 = vrot.lane.b32.xlu0 %v2546, 56
      %v2979 = vpop.permute.xlu0 %2978
      %2980 = vrot.lane.b32.xlu0 %v2547, 56
      %v2981 = vpop.permute.xlu0 %2980
      %2982 = vrot.lane.b32.xlu0 %v2548, 56
      %v2983 = vpop.permute.xlu0 %2982
      %2984 = vrot.lane.b32.xlu0 %v2549, 56
      %v2985 = vpop.permute.xlu0 %2984
      %2986 = vrot.lane.b32.xlu0 %v2550, 56
      %v2987 = vpop.permute.xlu0 %2986
      %2988 = vrot.lane.b32.xlu0 %v2551, 56
      %v2989 = vpop.permute.xlu0 %2988
      %2990 = vrot.lane.b32.xlu0 %v2552, 56
      %v2991 = vpop.permute.xlu0 %2990
      %2992 = vrot.lane.b32.xlu0 %v2553, 56
      %v2993 = vpop.permute.xlu0 %2992
      %2994 = vrot.lane.b32.xlu0 %v2554, 56
      %v2995 = vpop.permute.xlu0 %2994
      %2996 = vrot.lane.b32.xlu0 %v2555, 56
      %v2997 = vpop.permute.xlu0 %2996
      %2998 = vrot.lane.b32.xlu0 %v2556, 56
      %v2999 = vpop.permute.xlu0 %2998
      %3000 = vrot.lane.b32.xlu0 %v2557, 56
      %v3001 = vpop.permute.xlu0 %3000
      %3002 = vrot.lane.b32.xlu0 %v2558, 56
      %v3003 = vpop.permute.xlu0 %3002
      %3004 = vrot.lane.b32.xlu0 %v2559, 56
      %v3005 = vpop.permute.xlu0 %3004
      %3006 = vrot.lane.b32.xlu0 %v2560, 56
      %v3007 = vpop.permute.xlu0 %3006
      %3008 = vrot.lane.b32.xlu0 %v2561, 56
      %v3009 = vpop.permute.xlu0 %3008
      %3042 = vrot.lane.b32.xlu0 %v2562, 64
      %v3043 = vpop.permute.xlu0 %3042
      %3044 = vrot.lane.b32.xlu0 %v2563, 64
      %v3045 = vpop.permute.xlu0 %3044
      %3046 = vrot.lane.b32.xlu0 %v2564, 64
      %v3047 = vpop.permute.xlu0 %3046
      %3048 = vrot.lane.b32.xlu0 %v2565, 64
      %v3049 = vpop.permute.xlu0 %3048
      %3050 = vrot.lane.b32.xlu0 %v2566, 64
      %v3051 = vpop.permute.xlu0 %3050
      %3052 = vrot.lane.b32.xlu0 %v2567, 64
      %v3053 = vpop.permute.xlu0 %3052
      %3054 = vrot.lane.b32.xlu0 %v2568, 64
      %v3055 = vpop.permute.xlu0 %3054
      %3056 = vrot.lane.b32.xlu0 %v2569, 64
      %v3057 = vpop.permute.xlu0 %3056
      %3058 = vrot.lane.b32.xlu0 %v2570, 64
      %v3059 = vpop.permute.xlu0 %3058
      %3060 = vrot.lane.b32.xlu0 %v2571, 64
      %v3061 = vpop.permute.xlu0 %3060
      %3062 = vrot.lane.b32.xlu0 %v2572, 64
      %v3063 = vpop.permute.xlu0 %3062
      %3064 = vrot.lane.b32.xlu0 %v2573, 64
      %v3065 = vpop.permute.xlu0 %3064
      %3066 = vrot.lane.b32.xlu0 %v2574, 64
      %v3067 = vpop.permute.xlu0 %3066
      %3068 = vrot.lane.b32.xlu0 %v2575, 64
      %v3069 = vpop.permute.xlu0 %3068
      %3070 = vrot.lane.b32.xlu0 %v2576, 64
      %v3071 = vpop.permute.xlu0 %3070
      %3072 = vrot.lane.b32.xlu0 %v2577, 64
      %v3073 = vpop.permute.xlu0 %3072
      %v3090 = vsel %vm433, %v2433, %v2595
      %v3091 = vsel %vm433, %v2434, %v2597
      %v3092 = vsel %vm433, %v2435, %v2599
      %v3093 = vsel %vm433, %v2436, %v2601
      %v3094 = vsel %vm433, %v2437, %v2603
      %v3095 = vsel %vm433, %v2438, %v2605
      %v3096 = vsel %vm433, %v2439, %v2607
      %v3097 = vsel %vm433, %v2440, %v2609
      %v3098 = vsel %vm433, %v2441, %v2611
      %v3099 = vsel %vm433, %v2442, %v2613
      %v3100 = vsel %vm433, %v2443, %v2615
      %v3101 = vsel %vm433, %v2444, %v2617
      %v3102 = vsel %vm433, %v2445, %v2619
      %v3103 = vsel %vm433, %v2446, %v2621
      %v3104 = vsel %vm433, %v2447, %v2623
      %v3105 = vsel %vm433, %v2448, %v2625
      %v3106 = vsel %vm1201, %v3090, %v2659
      %v3107 = vsel %vm1201, %v3091, %v2661
      %v3108 = vsel %vm1201, %v3092, %v2663
      %v3109 = vsel %vm1201, %v3093, %v2665
      %v3110 = vsel %vm1201, %v3094, %v2667
      %v3111 = vsel %vm1201, %v3095, %v2669
      %v3112 = vsel %vm1201, %v3096, %v2671
      %v3113 = vsel %vm1201, %v3097, %v2673
      %v3114 = vsel %vm1201, %v3098, %v2675
      %v3115 = vsel %vm1201, %v3099, %v2677
      %v3116 = vsel %vm1201, %v3100, %v2679
      %v3117 = vsel %vm1201, %v3101, %v2681
      %v3118 = vsel %vm1201, %v3102, %v2683
      %v3119 = vsel %vm1201, %v3103, %v2685
      %v3120 = vsel %vm1201, %v3104, %v2687
      %v3121 = vsel %vm1201, %v3105, %v2689
      %v3122 = vsel %vm1235, %v3106, %v2723
      %v3123 = vsel %vm1235, %v3107, %v2725
      %v3124 = vsel %vm1235, %v3108, %v2727
      %v3125 = vsel %vm1235, %v3109, %v2729
      %v3126 = vsel %vm1235, %v3110, %v2731
      %v3127 = vsel %vm1235, %v3111, %v2733
      %v3128 = vsel %vm1235, %v3112, %v2735
      %v3129 = vsel %vm1235, %v3113, %v2737
      %v3130 = vsel %vm1235, %v3114, %v2739
      %v3131 = vsel %vm1235, %v3115, %v2741
      %v3132 = vsel %vm1235, %v3116, %v2743
      %v3133 = vsel %vm1235, %v3117, %v2745
      %v3134 = vsel %vm1235, %v3118, %v2747
      %v3135 = vsel %vm1235, %v3119, %v2749
      %v3136 = vsel %vm1235, %v3120, %v2751
      %v3137 = vsel %vm1235, %v3121, %v2753
      %v3138 = vsel %vm1269, %v3122, %v2787
      %v3139 = vsel %vm1269, %v3123, %v2789
      %v3140 = vsel %vm1269, %v3124, %v2791
      %v3141 = vsel %vm1269, %v3125, %v2793
      %v3142 = vsel %vm1269, %v3126, %v2795
      %v3143 = vsel %vm1269, %v3127, %v2797
      %v3144 = vsel %vm1269, %v3128, %v2799
      %v3145 = vsel %vm1269, %v3129, %v2801
      %v3146 = vsel %vm1269, %v3130, %v2803
      %v3147 = vsel %vm1269, %v3131, %v2805
      %v3148 = vsel %vm1269, %v3132, %v2807
      %v3149 = vsel %vm1269, %v3133, %v2809
      %v3150 = vsel %vm1269, %v3134, %v2811
      %v3151 = vsel %vm1269, %v3135, %v2813
      %v3152 = vsel %vm1269, %v3136, %v2815
      %v3153 = vsel %vm1269, %v3137, %v2817
      %vm3154 = vcmask 326656
      %v3155 = vsel %vm3154, %v3138, %v2851
      %v3156 = vsel %vm3154, %v3139, %v2853
      %v3157 = vsel %vm3154, %v3140, %v2855
      %v3158 = vsel %vm3154, %v3141, %v2857
      %v3159 = vsel %vm3154, %v3142, %v2859
      %v3160 = vsel %vm3154, %v3143, %v2861
      %v3161 = vsel %vm3154, %v3144, %v2863
      %v3162 = vsel %vm3154, %v3145, %v2865
      %v3163 = vsel %vm3154, %v3146, %v2867
      %v3164 = vsel %vm3154, %v3147, %v2869
      %v3165 = vsel %vm3154, %v3148, %v2871
      %v3166 = vsel %vm3154, %v3149, %v2873
      %v3167 = vsel %vm3154, %v3150, %v2875
      %v3168 = vsel %vm3154, %v3151, %v2877
      %v3169 = vsel %vm3154, %v3152, %v2879
      %v3170 = vsel %vm3154, %v3153, %v2881
      %vm3171 = vcmask 392192
      %v3172 = vsel %vm3171, %v3155, %v2915
      %v3173 = vsel %vm3171, %v3156, %v2917
      %v3174 = vsel %vm3171, %v3157, %v2919
      %v3175 = vsel %vm3171, %v3158, %v2921
      %v3176 = vsel %vm3171, %v3159, %v2923
      %v3177 = vsel %vm3171, %v3160, %v2925
      %v3178 = vsel %vm3171, %v3161, %v2927
      %v3179 = vsel %vm3171, %v3162, %v2929
      %v3180 = vsel %vm3171, %v3163, %v2931
      %v3181 = vsel %vm3171, %v3164, %v2933
      %v3182 = vsel %vm3171, %v3165, %v2935
      %v3183 = vsel %vm3171, %v3166, %v2937
      %v3184 = vsel %vm3171, %v3167, %v2939
      %v3185 = vsel %vm3171, %v3168, %v2941
      %v3186 = vsel %vm3171, %v3169, %v2943
      %v3187 = vsel %vm3171, %v3170, %v2945
      %vm3188 = vcmask 457728
      %v3189 = vsel %vm3188, %v3172, %v2979
      %v3190 = vsel %vm3188, %v3173, %v2981
      %v3191 = vsel %vm3188, %v3174, %v2983
      %v3192 = vsel %vm3188, %v3175, %v2985
      %v3193 = vsel %vm3188, %v3176, %v2987
      %v3194 = vsel %vm3188, %v3177, %v2989
      %v3195 = vsel %vm3188, %v3178, %v2991
      %v3196 = vsel %vm3188, %v3179, %v2993
      %v3197 = vsel %vm3188, %v3180, %v2995
      %v3198 = vsel %vm3188, %v3181, %v2997
      %v3199 = vsel %vm3188, %v3182, %v2999
      %v3200 = vsel %vm3188, %v3183, %v3001
      %v3201 = vsel %vm3188, %v3184, %v3003
      %v3202 = vsel %vm3188, %v3185, %v3005
      %v3203 = vsel %vm3188, %v3186, %v3007
      %v3204 = vsel %vm3188, %v3187, %v3009
      %vm3205 = vcmask 523264
      %v3206 = vsel %vm3205, %v3189, %v3043
      %v3207 = vsel %vm3205, %v3190, %v3045
      %v3208 = vsel %vm3205, %v3191, %v3047
      %v3209 = vsel %vm3205, %v3192, %v3049
      %v3210 = vsel %vm3205, %v3193, %v3051
      %v3211 = vsel %vm3205, %v3194, %v3053
      %v3212 = vsel %vm3205, %v3195, %v3055
      %v3213 = vsel %vm3205, %v3196, %v3057
      %v3214 = vsel %vm3205, %v3197, %v3059
      %v3215 = vsel %vm3205, %v3198, %v3061
      %v3216 = vsel %vm3205, %v3199, %v3063
      %v3217 = vsel %vm3205, %v3200, %v3065
      %v3218 = vsel %vm3205, %v3201, %v3067
      %v3219 = vsel %vm3205, %v3202, %v3069
      %v3220 = vsel %vm3205, %v3203, %v3071
      %v3221 = vsel %vm3205, %v3204, %v3073
      %v3222 = vpack.c.bf16 %v3207, %v3206
      %v3223 = vpack.c.bf16 %v3209, %v3208
      %v3224 = vpack.c.bf16 %v3211, %v3210
      %v3225 = vpack.c.bf16 %v3213, %v3212
      %v3226 = vpack.c.bf16 %v3215, %v3214
      %v3227 = vpack.c.bf16 %v3217, %v3216
      %v3228 = vpack.c.bf16 %v3219, %v3218
      %v3229 = vpack.c.bf16 %v3221, %v3220
      %v3231 = vlaneseq
      %v3232 = vshrl.u32 %v3231, 7
      %v3233 = vsub.s32 0, %v3232
      %v3234 = vrot.slane %v2432, %v3233
      %v3245 = vunpack.c.l.b16 %v2423
      %v3246 = vunpack.c.l.b16 %v2424
      %v3247 = vunpack.c.l.b16 %v2425
      %v3248 = vunpack.c.l.b16 %v2426
      %v3249 = vunpack.c.l.b16 %v2427
      %v3250 = vunpack.c.l.b16 %v2428
      %v3251 = vunpack.c.l.b16 %v2429
      %v3252 = vunpack.c.l.b16 %v2430
      %v3253 = vunpack.c.l.b16 %v2431
      %v3254 = vpack.c.b16 %v3246, %v3245
      %v3255 = vpack.c.b16 %v3248, %v3247
      %v3256 = vpack.c.b16 %v3250, %v3249
      %v3257 = vpack.c.b16 %v3252, %v3251
      %v3258 = vpack.c.b16 %v3253, %v3253
      %vm3263 = vcmask 588800
      %v3265 = vsel %vm3263, %v3222, 0
      %v3268 = vsel %vm3263, %v3223, 0
      %v3271 = vsel %vm3263, %v3224, 0
      %v3274 = vsel %vm3263, %v3225, 0
      %v3277 = vsel %vm3263, %v3226, 0
      %v3280 = vsel %vm3263, %v3227, 0
      %v3283 = vsel %vm3263, %v3228, 0
      %v3286 = vsel %vm3263, %v3229, 0
      %vm3288 = vcmask 1043456
      %v3290 = vsel %vm3288, %v3258, 0
      %3292 = vmatprep.subr.bf16.mxu0 0
      %3293 = vmatpush1.bf16.msra.mxu0 %v3254
      %3294 = vmatprep.subr.bf16.mxu0 0
      %3295 = vmatpush1.bf16.msra.mxu0 %v3255
      %3296 = vmatprep.subr.bf16.mxu0 0
      %3297 = vmatpush1.bf16.msra.mxu0 %v3256
      %3298 = vmatprep.subr.bf16.mxu0 0
      %3299 = vmatpush1.bf16.msra.mxu0 %v3257
      %3300 = vmatprep.subr.bf16.mxu0 0
      %3301 = vmatpush1.bf16.msra.mxu0 %v3290
      %3302 = vmatprep.subr.bf16.mxu0 0
      %3303 = vmatpush1.bf16.msra.mxu0 0
      %3304 = vmatprep.subr.bf16.mxu0 0
      %3305 = vmatpush1.bf16.msra.mxu0 0
      %3306 = vmatprep.subr.bf16.mxu0 0
      %3307 = vmatpush1.bf16.msra.mxu0 0
      %3308 = vmatprep.subr.bf16.mxu0 0
      %3309 = vmatpush1.bf16.msra.mxu0 0
      %3310 = vmatprep.subr.bf16.mxu0 0
      %3311 = vmatpush1.bf16.msra.mxu0 0
      %3312 = vmatprep.subr.bf16.mxu0 0
      %3313 = vmatpush1.bf16.msra.mxu0 0
      %3314 = vmatprep.subr.bf16.mxu0 0
      %3315 = vmatpush1.bf16.msra.mxu0 0
      %3316 = vmatprep.subr.bf16.mxu0 0
      %3317 = vmatpush1.bf16.msra.mxu0 0
      %3318 = vmatprep.subr.bf16.mxu0 0
      %3319 = vmatpush1.bf16.msra.mxu0 0
      %3320 = vmatprep.subr.bf16.mxu0 0
      %3321 = vmatpush1.bf16.msra.mxu0 0
      %3322 = vmatprep.subr.bf16.mxu0 0
      %3323 = vmatpush1.bf16.msra.mxu0 0
      %3324 = vmatprep.mubr.bf16.mxu0 0
      %3325 = vmatmul.mubr.bf16.gmra.mrb[0].mxu0 %v3265
      %v3326 = vpop.f32.mrb[0].mxu0
      %v3327 = vadd.f32 %v3234, %v3326
      %v3328 = vpop.f32.mrb[0].mxu0
      %v3329 = vpop.f32.mrb[0].mxu0
      %v3330 = vadd.f32 %v3234, %v3329
      %v3331 = vpop.f32.mrb[0].mxu0
      %3332 = vmatprep.mubr.bf16.mxu0 0
      %3333 = vmatmul.mubr.bf16.gmra.mrb[0].mxu0 %v3268
      %v3334 = vpop.f32.mrb[0].mxu0
      %v3335 = vadd.f32 %v3234, %v3334
      %v3336 = vpop.f32.mrb[0].mxu0
      %v3337 = vpop.f32.mrb[0].mxu0
      %v3338 = vadd.f32 %v3234, %v3337
      %v3339 = vpop.f32.mrb[0].mxu0
      %3340 = vmatprep.mubr.bf16.mxu0 0
      %3341 = vmatmul.mubr.bf16.gmra.mrb[0].mxu0 %v3271
      %v3342 = vpop.f32.mrb[0].mxu0
      %v3343 = vadd.f32 %v3234, %v3342
      %v3344 = vpop.f32.mrb[0].mxu0
      %v3345 = vpop.f32.mrb[0].mxu0
      %v3346 = vadd.f32 %v3234, %v3345
      %v3347 = vpop.f32.mrb[0].mxu0
      %3348 = vmatprep.mubr.bf16.mxu0 0
      %3349 = vmatmul.mubr.bf16.gmra.mrb[0].mxu0 %v3274
      %v3350 = vpop.f32.mrb[0].mxu0
      %v3351 = vadd.f32 %v3234, %v3350
      %v3352 = vpop.f32.mrb[0].mxu0
      %v3353 = vpop.f32.mrb[0].mxu0
      %v3354 = vadd.f32 %v3234, %v3353
      %v3355 = vpop.f32.mrb[0].mxu0
      %3356 = vmatprep.mubr.bf16.mxu0 0
      %3357 = vmatmul.mubr.bf16.gmra.mrb[0].mxu0 %v3277
      %v3358 = vpop.f32.mrb[0].mxu0
      %v3359 = vadd.f32 %v3234, %v3358
      %v3360 = vpop.f32.mrb[0].mxu0
      %v3361 = vpop.f32.mrb[0].mxu0
      %v3362 = vadd.f32 %v3234, %v3361
      %v3363 = vpop.f32.mrb[0].mxu0
      %3364 = vmatprep.mubr.bf16.mxu0 0
      %3365 = vmatmul.mubr.bf16.gmra.mrb[0].mxu0 %v3280
      %v3366 = vpop.f32.mrb[0].mxu0
      %v3367 = vadd.f32 %v3234, %v3366
      %v3368 = vpop.f32.mrb[0].mxu0
      %v3369 = vpop.f32.mrb[0].mxu0
      %v3370 = vadd.f32 %v3234, %v3369
      %v3371 = vpop.f32.mrb[0].mxu0
      %3372 = vmatprep.mubr.bf16.mxu0 0
      %3373 = vmatmul.mubr.bf16.gmra.mrb[0].mxu0 %v3283
      %v3374 = vpop.f32.mrb[0].mxu0
      %v3375 = vadd.f32 %v3234, %v3374
      %v3376 = vpop.f32.mrb[0].mxu0
      %v3377 = vpop.f32.mrb[0].mxu0
      %v3378 = vadd.f32 %v3234, %v3377
      %v3379 = vpop.f32.mrb[0].mxu0
      %3380 = vmatprep.mubr.bf16.mxu0 0
      %3381 = vmatmul.mubr.bf16.gmra.mrb[0].mxu0 %v3286
      %v3382 = vpop.f32.mrb[0].mxu0
      %v3383 = vadd.f32 %v3234, %v3382
      %v3384 = vpop.f32.mrb[0].mxu0
      %v3385 = vpop.f32.mrb[0].mxu0
      %v3386 = vadd.f32 %v3234, %v3385
      %v3387 = vpop.f32.mrb[0].mxu0
      %3388 = vdwg.mxu0
      %3389 = vst.msk [vmem:[#allocation4] sm:$0xff] %vm433, %v3327
      %3390 = vst.msk [vmem:[#allocation4 + $0x8] sm:$0xff] %vm433, %v3330
      %3391 = vst.msk [vmem:[#allocation4 + $0x10] sm:$0xff] %vm433, %v3335
      %3392 = vst.msk [vmem:[#allocation4 + $0x18] sm:$0xff] %vm433, %v3338
      %3393 = vst.msk [vmem:[#allocation4 + $0x20] sm:$0xff] %vm433, %v3343
      %3394 = vst.msk [vmem:[#allocation4 + $0x28] sm:$0xff] %vm433, %v3346
      %3395 = vst.msk [vmem:[#allocation4 + $0x30] sm:$0xff] %vm433, %v3351
      %3396 = vst.msk [vmem:[#allocation4 + $0x38] sm:$0xff] %vm433, %v3354
      %3397 = vst.msk [vmem:[#allocation4 + $0x40] sm:$0xff] %vm433, %v3359
      %3398 = vst.msk [vmem:[#allocation4 + $0x48] sm:$0xff] %vm433, %v3362
      %3399 = vst.msk [vmem:[#allocation4 + $0x50] sm:$0xff] %vm433, %v3367
      %3400 = vst.msk [vmem:[#allocation4 + $0x58] sm:$0xff] %vm433, %v3370
      %3401 = vst.msk [vmem:[#allocation4 + $0x60] sm:$0xff] %vm433, %v3375
      %3402 = vst.msk [vmem:[#allocation4 + $0x68] sm:$0xff] %vm433, %v3378
      %3403 = vst.msk [vmem:[#allocation4 + $0x70] sm:$0xff] %vm433, %v3383
      %3404 = vst.msk [vmem:[#allocation4 + $0x78] sm:$0xff] %vm433, %v3386
      %s3405 = scalar_lea.vmem [#allocation3], 192
      %v3406 = vld [vmem:[%s3405] sm:$0xff]
      %v3407 = vld [vmem:[%s3405 + $0x8] sm:$0xff]
      %v3408 = vld [vmem:[%s3405 + $0x18] sm:$0xff]
      %v3409 = vld [vmem:[%s3405 + $0x20] sm:$0xff]
      %v3410 = vld [vmem:[%s3405 + $0x30] sm:$0xff]
      %v3411 = vld [vmem:[%s3405 + $0x38] sm:$0xff]
      %v3412 = vld [vmem:[%s3405 + $0x48] sm:$0xff]
      %v3413 = vld [vmem:[%s3405 + $0x50] sm:$0xff]
      %v3414 = vld [vmem:[%s3405 + $0x60] sm:$0xff]
      %v3415 = vld [vmem:[%s3405 + $0x68] sm:$0xff]
      %v3416 = vld [vmem:[%s3405 + $0x78] sm:$0xff]
      %v3417 = vld [vmem:[%s3405 + $0x80] sm:$0xff]
      %v3418 = vld [vmem:[%s3405 + $0x90] sm:$0xff]
      %v3419 = vld [vmem:[%s3405 + $0x98] sm:$0xff]
      %v3420 = vld [vmem:[%s3405 + $0xa8] sm:$0xff]
      %v3421 = vld [vmem:[%s3405 + $0xb0] sm:$0xff]
      %v3422 = vld [vmem:[%s3405 + $0x1] sm:$0xff]
      %v3423 = vld [vmem:[%s3405 + $0x9] sm:$0xff]
      %v3424 = vld [vmem:[%s3405 + $0x19] sm:$0xff]
      %v3425 = vld [vmem:[%s3405 + $0x21] sm:$0xff]
      %v3426 = vld [vmem:[%s3405 + $0x31] sm:$0xff]
      %v3427 = vld [vmem:[%s3405 + $0x39] sm:$0xff]
      %v3428 = vld [vmem:[%s3405 + $0x49] sm:$0xff]
      %v3429 = vld [vmem:[%s3405 + $0x51] sm:$0xff]
      %v3430 = vld [vmem:[%s3405 + $0x61] sm:$0xff]
      %v3431 = vld [vmem:[%s3405 + $0x69] sm:$0xff]
      %v3432 = vld [vmem:[%s3405 + $0x79] sm:$0xff]
      %v3433 = vld [vmem:[%s3405 + $0x81] sm:$0xff]
      %v3434 = vld [vmem:[%s3405 + $0x91] sm:$0xff]
      %v3435 = vld [vmem:[%s3405 + $0x99] sm:$0xff]
      %v3436 = vld [vmem:[%s3405 + $0xa9] sm:$0xff]
      %v3437 = vld [vmem:[%s3405 + $0xb1] sm:$0xff]
      %v3438 = vld [vmem:[%s3405 + $0x2] sm:$0xff]
      %v3439 = vld [vmem:[%s3405 + $0xa] sm:$0xff]
      %v3440 = vld [vmem:[%s3405 + $0x1a] sm:$0xff]
      %v3441 = vld [vmem:[%s3405 + $0x22] sm:$0xff]
      %v3442 = vld [vmem:[%s3405 + $0x32] sm:$0xff]
      %v3443 = vld [vmem:[%s3405 + $0x3a] sm:$0xff]
      %v3444 = vld [vmem:[%s3405 + $0x4a] sm:$0xff]
      %v3445 = vld [vmem:[%s3405 + $0x52] sm:$0xff]
      %v3446 = vld [vmem:[%s3405 + $0x62] sm:$0xff]
      %v3447 = vld [vmem:[%s3405 + $0x6a] sm:$0xff]
      %v3448 = vld [vmem:[%s3405 + $0x7a] sm:$0xff]
      %v3449 = vld [vmem:[%s3405 + $0x82] sm:$0xff]
      %v3450 = vld [vmem:[%s3405 + $0x92] sm:$0xff]
      %v3451 = vld [vmem:[%s3405 + $0x9a] sm:$0xff]
      %v3452 = vld [vmem:[%s3405 + $0xaa] sm:$0xff]
      %v3453 = vld [vmem:[%s3405 + $0xb2] sm:$0xff]
      %v3454 = vld [vmem:[%s2406] sm:$0xff]
      %v3455 = vld [vmem:[%s2406 + $0x8] sm:$0xff]
      %v3456 = vld [vmem:[%s2406 + $0x18] sm:$0xff]
      %v3457 = vld [vmem:[%s2406 + $0x20] sm:$0xff]
      %v3458 = vld [vmem:[%s2406 + $0x30] sm:$0xff]
      %v3459 = vld [vmem:[%s2406 + $0x38] sm:$0xff]
      %v3460 = vld [vmem:[%s2406 + $0x48] sm:$0xff]
      %v3461 = vld [vmem:[%s2406 + $0x50] sm:$0xff]
      %v3462 = vld [vmem:[%s2406 + $0x60] sm:$0xff]
      %v3463 = vld [vmem:[%s2406 + $0x68] sm:$0xff]
      %v3464 = vld [vmem:[%s2406 + $0x78] sm:$0xff]
      %v3465 = vld [vmem:[%s2406 + $0x80] sm:$0xff]
      %v3466 = vld [vmem:[%s2406 + $0x90] sm:$0xff]
      %v3467 = vld [vmem:[%s2406 + $0x98] sm:$0xff]
      %v3468 = vld [vmem:[%s2406 + $0xa8] sm:$0xff]
      %v3469 = vld [vmem:[%s2406 + $0xb0] sm:$0xff]
      %v3470 = vld [vmem:[%s2406 + $0x1] sm:$0xff]
      %v3471 = vld [vmem:[%s2406 + $0x9] sm:$0xff]
      %v3472 = vld [vmem:[%s2406 + $0x19] sm:$0xff]
      %v3473 = vld [vmem:[%s2406 + $0x21] sm:$0xff]
      %v3474 = vld [vmem:[%s2406 + $0x31] sm:$0xff]
      %v3475 = vld [vmem:[%s2406 + $0x39] sm:$0xff]
      %v3476 = vld [vmem:[%s2406 + $0x49] sm:$0xff]
      %v3477 = vld [vmem:[%s2406 + $0x51] sm:$0xff]
      %v3478 = vld [vmem:[%s2406 + $0x61] sm:$0xff]
      %v3479 = vld [vmem:[%s2406 + $0x69] sm:$0xff]
      %v3480 = vld [vmem:[%s2406 + $0x79] sm:$0xff]
      %v3481 = vld [vmem:[%s2406 + $0x81] sm:$0xff]
      %v3482 = vld [vmem:[%s2406 + $0x91] sm:$0xff]
      %v3483 = vld [vmem:[%s2406 + $0x99] sm:$0xff]
      %v3484 = vld [vmem:[%s2406 + $0xa9] sm:$0xff]
      %v3485 = vld [vmem:[%s2406 + $0xb1] sm:$0xff]
      %v3486 = vld [vmem:[%s2406 + $0x2] sm:$0xff]
      %v3487 = vld [vmem:[%s2406 + $0xa] sm:$0xff]
      %v3488 = vld [vmem:[%s2406 + $0x1a] sm:$0xff]
      %v3489 = vld [vmem:[%s2406 + $0x22] sm:$0xff]
      %v3490 = vld [vmem:[%s2406 + $0x32] sm:$0xff]
      %v3491 = vld [vmem:[%s2406 + $0x3a] sm:$0xff]
      %v3492 = vld [vmem:[%s2406 + $0x4a] sm:$0xff]
      %v3493 = vld [vmem:[%s2406 + $0x52] sm:$0xff]
      %v3494 = vld [vmem:[%s2406 + $0x62] sm:$0xff]
      %v3495 = vld [vmem:[%s2406 + $0x6a] sm:$0xff]
      %v3496 = vld [vmem:[%s2406 + $0x7a] sm:$0xff]
      %v3497 = vld [vmem:[%s2406 + $0x82] sm:$0xff]
      %v3498 = vld [vmem:[%s2406 + $0x92] sm:$0xff]
      %v3499 = vld [vmem:[%s2406 + $0x9a] sm:$0xff]
      %v3500 = vld [vmem:[%s2406 + $0xaa] sm:$0xff]
      %v3501 = vld [vmem:[%s2406 + $0xb2] sm:$0xff]
      %s3502 = scalar_lea.vmem [#allocation3], 240
      %v3503 = vld [vmem:[%s3502] sm:$0xff]
      %v3504 = vld [vmem:[%s3502 + $0x8] sm:$0xff]
      %v3505 = vld [vmem:[%s3502 + $0x18] sm:$0xff]
      %v3506 = vld [vmem:[%s3502 + $0x20] sm:$0xff]
      %v3507 = vld [vmem:[%s3502 + $0x30] sm:$0xff]
      %v3508 = vld [vmem:[%s3502 + $0x38] sm:$0xff]
      %v3509 = vld [vmem:[%s3502 + $0x48] sm:$0xff]
      %v3510 = vld [vmem:[%s3502 + $0x50] sm:$0xff]
      %v3511 = vld [vmem:[%s3502 + $0x60] sm:$0xff]
      %v3512 = vld [vmem:[%s3502 + $0x68] sm:$0xff]
      %v3513 = vld [vmem:[%s3502 + $0x78] sm:$0xff]
      %v3514 = vld [vmem:[%s3502 + $0x80] sm:$0xff]
      %v3515 = vld [vmem:[%s3502 + $0x90] sm:$0xff]
      %v3516 = vld [vmem:[%s3502 + $0x98] sm:$0xff]
      %v3517 = vld [vmem:[%s3502 + $0xa8] sm:$0xff]
      %v3518 = vld [vmem:[%s3502 + $0xb0] sm:$0xff]
      %v3519 = vld [vmem:[%s3502 + $0x1] sm:$0xff]
      %v3520 = vld [vmem:[%s3502 + $0x9] sm:$0xff]
      %v3521 = vld [vmem:[%s3502 + $0x19] sm:$0xff]
      %v3522 = vld [vmem:[%s3502 + $0x21] sm:$0xff]
      %v3523 = vld [vmem:[%s3502 + $0x31] sm:$0xff]
      %v3524 = vld [vmem:[%s3502 + $0x39] sm:$0xff]
      %v3525 = vld [vmem:[%s3502 + $0x49] sm:$0xff]
      %v3526 = vld [vmem:[%s3502 + $0x51] sm:$0xff]
      %v3527 = vld [vmem:[%s3502 + $0x61] sm:$0xff]
      %v3528 = vld [vmem:[%s3502 + $0x69] sm:$0xff]
      %v3529 = vld [vmem:[%s3502 + $0x79] sm:$0xff]
      %v3530 = vld [vmem:[%s3502 + $0x81] sm:$0xff]
      %v3531 = vld [vmem:[%s3502 + $0x91] sm:$0xff]
      %v3532 = vld [vmem:[%s3502 + $0x99] sm:$0xff]
      %v3533 = vld [vmem:[%s3502 + $0xa9] sm:$0xff]
      %v3534 = vld [vmem:[%s3502 + $0xb1] sm:$0xff]
      %v3535 = vld [vmem:[%s3502 + $0x2] sm:$0xff]
      %v3536 = vld [vmem:[%s3502 + $0xa] sm:$0xff]
      %v3537 = vld [vmem:[%s3502 + $0x1a] sm:$0xff]
      %v3538 = vld [vmem:[%s3502 + $0x22] sm:$0xff]
      %v3539 = vld [vmem:[%s3502 + $0x32] sm:$0xff]
      %v3540 = vld [vmem:[%s3502 + $0x3a] sm:$0xff]
      %v3541 = vld [vmem:[%s3502 + $0x4a] sm:$0xff]
      %v3542 = vld [vmem:[%s3502 + $0x52] sm:$0xff]
      %v3543 = vld [vmem:[%s3502 + $0x62] sm:$0xff]
      %v3544 = vld [vmem:[%s3502 + $0x6a] sm:$0xff]
      %v3545 = vld [vmem:[%s3502 + $0x7a] sm:$0xff]
      %v3546 = vld [vmem:[%s3502 + $0x82] sm:$0xff]
      %v3547 = vld [vmem:[%s3502 + $0x92] sm:$0xff]
      %v3548 = vld [vmem:[%s3502 + $0x9a] sm:$0xff]
      %v3549 = vld [vmem:[%s3502 + $0xaa] sm:$0xff]
      %v3550 = vld [vmem:[%s3502 + $0xb2] sm:$0xff]
      %3567 = vrot.lane.b32.xlu0 %v3422, 8
      %v3568 = vpop.permute.xlu0 %3567
      %3569 = vrot.lane.b32.xlu0 %v3423, 8
      %v3570 = vpop.permute.xlu0 %3569
      %3571 = vrot.lane.b32.xlu0 %v3424, 8
      %v3572 = vpop.permute.xlu0 %3571
      %3573 = vrot.lane.b32.xlu0 %v3425, 8
      %v3574 = vpop.permute.xlu0 %3573
      %3575 = vrot.lane.b32.xlu0 %v3426, 8
      %v3576 = vpop.permute.xlu0 %3575
      %3577 = vrot.lane.b32.xlu0 %v3427, 8
      %v3578 = vpop.permute.xlu0 %3577
      %3579 = vrot.lane.b32.xlu0 %v3428, 8
      %v3580 = vpop.permute.xlu0 %3579
      %3581 = vrot.lane.b32.xlu0 %v3429, 8
      %v3582 = vpop.permute.xlu0 %3581
      %3583 = vrot.lane.b32.xlu0 %v3430, 8
      %v3584 = vpop.permute.xlu0 %3583
      %3585 = vrot.lane.b32.xlu0 %v3431, 8
      %v3586 = vpop.permute.xlu0 %3585
      %3587 = vrot.lane.b32.xlu0 %v3432, 8
      %v3588 = vpop.permute.xlu0 %3587
      %3589 = vrot.lane.b32.xlu0 %v3433, 8
      %v3590 = vpop.permute.xlu0 %3589
      %3591 = vrot.lane.b32.xlu0 %v3434, 8
      %v3592 = vpop.permute.xlu0 %3591
      %3593 = vrot.lane.b32.xlu0 %v3435, 8
      %v3594 = vpop.permute.xlu0 %3593
      %3595 = vrot.lane.b32.xlu0 %v3436, 8
      %v3596 = vpop.permute.xlu0 %3595
      %3597 = vrot.lane.b32.xlu0 %v3437, 8
      %v3598 = vpop.permute.xlu0 %3597
      %3631 = vrot.lane.b32.xlu0 %v3438, 16
      %v3632 = vpop.permute.xlu0 %3631
      %3633 = vrot.lane.b32.xlu0 %v3439, 16
      %v3634 = vpop.permute.xlu0 %3633
      %3635 = vrot.lane.b32.xlu0 %v3440, 16
      %v3636 = vpop.permute.xlu0 %3635
      %3637 = vrot.lane.b32.xlu0 %v3441, 16
      %v3638 = vpop.permute.xlu0 %3637
      %3639 = vrot.lane.b32.xlu0 %v3442, 16
      %v3640 = vpop.permute.xlu0 %3639
      %3641 = vrot.lane.b32.xlu0 %v3443, 16
      %v3642 = vpop.permute.xlu0 %3641
      %3643 = vrot.lane.b32.xlu0 %v3444, 16
      %v3644 = vpop.permute.xlu0 %3643
      %3645 = vrot.lane.b32.xlu0 %v3445, 16
      %v3646 = vpop.permute.xlu0 %3645
      %3647 = vrot.lane.b32.xlu0 %v3446, 16
      %v3648 = vpop.permute.xlu0 %3647
      %3649 = vrot.lane.b32.xlu0 %v3447, 16
      %v3650 = vpop.permute.xlu0 %3649
      %3651 = vrot.lane.b32.xlu0 %v3448, 16
      %v3652 = vpop.permute.xlu0 %3651
      %3653 = vrot.lane.b32.xlu0 %v3449, 16
      %v3654 = vpop.permute.xlu0 %3653
      %3655 = vrot.lane.b32.xlu0 %v3450, 16
      %v3656 = vpop.permute.xlu0 %3655
      %3657 = vrot.lane.b32.xlu0 %v3451, 16
      %v3658 = vpop.permute.xlu0 %3657
      %3659 = vrot.lane.b32.xlu0 %v3452, 16
      %v3660 = vpop.permute.xlu0 %3659
      %3661 = vrot.lane.b32.xlu0 %v3453, 16
      %v3662 = vpop.permute.xlu0 %3661
      %3695 = vrot.lane.b32.xlu0 %v3454, 24
      %v3696 = vpop.permute.xlu0 %3695
      %3697 = vrot.lane.b32.xlu0 %v3455, 24
      %v3698 = vpop.permute.xlu0 %3697
      %3699 = vrot.lane.b32.xlu0 %v3456, 24
      %v3700 = vpop.permute.xlu0 %3699
      %3701 = vrot.lane.b32.xlu0 %v3457, 24
      %v3702 = vpop.permute.xlu0 %3701
      %3703 = vrot.lane.b32.xlu0 %v3458, 24
      %v3704 = vpop.permute.xlu0 %3703
      %3705 = vrot.lane.b32.xlu0 %v3459, 24
      %v3706 = vpop.permute.xlu0 %3705
      %3707 = vrot.lane.b32.xlu0 %v3460, 24
      %v3708 = vpop.permute.xlu0 %3707
      %3709 = vrot.lane.b32.xlu0 %v3461, 24
      %v3710 = vpop.permute.xlu0 %3709
      %3711 = vrot.lane.b32.xlu0 %v3462, 24
      %v3712 = vpop.permute.xlu0 %3711
      %3713 = vrot.lane.b32.xlu0 %v3463, 24
      %v3714 = vpop.permute.xlu0 %3713
      %3715 = vrot.lane.b32.xlu0 %v3464, 24
      %v3716 = vpop.permute.xlu0 %3715
      %3717 = vrot.lane.b32.xlu0 %v3465, 24
      %v3718 = vpop.permute.xlu0 %3717
      %3719 = vrot.lane.b32.xlu0 %v3466, 24
      %v3720 = vpop.permute.xlu0 %3719
      %3721 = vrot.lane.b32.xlu0 %v3467, 24
      %v3722 = vpop.permute.xlu0 %3721
      %3723 = vrot.lane.b32.xlu0 %v3468, 24
      %v3724 = vpop.permute.xlu0 %3723
      %3725 = vrot.lane.b32.xlu0 %v3469, 24
      %v3726 = vpop.permute.xlu0 %3725
      %3759 = vrot.lane.b32.xlu0 %v3470, 32
      %v3760 = vpop.permute.xlu0 %3759
      %3761 = vrot.lane.b32.xlu0 %v3471, 32
      %v3762 = vpop.permute.xlu0 %3761
      %3763 = vrot.lane.b32.xlu0 %v3472, 32
      %v3764 = vpop.permute.xlu0 %3763
      %3765 = vrot.lane.b32.xlu0 %v3473, 32
      %v3766 = vpop.permute.xlu0 %3765
      %3767 = vrot.lane.b32.xlu0 %v3474, 32
      %v3768 = vpop.permute.xlu0 %3767
      %3769 = vrot.lane.b32.xlu0 %v3475, 32
      %v3770 = vpop.permute.xlu0 %3769
      %3771 = vrot.lane.b32.xlu0 %v3476, 32
      %v3772 = vpop.permute.xlu0 %3771
      %3773 = vrot.lane.b32.xlu0 %v3477, 32
      %v3774 = vpop.permute.xlu0 %3773
      %3775 = vrot.lane.b32.xlu0 %v3478, 32
      %v3776 = vpop.permute.xlu0 %3775
      %3777 = vrot.lane.b32.xlu0 %v3479, 32
      %v3778 = vpop.permute.xlu0 %3777
      %3779 = vrot.lane.b32.xlu0 %v3480, 32
      %v3780 = vpop.permute.xlu0 %3779
      %3781 = vrot.lane.b32.xlu0 %v3481, 32
      %v3782 = vpop.permute.xlu0 %3781
      %3783 = vrot.lane.b32.xlu0 %v3482, 32
      %v3784 = vpop.permute.xlu0 %3783
      %3785 = vrot.lane.b32.xlu0 %v3483, 32
      %v3786 = vpop.permute.xlu0 %3785
      %3787 = vrot.lane.b32.xlu0 %v3484, 32
      %v3788 = vpop.permute.xlu0 %3787
      %3789 = vrot.lane.b32.xlu0 %v3485, 32
      %v3790 = vpop.permute.xlu0 %3789
      %3823 = vrot.lane.b32.xlu0 %v3486, 40
      %v3824 = vpop.permute.xlu0 %3823
      %3825 = vrot.lane.b32.xlu0 %v3487, 40
      %v3826 = vpop.permute.xlu0 %3825
      %3827 = vrot.lane.b32.xlu0 %v3488, 40
      %v3828 = vpop.permute.xlu0 %3827
      %3829 = vrot.lane.b32.xlu0 %v3489, 40
      %v3830 = vpop.permute.xlu0 %3829
      %3831 = vrot.lane.b32.xlu0 %v3490, 40
      %v3832 = vpop.permute.xlu0 %3831
      %3833 = vrot.lane.b32.xlu0 %v3491, 40
      %v3834 = vpop.permute.xlu0 %3833
      %3835 = vrot.lane.b32.xlu0 %v3492, 40
      %v3836 = vpop.permute.xlu0 %3835
      %3837 = vrot.lane.b32.xlu0 %v3493, 40
      %v3838 = vpop.permute.xlu0 %3837
      %3839 = vrot.lane.b32.xlu0 %v3494, 40
      %v3840 = vpop.permute.xlu0 %3839
      %3841 = vrot.lane.b32.xlu0 %v3495, 40
      %v3842 = vpop.permute.xlu0 %3841
      %3843 = vrot.lane.b32.xlu0 %v3496, 40
      %v3844 = vpop.permute.xlu0 %3843
      %3845 = vrot.lane.b32.xlu0 %v3497, 40
      %v3846 = vpop.permute.xlu0 %3845
      %3847 = vrot.lane.b32.xlu0 %v3498, 40
      %v3848 = vpop.permute.xlu0 %3847
      %3849 = vrot.lane.b32.xlu0 %v3499, 40
      %v3850 = vpop.permute.xlu0 %3849
      %3851 = vrot.lane.b32.xlu0 %v3500, 40
      %v3852 = vpop.permute.xlu0 %3851
      %3853 = vrot.lane.b32.xlu0 %v3501, 40
      %v3854 = vpop.permute.xlu0 %3853
      %3887 = vrot.lane.b32.xlu0 %v3503, 48
      %v3888 = vpop.permute.xlu0 %3887
      %3889 = vrot.lane.b32.xlu0 %v3504, 48
      %v3890 = vpop.permute.xlu0 %3889
      %3891 = vrot.lane.b32.xlu0 %v3505, 48
      %v3892 = vpop.permute.xlu0 %3891
      %3893 = vrot.lane.b32.xlu0 %v3506, 48
      %v3894 = vpop.permute.xlu0 %3893
      %3895 = vrot.lane.b32.xlu0 %v3507, 48
      %v3896 = vpop.permute.xlu0 %3895
      %3897 = vrot.lane.b32.xlu0 %v3508, 48
      %v3898 = vpop.permute.xlu0 %3897
      %3899 = vrot.lane.b32.xlu0 %v3509, 48
      %v3900 = vpop.permute.xlu0 %3899
      %3901 = vrot.lane.b32.xlu0 %v3510, 48
      %v3902 = vpop.permute.xlu0 %3901
      %3903 = vrot.lane.b32.xlu0 %v3511, 48
      %v3904 = vpop.permute.xlu0 %3903
      %3905 = vrot.lane.b32.xlu0 %v3512, 48
      %v3906 = vpop.permute.xlu0 %3905
      %3907 = vrot.lane.b32.xlu0 %v3513, 48
      %v3908 = vpop.permute.xlu0 %3907
      %3909 = vrot.lane.b32.xlu0 %v3514, 48
      %v3910 = vpop.permute.xlu0 %3909
      %3911 = vrot.lane.b32.xlu0 %v3515, 48
      %v3912 = vpop.permute.xlu0 %3911
      %3913 = vrot.lane.b32.xlu0 %v3516, 48
      %v3914 = vpop.permute.xlu0 %3913
      %3915 = vrot.lane.b32.xlu0 %v3517, 48
      %v3916 = vpop.permute.xlu0 %3915
      %3917 = vrot.lane.b32.xlu0 %v3518, 48
      %v3918 = vpop.permute.xlu0 %3917
      %3951 = vrot.lane.b32.xlu0 %v3519, 56
      %v3952 = vpop.permute.xlu0 %3951
      %3953 = vrot.lane.b32.xlu0 %v3520, 56
      %v3954 = vpop.permute.xlu0 %3953
      %3955 = vrot.lane.b32.xlu0 %v3521, 56
      %v3956 = vpop.permute.xlu0 %3955
      %3957 = vrot.lane.b32.xlu0 %v3522, 56
      %v3958 = vpop.permute.xlu0 %3957
      %3959 = vrot.lane.b32.xlu0 %v3523, 56
      %v3960 = vpop.permute.xlu0 %3959
      %3961 = vrot.lane.b32.xlu0 %v3524, 56
      %v3962 = vpop.permute.xlu0 %3961
      %3963 = vrot.lane.b32.xlu0 %v3525, 56
      %v3964 = vpop.permute.xlu0 %3963
      %3965 = vrot.lane.b32.xlu0 %v3526, 56
      %v3966 = vpop.permute.xlu0 %3965
      %3967 = vrot.lane.b32.xlu0 %v3527, 56
      %v3968 = vpop.permute.xlu0 %3967
      %3969 = vrot.lane.b32.xlu0 %v3528, 56
      %v3970 = vpop.permute.xlu0 %3969
      %3971 = vrot.lane.b32.xlu0 %v3529, 56
      %v3972 = vpop.permute.xlu0 %3971
      %3973 = vrot.lane.b32.xlu0 %v3530, 56
      %v3974 = vpop.permute.xlu0 %3973
      %3975 = vrot.lane.b32.xlu0 %v3531, 56
      %v3976 = vpop.permute.xlu0 %3975
      %3977 = vrot.lane.b32.xlu0 %v3532, 56
      %v3978 = vpop.permute.xlu0 %3977
      %3979 = vrot.lane.b32.xlu0 %v3533, 56
      %v3980 = vpop.permute.xlu0 %3979
      %3981 = vrot.lane.b32.xlu0 %v3534, 56
      %v3982 = vpop.permute.xlu0 %3981
      %4015 = vrot.lane.b32.xlu0 %v3535, 64
      %v4016 = vpop.permute.xlu0 %4015
      %4017 = vrot.lane.b32.xlu0 %v3536, 64
      %v4018 = vpop.permute.xlu0 %4017
      %4019 = vrot.lane.b32.xlu0 %v3537, 64
      %v4020 = vpop.permute.xlu0 %4019
      %4021 = vrot.lane.b32.xlu0 %v3538, 64
      %v4022 = vpop.permute.xlu0 %4021
      %4023 = vrot.lane.b32.xlu0 %v3539, 64
      %v4024 = vpop.permute.xlu0 %4023
      %4025 = vrot.lane.b32.xlu0 %v3540, 64
      %v4026 = vpop.permute.xlu0 %4025
      %4027 = vrot.lane.b32.xlu0 %v3541, 64
      %v4028 = vpop.permute.xlu0 %4027
      %4029 = vrot.lane.b32.xlu0 %v3542, 64
      %v4030 = vpop.permute.xlu0 %4029
      %4031 = vrot.lane.b32.xlu0 %v3543, 64
      %v4032 = vpop.permute.xlu0 %4031
      %4033 = vrot.lane.b32.xlu0 %v3544, 64
      %v4034 = vpop.permute.xlu0 %4033
      %4035 = vrot.lane.b32.xlu0 %v3545, 64
      %v4036 = vpop.permute.xlu0 %4035
      %4037 = vrot.lane.b32.xlu0 %v3546, 64
      %v4038 = vpop.permute.xlu0 %4037
      %4039 = vrot.lane.b32.xlu0 %v3547, 64
      %v4040 = vpop.permute.xlu0 %4039
      %4041 = vrot.lane.b32.xlu0 %v3548, 64
      %v4042 = vpop.permute.xlu0 %4041
      %4043 = vrot.lane.b32.xlu0 %v3549, 64
      %v4044 = vpop.permute.xlu0 %4043
      %4045 = vrot.lane.b32.xlu0 %v3550, 64
      %v4046 = vpop.permute.xlu0 %4045
      %v4063 = vsel %vm433, %v3406, %v3568
      %v4064 = vsel %vm433, %v3407, %v3570
      %v4065 = vsel %vm433, %v3408, %v3572
      %v4066 = vsel %vm433, %v3409, %v3574
      %v4067 = vsel %vm433, %v3410, %v3576
      %v4068 = vsel %vm433, %v3411, %v3578
      %v4069 = vsel %vm433, %v3412, %v3580
      %v4070 = vsel %vm433, %v3413, %v3582
      %v4071 = vsel %vm433, %v3414, %v3584
      %v4072 = vsel %vm433, %v3415, %v3586
      %v4073 = vsel %vm433, %v3416, %v3588
      %v4074 = vsel %vm433, %v3417, %v3590
      %v4075 = vsel %vm433, %v3418, %v3592
      %v4076 = vsel %vm433, %v3419, %v3594
      %v4077 = vsel %vm433, %v3420, %v3596
      %v4078 = vsel %vm433, %v3421, %v3598
      %v4079 = vsel %vm1201, %v4063, %v3632
      %v4080 = vsel %vm1201, %v4064, %v3634
      %v4081 = vsel %vm1201, %v4065, %v3636
      %v4082 = vsel %vm1201, %v4066, %v3638
      %v4083 = vsel %vm1201, %v4067, %v3640
      %v4084 = vsel %vm1201, %v4068, %v3642
      %v4085 = vsel %vm1201, %v4069, %v3644
      %v4086 = vsel %vm1201, %v4070, %v3646
      %v4087 = vsel %vm1201, %v4071, %v3648
      %v4088 = vsel %vm1201, %v4072, %v3650
      %v4089 = vsel %vm1201, %v4073, %v3652
      %v4090 = vsel %vm1201, %v4074, %v3654
      %v4091 = vsel %vm1201, %v4075, %v3656
      %v4092 = vsel %vm1201, %v4076, %v3658
      %v4093 = vsel %vm1201, %v4077, %v3660
      %v4094 = vsel %vm1201, %v4078, %v3662
      %v4095 = vsel %vm1235, %v4079, %v3696
      %v4096 = vsel %vm1235, %v4080, %v3698
      %v4097 = vsel %vm1235, %v4081, %v3700
      %v4098 = vsel %vm1235, %v4082, %v3702
      %v4099 = vsel %vm1235, %v4083, %v3704
      %v4100 = vsel %vm1235, %v4084, %v3706
      %v4101 = vsel %vm1235, %v4085, %v3708
      %v4102 = vsel %vm1235, %v4086, %v3710
      %v4103 = vsel %vm1235, %v4087, %v3712
      %v4104 = vsel %vm1235, %v4088, %v3714
      %v4105 = vsel %vm1235, %v4089, %v3716
      %v4106 = vsel %vm1235, %v4090, %v3718
      %v4107 = vsel %vm1235, %v4091, %v3720
      %v4108 = vsel %vm1235, %v4092, %v3722
      %v4109 = vsel %vm1235, %v4093, %v3724
      %v4110 = vsel %vm1235, %v4094, %v3726
      %v4111 = vsel %vm1269, %v4095, %v3760
      %v4112 = vsel %vm1269, %v4096, %v3762
      %v4113 = vsel %vm1269, %v4097, %v3764
      %v4114 = vsel %vm1269, %v4098, %v3766
      %v4115 = vsel %vm1269, %v4099, %v3768
      %v4116 = vsel %vm1269, %v4100, %v3770
      %v4117 = vsel %vm1269, %v4101, %v3772
      %v4118 = vsel %vm1269, %v4102, %v3774
      %v4119 = vsel %vm1269, %v4103, %v3776
      %v4120 = vsel %vm1269, %v4104, %v3778
      %v4121 = vsel %vm1269, %v4105, %v3780
      %v4122 = vsel %vm1269, %v4106, %v3782
      %v4123 = vsel %vm1269, %v4107, %v3784
      %v4124 = vsel %vm1269, %v4108, %v3786
      %v4125 = vsel %vm1269, %v4109, %v3788
      %v4126 = vsel %vm1269, %v4110, %v3790
      %v4127 = vsel %vm3154, %v4111, %v3824
      %v4128 = vsel %vm3154, %v4112, %v3826
      %v4129 = vsel %vm3154, %v4113, %v3828
      %v4130 = vsel %vm3154, %v4114, %v3830
      %v4131 = vsel %vm3154, %v4115, %v3832
      %v4132 = vsel %vm3154, %v4116, %v3834
      %v4133 = vsel %vm3154, %v4117, %v3836
      %v4134 = vsel %vm3154, %v4118, %v3838
      %v4135 = vsel %vm3154, %v4119, %v3840
      %v4136 = vsel %vm3154, %v4120, %v3842
      %v4137 = vsel %vm3154, %v4121, %v3844
      %v4138 = vsel %vm3154, %v4122, %v3846
      %v4139 = vsel %vm3154, %v4123, %v3848
      %v4140 = vsel %vm3154, %v4124, %v3850
      %v4141 = vsel %vm3154, %v4125, %v3852
      %v4142 = vsel %vm3154, %v4126, %v3854
      %v4143 = vsel %vm3171, %v4127, %v3888
      %v4144 = vsel %vm3171, %v4128, %v3890
      %v4145 = vsel %vm3171, %v4129, %v3892
      %v4146 = vsel %vm3171, %v4130, %v3894
      %v4147 = vsel %vm3171, %v4131, %v3896
      %v4148 = vsel %vm3171, %v4132, %v3898
      %v4149 = vsel %vm3171, %v4133, %v3900
      %v4150 = vsel %vm3171, %v4134, %v3902
      %v4151 = vsel %vm3171, %v4135, %v3904
      %v4152 = vsel %vm3171, %v4136, %v3906
      %v4153 = vsel %vm3171, %v4137, %v3908
      %v4154 = vsel %vm3171, %v4138, %v3910
      %v4155 = vsel %vm3171, %v4139, %v3912
      %v4156 = vsel %vm3171, %v4140, %v3914
      %v4157 = vsel %vm3171, %v4141, %v3916
      %v4158 = vsel %vm3171, %v4142, %v3918
      %v4159 = vsel %vm3188, %v4143, %v3952
      %v4160 = vsel %vm3188, %v4144, %v3954
      %v4161 = vsel %vm3188, %v4145, %v3956
      %v4162 = vsel %vm3188, %v4146, %v3958
      %v4163 = vsel %vm3188, %v4147, %v3960
      %v4164 = vsel %vm3188, %v4148, %v3962
      %v4165 = vsel %vm3188, %v4149, %v3964
      %v4166 = vsel %vm3188, %v4150, %v3966
      %v4167 = vsel %vm3188, %v4151, %v3968
      %v4168 = vsel %vm3188, %v4152, %v3970
      %v4169 = vsel %vm3188, %v4153, %v3972
      %v4170 = vsel %vm3188, %v4154, %v3974
      %v4171 = vsel %vm3188, %v4155, %v3976
      %v4172 = vsel %vm3188, %v4156, %v3978
      %v4173 = vsel %vm3188, %v4157, %v3980
      %v4174 = vsel %vm3188, %v4158, %v3982
      %v4175 = vsel %vm3205, %v4159, %v4016
      %v4176 = vsel %vm3205, %v4160, %v4018
      %v4177 = vsel %vm3205, %v4161, %v4020
      %v4178 = vsel %vm3205, %v4162, %v4022
      %v4179 = vsel %vm3205, %v4163, %v4024
      %v4180 = vsel %vm3205, %v4164, %v4026
      %v4181 = vsel %vm3205, %v4165, %v4028
      %v4182 = vsel %vm3205, %v4166, %v4030
      %v4183 = vsel %vm3205, %v4167, %v4032
      %v4184 = vsel %vm3205, %v4168, %v4034
      %v4185 = vsel %vm3205, %v4169, %v4036
      %v4186 = vsel %vm3205, %v4170, %v4038
      %v4187 = vsel %vm3205, %v4171, %v4040
      %v4188 = vsel %vm3205, %v4172, %v4042
      %v4189 = vsel %vm3205, %v4173, %v4044
      %v4190 = vsel %vm3205, %v4174, %v4046
      %v4191 = vpack.c.bf16 %v4176, %v4175
      %v4192 = vpack.c.bf16 %v4178, %v4177
      %v4193 = vpack.c.bf16 %v4180, %v4179
      %v4194 = vpack.c.bf16 %v4182, %v4181
      %v4195 = vpack.c.bf16 %v4184, %v4183
      %v4196 = vpack.c.bf16 %v4186, %v4185
      %v4197 = vpack.c.bf16 %v4188, %v4187
      %v4198 = vpack.c.bf16 %v4190, %v4189
      %v4200 = vsel %vm3263, %v4191, 0
      %v4203 = vsel %vm3263, %v4192, 0
      %v4206 = vsel %vm3263, %v4193, 0
      %v4209 = vsel %vm3263, %v4194, 0
      %v4212 = vsel %vm3263, %v4195, 0
      %v4215 = vsel %vm3263, %v4196, 0
      %v4218 = vsel %vm3263, %v4197, 0
      %v4221 = vsel %vm3263, %v4198, 0
      %4223 = vmatprep.subr.bf16.mxu0 0
      %4224 = vmatpush1.bf16.msra.mxu0 %v3254
      %4225 = vmatprep.subr.bf16.mxu0 0
      %4226 = vmatpush1.bf16.msra.mxu0 %v3255
      %4227 = vmatprep.subr.bf16.mxu0 0
      %4228 = vmatpush1.bf16.msra.mxu0 %v3256
      %4229 = vmatprep.subr.bf16.mxu0 0
      %4230 = vmatpush1.bf16.msra.mxu0 %v3257
      %4231 = vmatprep.subr.bf16.mxu0 0
      %4232 = vmatpush1.bf16.msra.mxu0 %v3290
      %4233 = vmatprep.subr.bf16.mxu0 0
      %4234 = vmatpush1.bf16.msra.mxu0 0
      %4235 = vmatprep.subr.bf16.mxu0 0
      %4236 = vmatpush1.bf16.msra.mxu0 0
      %4237 = vmatprep.subr.bf16.mxu0 0
      %4238 = vmatpush1.bf16.msra.mxu0 0
      %4239 = vmatprep.subr.bf16.mxu0 0
      %4240 = vmatpush1.bf16.msra.mxu0 0
      %4241 = vmatprep.subr.bf16.mxu0 0
      %4242 = vmatpush1.bf16.msra.mxu0 0
      %4243 = vmatprep.subr.bf16.mxu0 0
      %4244 = vmatpush1.bf16.msra.mxu0 0
      %4245 = vmatprep.subr.bf16.mxu0 0
      %4246 = vmatpush1.bf16.msra.mxu0 0
      %4247 = vmatprep.subr.bf16.mxu0 0
      %4248 = vmatpush1.bf16.msra.mxu0 0
      %4249 = vmatprep.subr.bf16.mxu0 0
      %4250 = vmatpush1.bf16.msra.mxu0 0
      %4251 = vmatprep.subr.bf16.mxu0 0
      %4252 = vmatpush1.bf16.msra.mxu0 0
      %4253 = vmatprep.subr.bf16.mxu0 0
      %4254 = vmatpush1.bf16.msra.mxu0 0
      %4255 = vmatprep.mubr.bf16.mxu0 0
      %4256 = vmatmul.mubr.bf16.gmra.mrb[0].mxu0 %v4200
      %v4257 = vpop.f32.mrb[0].mxu0
      %v4258 = vadd.f32 %v3234, %v4257
      %v4259 = vpop.f32.mrb[0].mxu0
      %v4260 = vpop.f32.mrb[0].mxu0
      %v4261 = vadd.f32 %v3234, %v4260
      %v4262 = vpop.f32.mrb[0].mxu0
      %4263 = vmatprep.mubr.bf16.mxu0 0
      %4264 = vmatmul.mubr.bf16.gmra.mrb[0].mxu0 %v4203
      %v4265 = vpop.f32.mrb[0].mxu0
      %v4266 = vadd.f32 %v3234, %v4265
      %v4267 = vpop.f32.mrb[0].mxu0
      %v4268 = vpop.f32.mrb[0].mxu0
      %v4269 = vadd.f32 %v3234, %v4268
      %v4270 = vpop.f32.mrb[0].mxu0
      %4271 = vmatprep.mubr.bf16.mxu0 0
      %4272 = vmatmul.mubr.bf16.gmra.mrb[0].mxu0 %v4206
      %v4273 = vpop.f32.mrb[0].mxu0
      %v4274 = vadd.f32 %v3234, %v4273
      %v4275 = vpop.f32.mrb[0].mxu0
      %v4276 = vpop.f32.mrb[0].mxu0
      %v4277 = vadd.f32 %v3234, %v4276
      %v4278 = vpop.f32.mrb[0].mxu0
      %4279 = vmatprep.mubr.bf16.mxu0 0
      %4280 = vmatmul.mubr.bf16.gmra.mrb[0].mxu0 %v4209
      %v4281 = vpop.f32.mrb[0].mxu0
      %v4282 = vadd.f32 %v3234, %v4281
      %v4283 = vpop.f32.mrb[0].mxu0
      %v4284 = vpop.f32.mrb[0].mxu0
      %v4285 = vadd.f32 %v3234, %v4284
      %v4286 = vpop.f32.mrb[0].mxu0
      %4287 = vmatprep.mubr.bf16.mxu0 0
      %4288 = vmatmul.mubr.bf16.gmra.mrb[0].mxu0 %v4212
      %v4289 = vpop.f32.mrb[0].mxu0
      %v4290 = vadd.f32 %v3234, %v4289
      %v4291 = vpop.f32.mrb[0].mxu0
      %v4292 = vpop.f32.mrb[0].mxu0
      %v4293 = vadd.f32 %v3234, %v4292
      %v4294 = vpop.f32.mrb[0].mxu0
      %4295 = vmatprep.mubr.bf16.mxu0 0
      %4296 = vmatmul.mubr.bf16.gmra.mrb[0].mxu0 %v4215
      %v4297 = vpop.f32.mrb[0].mxu0
      %v4298 = vadd.f32 %v3234, %v4297
      %v4299 = vpop.f32.mrb[0].mxu0
      %v4300 = vpop.f32.mrb[0].mxu0
      %v4301 = vadd.f32 %v3234, %v4300
      %v4302 = vpop.f32.mrb[0].mxu0
      %4303 = vmatprep.mubr.bf16.mxu0 0
      %4304 = vmatmul.mubr.bf16.gmra.mrb[0].mxu0 %v4218
      %v4305 = vpop.f32.mrb[0].mxu0
      %v4306 = vadd.f32 %v3234, %v4305
      %v4307 = vpop.f32.mrb[0].mxu0
      %v4308 = vpop.f32.mrb[0].mxu0
      %v4309 = vadd.f32 %v3234, %v4308
      %v4310 = vpop.f32.mrb[0].mxu0
      %4311 = vmatprep.mubr.bf16.mxu0 0
      %4312 = vmatmul.mubr.bf16.gmra.mrb[0].mxu0 %v4221
      %v4313 = vpop.f32.mrb[0].mxu0
      %v4314 = vadd.f32 %v3234, %v4313
      %v4315 = vpop.f32.mrb[0].mxu0
      %v4316 = vpop.f32.mrb[0].mxu0
      %v4317 = vadd.f32 %v3234, %v4316
      %v4318 = vpop.f32.mrb[0].mxu0
      %4319 = vdwg.mxu0
      %s4320 = scalar_lea.vmem [#allocation4], 128
      %4321 = vst.msk [vmem:[%s4320] sm:$0xff] %vm433, %v4258
      %4322 = vst.msk [vmem:[%s4320 + $0x8] sm:$0xff] %vm433, %v4261
      %4323 = vst.msk [vmem:[%s4320 + $0x10] sm:$0xff] %vm433, %v4266
      %4324 = vst.msk [vmem:[%s4320 + $0x18] sm:$0xff] %vm433, %v4269
      %4325 = vst.msk [vmem:[%s4320 + $0x20] sm:$0xff] %vm433, %v4274
      %4326 = vst.msk [vmem:[%s4320 + $0x28] sm:$0xff] %vm433, %v4277
      %4327 = vst.msk [vmem:[%s4320 + $0x30] sm:$0xff] %vm433, %v4282
      %4328 = vst.msk [vmem:[%s4320 + $0x38] sm:$0xff] %vm433, %v4285
      %4329 = vst.msk [vmem:[%s4320 + $0x40] sm:$0xff] %vm433, %v4290
      %4330 = vst.msk [vmem:[%s4320 + $0x48] sm:$0xff] %vm433, %v4293
      %4331 = vst.msk [vmem:[%s4320 + $0x50] sm:$0xff] %vm433, %v4298
      %4332 = vst.msk [vmem:[%s4320 + $0x58] sm:$0xff] %vm433, %v4301
      %4333 = vst.msk [vmem:[%s4320 + $0x60] sm:$0xff] %vm433, %v4306
      %4334 = vst.msk [vmem:[%s4320 + $0x68] sm:$0xff] %vm433, %v4309
      %4335 = vst.msk [vmem:[%s4320 + $0x70] sm:$0xff] %vm433, %v4314
      %4336 = vst.msk [vmem:[%s4320 + $0x78] sm:$0xff] %vm433, %v4317
      %v4337 = vld [vmem:[#allocation4] sm:$0xff]
      %v4338 = vld [vmem:[#allocation4 + $0x8] sm:$0xff]
      %v4339 = vld [vmem:[#allocation4 + $0x10] sm:$0xff]
      %v4340 = vld [vmem:[#allocation4 + $0x18] sm:$0xff]
      %v4341 = vld [vmem:[#allocation4 + $0x20] sm:$0xff]
      %v4342 = vld [vmem:[#allocation4 + $0x28] sm:$0xff]
      %v4343 = vld [vmem:[#allocation4 + $0x30] sm:$0xff]
      %v4344 = vld [vmem:[#allocation4 + $0x38] sm:$0xff]
      %v4345 = vld [vmem:[#allocation4 + $0x40] sm:$0xff]
      %v4346 = vld [vmem:[#allocation4 + $0x48] sm:$0xff]
      %v4347 = vld [vmem:[#allocation4 + $0x50] sm:$0xff]
      %v4348 = vld [vmem:[#allocation4 + $0x58] sm:$0xff]
      %v4349 = vld [vmem:[#allocation4 + $0x60] sm:$0xff]
      %v4350 = vld [vmem:[#allocation4 + $0x68] sm:$0xff]
      %v4351 = vld [vmem:[#allocation4 + $0x70] sm:$0xff]
      %v4352 = vld [vmem:[#allocation4 + $0x78] sm:$0xff]
      %v4353 = vld [vmem:[#allocation4 + $0x80] sm:$0xff]
      %v4354 = vld [vmem:[#allocation4 + $0x88] sm:$0xff]
      %v4355 = vld [vmem:[#allocation4 + $0x90] sm:$0xff]
      %v4356 = vld [vmem:[#allocation4 + $0x98] sm:$0xff]
      %v4357 = vld [vmem:[#allocation4 + $0xa0] sm:$0xff]
      %v4358 = vld [vmem:[#allocation4 + $0xa8] sm:$0xff]
      %v4359 = vld [vmem:[#allocation4 + $0xb0] sm:$0xff]
      %v4360 = vld [vmem:[#allocation4 + $0xb8] sm:$0xff]
      %v4361 = vld [vmem:[#allocation4 + $0xc0] sm:$0xff]
      %v4362 = vld [vmem:[#allocation4 + $0xc8] sm:$0xff]
      %v4363 = vld [vmem:[#allocation4 + $0xd0] sm:$0xff]
      %v4364 = vld [vmem:[#allocation4 + $0xd8] sm:$0xff]
      %v4365 = vld [vmem:[#allocation4 + $0xe0] sm:$0xff]
      %v4366 = vld [vmem:[#allocation4 + $0xe8] sm:$0xff]
      %v4367 = vld [vmem:[#allocation4 + $0xf0] sm:$0xff]
      %v4368 = vld [vmem:[#allocation4 + $0xf8] sm:$0xff]
      %v4401 = vcombine.high %v4337, %v4337
      %v4403 = vunpack.c.l.s4 1983009808
      %v4404 = vunpack.c.0.s8 %v4403
      %v4405 = vlaneseq
      %v4406 = vshrl.u32 %v4405, 7
      %v4407 = vsub.s32 %v4404, %v4406
      %v4408 = vrot.slane %v4337, %v4407
      %v4410 = vunpack.c.l.s4 1983009808
      %v4411 = vunpack.c.0.s8 %v4410
      %v4412 = vlaneseq
      %v4413 = vshrl.u32 %v4412, 7
      %v4414 = vsub.s32 %v4411, %v4413
      %v4415 = vrot.slane %v4401, %v4414
      %v4416 = vcombine.high %v4408, %v4408
      %v4417 = vcombine.high %v4415, %v4415
      %v4418 = vcombine.high %v4338, %v4338
      %v4420 = vunpack.c.l.s4 1983009808
      %v4421 = vunpack.c.0.s8 %v4420
      %v4422 = vlaneseq
      %v4423 = vshrl.u32 %v4422, 7
      %v4424 = vsub.s32 %v4421, %v4423
      %v4425 = vrot.slane %v4338, %v4424
      %v4427 = vunpack.c.l.s4 1983009808
      %v4428 = vunpack.c.0.s8 %v4427
      %v4429 = vlaneseq
      %v4430 = vshrl.u32 %v4429, 7
      %v4431 = vsub.s32 %v4428, %v4430
      %v4432 = vrot.slane %v4418, %v4431
      %v4433 = vcombine.high %v4425, %v4425
      %v4434 = vcombine.high %v4432, %v4432
      %v4435 = vcombine.high %v4339, %v4339
      %v4437 = vunpack.c.l.s4 1983009808
      %v4438 = vunpack.c.0.s8 %v4437
      %v4439 = vlaneseq
      %v4440 = vshrl.u32 %v4439, 7
      %v4441 = vsub.s32 %v4438, %v4440
      %v4442 = vrot.slane %v4339, %v4441
      %v4444 = vunpack.c.l.s4 1983009808
      %v4445 = vunpack.c.0.s8 %v4444
      %v4446 = vlaneseq
      %v4447 = vshrl.u32 %v4446, 7
      %v4448 = vsub.s32 %v4445, %v4447
      %v4449 = vrot.slane %v4435, %v4448
      %v4450 = vcombine.high %v4442, %v4442
      %v4451 = vcombine.high %v4449, %v4449
      %v4452 = vcombine.high %v4340, %v4340
      %v4454 = vunpack.c.l.s4 1983009808
      %v4455 = vunpack.c.0.s8 %v4454
      %v4456 = vlaneseq
      %v4457 = vshrl.u32 %v4456, 7
      %v4458 = vsub.s32 %v4455, %v4457
      %v4459 = vrot.slane %v4340, %v4458
      %v4461 = vunpack.c.l.s4 1983009808
      %v4462 = vunpack.c.0.s8 %v4461
      %v4463 = vlaneseq
      %v4464 = vshrl.u32 %v4463, 7
      %v4465 = vsub.s32 %v4462, %v4464
      %v4466 = vrot.slane %v4452, %v4465
      %v4467 = vcombine.high %v4459, %v4459
      %v4468 = vcombine.high %v4466, %v4466
      %v4469 = vcombine.high %v4341, %v4341
      %v4471 = vunpack.c.l.s4 1983009808
      %v4472 = vunpack.c.0.s8 %v4471
      %v4473 = vlaneseq
      %v4474 = vshrl.u32 %v4473, 7
      %v4475 = vsub.s32 %v4472, %v4474
      %v4476 = vrot.slane %v4341, %v4475
      %v4478 = vunpack.c.l.s4 1983009808
      %v4479 = vunpack.c.0.s8 %v4478
      %v4480 = vlaneseq
      %v4481 = vshrl.u32 %v4480, 7
      %v4482 = vsub.s32 %v4479, %v4481
      %v4483 = vrot.slane %v4469, %v4482
      %v4484 = vcombine.high %v4476, %v4476
      %v4485 = vcombine.high %v4483, %v4483
      %v4486 = vcombine.high %v4342, %v4342
      %v4488 = vunpack.c.l.s4 1983009808
      %v4489 = vunpack.c.0.s8 %v4488
      %v4490 = vlaneseq
      %v4491 = vshrl.u32 %v4490, 7
      %v4492 = vsub.s32 %v4489, %v4491
      %v4493 = vrot.slane %v4342, %v4492
      %v4495 = vunpack.c.l.s4 1983009808
      %v4496 = vunpack.c.0.s8 %v4495
      %v4497 = vlaneseq
      %v4498 = vshrl.u32 %v4497, 7
      %v4499 = vsub.s32 %v4496, %v4498
      %v4500 = vrot.slane %v4486, %v4499
      %v4501 = vcombine.high %v4493, %v4493
      %v4502 = vcombine.high %v4500, %v4500
      %v4503 = vcombine.high %v4343, %v4343
      %v4505 = vunpack.c.l.s4 1983009808
      %v4506 = vunpack.c.0.s8 %v4505
      %v4507 = vlaneseq
      %v4508 = vshrl.u32 %v4507, 7
      %v4509 = vsub.s32 %v4506, %v4508
      %v4510 = vrot.slane %v4343, %v4509
      %v4512 = vunpack.c.l.s4 1983009808
      %v4513 = vunpack.c.0.s8 %v4512
      %v4514 = vlaneseq
      %v4515 = vshrl.u32 %v4514, 7
      %v4516 = vsub.s32 %v4513, %v4515
      %v4517 = vrot.slane %v4503, %v4516
      %v4518 = vcombine.high %v4510, %v4510
      %v4519 = vcombine.high %v4517, %v4517
      %v4520 = vcombine.high %v4344, %v4344
      %v4522 = vunpack.c.l.s4 1983009808
      %v4523 = vunpack.c.0.s8 %v4522
      %v4524 = vlaneseq
      %v4525 = vshrl.u32 %v4524, 7
      %v4526 = vsub.s32 %v4523, %v4525
      %v4527 = vrot.slane %v4344, %v4526
      %v4529 = vunpack.c.l.s4 1983009808
      %v4530 = vunpack.c.0.s8 %v4529
      %v4531 = vlaneseq
      %v4532 = vshrl.u32 %v4531, 7
      %v4533 = vsub.s32 %v4530, %v4532
      %v4534 = vrot.slane %v4520, %v4533
      %v4535 = vcombine.high %v4527, %v4527
      %v4536 = vcombine.high %v4534, %v4534
      %v4537 = vcombine.high %v4345, %v4345
      %v4539 = vunpack.c.l.s4 1983009808
      %v4540 = vunpack.c.0.s8 %v4539
      %v4541 = vlaneseq
      %v4542 = vshrl.u32 %v4541, 7
      %v4543 = vsub.s32 %v4540, %v4542
      %v4544 = vrot.slane %v4345, %v4543
      %v4546 = vunpack.c.l.s4 1983009808
      %v4547 = vunpack.c.0.s8 %v4546
      %v4548 = vlaneseq
      %v4549 = vshrl.u32 %v4548, 7
      %v4550 = vsub.s32 %v4547, %v4549
      %v4551 = vrot.slane %v4537, %v4550
      %v4552 = vcombine.high %v4544, %v4544
      %v4553 = vcombine.high %v4551, %v4551
      %v4554 = vcombine.high %v4346, %v4346
      %v4556 = vunpack.c.l.s4 1983009808
      %v4557 = vunpack.c.0.s8 %v4556
      %v4558 = vlaneseq
      %v4559 = vshrl.u32 %v4558, 7
      %v4560 = vsub.s32 %v4557, %v4559
      %v4561 = vrot.slane %v4346, %v4560
      %v4563 = vunpack.c.l.s4 1983009808
      %v4564 = vunpack.c.0.s8 %v4563
      %v4565 = vlaneseq
      %v4566 = vshrl.u32 %v4565, 7
      %v4567 = vsub.s32 %v4564, %v4566
      %v4568 = vrot.slane %v4554, %v4567
      %v4569 = vcombine.high %v4561, %v4561
      %v4570 = vcombine.high %v4568, %v4568
      %v4571 = vcombine.high %v4347, %v4347
      %v4573 = vunpack.c.l.s4 1983009808
      %v4574 = vunpack.c.0.s8 %v4573
      %v4575 = vlaneseq
      %v4576 = vshrl.u32 %v4575, 7
      %v4577 = vsub.s32 %v4574, %v4576
      %v4578 = vrot.slane %v4347, %v4577
      %v4580 = vunpack.c.l.s4 1983009808
      %v4581 = vunpack.c.0.s8 %v4580
      %v4582 = vlaneseq
      %v4583 = vshrl.u32 %v4582, 7
      %v4584 = vsub.s32 %v4581, %v4583
      %v4585 = vrot.slane %v4571, %v4584
      %v4586 = vcombine.high %v4578, %v4578
      %v4587 = vcombine.high %v4585, %v4585
      %v4588 = vcombine.high %v4348, %v4348
      %v4590 = vunpack.c.l.s4 1983009808
      %v4591 = vunpack.c.0.s8 %v4590
      %v4592 = vlaneseq
      %v4593 = vshrl.u32 %v4592, 7
      %v4594 = vsub.s32 %v4591, %v4593
      %v4595 = vrot.slane %v4348, %v4594
      %v4597 = vunpack.c.l.s4 1983009808
      %v4598 = vunpack.c.0.s8 %v4597
      %v4599 = vlaneseq
      %v4600 = vshrl.u32 %v4599, 7
      %v4601 = vsub.s32 %v4598, %v4600
      %v4602 = vrot.slane %v4588, %v4601
      %v4603 = vcombine.high %v4595, %v4595
      %v4604 = vcombine.high %v4602, %v4602
      %v4605 = vcombine.high %v4349, %v4349
      %v4607 = vunpack.c.l.s4 1983009808
      %v4608 = vunpack.c.0.s8 %v4607
      %v4609 = vlaneseq
      %v4610 = vshrl.u32 %v4609, 7
      %v4611 = vsub.s32 %v4608, %v4610
      %v4612 = vrot.slane %v4349, %v4611
      %v4614 = vunpack.c.l.s4 1983009808
      %v4615 = vunpack.c.0.s8 %v4614
      %v4616 = vlaneseq
      %v4617 = vshrl.u32 %v4616, 7
      %v4618 = vsub.s32 %v4615, %v4617
      %v4619 = vrot.slane %v4605, %v4618
      %v4620 = vcombine.high %v4612, %v4612
      %v4621 = vcombine.high %v4619, %v4619
      %v4622 = vcombine.high %v4350, %v4350
      %v4624 = vunpack.c.l.s4 1983009808
      %v4625 = vunpack.c.0.s8 %v4624
      %v4626 = vlaneseq
      %v4627 = vshrl.u32 %v4626, 7
      %v4628 = vsub.s32 %v4625, %v4627
      %v4629 = vrot.slane %v4350, %v4628
      %v4631 = vunpack.c.l.s4 1983009808
      %v4632 = vunpack.c.0.s8 %v4631
      %v4633 = vlaneseq
      %v4634 = vshrl.u32 %v4633, 7
      %v4635 = vsub.s32 %v4632, %v4634
      %v4636 = vrot.slane %v4622, %v4635
      %v4637 = vcombine.high %v4629, %v4629
      %v4638 = vcombine.high %v4636, %v4636
      %v4639 = vcombine.high %v4351, %v4351
      %v4641 = vunpack.c.l.s4 1983009808
      %v4642 = vunpack.c.0.s8 %v4641
      %v4643 = vlaneseq
      %v4644 = vshrl.u32 %v4643, 7
      %v4645 = vsub.s32 %v4642, %v4644
      %v4646 = vrot.slane %v4351, %v4645
      %v4648 = vunpack.c.l.s4 1983009808
      %v4649 = vunpack.c.0.s8 %v4648
      %v4650 = vlaneseq
      %v4651 = vshrl.u32 %v4650, 7
      %v4652 = vsub.s32 %v4649, %v4651
      %v4653 = vrot.slane %v4639, %v4652
      %v4654 = vcombine.high %v4646, %v4646
      %v4655 = vcombine.high %v4653, %v4653
      %v4656 = vcombine.high %v4352, %v4352
      %v4658 = vunpack.c.l.s4 1983009808
      %v4659 = vunpack.c.0.s8 %v4658
      %v4660 = vlaneseq
      %v4661 = vshrl.u32 %v4660, 7
      %v4662 = vsub.s32 %v4659, %v4661
      %v4663 = vrot.slane %v4352, %v4662
      %v4665 = vunpack.c.l.s4 1983009808
      %v4666 = vunpack.c.0.s8 %v4665
      %v4667 = vlaneseq
      %v4668 = vshrl.u32 %v4667, 7
      %v4669 = vsub.s32 %v4666, %v4668
      %v4670 = vrot.slane %v4656, %v4669
      %v4671 = vcombine.high %v4663, %v4663
      %v4672 = vcombine.high %v4670, %v4670
      %v4673 = vcombine.high %v4353, %v4353
      %v4675 = vunpack.c.l.s4 1983009808
      %v4676 = vunpack.c.0.s8 %v4675
      %v4677 = vlaneseq
      %v4678 = vshrl.u32 %v4677, 7
      %v4679 = vsub.s32 %v4676, %v4678
      %v4680 = vrot.slane %v4353, %v4679
      %v4682 = vunpack.c.l.s4 1983009808
      %v4683 = vunpack.c.0.s8 %v4682
      %v4684 = vlaneseq
      %v4685 = vshrl.u32 %v4684, 7
      %v4686 = vsub.s32 %v4683, %v4685
      %v4687 = vrot.slane %v4673, %v4686
      %v4688 = vcombine.high %v4680, %v4680
      %v4689 = vcombine.high %v4687, %v4687
      %v4690 = vcombine.high %v4354, %v4354
      %v4692 = vunpack.c.l.s4 1983009808
      %v4693 = vunpack.c.0.s8 %v4692
      %v4694 = vlaneseq
      %v4695 = vshrl.u32 %v4694, 7
      %v4696 = vsub.s32 %v4693, %v4695
      %v4697 = vrot.slane %v4354, %v4696
      %v4699 = vunpack.c.l.s4 1983009808
      %v4700 = vunpack.c.0.s8 %v4699
      %v4701 = vlaneseq
      %v4702 = vshrl.u32 %v4701, 7
      %v4703 = vsub.s32 %v4700, %v4702
      %v4704 = vrot.slane %v4690, %v4703
      %v4705 = vcombine.high %v4697, %v4697
      %v4706 = vcombine.high %v4704, %v4704
      %v4707 = vcombine.high %v4355, %v4355
      %v4709 = vunpack.c.l.s4 1983009808
      %v4710 = vunpack.c.0.s8 %v4709
      %v4711 = vlaneseq
      %v4712 = vshrl.u32 %v4711, 7
      %v4713 = vsub.s32 %v4710, %v4712
      %v4714 = vrot.slane %v4355, %v4713
      %v4716 = vunpack.c.l.s4 1983009808
      %v4717 = vunpack.c.0.s8 %v4716
      %v4718 = vlaneseq
      %v4719 = vshrl.u32 %v4718, 7
      %v4720 = vsub.s32 %v4717, %v4719
      %v4721 = vrot.slane %v4707, %v4720
      %v4722 = vcombine.high %v4714, %v4714
      %v4723 = vcombine.high %v4721, %v4721
      %v4724 = vcombine.high %v4356, %v4356
      %v4726 = vunpack.c.l.s4 1983009808
      %v4727 = vunpack.c.0.s8 %v4726
      %v4728 = vlaneseq
      %v4729 = vshrl.u32 %v4728, 7
      %v4730 = vsub.s32 %v4727, %v4729
      %v4731 = vrot.slane %v4356, %v4730
      %v4733 = vunpack.c.l.s4 1983009808
      %v4734 = vunpack.c.0.s8 %v4733
      %v4735 = vlaneseq
      %v4736 = vshrl.u32 %v4735, 7
      %v4737 = vsub.s32 %v4734, %v4736
      %v4738 = vrot.slane %v4724, %v4737
      %v4739 = vcombine.high %v4731, %v4731
      %v4740 = vcombine.high %v4738, %v4738
      %v4741 = vcombine.high %v4357, %v4357
      %v4743 = vunpack.c.l.s4 1983009808
      %v4744 = vunpack.c.0.s8 %v4743
      %v4745 = vlaneseq
      %v4746 = vshrl.u32 %v4745, 7
      %v4747 = vsub.s32 %v4744, %v4746
      %v4748 = vrot.slane %v4357, %v4747
      %v4750 = vunpack.c.l.s4 1983009808
      %v4751 = vunpack.c.0.s8 %v4750
      %v4752 = vlaneseq
      %v4753 = vshrl.u32 %v4752, 7
      %v4754 = vsub.s32 %v4751, %v4753
      %v4755 = vrot.slane %v4741, %v4754
      %v4756 = vcombine.high %v4748, %v4748
      %v4757 = vcombine.high %v4755, %v4755
      %v4758 = vcombine.high %v4358, %v4358
      %v4760 = vunpack.c.l.s4 1983009808
      %v4761 = vunpack.c.0.s8 %v4760
      %v4762 = vlaneseq
      %v4763 = vshrl.u32 %v4762, 7
      %v4764 = vsub.s32 %v4761, %v4763
      %v4765 = vrot.slane %v4358, %v4764
      %v4767 = vunpack.c.l.s4 1983009808
      %v4768 = vunpack.c.0.s8 %v4767
      %v4769 = vlaneseq
      %v4770 = vshrl.u32 %v4769, 7
      %v4771 = vsub.s32 %v4768, %v4770
      %v4772 = vrot.slane %v4758, %v4771
      %v4773 = vcombine.high %v4765, %v4765
      %v4774 = vcombine.high %v4772, %v4772
      %v4775 = vcombine.high %v4359, %v4359
      %v4777 = vunpack.c.l.s4 1983009808
      %v4778 = vunpack.c.0.s8 %v4777
      %v4779 = vlaneseq
      %v4780 = vshrl.u32 %v4779, 7
      %v4781 = vsub.s32 %v4778, %v4780
      %v4782 = vrot.slane %v4359, %v4781
      %v4784 = vunpack.c.l.s4 1983009808
      %v4785 = vunpack.c.0.s8 %v4784
      %v4786 = vlaneseq
      %v4787 = vshrl.u32 %v4786, 7
      %v4788 = vsub.s32 %v4785, %v4787
      %v4789 = vrot.slane %v4775, %v4788
      %v4790 = vcombine.high %v4782, %v4782
      %v4791 = vcombine.high %v4789, %v4789
      %v4792 = vcombine.high %v4360, %v4360
      %v4794 = vunpack.c.l.s4 1983009808
      %v4795 = vunpack.c.0.s8 %v4794
      %v4796 = vlaneseq
      %v4797 = vshrl.u32 %v4796, 7
      %v4798 = vsub.s32 %v4795, %v4797
      %v4799 = vrot.slane %v4360, %v4798
      %v4801 = vunpack.c.l.s4 1983009808
      %v4802 = vunpack.c.0.s8 %v4801
      %v4803 = vlaneseq
      %v4804 = vshrl.u32 %v4803, 7
      %v4805 = vsub.s32 %v4802, %v4804
      %v4806 = vrot.slane %v4792, %v4805
      %v4807 = vcombine.high %v4799, %v4799
      %v4808 = vcombine.high %v4806, %v4806
      %v4809 = vcombine.high %v4361, %v4361
      %v4811 = vunpack.c.l.s4 1983009808
      %v4812 = vunpack.c.0.s8 %v4811
      %v4813 = vlaneseq
      %v4814 = vshrl.u32 %v4813, 7
      %v4815 = vsub.s32 %v4812, %v4814
      %v4816 = vrot.slane %v4361, %v4815
      %v4818 = vunpack.c.l.s4 1983009808
      %v4819 = vunpack.c.0.s8 %v4818
      %v4820 = vlaneseq
      %v4821 = vshrl.u32 %v4820, 7
      %v4822 = vsub.s32 %v4819, %v4821
      %v4823 = vrot.slane %v4809, %v4822
      %v4824 = vcombine.high %v4816, %v4816
      %v4825 = vcombine.high %v4823, %v4823
      %v4826 = vcombine.high %v4362, %v4362
      %v4828 = vunpack.c.l.s4 1983009808
      %v4829 = vunpack.c.0.s8 %v4828
      %v4830 = vlaneseq
      %v4831 = vshrl.u32 %v4830, 7
      %v4832 = vsub.s32 %v4829, %v4831
      %v4833 = vrot.slane %v4362, %v4832
      %v4835 = vunpack.c.l.s4 1983009808
      %v4836 = vunpack.c.0.s8 %v4835
      %v4837 = vlaneseq
      %v4838 = vshrl.u32 %v4837, 7
      %v4839 = vsub.s32 %v4836, %v4838
      %v4840 = vrot.slane %v4826, %v4839
      %v4841 = vcombine.high %v4833, %v4833
      %v4842 = vcombine.high %v4840, %v4840
      %v4843 = vcombine.high %v4363, %v4363
      %v4845 = vunpack.c.l.s4 1983009808
      %v4846 = vunpack.c.0.s8 %v4845
      %v4847 = vlaneseq
      %v4848 = vshrl.u32 %v4847, 7
      %v4849 = vsub.s32 %v4846, %v4848
      %v4850 = vrot.slane %v4363, %v4849
      %v4852 = vunpack.c.l.s4 1983009808
      %v4853 = vunpack.c.0.s8 %v4852
      %v4854 = vlaneseq
      %v4855 = vshrl.u32 %v4854, 7
      %v4856 = vsub.s32 %v4853, %v4855
      %v4857 = vrot.slane %v4843, %v4856
      %v4858 = vcombine.high %v4850, %v4850
      %v4859 = vcombine.high %v4857, %v4857
      %v4860 = vcombine.high %v4364, %v4364
      %v4862 = vunpack.c.l.s4 1983009808
      %v4863 = vunpack.c.0.s8 %v4862
      %v4864 = vlaneseq
      %v4865 = vshrl.u32 %v4864, 7
      %v4866 = vsub.s32 %v4863, %v4865
      %v4867 = vrot.slane %v4364, %v4866
      %v4869 = vunpack.c.l.s4 1983009808
      %v4870 = vunpack.c.0.s8 %v4869
      %v4871 = vlaneseq
      %v4872 = vshrl.u32 %v4871, 7
      %v4873 = vsub.s32 %v4870, %v4872
      %v4874 = vrot.slane %v4860, %v4873
      %v4875 = vcombine.high %v4867, %v4867
      %v4876 = vcombine.high %v4874, %v4874
      %v4877 = vcombine.high %v4365, %v4365
      %v4879 = vunpack.c.l.s4 1983009808
      %v4880 = vunpack.c.0.s8 %v4879
      %v4881 = vlaneseq
      %v4882 = vshrl.u32 %v4881, 7
      %v4883 = vsub.s32 %v4880, %v4882
      %v4884 = vrot.slane %v4365, %v4883
      %v4886 = vunpack.c.l.s4 1983009808
      %v4887 = vunpack.c.0.s8 %v4886
      %v4888 = vlaneseq
      %v4889 = vshrl.u32 %v4888, 7
      %v4890 = vsub.s32 %v4887, %v4889
      %v4891 = vrot.slane %v4877, %v4890
      %v4892 = vcombine.high %v4884, %v4884
      %v4893 = vcombine.high %v4891, %v4891
      %v4894 = vcombine.high %v4366, %v4366
      %v4896 = vunpack.c.l.s4 1983009808
      %v4897 = vunpack.c.0.s8 %v4896
      %v4898 = vlaneseq
      %v4899 = vshrl.u32 %v4898, 7
      %v4900 = vsub.s32 %v4897, %v4899
      %v4901 = vrot.slane %v4366, %v4900
      %v4903 = vunpack.c.l.s4 1983009808
      %v4904 = vunpack.c.0.s8 %v4903
      %v4905 = vlaneseq
      %v4906 = vshrl.u32 %v4905, 7
      %v4907 = vsub.s32 %v4904, %v4906
      %v4908 = vrot.slane %v4894, %v4907
      %v4909 = vcombine.high %v4901, %v4901
      %v4910 = vcombine.high %v4908, %v4908
      %v4911 = vcombine.high %v4367, %v4367
      %v4913 = vunpack.c.l.s4 1983009808
      %v4914 = vunpack.c.0.s8 %v4913
      %v4915 = vlaneseq
      %v4916 = vshrl.u32 %v4915, 7
      %v4917 = vsub.s32 %v4914, %v4916
      %v4918 = vrot.slane %v4367, %v4917
      %v4920 = vunpack.c.l.s4 1983009808
      %v4921 = vunpack.c.0.s8 %v4920
      %v4922 = vlaneseq
      %v4923 = vshrl.u32 %v4922, 7
      %v4924 = vsub.s32 %v4921, %v4923
      %v4925 = vrot.slane %v4911, %v4924
      %v4926 = vcombine.high %v4918, %v4918
      %v4927 = vcombine.high %v4925, %v4925
      %v4928 = vcombine.high %v4368, %v4368
      %v4930 = vunpack.c.l.s4 1983009808
      %v4931 = vunpack.c.0.s8 %v4930
      %v4932 = vlaneseq
      %v4933 = vshrl.u32 %v4932, 7
      %v4934 = vsub.s32 %v4931, %v4933
      %v4935 = vrot.slane %v4368, %v4934
      %v4937 = vunpack.c.l.s4 1983009808
      %v4938 = vunpack.c.0.s8 %v4937
      %v4939 = vlaneseq
      %v4940 = vshrl.u32 %v4939, 7
      %v4941 = vsub.s32 %v4938, %v4940
      %v4942 = vrot.slane %v4928, %v4941
      %v4943 = vcombine.high %v4935, %v4935
      %v4944 = vcombine.high %v4942, %v4942
      %v5073 = vrot.slane %v4408, 7
      %v5074 = vrot.slane %v5073, 2
      %v5075 = vrot.slane %v4416, 7
      %v5076 = vrot.slane %v5075, 2
      %v5077 = vrot.slane %v4415, 7
      %v5078 = vrot.slane %v5077, 2
      %v5079 = vrot.slane %v4417, 7
      %v5080 = vrot.slane %v5079, 2
      %v5081 = vrot.slane %v4425, 7
      %v5082 = vrot.slane %v5081, 2
      %v5083 = vrot.slane %v4433, 7
      %v5084 = vrot.slane %v5083, 2
      %v5085 = vrot.slane %v4432, 7
      %v5086 = vrot.slane %v5085, 2
      %v5087 = vrot.slane %v4434, 7
      %v5088 = vrot.slane %v5087, 2
      %v5089 = vrot.slane %v4476, 7
      %v5090 = vrot.slane %v5089, 2
      %v5091 = vrot.slane %v4484, 7
      %v5092 = vrot.slane %v5091, 2
      %v5093 = vrot.slane %v4483, 7
      %v5094 = vrot.slane %v5093, 2
      %v5095 = vrot.slane %v4485, 7
      %v5096 = vrot.slane %v5095, 2
      %v5097 = vrot.slane %v4493, 7
      %v5098 = vrot.slane %v5097, 2
      %v5099 = vrot.slane %v4501, 7
      %v5100 = vrot.slane %v5099, 2
      %v5101 = vrot.slane %v4500, 7
      %v5102 = vrot.slane %v5101, 2
      %v5103 = vrot.slane %v4502, 7
      %v5104 = vrot.slane %v5103, 2
      %v5105 = vrot.slane %v4544, 7
      %v5106 = vrot.slane %v5105, 2
      %v5107 = vrot.slane %v4552, 7
      %v5108 = vrot.slane %v5107, 2
      %v5109 = vrot.slane %v4551, 7
      %v5110 = vrot.slane %v5109, 2
      %v5111 = vrot.slane %v4553, 7
      %v5112 = vrot.slane %v5111, 2
      %v5113 = vrot.slane %v4561, 7
      %v5114 = vrot.slane %v5113, 2
      %v5115 = vrot.slane %v4569, 7
      %v5116 = vrot.slane %v5115, 2
      %v5117 = vrot.slane %v4568, 7
      %v5118 = vrot.slane %v5117, 2
      %v5119 = vrot.slane %v4570, 7
      %v5120 = vrot.slane %v5119, 2
      %v5121 = vrot.slane %v4612, 7
      %v5122 = vrot.slane %v5121, 2
      %v5123 = vrot.slane %v4620, 7
      %v5124 = vrot.slane %v5123, 2
      %v5125 = vrot.slane %v4619, 7
      %v5126 = vrot.slane %v5125, 2
      %v5127 = vrot.slane %v4621, 7
      %v5128 = vrot.slane %v5127, 2
      %v5129 = vrot.slane %v4629, 7
      %v5130 = vrot.slane %v5129, 2
      %v5131 = vrot.slane %v4637, 7
      %v5132 = vrot.slane %v5131, 2
      %v5133 = vrot.slane %v4636, 7
      %v5134 = vrot.slane %v5133, 2
      %v5135 = vrot.slane %v4638, 7
      %v5136 = vrot.slane %v5135, 2
      %v5137 = vrot.slane %v4680, 7
      %v5138 = vrot.slane %v5137, 2
      %v5139 = vrot.slane %v4688, 7
      %v5140 = vrot.slane %v5139, 2
      %v5141 = vrot.slane %v4687, 7
      %v5142 = vrot.slane %v5141, 2
      %v5143 = vrot.slane %v4689, 7
      %v5144 = vrot.slane %v5143, 2
      %v5145 = vrot.slane %v4697, 7
      %v5146 = vrot.slane %v5145, 2
      %v5147 = vrot.slane %v4705, 7
      %v5148 = vrot.slane %v5147, 2
      %v5149 = vrot.slane %v4704, 7
      %v5150 = vrot.slane %v5149, 2
      %v5151 = vrot.slane %v4706, 7
      %v5152 = vrot.slane %v5151, 2
      %v5153 = vrot.slane %v4748, 7
      %v5154 = vrot.slane %v5153, 2
      %v5155 = vrot.slane %v4756, 7
      %v5156 = vrot.slane %v5155, 2
      %v5157 = vrot.slane %v4755, 7
      %v5158 = vrot.slane %v5157, 2
      %v5159 = vrot.slane %v4757, 7
      %v5160 = vrot.slane %v5159, 2
      %v5161 = vrot.slane %v4765, 7
      %v5162 = vrot.slane %v5161, 2
      %v5163 = vrot.slane %v4773, 7
      %v5164 = vrot.slane %v5163, 2
      %v5165 = vrot.slane %v4772, 7
      %v5166 = vrot.slane %v5165, 2
      %v5167 = vrot.slane %v4774, 7
      %v5168 = vrot.slane %v5167, 2
      %v5169 = vrot.slane %v4816, 7
      %v5170 = vrot.slane %v5169, 2
      %v5171 = vrot.slane %v4824, 7
      %v5172 = vrot.slane %v5171, 2
      %v5173 = vrot.slane %v4823, 7
      %v5174 = vrot.slane %v5173, 2
      %v5175 = vrot.slane %v4825, 7
      %v5176 = vrot.slane %v5175, 2
      %v5177 = vrot.slane %v4833, 7
      %v5178 = vrot.slane %v5177, 2
      %v5179 = vrot.slane %v4841, 7
      %v5180 = vrot.slane %v5179, 2
      %v5181 = vrot.slane %v4840, 7
      %v5182 = vrot.slane %v5181, 2
      %v5183 = vrot.slane %v4842, 7
      %v5184 = vrot.slane %v5183, 2
      %v5185 = vrot.slane %v4884, 7
      %v5186 = vrot.slane %v5185, 2
      %v5187 = vrot.slane %v4892, 7
      %v5188 = vrot.slane %v5187, 2
      %v5189 = vrot.slane %v4891, 7
      %v5190 = vrot.slane %v5189, 2
      %v5191 = vrot.slane %v4893, 7
      %v5192 = vrot.slane %v5191, 2
      %v5193 = vrot.slane %v4901, 7
      %v5194 = vrot.slane %v5193, 2
      %v5195 = vrot.slane %v4909, 7
      %v5196 = vrot.slane %v5195, 2
      %v5197 = vrot.slane %v4908, 7
      %v5198 = vrot.slane %v5197, 2
      %v5199 = vrot.slane %v4910, 7
      %v5200 = vrot.slane %v5199, 2
      %v5265 = vadd.f32 %v4408, %v5074
      %v5266 = vadd.f32 %v4416, %v5076
      %v5267 = vadd.f32 %v4415, %v5078
      %v5268 = vadd.f32 %v4417, %v5080
      %v5269 = vadd.f32 %v4425, %v5082
      %v5270 = vadd.f32 %v4433, %v5084
      %v5271 = vadd.f32 %v4432, %v5086
      %v5272 = vadd.f32 %v4434, %v5088
      %v5273 = vadd.f32 %v4476, %v5090
      %v5274 = vadd.f32 %v4484, %v5092
      %v5275 = vadd.f32 %v4483, %v5094
      %v5276 = vadd.f32 %v4485, %v5096
      %v5277 = vadd.f32 %v4493, %v5098
      %v5278 = vadd.f32 %v4501, %v5100
      %v5279 = vadd.f32 %v4500, %v5102
      %v5280 = vadd.f32 %v4502, %v5104
      %v5281 = vadd.f32 %v4544, %v5106
      %v5282 = vadd.f32 %v4552, %v5108
      %v5283 = vadd.f32 %v4551, %v5110
      %v5284 = vadd.f32 %v4553, %v5112
      %v5285 = vadd.f32 %v4561, %v5114
      %v5286 = vadd.f32 %v4569, %v5116
      %v5287 = vadd.f32 %v4568, %v5118
      %v5288 = vadd.f32 %v4570, %v5120
      %v5289 = vadd.f32 %v4612, %v5122
      %v5290 = vadd.f32 %v4620, %v5124
      %v5291 = vadd.f32 %v4619, %v5126
      %v5292 = vadd.f32 %v4621, %v5128
      %v5293 = vadd.f32 %v4629, %v5130
      %v5294 = vadd.f32 %v4637, %v5132
      %v5295 = vadd.f32 %v4636, %v5134
      %v5296 = vadd.f32 %v4638, %v5136
      %v5297 = vadd.f32 %v4680, %v5138
      %v5298 = vadd.f32 %v4688, %v5140
      %v5299 = vadd.f32 %v4687, %v5142
      %v5300 = vadd.f32 %v4689, %v5144
      %v5301 = vadd.f32 %v4697, %v5146
      %v5302 = vadd.f32 %v4705, %v5148
      %v5303 = vadd.f32 %v4704, %v5150
      %v5304 = vadd.f32 %v4706, %v5152
      %v5305 = vadd.f32 %v4748, %v5154
      %v5306 = vadd.f32 %v4756, %v5156
      %v5307 = vadd.f32 %v4755, %v5158
      %v5308 = vadd.f32 %v4757, %v5160
      %v5309 = vadd.f32 %v4765, %v5162
      %v5310 = vadd.f32 %v4773, %v5164
      %v5311 = vadd.f32 %v4772, %v5166
      %v5312 = vadd.f32 %v4774, %v5168
      %v5313 = vadd.f32 %v4816, %v5170
      %v5314 = vadd.f32 %v4824, %v5172
      %v5315 = vadd.f32 %v4823, %v5174
      %v5316 = vadd.f32 %v4825, %v5176
      %v5317 = vadd.f32 %v4833, %v5178
      %v5318 = vadd.f32 %v4841, %v5180
      %v5319 = vadd.f32 %v4840, %v5182
      %v5320 = vadd.f32 %v4842, %v5184
      %v5321 = vadd.f32 %v4884, %v5186
      %v5322 = vadd.f32 %v4892, %v5188
      %v5323 = vadd.f32 %v4891, %v5190
      %v5324 = vadd.f32 %v4893, %v5192
      %v5325 = vadd.f32 %v4901, %v5194
      %v5326 = vadd.f32 %v4909, %v5196
      %v5327 = vadd.f32 %v4908, %v5198
      %v5328 = vadd.f32 %v4910, %v5200
      %v5329 = vadd.f32 %v5265, %v4442
      %v5330 = vadd.f32 %v5266, %v4450
      %v5331 = vadd.f32 %v5267, %v4449
      %v5332 = vadd.f32 %v5268, %v4451
      %v5333 = vadd.f32 %v5269, %v4459
      %v5334 = vadd.f32 %v5270, %v4467
      %v5335 = vadd.f32 %v5271, %v4466
      %v5336 = vadd.f32 %v5272, %v4468
      %v5337 = vadd.f32 %v5273, %v4510
      %v5338 = vadd.f32 %v5274, %v4518
      %v5339 = vadd.f32 %v5275, %v4517
      %v5340 = vadd.f32 %v5276, %v4519
      %v5341 = vadd.f32 %v5277, %v4527
      %v5342 = vadd.f32 %v5278, %v4535
      %v5343 = vadd.f32 %v5279, %v4534
      %v5344 = vadd.f32 %v5280, %v4536
      %v5345 = vadd.f32 %v5281, %v4578
      %v5346 = vadd.f32 %v5282, %v4586
      %v5347 = vadd.f32 %v5283, %v4585
      %v5348 = vadd.f32 %v5284, %v4587
      %v5349 = vadd.f32 %v5285, %v4595
      %v5350 = vadd.f32 %v5286, %v4603
      %v5351 = vadd.f32 %v5287, %v4602
      %v5352 = vadd.f32 %v5288, %v4604
      %v5353 = vadd.f32 %v5289, %v4646
      %v5354 = vadd.f32 %v5290, %v4654
      %v5355 = vadd.f32 %v5291, %v4653
      %v5356 = vadd.f32 %v5292, %v4655
      %v5357 = vadd.f32 %v5293, %v4663
      %v5358 = vadd.f32 %v5294, %v4671
      %v5359 = vadd.f32 %v5295, %v4670
      %v5360 = vadd.f32 %v5296, %v4672
      %v5361 = vadd.f32 %v5297, %v4714
      %v5362 = vadd.f32 %v5298, %v4722
      %v5363 = vadd.f32 %v5299, %v4721
      %v5364 = vadd.f32 %v5300, %v4723
      %v5365 = vadd.f32 %v5301, %v4731
      %v5366 = vadd.f32 %v5302, %v4739
      %v5367 = vadd.f32 %v5303, %v4738
      %v5368 = vadd.f32 %v5304, %v4740
      %v5369 = vadd.f32 %v5305, %v4782
      %v5370 = vadd.f32 %v5306, %v4790
      %v5371 = vadd.f32 %v5307, %v4789
      %v5372 = vadd.f32 %v5308, %v4791
      %v5373 = vadd.f32 %v5309, %v4799
      %v5374 = vadd.f32 %v5310, %v4807
      %v5375 = vadd.f32 %v5311, %v4806
      %v5376 = vadd.f32 %v5312, %v4808
      %v5377 = vadd.f32 %v5313, %v4850
      %v5378 = vadd.f32 %v5314, %v4858
      %v5379 = vadd.f32 %v5315, %v4857
      %v5380 = vadd.f32 %v5316, %v4859
      %v5381 = vadd.f32 %v5317, %v4867
      %v5382 = vadd.f32 %v5318, %v4875
      %v5383 = vadd.f32 %v5319, %v4874
      %v5384 = vadd.f32 %v5320, %v4876
      %v5385 = vadd.f32 %v5321, %v4918
      %v5386 = vadd.f32 %v5322, %v4926
      %v5387 = vadd.f32 %v5323, %v4925
      %v5388 = vadd.f32 %v5324, %v4927
      %v5389 = vadd.f32 %v5325, %v4935
      %v5390 = vadd.f32 %v5326, %v4943
      %v5391 = vadd.f32 %v5327, %v4942
      %v5392 = vadd.f32 %v5328, %v4944
      %v5393 = vrot.slane %v4442, 7
      %v5394 = vrot.slane %v5393, 2
      %v5395 = vrot.slane %v4450, 7
      %v5396 = vrot.slane %v5395, 2
      %v5397 = vrot.slane %v4449, 7
      %v5398 = vrot.slane %v5397, 2
      %v5399 = vrot.slane %v4451, 7
      %v5400 = vrot.slane %v5399, 2
      %v5401 = vrot.slane %v4459, 7
      %v5402 = vrot.slane %v5401, 2
      %v5403 = vrot.slane %v4467, 7
      %v5404 = vrot.slane %v5403, 2
      %v5405 = vrot.slane %v4466, 7
      %v5406 = vrot.slane %v5405, 2
      %v5407 = vrot.slane %v4468, 7
      %v5408 = vrot.slane %v5407, 2
      %v5409 = vrot.slane %v4510, 7
      %v5410 = vrot.slane %v5409, 2
      %v5411 = vrot.slane %v4518, 7
      %v5412 = vrot.slane %v5411, 2
      %v5413 = vrot.slane %v4517, 7
      %v5414 = vrot.slane %v5413, 2
      %v5415 = vrot.slane %v4519, 7
      %v5416 = vrot.slane %v5415, 2
      %v5417 = vrot.slane %v4527, 7
      %v5418 = vrot.slane %v5417, 2
      %v5419 = vrot.slane %v4535, 7
      %v5420 = vrot.slane %v5419, 2
      %v5421 = vrot.slane %v4534, 7
      %v5422 = vrot.slane %v5421, 2
      %v5423 = vrot.slane %v4536, 7
      %v5424 = vrot.slane %v5423, 2
      %v5425 = vrot.slane %v4578, 7
      %v5426 = vrot.slane %v5425, 2
      %v5427 = vrot.slane %v4586, 7
      %v5428 = vrot.slane %v5427, 2
      %v5429 = vrot.slane %v4585, 7
      %v5430 = vrot.slane %v5429, 2
      %v5431 = vrot.slane %v4587, 7
      %v5432 = vrot.slane %v5431, 2
      %v5433 = vrot.slane %v4595, 7
      %v5434 = vrot.slane %v5433, 2
      %v5435 = vrot.slane %v4603, 7
      %v5436 = vrot.slane %v5435, 2
      %v5437 = vrot.slane %v4602, 7
      %v5438 = vrot.slane %v5437, 2
      %v5439 = vrot.slane %v4604, 7
      %v5440 = vrot.slane %v5439, 2
      %v5441 = vrot.slane %v4646, 7
      %v5442 = vrot.slane %v5441, 2
      %v5443 = vrot.slane %v4654, 7
      %v5444 = vrot.slane %v5443, 2
      %v5445 = vrot.slane %v4653, 7
      %v5446 = vrot.slane %v5445, 2
      %v5447 = vrot.slane %v4655, 7
      %v5448 = vrot.slane %v5447, 2
      %v5449 = vrot.slane %v4663, 7
      %v5450 = vrot.slane %v5449, 2
      %v5451 = vrot.slane %v4671, 7
      %v5452 = vrot.slane %v5451, 2
      %v5453 = vrot.slane %v4670, 7
      %v5454 = vrot.slane %v5453, 2
      %v5455 = vrot.slane %v4672, 7
      %v5456 = vrot.slane %v5455, 2
      %v5457 = vrot.slane %v4714, 7
      %v5458 = vrot.slane %v5457, 2
      %v5459 = vrot.slane %v4722, 7
      %v5460 = vrot.slane %v5459, 2
      %v5461 = vrot.slane %v4721, 7
      %v5462 = vrot.slane %v5461, 2
      %v5463 = vrot.slane %v4723, 7
      %v5464 = vrot.slane %v5463, 2
      %v5465 = vrot.slane %v4731, 7
      %v5466 = vrot.slane %v5465, 2
      %v5467 = vrot.slane %v4739, 7
      %v5468 = vrot.slane %v5467, 2
      %v5469 = vrot.slane %v4738, 7
      %v5470 = vrot.slane %v5469, 2
      %v5471 = vrot.slane %v4740, 7
      %v5472 = vrot.slane %v5471, 2
      %v5473 = vrot.slane %v4782, 7
      %v5474 = vrot.slane %v5473, 2
      %v5475 = vrot.slane %v4790, 7
      %v5476 = vrot.slane %v5475, 2
      %v5477 = vrot.slane %v4789, 7
      %v5478 = vrot.slane %v5477, 2
      %v5479 = vrot.slane %v4791, 7
      %v5480 = vrot.slane %v5479, 2
      %v5481 = vrot.slane %v4799, 7
      %v5482 = vrot.slane %v5481, 2
      %v5483 = vrot.slane %v4807, 7
      %v5484 = vrot.slane %v5483, 2
      %v5485 = vrot.slane %v4806, 7
      %v5486 = vrot.slane %v5485, 2
      %v5487 = vrot.slane %v4808, 7
      %v5488 = vrot.slane %v5487, 2
      %v5489 = vrot.slane %v4850, 7
      %v5490 = vrot.slane %v5489, 2
      %v5491 = vrot.slane %v4858, 7
      %v5492 = vrot.slane %v5491, 2
      %v5493 = vrot.slane %v4857, 7
      %v5494 = vrot.slane %v5493, 2
      %v5495 = vrot.slane %v4859, 7
      %v5496 = vrot.slane %v5495, 2
      %v5497 = vrot.slane %v4867, 7
      %v5498 = vrot.slane %v5497, 2
      %v5499 = vrot.slane %v4875, 7
      %v5500 = vrot.slane %v5499, 2
      %v5501 = vrot.slane %v4874, 7
      %v5502 = vrot.slane %v5501, 2
      %v5503 = vrot.slane %v4876, 7
      %v5504 = vrot.slane %v5503, 2
      %v5505 = vrot.slane %v4918, 7
      %v5506 = vrot.slane %v5505, 2
      %v5507 = vrot.slane %v4926, 7
      %v5508 = vrot.slane %v5507, 2
      %v5509 = vrot.slane %v4925, 7
      %v5510 = vrot.slane %v5509, 2
      %v5511 = vrot.slane %v4927, 7
      %v5512 = vrot.slane %v5511, 2
      %v5513 = vrot.slane %v4935, 7
      %v5514 = vrot.slane %v5513, 2
      %v5515 = vrot.slane %v4943, 7
      %v5516 = vrot.slane %v5515, 2
      %v5517 = vrot.slane %v4942, 7
      %v5518 = vrot.slane %v5517, 2
      %v5519 = vrot.slane %v4944, 7
      %v5520 = vrot.slane %v5519, 2
      %v5585 = vadd.f32 %v5329, %v5394
      %v5586 = vadd.f32 %v5330, %v5396
      %v5587 = vadd.f32 %v5331, %v5398
      %v5588 = vadd.f32 %v5332, %v5400
      %v5589 = vadd.f32 %v5333, %v5402
      %v5590 = vadd.f32 %v5334, %v5404
      %v5591 = vadd.f32 %v5335, %v5406
      %v5592 = vadd.f32 %v5336, %v5408
      %v5593 = vadd.f32 %v5337, %v5410
      %v5594 = vadd.f32 %v5338, %v5412
      %v5595 = vadd.f32 %v5339, %v5414
      %v5596 = vadd.f32 %v5340, %v5416
      %v5597 = vadd.f32 %v5341, %v5418
      %v5598 = vadd.f32 %v5342, %v5420
      %v5599 = vadd.f32 %v5343, %v5422
      %v5600 = vadd.f32 %v5344, %v5424
      %v5601 = vadd.f32 %v5345, %v5426
      %v5602 = vadd.f32 %v5346, %v5428
      %v5603 = vadd.f32 %v5347, %v5430
      %v5604 = vadd.f32 %v5348, %v5432
      %v5605 = vadd.f32 %v5349, %v5434
      %v5606 = vadd.f32 %v5350, %v5436
      %v5607 = vadd.f32 %v5351, %v5438
      %v5608 = vadd.f32 %v5352, %v5440
      %v5609 = vadd.f32 %v5353, %v5442
      %v5610 = vadd.f32 %v5354, %v5444
      %v5611 = vadd.f32 %v5355, %v5446
      %v5612 = vadd.f32 %v5356, %v5448
      %v5613 = vadd.f32 %v5357, %v5450
      %v5614 = vadd.f32 %v5358, %v5452
      %v5615 = vadd.f32 %v5359, %v5454
      %v5616 = vadd.f32 %v5360, %v5456
      %v5617 = vadd.f32 %v5361, %v5458
      %v5618 = vadd.f32 %v5362, %v5460
      %v5619 = vadd.f32 %v5363, %v5462
      %v5620 = vadd.f32 %v5364, %v5464
      %v5621 = vadd.f32 %v5365, %v5466
      %v5622 = vadd.f32 %v5366, %v5468
      %v5623 = vadd.f32 %v5367, %v5470
      %v5624 = vadd.f32 %v5368, %v5472
      %v5625 = vadd.f32 %v5369, %v5474
      %v5626 = vadd.f32 %v5370, %v5476
      %v5627 = vadd.f32 %v5371, %v5478
      %v5628 = vadd.f32 %v5372, %v5480
      %v5629 = vadd.f32 %v5373, %v5482
      %v5630 = vadd.f32 %v5374, %v5484
      %v5631 = vadd.f32 %v5375, %v5486
      %v5632 = vadd.f32 %v5376, %v5488
      %v5633 = vadd.f32 %v5377, %v5490
      %v5634 = vadd.f32 %v5378, %v5492
      %v5635 = vadd.f32 %v5379, %v5494
      %v5636 = vadd.f32 %v5380, %v5496
      %v5637 = vadd.f32 %v5381, %v5498
      %v5638 = vadd.f32 %v5382, %v5500
      %v5639 = vadd.f32 %v5383, %v5502
      %v5640 = vadd.f32 %v5384, %v5504
      %v5641 = vadd.f32 %v5385, %v5506
      %v5642 = vadd.f32 %v5386, %v5508
      %v5643 = vadd.f32 %v5387, %v5510
      %v5644 = vadd.f32 %v5388, %v5512
      %v5645 = vadd.f32 %v5389, %v5514
      %v5646 = vadd.f32 %v5390, %v5516
      %v5647 = vadd.f32 %v5391, %v5518
      %v5648 = vadd.f32 %v5392, %v5520
      %v5649 = vmul.f32 %v5585, 0.25
      %v5650 = vmul.f32 %v5586, 0.25
      %v5651 = vmul.f32 %v5587, 0.25
      %v5652 = vmul.f32 %v5588, 0.25
      %v5653 = vmul.f32 %v5589, 0.25
      %v5654 = vmul.f32 %v5590, 0.25
      %v5655 = vmul.f32 %v5591, 0.25
      %v5656 = vmul.f32 %v5592, 0.25
      %v5657 = vmul.f32 %v5593, 0.25
      %v5658 = vmul.f32 %v5594, 0.25
      %v5659 = vmul.f32 %v5595, 0.25
      %v5660 = vmul.f32 %v5596, 0.25
      %v5661 = vmul.f32 %v5597, 0.25
      %v5662 = vmul.f32 %v5598, 0.25
      %v5663 = vmul.f32 %v5599, 0.25
      %v5664 = vmul.f32 %v5600, 0.25
      %v5665 = vmul.f32 %v5601, 0.25
      %v5666 = vmul.f32 %v5602, 0.25
      %v5667 = vmul.f32 %v5603, 0.25
      %v5668 = vmul.f32 %v5604, 0.25
      %v5669 = vmul.f32 %v5605, 0.25
      %v5670 = vmul.f32 %v5606, 0.25
      %v5671 = vmul.f32 %v5607, 0.25
      %v5672 = vmul.f32 %v5608, 0.25
      %v5673 = vmul.f32 %v5609, 0.25
      %v5674 = vmul.f32 %v5610, 0.25
      %v5675 = vmul.f32 %v5611, 0.25
      %v5676 = vmul.f32 %v5612, 0.25
      %v5677 = vmul.f32 %v5613, 0.25
      %v5678 = vmul.f32 %v5614, 0.25
      %v5679 = vmul.f32 %v5615, 0.25
      %v5680 = vmul.f32 %v5616, 0.25
      %v5681 = vmul.f32 %v5617, 0.25
      %v5682 = vmul.f32 %v5618, 0.25
      %v5683 = vmul.f32 %v5619, 0.25
      %v5684 = vmul.f32 %v5620, 0.25
      %v5685 = vmul.f32 %v5621, 0.25
      %v5686 = vmul.f32 %v5622, 0.25
      %v5687 = vmul.f32 %v5623, 0.25
      %v5688 = vmul.f32 %v5624, 0.25
      %v5689 = vmul.f32 %v5625, 0.25
      %v5690 = vmul.f32 %v5626, 0.25
      %v5691 = vmul.f32 %v5627, 0.25
      %v5692 = vmul.f32 %v5628, 0.25
      %v5693 = vmul.f32 %v5629, 0.25
      %v5694 = vmul.f32 %v5630, 0.25
      %v5695 = vmul.f32 %v5631, 0.25
      %v5696 = vmul.f32 %v5632, 0.25
      %v5697 = vmul.f32 %v5633, 0.25
      %v5698 = vmul.f32 %v5634, 0.25
      %v5699 = vmul.f32 %v5635, 0.25
      %v5700 = vmul.f32 %v5636, 0.25
      %v5701 = vmul.f32 %v5637, 0.25
      %v5702 = vmul.f32 %v5638, 0.25
      %v5703 = vmul.f32 %v5639, 0.25
      %v5704 = vmul.f32 %v5640, 0.25
      %v5705 = vmul.f32 %v5641, 0.25
      %v5706 = vmul.f32 %v5642, 0.25
      %v5707 = vmul.f32 %v5643, 0.25
      %v5708 = vmul.f32 %v5644, 0.25
      %v5709 = vmul.f32 %v5645, 0.25
      %v5710 = vmul.f32 %v5646, 0.25
      %v5711 = vmul.f32 %v5647, 0.25
      %v5712 = vmul.f32 %v5648, 0.25
      %v5745 = vcombine.high %v280, %v280
      %v5747 = vunpack.c.l.s4 1983009808
      %v5748 = vunpack.c.0.s8 %v5747
      %v5749 = vlaneseq
      %v5750 = vshrl.u32 %v5749, 7
      %v5751 = vsub.s32 %v5748, %v5750
      %v5752 = vrot.slane %v280, %v5751
      %v5754 = vunpack.c.l.s4 1983009808
      %v5755 = vunpack.c.0.s8 %v5754
      %v5756 = vlaneseq
      %v5757 = vshrl.u32 %v5756, 7
      %v5758 = vsub.s32 %v5755, %v5757
      %v5759 = vrot.slane %v5745, %v5758
      %v5760 = vcombine.high %v5752, %v5752
      %v5761 = vcombine.high %v5759, %v5759
      %v5762 = vcombine.high %v281, %v281
      %v5764 = vunpack.c.l.s4 1983009808
      %v5765 = vunpack.c.0.s8 %v5764
      %v5766 = vlaneseq
      %v5767 = vshrl.u32 %v5766, 7
      %v5768 = vsub.s32 %v5765, %v5767
      %v5769 = vrot.slane %v281, %v5768
      %v5771 = vunpack.c.l.s4 1983009808
      %v5772 = vunpack.c.0.s8 %v5771
      %v5773 = vlaneseq
      %v5774 = vshrl.u32 %v5773, 7
      %v5775 = vsub.s32 %v5772, %v5774
      %v5776 = vrot.slane %v5762, %v5775
      %v5777 = vcombine.high %v5769, %v5769
      %v5778 = vcombine.high %v5776, %v5776
      %v5779 = vcombine.high %v282, %v282
      %v5781 = vunpack.c.l.s4 1983009808
      %v5782 = vunpack.c.0.s8 %v5781
      %v5783 = vlaneseq
      %v5784 = vshrl.u32 %v5783, 7
      %v5785 = vsub.s32 %v5782, %v5784
      %v5786 = vrot.slane %v282, %v5785
      %v5788 = vunpack.c.l.s4 1983009808
      %v5789 = vunpack.c.0.s8 %v5788
      %v5790 = vlaneseq
      %v5791 = vshrl.u32 %v5790, 7
      %v5792 = vsub.s32 %v5789, %v5791
      %v5793 = vrot.slane %v5779, %v5792
      %v5794 = vcombine.high %v5786, %v5786
      %v5795 = vcombine.high %v5793, %v5793
      %v5796 = vcombine.high %v283, %v283
      %v5798 = vunpack.c.l.s4 1983009808
      %v5799 = vunpack.c.0.s8 %v5798
      %v5800 = vlaneseq
      %v5801 = vshrl.u32 %v5800, 7
      %v5802 = vsub.s32 %v5799, %v5801
      %v5803 = vrot.slane %v283, %v5802
      %v5805 = vunpack.c.l.s4 1983009808
      %v5806 = vunpack.c.0.s8 %v5805
      %v5807 = vlaneseq
      %v5808 = vshrl.u32 %v5807, 7
      %v5809 = vsub.s32 %v5806, %v5808
      %v5810 = vrot.slane %v5796, %v5809
      %v5811 = vcombine.high %v5803, %v5803
      %v5812 = vcombine.high %v5810, %v5810
      %v5813 = vcombine.high %v284, %v284
      %v5815 = vunpack.c.l.s4 1983009808
      %v5816 = vunpack.c.0.s8 %v5815
      %v5817 = vlaneseq
      %v5818 = vshrl.u32 %v5817, 7
      %v5819 = vsub.s32 %v5816, %v5818
      %v5820 = vrot.slane %v284, %v5819
      %v5822 = vunpack.c.l.s4 1983009808
      %v5823 = vunpack.c.0.s8 %v5822
      %v5824 = vlaneseq
      %v5825 = vshrl.u32 %v5824, 7
      %v5826 = vsub.s32 %v5823, %v5825
      %v5827 = vrot.slane %v5813, %v5826
      %v5828 = vcombine.high %v5820, %v5820
      %v5829 = vcombine.high %v5827, %v5827
      %v5830 = vcombine.high %v285, %v285
      %v5832 = vunpack.c.l.s4 1983009808
      %v5833 = vunpack.c.0.s8 %v5832
      %v5834 = vlaneseq
      %v5835 = vshrl.u32 %v5834, 7
      %v5836 = vsub.s32 %v5833, %v5835
      %v5837 = vrot.slane %v285, %v5836
      %v5839 = vunpack.c.l.s4 1983009808
      %v5840 = vunpack.c.0.s8 %v5839
      %v5841 = vlaneseq
      %v5842 = vshrl.u32 %v5841, 7
      %v5843 = vsub.s32 %v5840, %v5842
      %v5844 = vrot.slane %v5830, %v5843
      %v5845 = vcombine.high %v5837, %v5837
      %v5846 = vcombine.high %v5844, %v5844
      %v5847 = vcombine.high %v286, %v286
      %v5849 = vunpack.c.l.s4 1983009808
      %v5850 = vunpack.c.0.s8 %v5849
      %v5851 = vlaneseq
      %v5852 = vshrl.u32 %v5851, 7
      %v5853 = vsub.s32 %v5850, %v5852
      %v5854 = vrot.slane %v286, %v5853
      %v5856 = vunpack.c.l.s4 1983009808
      %v5857 = vunpack.c.0.s8 %v5856
      %v5858 = vlaneseq
      %v5859 = vshrl.u32 %v5858, 7
      %v5860 = vsub.s32 %v5857, %v5859
      %v5861 = vrot.slane %v5847, %v5860
      %v5862 = vcombine.high %v5854, %v5854
      %v5863 = vcombine.high %v5861, %v5861
      %v5864 = vcombine.high %v287, %v287
      %v5866 = vunpack.c.l.s4 1983009808
      %v5867 = vunpack.c.0.s8 %v5866
      %v5868 = vlaneseq
      %v5869 = vshrl.u32 %v5868, 7
      %v5870 = vsub.s32 %v5867, %v5869
      %v5871 = vrot.slane %v287, %v5870
      %v5873 = vunpack.c.l.s4 1983009808
      %v5874 = vunpack.c.0.s8 %v5873
      %v5875 = vlaneseq
      %v5876 = vshrl.u32 %v5875, 7
      %v5877 = vsub.s32 %v5874, %v5876
      %v5878 = vrot.slane %v5864, %v5877
      %v5879 = vcombine.high %v5871, %v5871
      %v5880 = vcombine.high %v5878, %v5878
      %v5881 = vcombine.high %v288, %v288
      %v5883 = vunpack.c.l.s4 1983009808
      %v5884 = vunpack.c.0.s8 %v5883
      %v5885 = vlaneseq
      %v5886 = vshrl.u32 %v5885, 7
      %v5887 = vsub.s32 %v5884, %v5886
      %v5888 = vrot.slane %v288, %v5887
      %v5890 = vunpack.c.l.s4 1983009808
      %v5891 = vunpack.c.0.s8 %v5890
      %v5892 = vlaneseq
      %v5893 = vshrl.u32 %v5892, 7
      %v5894 = vsub.s32 %v5891, %v5893
      %v5895 = vrot.slane %v5881, %v5894
      %v5896 = vcombine.high %v5888, %v5888
      %v5897 = vcombine.high %v5895, %v5895
      %v5898 = vcombine.high %v289, %v289
      %v5900 = vunpack.c.l.s4 1983009808
      %v5901 = vunpack.c.0.s8 %v5900
      %v5902 = vlaneseq
      %v5903 = vshrl.u32 %v5902, 7
      %v5904 = vsub.s32 %v5901, %v5903
      %v5905 = vrot.slane %v289, %v5904
      %v5907 = vunpack.c.l.s4 1983009808
      %v5908 = vunpack.c.0.s8 %v5907
      %v5909 = vlaneseq
      %v5910 = vshrl.u32 %v5909, 7
      %v5911 = vsub.s32 %v5908, %v5910
      %v5912 = vrot.slane %v5898, %v5911
      %v5913 = vcombine.high %v5905, %v5905
      %v5914 = vcombine.high %v5912, %v5912
      %v5915 = vcombine.high %v290, %v290
      %v5917 = vunpack.c.l.s4 1983009808
      %v5918 = vunpack.c.0.s8 %v5917
      %v5919 = vlaneseq
      %v5920 = vshrl.u32 %v5919, 7
      %v5921 = vsub.s32 %v5918, %v5920
      %v5922 = vrot.slane %v290, %v5921
      %v5924 = vunpack.c.l.s4 1983009808
      %v5925 = vunpack.c.0.s8 %v5924
      %v5926 = vlaneseq
      %v5927 = vshrl.u32 %v5926, 7
      %v5928 = vsub.s32 %v5925, %v5927
      %v5929 = vrot.slane %v5915, %v5928
      %v5930 = vcombine.high %v5922, %v5922
      %v5931 = vcombine.high %v5929, %v5929
      %v5932 = vcombine.high %v291, %v291
      %v5934 = vunpack.c.l.s4 1983009808
      %v5935 = vunpack.c.0.s8 %v5934
      %v5936 = vlaneseq
      %v5937 = vshrl.u32 %v5936, 7
      %v5938 = vsub.s32 %v5935, %v5937
      %v5939 = vrot.slane %v291, %v5938
      %v5941 = vunpack.c.l.s4 1983009808
      %v5942 = vunpack.c.0.s8 %v5941
      %v5943 = vlaneseq
      %v5944 = vshrl.u32 %v5943, 7
      %v5945 = vsub.s32 %v5942, %v5944
      %v5946 = vrot.slane %v5932, %v5945
      %v5947 = vcombine.high %v5939, %v5939
      %v5948 = vcombine.high %v5946, %v5946
      %v5949 = vcombine.high %v292, %v292
      %v5951 = vunpack.c.l.s4 1983009808
      %v5952 = vunpack.c.0.s8 %v5951
      %v5953 = vlaneseq
      %v5954 = vshrl.u32 %v5953, 7
      %v5955 = vsub.s32 %v5952, %v5954
      %v5956 = vrot.slane %v292, %v5955
      %v5958 = vunpack.c.l.s4 1983009808
      %v5959 = vunpack.c.0.s8 %v5958
      %v5960 = vlaneseq
      %v5961 = vshrl.u32 %v5960, 7
      %v5962 = vsub.s32 %v5959, %v5961
      %v5963 = vrot.slane %v5949, %v5962
      %v5964 = vcombine.high %v5956, %v5956
      %v5965 = vcombine.high %v5963, %v5963
      %v5966 = vcombine.high %v293, %v293
      %v5968 = vunpack.c.l.s4 1983009808
      %v5969 = vunpack.c.0.s8 %v5968
      %v5970 = vlaneseq
      %v5971 = vshrl.u32 %v5970, 7
      %v5972 = vsub.s32 %v5969, %v5971
      %v5973 = vrot.slane %v293, %v5972
      %v5975 = vunpack.c.l.s4 1983009808
      %v5976 = vunpack.c.0.s8 %v5975
      %v5977 = vlaneseq
      %v5978 = vshrl.u32 %v5977, 7
      %v5979 = vsub.s32 %v5976, %v5978
      %v5980 = vrot.slane %v5966, %v5979
      %v5981 = vcombine.high %v5973, %v5973
      %v5982 = vcombine.high %v5980, %v5980
      %v5983 = vcombine.high %v294, %v294
      %v5985 = vunpack.c.l.s4 1983009808
      %v5986 = vunpack.c.0.s8 %v5985
      %v5987 = vlaneseq
      %v5988 = vshrl.u32 %v5987, 7
      %v5989 = vsub.s32 %v5986, %v5988
      %v5990 = vrot.slane %v294, %v5989
      %v5992 = vunpack.c.l.s4 1983009808
      %v5993 = vunpack.c.0.s8 %v5992
      %v5994 = vlaneseq
      %v5995 = vshrl.u32 %v5994, 7
      %v5996 = vsub.s32 %v5993, %v5995
      %v5997 = vrot.slane %v5983, %v5996
      %v5998 = vcombine.high %v5990, %v5990
      %v5999 = vcombine.high %v5997, %v5997
      %v6000 = vcombine.high %v295, %v295
      %v6002 = vunpack.c.l.s4 1983009808
      %v6003 = vunpack.c.0.s8 %v6002
      %v6004 = vlaneseq
      %v6005 = vshrl.u32 %v6004, 7
      %v6006 = vsub.s32 %v6003, %v6005
      %v6007 = vrot.slane %v295, %v6006
      %v6009 = vunpack.c.l.s4 1983009808
      %v6010 = vunpack.c.0.s8 %v6009
      %v6011 = vlaneseq
      %v6012 = vshrl.u32 %v6011, 7
      %v6013 = vsub.s32 %v6010, %v6012
      %v6014 = vrot.slane %v6000, %v6013
      %v6015 = vcombine.high %v6007, %v6007
      %v6016 = vcombine.high %v6014, %v6014
      %v6017 = vcombine.high %v296, %v296
      %v6019 = vunpack.c.l.s4 1983009808
      %v6020 = vunpack.c.0.s8 %v6019
      %v6021 = vlaneseq
      %v6022 = vshrl.u32 %v6021, 7
      %v6023 = vsub.s32 %v6020, %v6022
      %v6024 = vrot.slane %v296, %v6023
      %v6026 = vunpack.c.l.s4 1983009808
      %v6027 = vunpack.c.0.s8 %v6026
      %v6028 = vlaneseq
      %v6029 = vshrl.u32 %v6028, 7
      %v6030 = vsub.s32 %v6027, %v6029
      %v6031 = vrot.slane %v6017, %v6030
      %v6032 = vcombine.high %v6024, %v6024
      %v6033 = vcombine.high %v6031, %v6031
      %v6034 = vcombine.high %v297, %v297
      %v6036 = vunpack.c.l.s4 1983009808
      %v6037 = vunpack.c.0.s8 %v6036
      %v6038 = vlaneseq
      %v6039 = vshrl.u32 %v6038, 7
      %v6040 = vsub.s32 %v6037, %v6039
      %v6041 = vrot.slane %v297, %v6040
      %v6043 = vunpack.c.l.s4 1983009808
      %v6044 = vunpack.c.0.s8 %v6043
      %v6045 = vlaneseq
      %v6046 = vshrl.u32 %v6045, 7
      %v6047 = vsub.s32 %v6044, %v6046
      %v6048 = vrot.slane %v6034, %v6047
      %v6049 = vcombine.high %v6041, %v6041
      %v6050 = vcombine.high %v6048, %v6048
      %v6051 = vcombine.high %v298, %v298
      %v6053 = vunpack.c.l.s4 1983009808
      %v6054 = vunpack.c.0.s8 %v6053
      %v6055 = vlaneseq
      %v6056 = vshrl.u32 %v6055, 7
      %v6057 = vsub.s32 %v6054, %v6056
      %v6058 = vrot.slane %v298, %v6057
      %v6060 = vunpack.c.l.s4 1983009808
      %v6061 = vunpack.c.0.s8 %v6060
      %v6062 = vlaneseq
      %v6063 = vshrl.u32 %v6062, 7
      %v6064 = vsub.s32 %v6061, %v6063
      %v6065 = vrot.slane %v6051, %v6064
      %v6066 = vcombine.high %v6058, %v6058
      %v6067 = vcombine.high %v6065, %v6065
      %v6068 = vcombine.high %v299, %v299
      %v6070 = vunpack.c.l.s4 1983009808
      %v6071 = vunpack.c.0.s8 %v6070
      %v6072 = vlaneseq
      %v6073 = vshrl.u32 %v6072, 7
      %v6074 = vsub.s32 %v6071, %v6073
      %v6075 = vrot.slane %v299, %v6074
      %v6077 = vunpack.c.l.s4 1983009808
      %v6078 = vunpack.c.0.s8 %v6077
      %v6079 = vlaneseq
      %v6080 = vshrl.u32 %v6079, 7
      %v6081 = vsub.s32 %v6078, %v6080
      %v6082 = vrot.slane %v6068, %v6081
      %v6083 = vcombine.high %v6075, %v6075
      %v6084 = vcombine.high %v6082, %v6082
      %v6085 = vcombine.high %v300, %v300
      %v6087 = vunpack.c.l.s4 1983009808
      %v6088 = vunpack.c.0.s8 %v6087
      %v6089 = vlaneseq
      %v6090 = vshrl.u32 %v6089, 7
      %v6091 = vsub.s32 %v6088, %v6090
      %v6092 = vrot.slane %v300, %v6091
      %v6094 = vunpack.c.l.s4 1983009808
      %v6095 = vunpack.c.0.s8 %v6094
      %v6096 = vlaneseq
      %v6097 = vshrl.u32 %v6096, 7
      %v6098 = vsub.s32 %v6095, %v6097
      %v6099 = vrot.slane %v6085, %v6098
      %v6100 = vcombine.high %v6092, %v6092
      %v6101 = vcombine.high %v6099, %v6099
      %v6102 = vcombine.high %v301, %v301
      %v6104 = vunpack.c.l.s4 1983009808
      %v6105 = vunpack.c.0.s8 %v6104
      %v6106 = vlaneseq
      %v6107 = vshrl.u32 %v6106, 7
      %v6108 = vsub.s32 %v6105, %v6107
      %v6109 = vrot.slane %v301, %v6108
      %v6111 = vunpack.c.l.s4 1983009808
      %v6112 = vunpack.c.0.s8 %v6111
      %v6113 = vlaneseq
      %v6114 = vshrl.u32 %v6113, 7
      %v6115 = vsub.s32 %v6112, %v6114
      %v6116 = vrot.slane %v6102, %v6115
      %v6117 = vcombine.high %v6109, %v6109
      %v6118 = vcombine.high %v6116, %v6116
      %v6119 = vcombine.high %v302, %v302
      %v6121 = vunpack.c.l.s4 1983009808
      %v6122 = vunpack.c.0.s8 %v6121
      %v6123 = vlaneseq
      %v6124 = vshrl.u32 %v6123, 7
      %v6125 = vsub.s32 %v6122, %v6124
      %v6126 = vrot.slane %v302, %v6125
      %v6128 = vunpack.c.l.s4 1983009808
      %v6129 = vunpack.c.0.s8 %v6128
      %v6130 = vlaneseq
      %v6131 = vshrl.u32 %v6130, 7
      %v6132 = vsub.s32 %v6129, %v6131
      %v6133 = vrot.slane %v6119, %v6132
      %v6134 = vcombine.high %v6126, %v6126
      %v6135 = vcombine.high %v6133, %v6133
      %v6136 = vcombine.high %v303, %v303
      %v6138 = vunpack.c.l.s4 1983009808
      %v6139 = vunpack.c.0.s8 %v6138
      %v6140 = vlaneseq
      %v6141 = vshrl.u32 %v6140, 7
      %v6142 = vsub.s32 %v6139, %v6141
      %v6143 = vrot.slane %v303, %v6142
      %v6145 = vunpack.c.l.s4 1983009808
      %v6146 = vunpack.c.0.s8 %v6145
      %v6147 = vlaneseq
      %v6148 = vshrl.u32 %v6147, 7
      %v6149 = vsub.s32 %v6146, %v6148
      %v6150 = vrot.slane %v6136, %v6149
      %v6151 = vcombine.high %v6143, %v6143
      %v6152 = vcombine.high %v6150, %v6150
      %v6153 = vcombine.high %v304, %v304
      %v6155 = vunpack.c.l.s4 1983009808
      %v6156 = vunpack.c.0.s8 %v6155
      %v6157 = vlaneseq
      %v6158 = vshrl.u32 %v6157, 7
      %v6159 = vsub.s32 %v6156, %v6158
      %v6160 = vrot.slane %v304, %v6159
      %v6162 = vunpack.c.l.s4 1983009808
      %v6163 = vunpack.c.0.s8 %v6162
      %v6164 = vlaneseq
      %v6165 = vshrl.u32 %v6164, 7
      %v6166 = vsub.s32 %v6163, %v6165
      %v6167 = vrot.slane %v6153, %v6166
      %v6168 = vcombine.high %v6160, %v6160
      %v6169 = vcombine.high %v6167, %v6167
      %v6170 = vcombine.high %v305, %v305
      %v6172 = vunpack.c.l.s4 1983009808
      %v6173 = vunpack.c.0.s8 %v6172
      %v6174 = vlaneseq
      %v6175 = vshrl.u32 %v6174, 7
      %v6176 = vsub.s32 %v6173, %v6175
      %v6177 = vrot.slane %v305, %v6176
      %v6179 = vunpack.c.l.s4 1983009808
      %v6180 = vunpack.c.0.s8 %v6179
      %v6181 = vlaneseq
      %v6182 = vshrl.u32 %v6181, 7
      %v6183 = vsub.s32 %v6180, %v6182
      %v6184 = vrot.slane %v6170, %v6183
      %v6185 = vcombine.high %v6177, %v6177
      %v6186 = vcombine.high %v6184, %v6184
      %v6187 = vcombine.high %v306, %v306
      %v6189 = vunpack.c.l.s4 1983009808
      %v6190 = vunpack.c.0.s8 %v6189
      %v6191 = vlaneseq
      %v6192 = vshrl.u32 %v6191, 7
      %v6193 = vsub.s32 %v6190, %v6192
      %v6194 = vrot.slane %v306, %v6193
      %v6196 = vunpack.c.l.s4 1983009808
      %v6197 = vunpack.c.0.s8 %v6196
      %v6198 = vlaneseq
      %v6199 = vshrl.u32 %v6198, 7
      %v6200 = vsub.s32 %v6197, %v6199
      %v6201 = vrot.slane %v6187, %v6200
      %v6202 = vcombine.high %v6194, %v6194
      %v6203 = vcombine.high %v6201, %v6201
      %v6204 = vcombine.high %v307, %v307
      %v6206 = vunpack.c.l.s4 1983009808
      %v6207 = vunpack.c.0.s8 %v6206
      %v6208 = vlaneseq
      %v6209 = vshrl.u32 %v6208, 7
      %v6210 = vsub.s32 %v6207, %v6209
      %v6211 = vrot.slane %v307, %v6210
      %v6213 = vunpack.c.l.s4 1983009808
      %v6214 = vunpack.c.0.s8 %v6213
      %v6215 = vlaneseq
      %v6216 = vshrl.u32 %v6215, 7
      %v6217 = vsub.s32 %v6214, %v6216
      %v6218 = vrot.slane %v6204, %v6217
      %v6219 = vcombine.high %v6211, %v6211
      %v6220 = vcombine.high %v6218, %v6218
      %v6221 = vcombine.high %v308, %v308
      %v6223 = vunpack.c.l.s4 1983009808
      %v6224 = vunpack.c.0.s8 %v6223
      %v6225 = vlaneseq
      %v6226 = vshrl.u32 %v6225, 7
      %v6227 = vsub.s32 %v6224, %v6226
      %v6228 = vrot.slane %v308, %v6227
      %v6230 = vunpack.c.l.s4 1983009808
      %v6231 = vunpack.c.0.s8 %v6230
      %v6232 = vlaneseq
      %v6233 = vshrl.u32 %v6232, 7
      %v6234 = vsub.s32 %v6231, %v6233
      %v6235 = vrot.slane %v6221, %v6234
      %v6236 = vcombine.high %v6228, %v6228
      %v6237 = vcombine.high %v6235, %v6235
      %v6238 = vcombine.high %v309, %v309
      %v6240 = vunpack.c.l.s4 1983009808
      %v6241 = vunpack.c.0.s8 %v6240
      %v6242 = vlaneseq
      %v6243 = vshrl.u32 %v6242, 7
      %v6244 = vsub.s32 %v6241, %v6243
      %v6245 = vrot.slane %v309, %v6244
      %v6247 = vunpack.c.l.s4 1983009808
      %v6248 = vunpack.c.0.s8 %v6247
      %v6249 = vlaneseq
      %v6250 = vshrl.u32 %v6249, 7
      %v6251 = vsub.s32 %v6248, %v6250
      %v6252 = vrot.slane %v6238, %v6251
      %v6253 = vcombine.high %v6245, %v6245
      %v6254 = vcombine.high %v6252, %v6252
      %v6255 = vcombine.high %v310, %v310
      %v6257 = vunpack.c.l.s4 1983009808
      %v6258 = vunpack.c.0.s8 %v6257
      %v6259 = vlaneseq
      %v6260 = vshrl.u32 %v6259, 7
      %v6261 = vsub.s32 %v6258, %v6260
      %v6262 = vrot.slane %v310, %v6261
      %v6264 = vunpack.c.l.s4 1983009808
      %v6265 = vunpack.c.0.s8 %v6264
      %v6266 = vlaneseq
      %v6267 = vshrl.u32 %v6266, 7
      %v6268 = vsub.s32 %v6265, %v6267
      %v6269 = vrot.slane %v6255, %v6268
      %v6270 = vcombine.high %v6262, %v6262
      %v6271 = vcombine.high %v6269, %v6269
      %v6272 = vcombine.high %v311, %v311
      %v6274 = vunpack.c.l.s4 1983009808
      %v6275 = vunpack.c.0.s8 %v6274
      %v6276 = vlaneseq
      %v6277 = vshrl.u32 %v6276, 7
      %v6278 = vsub.s32 %v6275, %v6277
      %v6279 = vrot.slane %v311, %v6278
      %v6281 = vunpack.c.l.s4 1983009808
      %v6282 = vunpack.c.0.s8 %v6281
      %v6283 = vlaneseq
      %v6284 = vshrl.u32 %v6283, 7
      %v6285 = vsub.s32 %v6282, %v6284
      %v6286 = vrot.slane %v6272, %v6285
      %v6287 = vcombine.high %v6279, %v6279
      %v6288 = vcombine.high %v6286, %v6286
      %v6417 = vrot.slane %v5752, 7
      %v6418 = vrot.slane %v6417, 2
      %v6419 = vrot.slane %v5760, 7
      %v6420 = vrot.slane %v6419, 2
      %v6421 = vrot.slane %v5759, 7
      %v6422 = vrot.slane %v6421, 2
      %v6423 = vrot.slane %v5761, 7
      %v6424 = vrot.slane %v6423, 2
      %v6425 = vrot.slane %v5769, 7
      %v6426 = vrot.slane %v6425, 2
      %v6427 = vrot.slane %v5777, 7
      %v6428 = vrot.slane %v6427, 2
      %v6429 = vrot.slane %v5776, 7
      %v6430 = vrot.slane %v6429, 2
      %v6431 = vrot.slane %v5778, 7
      %v6432 = vrot.slane %v6431, 2
      %v6433 = vrot.slane %v5820, 7
      %v6434 = vrot.slane %v6433, 2
      %v6435 = vrot.slane %v5828, 7
      %v6436 = vrot.slane %v6435, 2
      %v6437 = vrot.slane %v5827, 7
      %v6438 = vrot.slane %v6437, 2
      %v6439 = vrot.slane %v5829, 7
      %v6440 = vrot.slane %v6439, 2
      %v6441 = vrot.slane %v5837, 7
      %v6442 = vrot.slane %v6441, 2
      %v6443 = vrot.slane %v5845, 7
      %v6444 = vrot.slane %v6443, 2
      %v6445 = vrot.slane %v5844, 7
      %v6446 = vrot.slane %v6445, 2
      %v6447 = vrot.slane %v5846, 7
      %v6448 = vrot.slane %v6447, 2
      %v6449 = vrot.slane %v5888, 7
      %v6450 = vrot.slane %v6449, 2
      %v6451 = vrot.slane %v5896, 7
      %v6452 = vrot.slane %v6451, 2
      %v6453 = vrot.slane %v5895, 7
      %v6454 = vrot.slane %v6453, 2
      %v6455 = vrot.slane %v5897, 7
      %v6456 = vrot.slane %v6455, 2
      %v6457 = vrot.slane %v5905, 7
      %v6458 = vrot.slane %v6457, 2
      %v6459 = vrot.slane %v5913, 7
      %v6460 = vrot.slane %v6459, 2
      %v6461 = vrot.slane %v5912, 7
      %v6462 = vrot.slane %v6461, 2
      %v6463 = vrot.slane %v5914, 7
      %v6464 = vrot.slane %v6463, 2
      %v6465 = vrot.slane %v5956, 7
      %v6466 = vrot.slane %v6465, 2
      %v6467 = vrot.slane %v5964, 7
      %v6468 = vrot.slane %v6467, 2
      %v6469 = vrot.slane %v5963, 7
      %v6470 = vrot.slane %v6469, 2
      %v6471 = vrot.slane %v5965, 7
      %v6472 = vrot.slane %v6471, 2
      %v6473 = vrot.slane %v5973, 7
      %v6474 = vrot.slane %v6473, 2
      %v6475 = vrot.slane %v5981, 7
      %v6476 = vrot.slane %v6475, 2
      %v6477 = vrot.slane %v5980, 7
      %v6478 = vrot.slane %v6477, 2
      %v6479 = vrot.slane %v5982, 7
      %v6480 = vrot.slane %v6479, 2
      %v6481 = vrot.slane %v6024, 7
      %v6482 = vrot.slane %v6481, 2
      %v6483 = vrot.slane %v6032, 7
      %v6484 = vrot.slane %v6483, 2
      %v6485 = vrot.slane %v6031, 7
      %v6486 = vrot.slane %v6485, 2
      %v6487 = vrot.slane %v6033, 7
      %v6488 = vrot.slane %v6487, 2
      %v6489 = vrot.slane %v6041, 7
      %v6490 = vrot.slane %v6489, 2
      %v6491 = vrot.slane %v6049, 7
      %v6492 = vrot.slane %v6491, 2
      %v6493 = vrot.slane %v6048, 7
      %v6494 = vrot.slane %v6493, 2
      %v6495 = vrot.slane %v6050, 7
      %v6496 = vrot.slane %v6495, 2
      %v6497 = vrot.slane %v6092, 7
      %v6498 = vrot.slane %v6497, 2
      %v6499 = vrot.slane %v6100, 7
      %v6500 = vrot.slane %v6499, 2
      %v6501 = vrot.slane %v6099, 7
      %v6502 = vrot.slane %v6501, 2
      %v6503 = vrot.slane %v6101, 7
      %v6504 = vrot.slane %v6503, 2
      %v6505 = vrot.slane %v6109, 7
      %v6506 = vrot.slane %v6505, 2
      %v6507 = vrot.slane %v6117, 7
      %v6508 = vrot.slane %v6507, 2
      %v6509 = vrot.slane %v6116, 7
      %v6510 = vrot.slane %v6509, 2
      %v6511 = vrot.slane %v6118, 7
      %v6512 = vrot.slane %v6511, 2
      %v6513 = vrot.slane %v6160, 7
      %v6514 = vrot.slane %v6513, 2
      %v6515 = vrot.slane %v6168, 7
      %v6516 = vrot.slane %v6515, 2
      %v6517 = vrot.slane %v6167, 7
      %v6518 = vrot.slane %v6517, 2
      %v6519 = vrot.slane %v6169, 7
      %v6520 = vrot.slane %v6519, 2
      %v6521 = vrot.slane %v6177, 7
      %v6522 = vrot.slane %v6521, 2
      %v6523 = vrot.slane %v6185, 7
      %v6524 = vrot.slane %v6523, 2
      %v6525 = vrot.slane %v6184, 7
      %v6526 = vrot.slane %v6525, 2
      %v6527 = vrot.slane %v6186, 7
      %v6528 = vrot.slane %v6527, 2
      %v6529 = vrot.slane %v6228, 7
      %v6530 = vrot.slane %v6529, 2
      %v6531 = vrot.slane %v6236, 7
      %v6532 = vrot.slane %v6531, 2
      %v6533 = vrot.slane %v6235, 7
      %v6534 = vrot.slane %v6533, 2
      %v6535 = vrot.slane %v6237, 7
      %v6536 = vrot.slane %v6535, 2
      %v6537 = vrot.slane %v6245, 7
      %v6538 = vrot.slane %v6537, 2
      %v6539 = vrot.slane %v6253, 7
      %v6540 = vrot.slane %v6539, 2
      %v6541 = vrot.slane %v6252, 7
      %v6542 = vrot.slane %v6541, 2
      %v6543 = vrot.slane %v6254, 7
      %v6544 = vrot.slane %v6543, 2
      %v6609 = vadd.f32 %v5752, %v6418
      %v6610 = vadd.f32 %v5760, %v6420
      %v6611 = vadd.f32 %v5759, %v6422
      %v6612 = vadd.f32 %v5761, %v6424
      %v6613 = vadd.f32 %v5769, %v6426
      %v6614 = vadd.f32 %v5777, %v6428
      %v6615 = vadd.f32 %v5776, %v6430
      %v6616 = vadd.f32 %v5778, %v6432
      %v6617 = vadd.f32 %v5820, %v6434
      %v6618 = vadd.f32 %v5828, %v6436
      %v6619 = vadd.f32 %v5827, %v6438
      %v6620 = vadd.f32 %v5829, %v6440
      %v6621 = vadd.f32 %v5837, %v6442
      %v6622 = vadd.f32 %v5845, %v6444
      %v6623 = vadd.f32 %v5844, %v6446
      %v6624 = vadd.f32 %v5846, %v6448
      %v6625 = vadd.f32 %v5888, %v6450
      %v6626 = vadd.f32 %v5896, %v6452
      %v6627 = vadd.f32 %v5895, %v6454
      %v6628 = vadd.f32 %v5897, %v6456
      %v6629 = vadd.f32 %v5905, %v6458
      %v6630 = vadd.f32 %v5913, %v6460
      %v6631 = vadd.f32 %v5912, %v6462
      %v6632 = vadd.f32 %v5914, %v6464
      %v6633 = vadd.f32 %v5956, %v6466
      %v6634 = vadd.f32 %v5964, %v6468
      %v6635 = vadd.f32 %v5963, %v6470
      %v6636 = vadd.f32 %v5965, %v6472
      %v6637 = vadd.f32 %v5973, %v6474
      %v6638 = vadd.f32 %v5981, %v6476
      %v6639 = vadd.f32 %v5980, %v6478
      %v6640 = vadd.f32 %v5982, %v6480
      %v6641 = vadd.f32 %v6024, %v6482
      %v6642 = vadd.f32 %v6032, %v6484
      %v6643 = vadd.f32 %v6031, %v6486
      %v6644 = vadd.f32 %v6033, %v6488
      %v6645 = vadd.f32 %v6041, %v6490
      %v6646 = vadd.f32 %v6049, %v6492
      %v6647 = vadd.f32 %v6048, %v6494
      %v6648 = vadd.f32 %v6050, %v6496
      %v6649 = vadd.f32 %v6092, %v6498
      %v6650 = vadd.f32 %v6100, %v6500
      %v6651 = vadd.f32 %v6099, %v6502
      %v6652 = vadd.f32 %v6101, %v6504
      %v6653 = vadd.f32 %v6109, %v6506
      %v6654 = vadd.f32 %v6117, %v6508
      %v6655 = vadd.f32 %v6116, %v6510
      %v6656 = vadd.f32 %v6118, %v6512
      %v6657 = vadd.f32 %v6160, %v6514
      %v6658 = vadd.f32 %v6168, %v6516
      %v6659 = vadd.f32 %v6167, %v6518
      %v6660 = vadd.f32 %v6169, %v6520
      %v6661 = vadd.f32 %v6177, %v6522
      %v6662 = vadd.f32 %v6185, %v6524
      %v6663 = vadd.f32 %v6184, %v6526
      %v6664 = vadd.f32 %v6186, %v6528
      %v6665 = vadd.f32 %v6228, %v6530
      %v6666 = vadd.f32 %v6236, %v6532
      %v6667 = vadd.f32 %v6235, %v6534
      %v6668 = vadd.f32 %v6237, %v6536
      %v6669 = vadd.f32 %v6245, %v6538
      %v6670 = vadd.f32 %v6253, %v6540
      %v6671 = vadd.f32 %v6252, %v6542
      %v6672 = vadd.f32 %v6254, %v6544
      %v6673 = vadd.f32 %v6609, %v5786
      %v6674 = vadd.f32 %v6610, %v5794
      %v6675 = vadd.f32 %v6611, %v5793
      %v6676 = vadd.f32 %v6612, %v5795
      %v6677 = vadd.f32 %v6613, %v5803
      %v6678 = vadd.f32 %v6614, %v5811
      %v6679 = vadd.f32 %v6615, %v5810
      %v6680 = vadd.f32 %v6616, %v5812
      %v6681 = vadd.f32 %v6617, %v5854
      %v6682 = vadd.f32 %v6618, %v5862
      %v6683 = vadd.f32 %v6619, %v5861
      %v6684 = vadd.f32 %v6620, %v5863
      %v6685 = vadd.f32 %v6621, %v5871
      %v6686 = vadd.f32 %v6622, %v5879
      %v6687 = vadd.f32 %v6623, %v5878
      %v6688 = vadd.f32 %v6624, %v5880
      %v6689 = vadd.f32 %v6625, %v5922
      %v6690 = vadd.f32 %v6626, %v5930
      %v6691 = vadd.f32 %v6627, %v5929
      %v6692 = vadd.f32 %v6628, %v5931
      %v6693 = vadd.f32 %v6629, %v5939
      %v6694 = vadd.f32 %v6630, %v5947
      %v6695 = vadd.f32 %v6631, %v5946
      %v6696 = vadd.f32 %v6632, %v5948
      %v6697 = vadd.f32 %v6633, %v5990
      %v6698 = vadd.f32 %v6634, %v5998
      %v6699 = vadd.f32 %v6635, %v5997
      %v6700 = vadd.f32 %v6636, %v5999
      %v6701 = vadd.f32 %v6637, %v6007
      %v6702 = vadd.f32 %v6638, %v6015
      %v6703 = vadd.f32 %v6639, %v6014
      %v6704 = vadd.f32 %v6640, %v6016
      %v6705 = vadd.f32 %v6641, %v6058
      %v6706 = vadd.f32 %v6642, %v6066
      %v6707 = vadd.f32 %v6643, %v6065
      %v6708 = vadd.f32 %v6644, %v6067
      %v6709 = vadd.f32 %v6645, %v6075
      %v6710 = vadd.f32 %v6646, %v6083
      %v6711 = vadd.f32 %v6647, %v6082
      %v6712 = vadd.f32 %v6648, %v6084
      %v6713 = vadd.f32 %v6649, %v6126
      %v6714 = vadd.f32 %v6650, %v6134
      %v6715 = vadd.f32 %v6651, %v6133
      %v6716 = vadd.f32 %v6652, %v6135
      %v6717 = vadd.f32 %v6653, %v6143
      %v6718 = vadd.f32 %v6654, %v6151
      %v6719 = vadd.f32 %v6655, %v6150
      %v6720 = vadd.f32 %v6656, %v6152
      %v6721 = vadd.f32 %v6657, %v6194
      %v6722 = vadd.f32 %v6658, %v6202
      %v6723 = vadd.f32 %v6659, %v6201
      %v6724 = vadd.f32 %v6660, %v6203
      %v6725 = vadd.f32 %v6661, %v6211
      %v6726 = vadd.f32 %v6662, %v6219
      %v6727 = vadd.f32 %v6663, %v6218
      %v6728 = vadd.f32 %v6664, %v6220
      %v6729 = vadd.f32 %v6665, %v6262
      %v6730 = vadd.f32 %v6666, %v6270
      %v6731 = vadd.f32 %v6667, %v6269
      %v6732 = vadd.f32 %v6668, %v6271
      %v6733 = vadd.f32 %v6669, %v6279
      %v6734 = vadd.f32 %v6670, %v6287
      %v6735 = vadd.f32 %v6671, %v6286
      %v6736 = vadd.f32 %v6672, %v6288
      %v6737 = vrot.slane %v5786, 7
      %v6738 = vrot.slane %v6737, 2
      %v6739 = vrot.slane %v5794, 7
      %v6740 = vrot.slane %v6739, 2
      %v6741 = vrot.slane %v5793, 7
      %v6742 = vrot.slane %v6741, 2
      %v6743 = vrot.slane %v5795, 7
      %v6744 = vrot.slane %v6743, 2
      %v6745 = vrot.slane %v5803, 7
      %v6746 = vrot.slane %v6745, 2
      %v6747 = vrot.slane %v5811, 7
      %v6748 = vrot.slane %v6747, 2
      %v6749 = vrot.slane %v5810, 7
      %v6750 = vrot.slane %v6749, 2
      %v6751 = vrot.slane %v5812, 7
      %v6752 = vrot.slane %v6751, 2
      %v6753 = vrot.slane %v5854, 7
      %v6754 = vrot.slane %v6753, 2
      %v6755 = vrot.slane %v5862, 7
      %v6756 = vrot.slane %v6755, 2
      %v6757 = vrot.slane %v5861, 7
      %v6758 = vrot.slane %v6757, 2
      %v6759 = vrot.slane %v5863, 7
      %v6760 = vrot.slane %v6759, 2
      %v6761 = vrot.slane %v5871, 7
      %v6762 = vrot.slane %v6761, 2
      %v6763 = vrot.slane %v5879, 7
      %v6764 = vrot.slane %v6763, 2
      %v6765 = vrot.slane %v5878, 7
      %v6766 = vrot.slane %v6765, 2
      %v6767 = vrot.slane %v5880, 7
      %v6768 = vrot.slane %v6767, 2
      %v6769 = vrot.slane %v5922, 7
      %v6770 = vrot.slane %v6769, 2
      %v6771 = vrot.slane %v5930, 7
      %v6772 = vrot.slane %v6771, 2
      %v6773 = vrot.slane %v5929, 7
      %v6774 = vrot.slane %v6773, 2
      %v6775 = vrot.slane %v5931, 7
      %v6776 = vrot.slane %v6775, 2
      %v6777 = vrot.slane %v5939, 7
      %v6778 = vrot.slane %v6777, 2
      %v6779 = vrot.slane %v5947, 7
      %v6780 = vrot.slane %v6779, 2
      %v6781 = vrot.slane %v5946, 7
      %v6782 = vrot.slane %v6781, 2
      %v6783 = vrot.slane %v5948, 7
      %v6784 = vrot.slane %v6783, 2
      %v6785 = vrot.slane %v5990, 7
      %v6786 = vrot.slane %v6785, 2
      %v6787 = vrot.slane %v5998, 7
      %v6788 = vrot.slane %v6787, 2
      %v6789 = vrot.slane %v5997, 7
      %v6790 = vrot.slane %v6789, 2
      %v6791 = vrot.slane %v5999, 7
      %v6792 = vrot.slane %v6791, 2
      %v6793 = vrot.slane %v6007, 7
      %v6794 = vrot.slane %v6793, 2
      %v6795 = vrot.slane %v6015, 7
      %v6796 = vrot.slane %v6795, 2
      %v6797 = vrot.slane %v6014, 7
      %v6798 = vrot.slane %v6797, 2
      %v6799 = vrot.slane %v6016, 7
      %v6800 = vrot.slane %v6799, 2
      %v6801 = vrot.slane %v6058, 7
      %v6802 = vrot.slane %v6801, 2
      %v6803 = vrot.slane %v6066, 7
      %v6804 = vrot.slane %v6803, 2
      %v6805 = vrot.slane %v6065, 7
      %v6806 = vrot.slane %v6805, 2
      %v6807 = vrot.slane %v6067, 7
      %v6808 = vrot.slane %v6807, 2
      %v6809 = vrot.slane %v6075, 7
      %v6810 = vrot.slane %v6809, 2
      %v6811 = vrot.slane %v6083, 7
      %v6812 = vrot.slane %v6811, 2
      %v6813 = vrot.slane %v6082, 7
      %v6814 = vrot.slane %v6813, 2
      %v6815 = vrot.slane %v6084, 7
      %v6816 = vrot.slane %v6815, 2
      %v6817 = vrot.slane %v6126, 7
      %v6818 = vrot.slane %v6817, 2
      %v6819 = vrot.slane %v6134, 7
      %v6820 = vrot.slane %v6819, 2
      %v6821 = vrot.slane %v6133, 7
      %v6822 = vrot.slane %v6821, 2
      %v6823 = vrot.slane %v6135, 7
      %v6824 = vrot.slane %v6823, 2
      %v6825 = vrot.slane %v6143, 7
      %v6826 = vrot.slane %v6825, 2
      %v6827 = vrot.slane %v6151, 7
      %v6828 = vrot.slane %v6827, 2
      %v6829 = vrot.slane %v6150, 7
      %v6830 = vrot.slane %v6829, 2
      %v6831 = vrot.slane %v6152, 7
      %v6832 = vrot.slane %v6831, 2
      %v6833 = vrot.slane %v6194, 7
      %v6834 = vrot.slane %v6833, 2
      %v6835 = vrot.slane %v6202, 7
      %v6836 = vrot.slane %v6835, 2
      %v6837 = vrot.slane %v6201, 7
      %v6838 = vrot.slane %v6837, 2
      %v6839 = vrot.slane %v6203, 7
      %v6840 = vrot.slane %v6839, 2
      %v6841 = vrot.slane %v6211, 7
      %v6842 = vrot.slane %v6841, 2
      %v6843 = vrot.slane %v6219, 7
      %v6844 = vrot.slane %v6843, 2
      %v6845 = vrot.slane %v6218, 7
      %v6846 = vrot.slane %v6845, 2
      %v6847 = vrot.slane %v6220, 7
      %v6848 = vrot.slane %v6847, 2
      %v6849 = vrot.slane %v6262, 7
      %v6850 = vrot.slane %v6849, 2
      %v6851 = vrot.slane %v6270, 7
      %v6852 = vrot.slane %v6851, 2
      %v6853 = vrot.slane %v6269, 7
      %v6854 = vrot.slane %v6853, 2
      %v6855 = vrot.slane %v6271, 7
      %v6856 = vrot.slane %v6855, 2
      %v6857 = vrot.slane %v6279, 7
      %v6858 = vrot.slane %v6857, 2
      %v6859 = vrot.slane %v6287, 7
      %v6860 = vrot.slane %v6859, 2
      %v6861 = vrot.slane %v6286, 7
      %v6862 = vrot.slane %v6861, 2
      %v6863 = vrot.slane %v6288, 7
      %v6864 = vrot.slane %v6863, 2
      %v6929 = vadd.f32 %v6673, %v6738
      %v6930 = vadd.f32 %v6674, %v6740
      %v6931 = vadd.f32 %v6675, %v6742
      %v6932 = vadd.f32 %v6676, %v6744
      %v6933 = vadd.f32 %v6677, %v6746
      %v6934 = vadd.f32 %v6678, %v6748
      %v6935 = vadd.f32 %v6679, %v6750
      %v6936 = vadd.f32 %v6680, %v6752
      %v6937 = vadd.f32 %v6681, %v6754
      %v6938 = vadd.f32 %v6682, %v6756
      %v6939 = vadd.f32 %v6683, %v6758
      %v6940 = vadd.f32 %v6684, %v6760
      %v6941 = vadd.f32 %v6685, %v6762
      %v6942 = vadd.f32 %v6686, %v6764
      %v6943 = vadd.f32 %v6687, %v6766
      %v6944 = vadd.f32 %v6688, %v6768
      %v6945 = vadd.f32 %v6689, %v6770
      %v6946 = vadd.f32 %v6690, %v6772
      %v6947 = vadd.f32 %v6691, %v6774
      %v6948 = vadd.f32 %v6692, %v6776
      %v6949 = vadd.f32 %v6693, %v6778
      %v6950 = vadd.f32 %v6694, %v6780
      %v6951 = vadd.f32 %v6695, %v6782
      %v6952 = vadd.f32 %v6696, %v6784
      %v6953 = vadd.f32 %v6697, %v6786
      %v6954 = vadd.f32 %v6698, %v6788
      %v6955 = vadd.f32 %v6699, %v6790
      %v6956 = vadd.f32 %v6700, %v6792
      %v6957 = vadd.f32 %v6701, %v6794
      %v6958 = vadd.f32 %v6702, %v6796
      %v6959 = vadd.f32 %v6703, %v6798
      %v6960 = vadd.f32 %v6704, %v6800
      %v6961 = vadd.f32 %v6705, %v6802
      %v6962 = vadd.f32 %v6706, %v6804
      %v6963 = vadd.f32 %v6707, %v6806
      %v6964 = vadd.f32 %v6708, %v6808
      %v6965 = vadd.f32 %v6709, %v6810
      %v6966 = vadd.f32 %v6710, %v6812
      %v6967 = vadd.f32 %v6711, %v6814
      %v6968 = vadd.f32 %v6712, %v6816
      %v6969 = vadd.f32 %v6713, %v6818
      %v6970 = vadd.f32 %v6714, %v6820
      %v6971 = vadd.f32 %v6715, %v6822
      %v6972 = vadd.f32 %v6716, %v6824
      %v6973 = vadd.f32 %v6717, %v6826
      %v6974 = vadd.f32 %v6718, %v6828
      %v6975 = vadd.f32 %v6719, %v6830
      %v6976 = vadd.f32 %v6720, %v6832
      %v6977 = vadd.f32 %v6721, %v6834
      %v6978 = vadd.f32 %v6722, %v6836
      %v6979 = vadd.f32 %v6723, %v6838
      %v6980 = vadd.f32 %v6724, %v6840
      %v6981 = vadd.f32 %v6725, %v6842
      %v6982 = vadd.f32 %v6726, %v6844
      %v6983 = vadd.f32 %v6727, %v6846
      %v6984 = vadd.f32 %v6728, %v6848
      %v6985 = vadd.f32 %v6729, %v6850
      %v6986 = vadd.f32 %v6730, %v6852
      %v6987 = vadd.f32 %v6731, %v6854
      %v6988 = vadd.f32 %v6732, %v6856
      %v6989 = vadd.f32 %v6733, %v6858
      %v6990 = vadd.f32 %v6734, %v6860
      %v6991 = vadd.f32 %v6735, %v6862
      %v6992 = vadd.f32 %v6736, %v6864
      %v6993 = vmul.f32 %v6929, 0.25
      %v6994 = vmul.f32 %v6930, 0.25
      %v6995 = vmul.f32 %v6931, 0.25
      %v6996 = vmul.f32 %v6932, 0.25
      %v6997 = vmul.f32 %v6933, 0.25
      %v6998 = vmul.f32 %v6934, 0.25
      %v6999 = vmul.f32 %v6935, 0.25
      %v7000 = vmul.f32 %v6936, 0.25
      %v7001 = vmul.f32 %v6937, 0.25
      %v7002 = vmul.f32 %v6938, 0.25
      %v7003 = vmul.f32 %v6939, 0.25
      %v7004 = vmul.f32 %v6940, 0.25
      %v7005 = vmul.f32 %v6941, 0.25
      %v7006 = vmul.f32 %v6942, 0.25
      %v7007 = vmul.f32 %v6943, 0.25
      %v7008 = vmul.f32 %v6944, 0.25
      %v7009 = vmul.f32 %v6945, 0.25
      %v7010 = vmul.f32 %v6946, 0.25
      %v7011 = vmul.f32 %v6947, 0.25
      %v7012 = vmul.f32 %v6948, 0.25
      %v7013 = vmul.f32 %v6949, 0.25
      %v7014 = vmul.f32 %v6950, 0.25
      %v7015 = vmul.f32 %v6951, 0.25
      %v7016 = vmul.f32 %v6952, 0.25
      %v7017 = vmul.f32 %v6953, 0.25
      %v7018 = vmul.f32 %v6954, 0.25
      %v7019 = vmul.f32 %v6955, 0.25
      %v7020 = vmul.f32 %v6956, 0.25
      %v7021 = vmul.f32 %v6957, 0.25
      %v7022 = vmul.f32 %v6958, 0.25
      %v7023 = vmul.f32 %v6959, 0.25
      %v7024 = vmul.f32 %v6960, 0.25
      %v7025 = vmul.f32 %v6961, 0.25
      %v7026 = vmul.f32 %v6962, 0.25
      %v7027 = vmul.f32 %v6963, 0.25
      %v7028 = vmul.f32 %v6964, 0.25
      %v7029 = vmul.f32 %v6965, 0.25
      %v7030 = vmul.f32 %v6966, 0.25
      %v7031 = vmul.f32 %v6967, 0.25
      %v7032 = vmul.f32 %v6968, 0.25
      %v7033 = vmul.f32 %v6969, 0.25
      %v7034 = vmul.f32 %v6970, 0.25
      %v7035 = vmul.f32 %v6971, 0.25
      %v7036 = vmul.f32 %v6972, 0.25
      %v7037 = vmul.f32 %v6973, 0.25
      %v7038 = vmul.f32 %v6974, 0.25
      %v7039 = vmul.f32 %v6975, 0.25
      %v7040 = vmul.f32 %v6976, 0.25
      %v7041 = vmul.f32 %v6977, 0.25
      %v7042 = vmul.f32 %v6978, 0.25
      %v7043 = vmul.f32 %v6979, 0.25
      %v7044 = vmul.f32 %v6980, 0.25
      %v7045 = vmul.f32 %v6981, 0.25
      %v7046 = vmul.f32 %v6982, 0.25
      %v7047 = vmul.f32 %v6983, 0.25
      %v7048 = vmul.f32 %v6984, 0.25
      %v7049 = vmul.f32 %v6985, 0.25
      %v7050 = vmul.f32 %v6986, 0.25
      %v7051 = vmul.f32 %v6987, 0.25
      %v7052 = vmul.f32 %v6988, 0.25
      %v7053 = vmul.f32 %v6989, 0.25
      %v7054 = vmul.f32 %v6990, 0.25
      %v7055 = vmul.f32 %v6991, 0.25
      %v7056 = vmul.f32 %v6992, 0.25
      %v7057 = vpack.c.bf16 %v6993, %v6993
      %v7058 = vpack.c.bf16 %v6994, %v6994
      %v7059 = vpack.c.bf16 %v6995, %v6995
      %v7060 = vpack.c.bf16 %v6996, %v6996
      %v7061 = vpack.c.bf16 %v6997, %v6997
      %v7062 = vpack.c.bf16 %v6998, %v6998
      %v7063 = vpack.c.bf16 %v6999, %v6999
      %v7064 = vpack.c.bf16 %v7000, %v7000
      %v7065 = vpack.c.bf16 %v7001, %v7001
      %v7066 = vpack.c.bf16 %v7002, %v7002
      %v7067 = vpack.c.bf16 %v7003, %v7003
      %v7068 = vpack.c.bf16 %v7004, %v7004
      %v7069 = vpack.c.bf16 %v7005, %v7005
      %v7070 = vpack.c.bf16 %v7006, %v7006
      %v7071 = vpack.c.bf16 %v7007, %v7007
      %v7072 = vpack.c.bf16 %v7008, %v7008
      %v7073 = vpack.c.bf16 %v7009, %v7009
      %v7074 = vpack.c.bf16 %v7010, %v7010
      %v7075 = vpack.c.bf16 %v7011, %v7011
      %v7076 = vpack.c.bf16 %v7012, %v7012
      %v7077 = vpack.c.bf16 %v7013, %v7013
      %v7078 = vpack.c.bf16 %v7014, %v7014
      %v7079 = vpack.c.bf16 %v7015, %v7015
      %v7080 = vpack.c.bf16 %v7016, %v7016
      %v7081 = vpack.c.bf16 %v7017, %v7017
      %v7082 = vpack.c.bf16 %v7018, %v7018
      %v7083 = vpack.c.bf16 %v7019, %v7019
      %v7084 = vpack.c.bf16 %v7020, %v7020
      %v7085 = vpack.c.bf16 %v7021, %v7021
      %v7086 = vpack.c.bf16 %v7022, %v7022
      %v7087 = vpack.c.bf16 %v7023, %v7023
      %v7088 = vpack.c.bf16 %v7024, %v7024
      %v7089 = vpack.c.bf16 %v7025, %v7025
      %v7090 = vpack.c.bf16 %v7026, %v7026
      %v7091 = vpack.c.bf16 %v7027, %v7027
      %v7092 = vpack.c.bf16 %v7028, %v7028
      %v7093 = vpack.c.bf16 %v7029, %v7029
      %v7094 = vpack.c.bf16 %v7030, %v7030
      %v7095 = vpack.c.bf16 %v7031, %v7031
      %v7096 = vpack.c.bf16 %v7032, %v7032
      %v7097 = vpack.c.bf16 %v7033, %v7033
      %v7098 = vpack.c.bf16 %v7034, %v7034
      %v7099 = vpack.c.bf16 %v7035, %v7035
      %v7100 = vpack.c.bf16 %v7036, %v7036
      %v7101 = vpack.c.bf16 %v7037, %v7037
      %v7102 = vpack.c.bf16 %v7038, %v7038
      %v7103 = vpack.c.bf16 %v7039, %v7039
      %v7104 = vpack.c.bf16 %v7040, %v7040
      %v7105 = vpack.c.bf16 %v7041, %v7041
      %v7106 = vpack.c.bf16 %v7042, %v7042
      %v7107 = vpack.c.bf16 %v7043, %v7043
      %v7108 = vpack.c.bf16 %v7044, %v7044
      %v7109 = vpack.c.bf16 %v7045, %v7045
      %v7110 = vpack.c.bf16 %v7046, %v7046
      %v7111 = vpack.c.bf16 %v7047, %v7047
      %v7112 = vpack.c.bf16 %v7048, %v7048
      %v7113 = vpack.c.bf16 %v7049, %v7049
      %v7114 = vpack.c.bf16 %v7050, %v7050
      %v7115 = vpack.c.bf16 %v7051, %v7051
      %v7116 = vpack.c.bf16 %v7052, %v7052
      %v7117 = vpack.c.bf16 %v7053, %v7053
      %v7118 = vpack.c.bf16 %v7054, %v7054
      %v7119 = vpack.c.bf16 %v7055, %v7055
      %v7120 = vpack.c.bf16 %v7056, %v7056
      %v7121 = vld [vmem:[%s5] sm:$0x3]
      %v7122 = vld [vmem:[%s6] sm:$0x1]
      %v7124 = vlaneseq
      %v7125 = vshrl.u32 %v7124, 7
      %v7126 = vsub.s32 0, %v7125
      %v7127 = vrot.slane %v7122, %v7126
      %v7193 = vunpack.c.l.b16 %v7057
      %v7194 = vunpack.c.l.b16 %v7058
      %v7195 = vunpack.c.l.b16 %v7059
      %v7196 = vunpack.c.l.b16 %v7060
      %v7197 = vunpack.c.l.b16 %v7061
      %v7198 = vunpack.c.l.b16 %v7062
      %v7199 = vunpack.c.l.b16 %v7063
      %v7200 = vunpack.c.l.b16 %v7064
      %v7201 = vunpack.c.l.b16 %v7065
      %v7202 = vunpack.c.l.b16 %v7066
      %v7203 = vunpack.c.l.b16 %v7067
      %v7204 = vunpack.c.l.b16 %v7068
      %v7205 = vunpack.c.l.b16 %v7069
      %v7206 = vunpack.c.l.b16 %v7070
      %v7207 = vunpack.c.l.b16 %v7071
      %v7208 = vunpack.c.l.b16 %v7072
      %v7209 = vunpack.c.l.b16 %v7073
      %v7210 = vunpack.c.l.b16 %v7074
      %v7211 = vunpack.c.l.b16 %v7075
      %v7212 = vunpack.c.l.b16 %v7076
      %v7213 = vunpack.c.l.b16 %v7077
      %v7214 = vunpack.c.l.b16 %v7078
      %v7215 = vunpack.c.l.b16 %v7079
      %v7216 = vunpack.c.l.b16 %v7080
      %v7217 = vunpack.c.l.b16 %v7081
      %v7218 = vunpack.c.l.b16 %v7082
      %v7219 = vunpack.c.l.b16 %v7083
      %v7220 = vunpack.c.l.b16 %v7084
      %v7221 = vunpack.c.l.b16 %v7085
      %v7222 = vunpack.c.l.b16 %v7086
      %v7223 = vunpack.c.l.b16 %v7087
      %v7224 = vunpack.c.l.b16 %v7088
      %v7225 = vunpack.c.l.b16 %v7089
      %v7226 = vunpack.c.l.b16 %v7090
      %v7227 = vunpack.c.l.b16 %v7091
      %v7228 = vunpack.c.l.b16 %v7092
      %v7229 = vunpack.c.l.b16 %v7093
      %v7230 = vunpack.c.l.b16 %v7094
      %v7231 = vunpack.c.l.b16 %v7095
      %v7232 = vunpack.c.l.b16 %v7096
      %v7233 = vunpack.c.l.b16 %v7097
      %v7234 = vunpack.c.l.b16 %v7098
      %v7235 = vunpack.c.l.b16 %v7099
      %v7236 = vunpack.c.l.b16 %v7100
      %v7237 = vunpack.c.l.b16 %v7101
      %v7238 = vunpack.c.l.b16 %v7102
      %v7239 = vunpack.c.l.b16 %v7103
      %v7240 = vunpack.c.l.b16 %v7104
      %v7241 = vunpack.c.l.b16 %v7105
      %v7242 = vunpack.c.l.b16 %v7106
      %v7243 = vunpack.c.l.b16 %v7107
      %v7244 = vunpack.c.l.b16 %v7108
      %v7245 = vunpack.c.l.b16 %v7109
      %v7246 = vunpack.c.l.b16 %v7110
      %v7247 = vunpack.c.l.b16 %v7111
      %v7248 = vunpack.c.l.b16 %v7112
      %v7249 = vunpack.c.l.b16 %v7113
      %v7250 = vunpack.c.l.b16 %v7114
      %v7251 = vunpack.c.l.b16 %v7115
      %v7252 = vunpack.c.l.b16 %v7116
      %v7253 = vunpack.c.l.b16 %v7117
      %v7254 = vunpack.c.l.b16 %v7118
      %v7255 = vunpack.c.l.b16 %v7119
      %v7256 = vunpack.c.l.b16 %v7120
      %v7257 = vrot.slane %v7194, 7
      %vm7258 = vcmask 1041409
      %v7259 = vsel %vm7258, %v7257, %v7193
      %v7260 = vrot.slane %v7195, 6
      %vm7261 = vcmask 1042434
      %v7262 = vsel %vm7261, %v7260, %v7259
      %v7263 = vrot.slane %v7196, 5
      %vm7264 = vcmask 1043459
      %v7265 = vsel %vm7264, %v7263, %v7262
      %v7266 = vrot.slane %v7197, 4
      %vm7267 = vcmask 1044484
      %v7268 = vsel %vm7267, %v7266, %v7265
      %v7269 = vrot.slane %v7198, 3
      %vm7270 = vcmask 1045509
      %v7271 = vsel %vm7270, %v7269, %v7268
      %v7272 = vrot.slane %v7199, 2
      %vm7273 = vcmask 1046534
      %v7274 = vsel %vm7273, %v7272, %v7271
      %v7275 = vrot.slane %v7200, 1
      %vm7276 = vcmask 1047559
      %v7277 = vsel %vm7276, %v7275, %v7274
      %v7278 = vrot.slane %v7202, 7
      %v7279 = vsel %vm7258, %v7278, %v7201
      %v7280 = vrot.slane %v7203, 6
      %v7281 = vsel %vm7261, %v7280, %v7279
      %v7282 = vrot.slane %v7204, 5
      %v7283 = vsel %vm7264, %v7282, %v7281
      %v7284 = vrot.slane %v7205, 4
      %v7285 = vsel %vm7267, %v7284, %v7283
      %v7286 = vrot.slane %v7206, 3
      %v7287 = vsel %vm7270, %v7286, %v7285
      %v7288 = vrot.slane %v7207, 2
      %v7289 = vsel %vm7273, %v7288, %v7287
      %v7290 = vrot.slane %v7208, 1
      %v7291 = vsel %vm7276, %v7290, %v7289
      %v7292 = vrot.slane %v7210, 7
      %v7293 = vsel %vm7258, %v7292, %v7209
      %v7294 = vrot.slane %v7211, 6
      %v7295 = vsel %vm7261, %v7294, %v7293
      %v7296 = vrot.slane %v7212, 5
      %v7297 = vsel %vm7264, %v7296, %v7295
      %v7298 = vrot.slane %v7213, 4
      %v7299 = vsel %vm7267, %v7298, %v7297
      %v7300 = vrot.slane %v7214, 3
      %v7301 = vsel %vm7270, %v7300, %v7299
      %v7302 = vrot.slane %v7215, 2
      %v7303 = vsel %vm7273, %v7302, %v7301
      %v7304 = vrot.slane %v7216, 1
      %v7305 = vsel %vm7276, %v7304, %v7303
      %v7306 = vrot.slane %v7218, 7
      %v7307 = vsel %vm7258, %v7306, %v7217
      %v7308 = vrot.slane %v7219, 6
      %v7309 = vsel %vm7261, %v7308, %v7307
      %v7310 = vrot.slane %v7220, 5
      %v7311 = vsel %vm7264, %v7310, %v7309
      %v7312 = vrot.slane %v7221, 4
      %v7313 = vsel %vm7267, %v7312, %v7311
      %v7314 = vrot.slane %v7222, 3
      %v7315 = vsel %vm7270, %v7314, %v7313
      %v7316 = vrot.slane %v7223, 2
      %v7317 = vsel %vm7273, %v7316, %v7315
      %v7318 = vrot.slane %v7224, 1
      %v7319 = vsel %vm7276, %v7318, %v7317
      %v7320 = vrot.slane %v7226, 7
      %v7321 = vsel %vm7258, %v7320, %v7225
      %v7322 = vrot.slane %v7227, 6
      %v7323 = vsel %vm7261, %v7322, %v7321
      %v7324 = vrot.slane %v7228, 5
      %v7325 = vsel %vm7264, %v7324, %v7323
      %v7326 = vrot.slane %v7229, 4
      %v7327 = vsel %vm7267, %v7326, %v7325
      %v7328 = vrot.slane %v7230, 3
      %v7329 = vsel %vm7270, %v7328, %v7327
      %v7330 = vrot.slane %v7231, 2
      %v7331 = vsel %vm7273, %v7330, %v7329
      %v7332 = vrot.slane %v7232, 1
      %v7333 = vsel %vm7276, %v7332, %v7331
      %v7334 = vrot.slane %v7234, 7
      %v7335 = vsel %vm7258, %v7334, %v7233
      %v7336 = vrot.slane %v7235, 6
      %v7337 = vsel %vm7261, %v7336, %v7335
      %v7338 = vrot.slane %v7236, 5
      %v7339 = vsel %vm7264, %v7338, %v7337
      %v7340 = vrot.slane %v7237, 4
      %v7341 = vsel %vm7267, %v7340, %v7339
      %v7342 = vrot.slane %v7238, 3
      %v7343 = vsel %vm7270, %v7342, %v7341
      %v7344 = vrot.slane %v7239, 2
      %v7345 = vsel %vm7273, %v7344, %v7343
      %v7346 = vrot.slane %v7240, 1
      %v7347 = vsel %vm7276, %v7346, %v7345
      %v7348 = vrot.slane %v7242, 7
      %v7349 = vsel %vm7258, %v7348, %v7241
      %v7350 = vrot.slane %v7243, 6
      %v7351 = vsel %vm7261, %v7350, %v7349
      %v7352 = vrot.slane %v7244, 5
      %v7353 = vsel %vm7264, %v7352, %v7351
      %v7354 = vrot.slane %v7245, 4
      %v7355 = vsel %vm7267, %v7354, %v7353
      %v7356 = vrot.slane %v7246, 3
      %v7357 = vsel %vm7270, %v7356, %v7355
      %v7358 = vrot.slane %v7247, 2
      %v7359 = vsel %vm7273, %v7358, %v7357
      %v7360 = vrot.slane %v7248, 1
      %v7361 = vsel %vm7276, %v7360, %v7359
      %v7362 = vrot.slane %v7250, 7
      %v7363 = vsel %vm7258, %v7362, %v7249
      %v7364 = vrot.slane %v7251, 6
      %v7365 = vsel %vm7261, %v7364, %v7363
      %v7366 = vrot.slane %v7252, 5
      %v7367 = vsel %vm7264, %v7366, %v7365
      %v7368 = vrot.slane %v7253, 4
      %v7369 = vsel %vm7267, %v7368, %v7367
      %v7370 = vrot.slane %v7254, 3
      %v7371 = vsel %vm7270, %v7370, %v7369
      %v7372 = vrot.slane %v7255, 2
      %v7373 = vsel %vm7273, %v7372, %v7371
      %v7374 = vrot.slane %v7256, 1
      %v7375 = vsel %vm7276, %v7374, %v7373
      %v7376 = vpack.c.b16 %v7291, %v7277
      %v7377 = vpack.c.b16 %v7319, %v7305
      %v7378 = vpack.c.b16 %v7347, %v7333
      %v7379 = vpack.c.b16 %v7375, %v7361
      %v7381 = vsel %vm312, %v7376, 0
      %v7384 = vsel %vm312, %v7377, 0
      %v7387 = vsel %vm312, %v7378, 0
      %v7390 = vsel %vm312, %v7379, 0
      %v7393 = vsel %vm1340, %v7121, 0
      %7395 = vmatprep.subr.bf16.mxu0 0
      %7396 = vmatpush1.bf16.msra.mxu0 %v7393
      %7397 = vmatprep.subr.bf16.mxu0 0
      %7398 = vmatpush1.bf16.msra.mxu0 0
      %7399 = vmatprep.subr.bf16.mxu0 0
      %7400 = vmatpush1.bf16.msra.mxu0 0
      %7401 = vmatprep.subr.bf16.mxu0 0
      %7402 = vmatpush1.bf16.msra.mxu0 0
      %7403 = vmatprep.subr.bf16.mxu0 0
      %7404 = vmatpush1.bf16.msra.mxu0 0
      %7405 = vmatprep.subr.bf16.mxu0 0
      %7406 = vmatpush1.bf16.msra.mxu0 0
      %7407 = vmatprep.subr.bf16.mxu0 0
      %7408 = vmatpush1.bf16.msra.mxu0 0
      %7409 = vmatprep.subr.bf16.mxu0 0
      %7410 = vmatpush1.bf16.msra.mxu0 0
      %7411 = vmatprep.subr.bf16.mxu0 0
      %7412 = vmatpush1.bf16.msra.mxu0 0
      %7413 = vmatprep.subr.bf16.mxu0 0
      %7414 = vmatpush1.bf16.msra.mxu0 0
      %7415 = vmatprep.subr.bf16.mxu0 0
      %7416 = vmatpush1.bf16.msra.mxu0 0
      %7417 = vmatprep.subr.bf16.mxu0 0
      %7418 = vmatpush1.bf16.msra.mxu0 0
      %7419 = vmatprep.subr.bf16.mxu0 0
      %7420 = vmatpush1.bf16.msra.mxu0 0
      %7421 = vmatprep.subr.bf16.mxu0 0
      %7422 = vmatpush1.bf16.msra.mxu0 0
      %7423 = vmatprep.subr.bf16.mxu0 0
      %7424 = vmatpush1.bf16.msra.mxu0 0
      %7425 = vmatprep.subr.bf16.mxu0 0
      %7426 = vmatpush1.bf16.msra.mxu0 0
      %7427 = vmatprep.mubr.bf16.mxu0 0
      %7428 = vmatmul.mubr.bf16.gmra.mrb[0].mxu0 %v7381
      %v7429 = vpop.f32.mrb[0].mxu0
      %v7430 = vadd.f32 %v7127, %v7429
      %v7431 = vpop.f32.mrb[0].mxu0
      %v7432 = vpop.f32.mrb[0].mxu0
      %v7433 = vadd.f32 %v7127, %v7432
      %v7434 = vpop.f32.mrb[0].mxu0
      %7435 = vmatprep.mubr.bf16.mxu0 0
      %7436 = vmatmul.mubr.bf16.gmra.mrb[0].mxu0 %v7384
      %v7437 = vpop.f32.mrb[0].mxu0
      %v7438 = vadd.f32 %v7127, %v7437
      %v7439 = vpop.f32.mrb[0].mxu0
      %v7440 = vpop.f32.mrb[0].mxu0
      %v7441 = vadd.f32 %v7127, %v7440
      %v7442 = vpop.f32.mrb[0].mxu0
      %7443 = vmatprep.mubr.bf16.mxu0 0
      %7444 = vmatmul.mubr.bf16.gmra.mrb[0].mxu0 %v7387
      %v7445 = vpop.f32.mrb[0].mxu0
      %v7446 = vadd.f32 %v7127, %v7445
      %v7447 = vpop.f32.mrb[0].mxu0
      %v7448 = vpop.f32.mrb[0].mxu0
      %v7449 = vadd.f32 %v7127, %v7448
      %v7450 = vpop.f32.mrb[0].mxu0
      %7451 = vmatprep.mubr.bf16.mxu0 0
      %7452 = vmatmul.mubr.bf16.gmra.mrb[0].mxu0 %v7390
      %v7453 = vpop.f32.mrb[0].mxu0
      %v7454 = vadd.f32 %v7127, %v7453
      %v7455 = vpop.f32.mrb[0].mxu0
      %v7456 = vpop.f32.mrb[0].mxu0
      %v7457 = vadd.f32 %v7127, %v7456
      %v7458 = vpop.f32.mrb[0].mxu0
      %7459 = vdwg.mxu0
      %v7468 = vcombine.high %v7430, %v7430
      %v7470 = vunpack.c.l.s4 1983009808
      %v7471 = vunpack.c.0.s8 %v7470
      %v7472 = vlaneseq
      %v7473 = vshrl.u32 %v7472, 7
      %v7474 = vsub.s32 %v7471, %v7473
      %v7475 = vrot.slane %v7430, %v7474
      %v7477 = vunpack.c.l.s4 1983009808
      %v7478 = vunpack.c.0.s8 %v7477
      %v7479 = vlaneseq
      %v7480 = vshrl.u32 %v7479, 7
      %v7481 = vsub.s32 %v7478, %v7480
      %v7482 = vrot.slane %v7468, %v7481
      %v7483 = vcombine.high %v7475, %v7475
      %v7484 = vcombine.high %v7482, %v7482
      %v7485 = vcombine.high %v7433, %v7433
      %v7487 = vunpack.c.l.s4 1983009808
      %v7488 = vunpack.c.0.s8 %v7487
      %v7489 = vlaneseq
      %v7490 = vshrl.u32 %v7489, 7
      %v7491 = vsub.s32 %v7488, %v7490
      %v7492 = vrot.slane %v7433, %v7491
      %v7494 = vunpack.c.l.s4 1983009808
      %v7495 = vunpack.c.0.s8 %v7494
      %v7496 = vlaneseq
      %v7497 = vshrl.u32 %v7496, 7
      %v7498 = vsub.s32 %v7495, %v7497
      %v7499 = vrot.slane %v7485, %v7498
      %v7500 = vcombine.high %v7492, %v7492
      %v7501 = vcombine.high %v7499, %v7499
      %v7502 = vcombine.high %v7438, %v7438
      %v7504 = vunpack.c.l.s4 1983009808
      %v7505 = vunpack.c.0.s8 %v7504
      %v7506 = vlaneseq
      %v7507 = vshrl.u32 %v7506, 7
      %v7508 = vsub.s32 %v7505, %v7507
      %v7509 = vrot.slane %v7438, %v7508
      %v7511 = vunpack.c.l.s4 1983009808
      %v7512 = vunpack.c.0.s8 %v7511
      %v7513 = vlaneseq
      %v7514 = vshrl.u32 %v7513, 7
      %v7515 = vsub.s32 %v7512, %v7514
      %v7516 = vrot.slane %v7502, %v7515
      %v7517 = vcombine.high %v7509, %v7509
      %v7518 = vcombine.high %v7516, %v7516
      %v7519 = vcombine.high %v7441, %v7441
      %v7521 = vunpack.c.l.s4 1983009808
      %v7522 = vunpack.c.0.s8 %v7521
      %v7523 = vlaneseq
      %v7524 = vshrl.u32 %v7523, 7
      %v7525 = vsub.s32 %v7522, %v7524
      %v7526 = vrot.slane %v7441, %v7525
      %v7528 = vunpack.c.l.s4 1983009808
      %v7529 = vunpack.c.0.s8 %v7528
      %v7530 = vlaneseq
      %v7531 = vshrl.u32 %v7530, 7
      %v7532 = vsub.s32 %v7529, %v7531
      %v7533 = vrot.slane %v7519, %v7532
      %v7534 = vcombine.high %v7526, %v7526
      %v7535 = vcombine.high %v7533, %v7533
      %v7536 = vcombine.high %v7446, %v7446
      %v7538 = vunpack.c.l.s4 1983009808
      %v7539 = vunpack.c.0.s8 %v7538
      %v7540 = vlaneseq
      %v7541 = vshrl.u32 %v7540, 7
      %v7542 = vsub.s32 %v7539, %v7541
      %v7543 = vrot.slane %v7446, %v7542
      %v7545 = vunpack.c.l.s4 1983009808
      %v7546 = vunpack.c.0.s8 %v7545
      %v7547 = vlaneseq
      %v7548 = vshrl.u32 %v7547, 7
      %v7549 = vsub.s32 %v7546, %v7548
      %v7550 = vrot.slane %v7536, %v7549
      %v7551 = vcombine.high %v7543, %v7543
      %v7552 = vcombine.high %v7550, %v7550
      %v7553 = vcombine.high %v7449, %v7449
      %v7555 = vunpack.c.l.s4 1983009808
      %v7556 = vunpack.c.0.s8 %v7555
      %v7557 = vlaneseq
      %v7558 = vshrl.u32 %v7557, 7
      %v7559 = vsub.s32 %v7556, %v7558
      %v7560 = vrot.slane %v7449, %v7559
      %v7562 = vunpack.c.l.s4 1983009808
      %v7563 = vunpack.c.0.s8 %v7562
      %v7564 = vlaneseq
      %v7565 = vshrl.u32 %v7564, 7
      %v7566 = vsub.s32 %v7563, %v7565
      %v7567 = vrot.slane %v7553, %v7566
      %v7568 = vcombine.high %v7560, %v7560
      %v7569 = vcombine.high %v7567, %v7567
      %v7570 = vcombine.high %v7454, %v7454
      %v7572 = vunpack.c.l.s4 1983009808
      %v7573 = vunpack.c.0.s8 %v7572
      %v7574 = vlaneseq
      %v7575 = vshrl.u32 %v7574, 7
      %v7576 = vsub.s32 %v7573, %v7575
      %v7577 = vrot.slane %v7454, %v7576
      %v7579 = vunpack.c.l.s4 1983009808
      %v7580 = vunpack.c.0.s8 %v7579
      %v7581 = vlaneseq
      %v7582 = vshrl.u32 %v7581, 7
      %v7583 = vsub.s32 %v7580, %v7582
      %v7584 = vrot.slane %v7570, %v7583
      %v7585 = vcombine.high %v7577, %v7577
      %v7586 = vcombine.high %v7584, %v7584
      %v7587 = vcombine.high %v7457, %v7457
      %v7589 = vunpack.c.l.s4 1983009808
      %v7590 = vunpack.c.0.s8 %v7589
      %v7591 = vlaneseq
      %v7592 = vshrl.u32 %v7591, 7
      %v7593 = vsub.s32 %v7590, %v7592
      %v7594 = vrot.slane %v7457, %v7593
      %v7596 = vunpack.c.l.s4 1983009808
      %v7597 = vunpack.c.0.s8 %v7596
      %v7598 = vlaneseq
      %v7599 = vshrl.u32 %v7598, 7
      %v7600 = vsub.s32 %v7597, %v7599
      %v7601 = vrot.slane %v7587, %v7600
      %v7602 = vcombine.high %v7594, %v7594
      %v7603 = vcombine.high %v7601, %v7601
      %v7604 = vrot.slane %v7475, 1
      %v7605 = vrot.slane %v7483, 1
      %v7606 = vrot.slane %v7482, 1
      %v7607 = vrot.slane %v7484, 1
      %v7608 = vrot.slane %v7492, 1
      %v7609 = vrot.slane %v7500, 1
      %v7610 = vrot.slane %v7499, 1
      %v7611 = vrot.slane %v7501, 1
      %v7612 = vrot.slane %v7509, 1
      %v7613 = vrot.slane %v7517, 1
      %v7614 = vrot.slane %v7516, 1
      %v7615 = vrot.slane %v7518, 1
      %v7616 = vrot.slane %v7526, 1
      %v7617 = vrot.slane %v7534, 1
      %v7618 = vrot.slane %v7533, 1
      %v7619 = vrot.slane %v7535, 1
      %v7620 = vrot.slane %v7543, 1
      %v7621 = vrot.slane %v7551, 1
      %v7622 = vrot.slane %v7550, 1
      %v7623 = vrot.slane %v7552, 1
      %v7624 = vrot.slane %v7560, 1
      %v7625 = vrot.slane %v7568, 1
      %v7626 = vrot.slane %v7567, 1
      %v7627 = vrot.slane %v7569, 1
      %v7628 = vrot.slane %v7577, 1
      %v7629 = vrot.slane %v7585, 1
      %v7630 = vrot.slane %v7584, 1
      %v7631 = vrot.slane %v7586, 1
      %v7632 = vrot.slane %v7594, 1
      %v7633 = vrot.slane %v7602, 1
      %v7634 = vrot.slane %v7601, 1
      %v7635 = vrot.slane %v7603, 1
      %v7700 = vadd.f32 %v5649, %v7475
      %v7701 = vadd.f32 %v5650, %v7604
      %v7702 = vadd.f32 %v5651, %v7483
      %v7703 = vadd.f32 %v5652, %v7605
      %v7704 = vadd.f32 %v5653, %v7482
      %v7705 = vadd.f32 %v5654, %v7606
      %v7706 = vadd.f32 %v5655, %v7484
      %v7707 = vadd.f32 %v5656, %v7607
      %v7708 = vadd.f32 %v5657, %v7492
      %v7709 = vadd.f32 %v5658, %v7608
      %v7710 = vadd.f32 %v5659, %v7500
      %v7711 = vadd.f32 %v5660, %v7609
      %v7712 = vadd.f32 %v5661, %v7499
      %v7713 = vadd.f32 %v5662, %v7610
      %v7714 = vadd.f32 %v5663, %v7501
      %v7715 = vadd.f32 %v5664, %v7611
      %v7716 = vadd.f32 %v5665, %v7509
      %v7717 = vadd.f32 %v5666, %v7612
      %v7718 = vadd.f32 %v5667, %v7517
      %v7719 = vadd.f32 %v5668, %v7613
      %v7720 = vadd.f32 %v5669, %v7516
      %v7721 = vadd.f32 %v5670, %v7614
      %v7722 = vadd.f32 %v5671, %v7518
      %v7723 = vadd.f32 %v5672, %v7615
      %v7724 = vadd.f32 %v5673, %v7526
      %v7725 = vadd.f32 %v5674, %v7616
      %v7726 = vadd.f32 %v5675, %v7534
      %v7727 = vadd.f32 %v5676, %v7617
      %v7728 = vadd.f32 %v5677, %v7533
      %v7729 = vadd.f32 %v5678, %v7618
      %v7730 = vadd.f32 %v5679, %v7535
      %v7731 = vadd.f32 %v5680, %v7619
      %v7732 = vadd.f32 %v5681, %v7543
      %v7733 = vadd.f32 %v5682, %v7620
      %v7734 = vadd.f32 %v5683, %v7551
      %v7735 = vadd.f32 %v5684, %v7621
      %v7736 = vadd.f32 %v5685, %v7550
      %v7737 = vadd.f32 %v5686, %v7622
      %v7738 = vadd.f32 %v5687, %v7552
      %v7739 = vadd.f32 %v5688, %v7623
      %v7740 = vadd.f32 %v5689, %v7560
      %v7741 = vadd.f32 %v5690, %v7624
      %v7742 = vadd.f32 %v5691, %v7568
      %v7743 = vadd.f32 %v5692, %v7625
      %v7744 = vadd.f32 %v5693, %v7567
      %v7745 = vadd.f32 %v5694, %v7626
      %v7746 = vadd.f32 %v5695, %v7569
      %v7747 = vadd.f32 %v5696, %v7627
      %v7748 = vadd.f32 %v5697, %v7577
      %v7749 = vadd.f32 %v5698, %v7628
      %v7750 = vadd.f32 %v5699, %v7585
      %v7751 = vadd.f32 %v5700, %v7629
      %v7752 = vadd.f32 %v5701, %v7584
      %v7753 = vadd.f32 %v5702, %v7630
      %v7754 = vadd.f32 %v5703, %v7586
      %v7755 = vadd.f32 %v5704, %v7631
      %v7756 = vadd.f32 %v5705, %v7594
      %v7757 = vadd.f32 %v5706, %v7632
      %v7758 = vadd.f32 %v5707, %v7602
      %v7759 = vadd.f32 %v5708, %v7633
      %v7760 = vadd.f32 %v5709, %v7601
      %v7761 = vadd.f32 %v5710, %v7634
      %v7762 = vadd.f32 %v5711, %v7603
      %v7763 = vadd.f32 %v5712, %v7635
      %v7828 = vlaneseq
      %v7829 = vshrl.u32 %v7828, 7
      %v7830 = vsub.s32 0, %v7829
      %v7831 = vrot.slane %v7700, %v7830
      %v7832 = vlaneseq
      %v7833 = vshrl.u32 %v7832, 7
      %v7834 = vsub.s32 0, %v7833
      %v7835 = vrot.slane %v7701, %v7834
      %v7836 = vlaneseq
      %v7837 = vshrl.u32 %v7836, 7
      %v7838 = vsub.s32 0, %v7837
      %v7839 = vrot.slane %v7702, %v7838
      %v7840 = vlaneseq
      %v7841 = vshrl.u32 %v7840, 7
      %v7842 = vsub.s32 0, %v7841
      %v7843 = vrot.slane %v7703, %v7842
      %v7844 = vlaneseq
      %v7845 = vshrl.u32 %v7844, 7
      %v7846 = vsub.s32 0, %v7845
      %v7847 = vrot.slane %v7704, %v7846
      %v7848 = vlaneseq
      %v7849 = vshrl.u32 %v7848, 7
      %v7850 = vsub.s32 0, %v7849
      %v7851 = vrot.slane %v7705, %v7850
      %v7852 = vlaneseq
      %v7853 = vshrl.u32 %v7852, 7
      %v7854 = vsub.s32 0, %v7853
      %v7855 = vrot.slane %v7706, %v7854
      %v7856 = vlaneseq
      %v7857 = vshrl.u32 %v7856, 7
      %v7858 = vsub.s32 0, %v7857
      %v7859 = vrot.slane %v7707, %v7858
      %v7860 = vlaneseq
      %v7861 = vshrl.u32 %v7860, 7
      %v7862 = vsub.s32 0, %v7861
      %v7863 = vrot.slane %v7708, %v7862
      %v7864 = vlaneseq
      %v7865 = vshrl.u32 %v7864, 7
      %v7866 = vsub.s32 0, %v7865
      %v7867 = vrot.slane %v7709, %v7866
      %v7868 = vlaneseq
      %v7869 = vshrl.u32 %v7868, 7
      %v7870 = vsub.s32 0, %v7869
      %v7871 = vrot.slane %v7710, %v7870
      %v7872 = vlaneseq
      %v7873 = vshrl.u32 %v7872, 7
      %v7874 = vsub.s32 0, %v7873
      %v7875 = vrot.slane %v7711, %v7874
      %v7876 = vlaneseq
      %v7877 = vshrl.u32 %v7876, 7
      %v7878 = vsub.s32 0, %v7877
      %v7879 = vrot.slane %v7712, %v7878
      %v7880 = vlaneseq
      %v7881 = vshrl.u32 %v7880, 7
      %v7882 = vsub.s32 0, %v7881
      %v7883 = vrot.slane %v7713, %v7882
      %v7884 = vlaneseq
      %v7885 = vshrl.u32 %v7884, 7
      %v7886 = vsub.s32 0, %v7885
      %v7887 = vrot.slane %v7714, %v7886
      %v7888 = vlaneseq
      %v7889 = vshrl.u32 %v7888, 7
      %v7890 = vsub.s32 0, %v7889
      %v7891 = vrot.slane %v7715, %v7890
      %v7892 = vlaneseq
      %v7893 = vshrl.u32 %v7892, 7
      %v7894 = vsub.s32 0, %v7893
      %v7895 = vrot.slane %v7716, %v7894
      %v7896 = vlaneseq
      %v7897 = vshrl.u32 %v7896, 7
      %v7898 = vsub.s32 0, %v7897
      %v7899 = vrot.slane %v7717, %v7898
      %v7900 = vlaneseq
      %v7901 = vshrl.u32 %v7900, 7
      %v7902 = vsub.s32 0, %v7901
      %v7903 = vrot.slane %v7718, %v7902
      %v7904 = vlaneseq
      %v7905 = vshrl.u32 %v7904, 7
      %v7906 = vsub.s32 0, %v7905
      %v7907 = vrot.slane %v7719, %v7906
      %v7908 = vlaneseq
      %v7909 = vshrl.u32 %v7908, 7
      %v7910 = vsub.s32 0, %v7909
      %v7911 = vrot.slane %v7720, %v7910
      %v7912 = vlaneseq
      %v7913 = vshrl.u32 %v7912, 7
      %v7914 = vsub.s32 0, %v7913
      %v7915 = vrot.slane %v7721, %v7914
      %v7916 = vlaneseq
      %v7917 = vshrl.u32 %v7916, 7
      %v7918 = vsub.s32 0, %v7917
      %v7919 = vrot.slane %v7722, %v7918
      %v7920 = vlaneseq
      %v7921 = vshrl.u32 %v7920, 7
      %v7922 = vsub.s32 0, %v7921
      %v7923 = vrot.slane %v7723, %v7922
      %v7924 = vlaneseq
      %v7925 = vshrl.u32 %v7924, 7
      %v7926 = vsub.s32 0, %v7925
      %v7927 = vrot.slane %v7724, %v7926
      %v7928 = vlaneseq
      %v7929 = vshrl.u32 %v7928, 7
      %v7930 = vsub.s32 0, %v7929
      %v7931 = vrot.slane %v7725, %v7930
      %v7932 = vlaneseq
      %v7933 = vshrl.u32 %v7932, 7
      %v7934 = vsub.s32 0, %v7933
      %v7935 = vrot.slane %v7726, %v7934
      %v7936 = vlaneseq
      %v7937 = vshrl.u32 %v7936, 7
      %v7938 = vsub.s32 0, %v7937
      %v7939 = vrot.slane %v7727, %v7938
      %v7940 = vlaneseq
      %v7941 = vshrl.u32 %v7940, 7
      %v7942 = vsub.s32 0, %v7941
      %v7943 = vrot.slane %v7728, %v7942
      %v7944 = vlaneseq
      %v7945 = vshrl.u32 %v7944, 7
      %v7946 = vsub.s32 0, %v7945
      %v7947 = vrot.slane %v7729, %v7946
      %v7948 = vlaneseq
      %v7949 = vshrl.u32 %v7948, 7
      %v7950 = vsub.s32 0, %v7949
      %v7951 = vrot.slane %v7730, %v7950
      %v7952 = vlaneseq
      %v7953 = vshrl.u32 %v7952, 7
      %v7954 = vsub.s32 0, %v7953
      %v7955 = vrot.slane %v7731, %v7954
      %v7956 = vlaneseq
      %v7957 = vshrl.u32 %v7956, 7
      %v7958 = vsub.s32 0, %v7957
      %v7959 = vrot.slane %v7732, %v7958
      %v7960 = vlaneseq
      %v7961 = vshrl.u32 %v7960, 7
      %v7962 = vsub.s32 0, %v7961
      %v7963 = vrot.slane %v7733, %v7962
      %v7964 = vlaneseq
      %v7965 = vshrl.u32 %v7964, 7
      %v7966 = vsub.s32 0, %v7965
      %v7967 = vrot.slane %v7734, %v7966
      %v7968 = vlaneseq
      %v7969 = vshrl.u32 %v7968, 7
      %v7970 = vsub.s32 0, %v7969
      %v7971 = vrot.slane %v7735, %v7970
      %v7972 = vlaneseq
      %v7973 = vshrl.u32 %v7972, 7
      %v7974 = vsub.s32 0, %v7973
      %v7975 = vrot.slane %v7736, %v7974
      %v7976 = vlaneseq
      %v7977 = vshrl.u32 %v7976, 7
      %v7978 = vsub.s32 0, %v7977
      %v7979 = vrot.slane %v7737, %v7978
      %v7980 = vlaneseq
      %v7981 = vshrl.u32 %v7980, 7
      %v7982 = vsub.s32 0, %v7981
      %v7983 = vrot.slane %v7738, %v7982
      %v7984 = vlaneseq
      %v7985 = vshrl.u32 %v7984, 7
      %v7986 = vsub.s32 0, %v7985
      %v7987 = vrot.slane %v7739, %v7986
      %v7988 = vlaneseq
      %v7989 = vshrl.u32 %v7988, 7
      %v7990 = vsub.s32 0, %v7989
      %v7991 = vrot.slane %v7740, %v7990
      %v7992 = vlaneseq
      %v7993 = vshrl.u32 %v7992, 7
      %v7994 = vsub.s32 0, %v7993
      %v7995 = vrot.slane %v7741, %v7994
      %v7996 = vlaneseq
      %v7997 = vshrl.u32 %v7996, 7
      %v7998 = vsub.s32 0, %v7997
      %v7999 = vrot.slane %v7742, %v7998
      %v8000 = vlaneseq
      %v8001 = vshrl.u32 %v8000, 7
      %v8002 = vsub.s32 0, %v8001
      %v8003 = vrot.slane %v7743, %v8002
      %v8004 = vlaneseq
      %v8005 = vshrl.u32 %v8004, 7
      %v8006 = vsub.s32 0, %v8005
      %v8007 = vrot.slane %v7744, %v8006
      %v8008 = vlaneseq
      %v8009 = vshrl.u32 %v8008, 7
      %v8010 = vsub.s32 0, %v8009
      %v8011 = vrot.slane %v7745, %v8010
      %v8012 = vlaneseq
      %v8013 = vshrl.u32 %v8012, 7
      %v8014 = vsub.s32 0, %v8013
      %v8015 = vrot.slane %v7746, %v8014
      %v8016 = vlaneseq
      %v8017 = vshrl.u32 %v8016, 7
      %v8018 = vsub.s32 0, %v8017
      %v8019 = vrot.slane %v7747, %v8018
      %v8020 = vlaneseq
      %v8021 = vshrl.u32 %v8020, 7
      %v8022 = vsub.s32 0, %v8021
      %v8023 = vrot.slane %v7748, %v8022
      %v8024 = vlaneseq
      %v8025 = vshrl.u32 %v8024, 7
      %v8026 = vsub.s32 0, %v8025
      %v8027 = vrot.slane %v7749, %v8026
      %v8028 = vlaneseq
      %v8029 = vshrl.u32 %v8028, 7
      %v8030 = vsub.s32 0, %v8029
      %v8031 = vrot.slane %v7750, %v8030
      %v8032 = vlaneseq
      %v8033 = vshrl.u32 %v8032, 7
      %v8034 = vsub.s32 0, %v8033
      %v8035 = vrot.slane %v7751, %v8034
      %v8036 = vlaneseq
      %v8037 = vshrl.u32 %v8036, 7
      %v8038 = vsub.s32 0, %v8037
      %v8039 = vrot.slane %v7752, %v8038
      %v8040 = vlaneseq
      %v8041 = vshrl.u32 %v8040, 7
      %v8042 = vsub.s32 0, %v8041
      %v8043 = vrot.slane %v7753, %v8042
      %v8044 = vlaneseq
      %v8045 = vshrl.u32 %v8044, 7
      %v8046 = vsub.s32 0, %v8045
      %v8047 = vrot.slane %v7754, %v8046
      %v8048 = vlaneseq
      %v8049 = vshrl.u32 %v8048, 7
      %v8050 = vsub.s32 0, %v8049
      %v8051 = vrot.slane %v7755, %v8050
      %v8052 = vlaneseq
      %v8053 = vshrl.u32 %v8052, 7
      %v8054 = vsub.s32 0, %v8053
      %v8055 = vrot.slane %v7756, %v8054
      %v8056 = vlaneseq
      %v8057 = vshrl.u32 %v8056, 7
      %v8058 = vsub.s32 0, %v8057
      %v8059 = vrot.slane %v7757, %v8058
      %v8060 = vlaneseq
      %v8061 = vshrl.u32 %v8060, 7
      %v8062 = vsub.s32 0, %v8061
      %v8063 = vrot.slane %v7758, %v8062
      %v8064 = vlaneseq
      %v8065 = vshrl.u32 %v8064, 7
      %v8066 = vsub.s32 0, %v8065
      %v8067 = vrot.slane %v7759, %v8066
      %v8068 = vlaneseq
      %v8069 = vshrl.u32 %v8068, 7
      %v8070 = vsub.s32 0, %v8069
      %v8071 = vrot.slane %v7760, %v8070
      %v8072 = vlaneseq
      %v8073 = vshrl.u32 %v8072, 7
      %v8074 = vsub.s32 0, %v8073
      %v8075 = vrot.slane %v7761, %v8074
      %v8076 = vlaneseq
      %v8077 = vshrl.u32 %v8076, 7
      %v8078 = vsub.s32 0, %v8077
      %v8079 = vrot.slane %v7762, %v8078
      %v8080 = vlaneseq
      %v8081 = vshrl.u32 %v8080, 7
      %v8082 = vsub.s32 0, %v8081
      %v8083 = vrot.slane %v7763, %v8082
      %v8084 = vsel %vm7258, %v7835, %v7831
      %v8085 = vsel %vm7261, %v7839, %v8084
      %v8086 = vsel %vm7264, %v7843, %v8085
      %v8087 = vsel %vm7267, %v7847, %v8086
      %v8088 = vsel %vm7270, %v7851, %v8087
      %v8089 = vsel %vm7273, %v7855, %v8088
      %v8090 = vsel %vm7276, %v7859, %v8089
      %v8091 = vsel %vm7258, %v7867, %v7863
      %v8092 = vsel %vm7261, %v7871, %v8091
      %v8093 = vsel %vm7264, %v7875, %v8092
      %v8094 = vsel %vm7267, %v7879, %v8093
      %v8095 = vsel %vm7270, %v7883, %v8094
      %v8096 = vsel %vm7273, %v7887, %v8095
      %v8097 = vsel %vm7276, %v7891, %v8096
      %v8098 = vsel %vm7258, %v7899, %v7895
      %v8099 = vsel %vm7261, %v7903, %v8098
      %v8100 = vsel %vm7264, %v7907, %v8099
      %v8101 = vsel %vm7267, %v7911, %v8100
      %v8102 = vsel %vm7270, %v7915, %v8101
      %v8103 = vsel %vm7273, %v7919, %v8102
      %v8104 = vsel %vm7276, %v7923, %v8103
      %v8105 = vsel %vm7258, %v7931, %v7927
      %v8106 = vsel %vm7261, %v7935, %v8105
      %v8107 = vsel %vm7264, %v7939, %v8106
      %v8108 = vsel %vm7267, %v7943, %v8107
      %v8109 = vsel %vm7270, %v7947, %v8108
      %v8110 = vsel %vm7273, %v7951, %v8109
      %v8111 = vsel %vm7276, %v7955, %v8110
      %v8112 = vsel %vm7258, %v7963, %v7959
      %v8113 = vsel %vm7261, %v7967, %v8112
      %v8114 = vsel %vm7264, %v7971, %v8113
      %v8115 = vsel %vm7267, %v7975, %v8114
      %v8116 = vsel %vm7270, %v7979, %v8115
      %v8117 = vsel %vm7273, %v7983, %v8116
      %v8118 = vsel %vm7276, %v7987, %v8117
      %v8119 = vsel %vm7258, %v7995, %v7991
      %v8120 = vsel %vm7261, %v7999, %v8119
      %v8121 = vsel %vm7264, %v8003, %v8120
      %v8122 = vsel %vm7267, %v8007, %v8121
      %v8123 = vsel %vm7270, %v8011, %v8122
      %v8124 = vsel %vm7273, %v8015, %v8123
      %v8125 = vsel %vm7276, %v8019, %v8124
      %v8126 = vsel %vm7258, %v8027, %v8023
      %v8127 = vsel %vm7261, %v8031, %v8126
      %v8128 = vsel %vm7264, %v8035, %v8127
      %v8129 = vsel %vm7267, %v8039, %v8128
      %v8130 = vsel %vm7270, %v8043, %v8129
      %v8131 = vsel %vm7273, %v8047, %v8130
      %v8132 = vsel %vm7276, %v8051, %v8131
      %v8133 = vsel %vm7258, %v8059, %v8055
      %v8134 = vsel %vm7261, %v8063, %v8133
      %v8135 = vsel %vm7264, %v8067, %v8134
      %v8136 = vsel %vm7267, %v8071, %v8135
      %v8137 = vsel %vm7270, %v8075, %v8136
      %v8138 = vsel %vm7273, %v8079, %v8137
      %v8139 = vsel %vm7276, %v8083, %v8138
      %8148 = vst.msk [vmem:[%s278] sm:$0xff] %vm433, %v8090
      %8149 = vst.msk [vmem:[%s278 + $0x8] sm:$0xff] %vm433, %v8097
      %8150 = vst.msk [vmem:[%s278 + $0x10] sm:$0xff] %vm433, %v8104
      %8151 = vst.msk [vmem:[%s278 + $0x18] sm:$0xff] %vm433, %v8111
      %8152 = vst.msk [vmem:[%s278 + $0x20] sm:$0xff] %vm433, %v8118
      %8153 = vst.msk [vmem:[%s278 + $0x28] sm:$0xff] %vm433, %v8125
      %8154 = vst.msk [vmem:[%s278 + $0x30] sm:$0xff] %vm433, %v8132
      %8155 = vst.msk [vmem:[%s278 + $0x38] sm:$0xff] %vm433, %v8139
      %p8156 = scmp.lt.s32.totalorder %s18, 1
      %s8157 = scalar_select %p8156, %s18, 1
      %s8158 = smul.addr %s8157, 8
      %s8159 = smul.addr %s8158, 8
      %s8160 = scalar_lea.vmem %s7, %s8159
      // Predicated region
      $region49: #{d_block.1} parent=47 // pred_check
        %p8161 = pneg %p188
      $region50: #{d_block.1} parent=47 // pred_check_branch
        %8163 = sbr.rel (%p8161) target = $region52
      $region51: #{d_block.1} parent=47 // pred_region
        _
      $region52: #{d_block.1} parent=47 // pred_fallthru
        _
    $region48: #{d_block.1} parent=5 // pred_fallthru
      _
    %p8164 = scmp.le.s32.totalorder 2, %s13
    // Predicated region
    $region53: #{d_block.1} parent=5 // pred_check
      %p8165 = pneg %p8164
    $region54: #{d_block.1} parent=5 // pred_check_branch
      %8167 = sbr.rel (%p8165) target = $region56
    $region55: #{d_block.1} parent=5 // pred_region
      %s8168 = ssub.s32 %s13, 2
      // Predicated region
      $region57: #{d_block.1} parent=55 // pred_check
        %p8169 = pneg %p194
      $region58: #{d_block.1} parent=55 // pred_check_branch
        %8171 = sbr.rel (%p8169) target = $region60
      $region59: #{d_block.1} parent=55 // pred_region
        %p8172 = scmp.lt.s32.totalorder %s19, 1
        %s8173 = scalar_select %p8172, %s19, 1
        %s8174 = smul.addr %s8173, 8
        %s8175 = smul.addr %s8174, 8
        %s8176 = scalar_lea.vmem %s7, %s8175
      $region60: #{d_block.1} parent=55 // pred_fallthru
        _
    $region56: #{d_block.1} parent=5 // pred_fallthru
      _
  $region6: #{d_block.1} parent=0 // loop_footer
    %s17 = sadd.s32 1, %s13
  $region7: #{d_block.1} parent=0 // loop_footer_branch
    %12 = sbr.rel target = $region3
  $region8: #{d_block.1} parent=0 // loop_exit
    _

</llo_original>
